<compile_context>
chip_gen: v7x
topology: tpu7x:2x2x1
jax: 0.10.0
libtpu: 0.0.40
codegen_flags: <defaults>
</compile_context>

<pallas_src>
import jax
import jax.numpy as jnp
from jax.experimental import pallas as pl
from jax.experimental.pallas import tpu as pltpu

D_IN = 16384
D_H = 256
D_OUT = 64


def _embedder_kernel(x_ref, w1_ref, b1_ref, w2_ref, b2_ref, o_ref, acc_ref):
    """Fused fc1 -> relu -> fc2 -> relu.

    Grid axis 0 iterates over chunks of the 16384-wide input feature (K)
    dimension; fc1 partial products are accumulated in a f32 VMEM scratch.
    The accumulator is seeded with b1 at k==0, so the epilogue only applies
    ReLU, runs the small fc2 matmul + bias, applies ReLU, and writes out.
    """
    k = pl.program_id(0)

    @pl.when(k == 0)
    def _():
        # Seed the accumulator with the (broadcast) fc1 bias.
        acc_ref[...] = jnp.broadcast_to(b1_ref[...], acc_ref.shape)

    # fc1 partial product for this K-chunk: bf16 operands, f32 accumulate (MXU).
    acc_ref[...] += jnp.dot(
        x_ref[...], w1_ref[...], preferred_element_type=jnp.float32
    )

    @pl.when(k == pl.num_programs(0) - 1)
    def _():
        h = jnp.maximum(acc_ref[...], 0.0)                        # relu(fc1 + b1)
        y = jnp.dot(h, w2_ref[...], preferred_element_type=jnp.float32)
        y = jnp.maximum(y + b2_ref[...], 0.0)                     # relu(fc2 + b2)
        o_ref[...] = y.astype(o_ref.dtype)


def tabpfn_embedder_forward(x, w1, b1, w2, b2, *, tk=8192):
    """x: [B, 16384]; w1: [16384, 256]; b1: [256]; w2: [256, 64]; b2: [64]."""
    B, K = x.shape
    assert K == D_IN and K % tk == 0

    # HBM-bandwidth bound kernel: move x and W1 in bf16, accumulate in f32.
    x_bf16 = x.astype(jnp.bfloat16)
    w1_bf16 = w1.astype(jnp.bfloat16)
    b1_2d = b1.reshape(1, D_H).astype(jnp.float32)
    w2_f32 = w2.astype(jnp.float32)
    b2_2d = b2.reshape(1, D_OUT).astype(jnp.float32)

    grid = (K // tk,)

    bytes_accessed = (
        x_bf16.size * 2 + w1_bf16.size * 2          # dominant reads
        + b1_2d.size * 4 + w2_f32.size * 4 + b2_2d.size * 4
        + B * D_OUT * 4                             # output write
    )
    cost = pl.CostEstimate(
        flops=2 * B * K * D_H + 2 * B * D_H * D_OUT,
        transcendentals=0,
        bytes_accessed=bytes_accessed,
    )

    return pl.pallas_call(
        _embedder_kernel,
        out_shape=jax.ShapeDtypeStruct((B, D_OUT), jnp.float32),
        grid_spec=pltpu.PrefetchScalarGridSpec(
            num_scalar_prefetch=0,
            grid=grid,
            in_specs=[
                pl.BlockSpec((B, tk), lambda k: (0, k)),        # x chunk (bf16)
                pl.BlockSpec((tk, D_H), lambda k: (k, 0)),      # W1 chunk (bf16)
                pl.BlockSpec((1, D_H), lambda k: (0, 0)),       # b1 (resident)
                pl.BlockSpec((D_H, D_OUT), lambda k: (0, 0)),   # W2 (resident)
                pl.BlockSpec((1, D_OUT), lambda k: (0, 0)),     # b2 (resident)
            ],
            out_specs=pl.BlockSpec((B, D_OUT), lambda k: (0, 0)),
            scratch_shapes=[pltpu.VMEM((B, D_H), jnp.float32)],  # fc1 accumulator
        ),
        compiler_params=pltpu.CompilerParams(
            dimension_semantics=("arbitrary",),  # K is a reduction axis
        ),
        cost_estimate=cost,
    )(x_bf16, w1_bf16, b1_2d, w2_f32, b2_2d)


def reference_forward(x, w1, b1, w2, b2):
    h = jnp.maximum(x @ w1 + b1, 0.0)
    return jnp.maximum(h @ w2 + b2, 0.0)


if __name__ == "__main__":
    key = jax.random.PRNGKey(0)
    kx, kw1, kb1, kw2, kb2 = jax.random.split(key, 5)

    B = 2  # small batch; feature dim is fixed at 16384 by the module
    x = jax.random.normal(kx, (B, D_IN), dtype=jnp.float32)

    # Deterministic synthetic parameters (nn.Linear shapes, stored transposed
    # as [in, out] for the kernel). Scaled like PyTorch's default uniform init.
    bound1 = 1.0 / jnp.sqrt(D_IN)
    bound2 = 1.0 / jnp.sqrt(D_H)
    w1 = jax.random.uniform(kw1, (D_IN, D_H), jnp.float32, -bound1, bound1)
    b1 = jax.random.uniform(kb1, (D_H,), jnp.float32, -bound1, bound1)
    w2 = jax.random.uniform(kw2, (D_IN // 64, D_OUT), jnp.float32, -bound2, bound2)
    b2 = jax.random.uniform(kb2, (D_OUT,), jnp.float32, -bound2, bound2)

    out = tabpfn_embedder_forward(x, w1, b1, w2, b2)
    out = jax.block_until_ready(out)

    # f32 reference; tolerance loosened for the bf16 x/W1 quantization.
    ref = reference_forward(x, w1, b1, w2, b2)
    assert out.shape == (B, D_OUT)
    assert jnp.allclose(out, ref, atol=2e-2, rtol=2e-2), "mismatch vs reference"

    # Also check against a reference that quantizes x/W1 the same way (tight tol).
    ref_q = reference_forward(
        x.astype(jnp.bfloat16).astype(jnp.float32),
        w1.astype(jnp.bfloat16).astype(jnp.float32),
        b1, w2, b2,
    )
    assert jnp.allclose(out, ref_q, atol=2e-3, rtol=2e-3), "mismatch vs bf16 reference"

    print("KERNEL_OK")
</pallas_src>

<mosaic_0001>
module attributes {stable_mosaic.version = 11 : i64} {
  func.func @_embedder_kernel(%arg0: i32, %arg1: memref<2x8192xbf16, #tpu.memory_space<vmem>>, %arg2: memref<8192x256xbf16, #tpu.memory_space<vmem>>, %arg3: memref<1x256xf32, #tpu.memory_space<vmem>>, %arg4: memref<256x64xf32, #tpu.memory_space<vmem>>, %arg5: memref<1x64xf32, #tpu.memory_space<vmem>>, %arg6: memref<2x64xf32, #tpu.memory_space<vmem>>, %arg7: memref<2x256xf32, #tpu.memory_space<vmem>>) attributes {dimension_semantics = [#tpu.dimension_semantics<arbitrary>], iteration_bounds = array<i64: 2>, scalar_prefetch = 0 : i64, scratch_operands = 1 : i64, tpu.core_type = #tpu.core_type<tc>, window_params = [{transform_indices = @transform_0, window_bounds = array<i64: 2, 8192>}, {transform_indices = @transform_1, window_bounds = array<i64: 8192, 256>}, {pipeline_mode = #tpu.pipeline_mode<synchronous>, transform_indices = @transform_2, window_bounds = array<i64: 1, 256>}, {pipeline_mode = #tpu.pipeline_mode<synchronous>, transform_indices = @transform_3, window_bounds = array<i64: 256, 64>}, {pipeline_mode = #tpu.pipeline_mode<synchronous>, transform_indices = @transform_4, window_bounds = array<i64: 1, 64>}, {pipeline_mode = #tpu.pipeline_mode<synchronous>, transform_indices = @transform_5, window_bounds = array<i64: 2, 64>}]} {
    %c0_i32 = arith.constant 0 : i32
    %0 = arith.cmpi eq, %arg0, %c0_i32 : i32
    %1 = arith.extui %0 : i1 to i32
    %c0_i32_0 = arith.constant 0 : i32
    %2 = arith.cmpi ne, %1, %c0_i32_0 : i32
    scf.if %2 {
      %c0_9 = arith.constant 0 : index
      %c0_10 = arith.constant 0 : index
      %12 = vector.load %arg3[%c0_9, %c0_10] : memref<1x256xf32, #tpu.memory_space<vmem>>, vector<1x256xf32>
      %13 = vector.shape_cast %12 : vector<1x256xf32> to vector<1x256xf32>
      %14 = vector.broadcast %13 : vector<1x256xf32> to vector<2x256xf32>
      %c0_11 = arith.constant 0 : index
      %c0_12 = arith.constant 0 : index
      %15 = vector.load %arg7[%c0_11, %c0_12] : memref<2x256xf32, #tpu.memory_space<vmem>>, vector<2x256xf32>
      tpu.vector_store %arg7[%c0_11, %c0_12], %14 {strides = array<i32>} : memref<2x256xf32, #tpu.memory_space<vmem>>, vector<2x256xf32>,
    } else {
    }
    %c0 = arith.constant 0 : index
    %c0_1 = arith.constant 0 : index
    %3 = vector.load %arg7[%c0, %c0_1] : memref<2x256xf32, #tpu.memory_space<vmem>>, vector<2x256xf32>
    %c0_2 = arith.constant 0 : index
    %c0_3 = arith.constant 0 : index
    %4 = vector.load %arg1[%c0_2, %c0_3] : memref<2x8192xbf16, #tpu.memory_space<vmem>>, vector<2x8192xbf16>
    %c0_4 = arith.constant 0 : index
    %c0_5 = arith.constant 0 : index
    %5 = vector.load %arg2[%c0_4, %c0_5] : memref<8192x256xbf16, #tpu.memory_space<vmem>>, vector<8192x256xbf16>
    %cst = arith.constant dense<0.000000e+00> : vector<2x256xf32>
    %6 = tpu.matmul %4, %5, %cst {dimension_numbers = #tpu.dot_dimension_numbers<[1], [0], [0], [1], [0, 0, 1, 1], [], []>} : vector<2x8192xbf16>, vector<8192x256xbf16>, vector<2x256xf32> -> vector<2x256xf32>
    %7 = arith.addf %3, %6 : vector<2x256xf32>
    %c0_6 = arith.constant 0 : index
    %c0_7 = arith.constant 0 : index
    %8 = vector.load %arg7[%c0_6, %c0_7] : memref<2x256xf32, #tpu.memory_space<vmem>>, vector<2x256xf32>
    tpu.vector_store %arg7[%c0_6, %c0_7], %7 {strides = array<i32>} : memref<2x256xf32, #tpu.memory_space<vmem>>, vector<2x256xf32>,
    %c1_i32 = arith.constant 1 : i32
    %9 = arith.cmpi eq, %arg0, %c1_i32 : i32
    %10 = arith.extui %9 : i1 to i32
    %c0_i32_8 = arith.constant 0 : i32
    %11 = arith.cmpi ne, %10, %c0_i32_8 : i32
    scf.if %11 {
      %c0_9 = arith.constant 0 : index
      %c0_10 = arith.constant 0 : index
      %12 = vector.load %arg7[%c0_9, %c0_10] : memref<2x256xf32, #tpu.memory_space<vmem>>, vector<2x256xf32>
      %cst_11 = arith.constant 0.000000e+00 : f32
      %13 = vector.broadcast %cst_11 : f32 to vector<2x256xf32>
      %14 = arith.maximumf %12, %13 : vector<2x256xf32>
      %c0_12 = arith.constant 0 : index
      %c0_13 = arith.constant 0 : index
      %15 = vector.load %arg4[%c0_12, %c0_13] : memref<256x64xf32, #tpu.memory_space<vmem>>, vector<256x64xf32>
      %cst_14 = arith.constant dense<0.000000e+00> : vector<2x64xf32>
      %16 = tpu.matmul %14, %15, %cst_14 {dimension_numbers = #tpu.dot_dimension_numbers<[1], [0], [0], [1], [0, 0, 1, 1], [], []>} : vector<2x256xf32>, vector<256x64xf32>, vector<2x64xf32> -> vector<2x64xf32>
      %c0_15 = arith.constant 0 : index
      %c0_16 = arith.constant 0 : index
      %17 = vector.load %arg5[%c0_15, %c0_16] : memref<1x64xf32, #tpu.memory_space<vmem>>, vector<1x64xf32>
      %18 = vector.broadcast %17 : vector<1x64xf32> to vector<2x64xf32>
      %19 = arith.addf %16, %18 : vector<2x64xf32>
      %cst_17 = arith.constant 0.000000e+00 : f32
      %20 = vector.broadcast %cst_17 : f32 to vector<2x64xf32>
      %21 = arith.maximumf %19, %20 : vector<2x64xf32>
      %c0_18 = arith.constant 0 : index
      %c0_19 = arith.constant 0 : index
      %22 = vector.load %arg6[%c0_18, %c0_19] : memref<2x64xf32, #tpu.memory_space<vmem>>, vector<2x64xf32>
      tpu.vector_store %arg6[%c0_18, %c0_19], %21 {strides = array<i32>} : memref<2x64xf32, #tpu.memory_space<vmem>>, vector<2x64xf32>,
    } else {
    }
    return
  }
  func.func @transform_0(%arg0: i32) -> (i32, i32) {
    %c0_i32 = arith.constant 0 : i32
    %c0_i32_0 = arith.constant 0 : i32
    return %c0_i32, %arg0 : i32, i32
  }
  func.func @transform_1(%arg0: i32) -> (i32, i32) {
    %c0_i32 = arith.constant 0 : i32
    %c0_i32_0 = arith.constant 0 : i32
    return %arg0, %c0_i32 : i32, i32
  }
  func.func @transform_2(%arg0: i32) -> (i32, i32) {
    %c0_i32 = arith.constant 0 : i32
    %c0_i32_0 = arith.constant 0 : i32
    %c0_i32_1 = arith.constant 0 : i32
    return %c0_i32, %c0_i32_0 : i32, i32
  }
  func.func @transform_3(%arg0: i32) -> (i32, i32) {
    %c0_i32 = arith.constant 0 : i32
    %c0_i32_0 = arith.constant 0 : i32
    %c0_i32_1 = arith.constant 0 : i32
    return %c0_i32, %c0_i32_0 : i32, i32
  }
  func.func @transform_4(%arg0: i32) -> (i32, i32) {
    %c0_i32 = arith.constant 0 : i32
    %c0_i32_0 = arith.constant 0 : i32
    %c0_i32_1 = arith.constant 0 : i32
    return %c0_i32, %c0_i32_0 : i32, i32
  }
  func.func @transform_5(%arg0: i32) -> (i32, i32) {
    %c0_i32 = arith.constant 0 : i32
    %c0_i32_0 = arith.constant 0 : i32
    %c0_i32_1 = arith.constant 0 : i32
    return %c0_i32, %c0_i32_0 : i32, i32
  }
}

</mosaic_0001>

<llo_original>
// kernel: tpu_custom_call.1
$region0: #{tpu_custom_call.1}
  #allocation0 [shape = 'u32[]', space=smem, size = 0x4, offset = 0x4, fixed_abs, tag = 'smem constant byte address 0x4 - core index']
  #allocation1 [shape = 'u32[144,128]{1,0:T(1,128)}', space=vmem, size = 0x12000, scoped, tag = 'internal scratch']
  #allocation2 [shape = 'f32[2,256]{1,0:T(2,128)}', space=vmem, size = 0x800, scoped, tag = 'scratch operand']
  %s0 = inlined_call_operand.hbm [shape: bf16[2,16384], index: 0, kind: input, shape index: {}]
  %s1 = inlined_call_operand.hbm [shape: bf16[16384,256], index: 1, kind: input, shape index: {}]
  %s2 = inlined_call_operand.hbm [shape: f32[1,256], index: 2, kind: input, shape index: {}]
  %s3 = inlined_call_operand.vmem [shape: f32[256,64], index: 3, kind: input, shape index: {}]
  %s4 = inlined_call_operand.hbm [shape: f32[1,64], index: 4, kind: input, shape index: {}]
  %s5 = inlined_call_operand.hbm [shape: f32[2,64], index: 5, kind: output, shape index: {}]
  %s6 = sld [smem:[#allocation0]]
  $region77: #{tpu_custom_call.1} parent=0
    _
  %s8 = ssub.s32 1, %s6
  %s9 = scalar_select 0, %s8, %s6
  $region1: #{tpu_custom_call.1} parent=0
    #allocation3 [shape = 'u8[65536]{0}', space=vmem, size = 0x10000, scoped, tag = 'input window, operand 0']
    #allocation4 [shape = 's32[2]{0}', space=sflag, size = 0x8, scoped, tag = 'scoped memory for tpu_custom_call.1']
    #allocation5 [shape = 's32[2]{0}', space=sflag, size = 0x8, scoped, tag = 'scoped memory for tpu_custom_call.1']
    #allocation6 [shape = 'u8[8388608]{0}', space=vmem, size = 0x800000, scoped, tag = 'input window, operand 1']
    #allocation7 [shape = 's32[2]{0}', space=sflag, size = 0x8, scoped, tag = 'scoped memory for tpu_custom_call.1']
    #allocation8 [shape = 'u8[1024]{0}', space=vmem, size = 0x400, scoped, tag = 'input window, operand 2, single buffered']
    #allocation9 [shape = 'u8[512]{0}', space=vmem, size = 0x400, scoped, tag = 'input window, operand 4, single buffered']
    #allocation10 [shape = 's32[1]{0}', space=sflag, size = 0x4, scoped, tag = 'scoped memory for tpu_custom_call.1']
    #allocation11 [shape = 'u8[1024]{0}', space=vmem, size = 0x400, scoped, tag = 'output window, operand 0, single buffered']
    %10 = vsyncpa [#allocation4], 0
    %s11 = scalar_lea.sflag [#allocation4], 1
    %12 = vsyncpa %s11, 0
    %13 = vsyncpa [#allocation7], 0
    %s14 = scalar_lea.sflag [#allocation7], 1
    %15 = vsyncpa %s14, 0
    %16 = vsyncpa [#allocation10], 0
    %17 = vsyncpa [#allocation5], 0
    loop: start=0, step=1, limit=4
    $region2: #{tpu_custom_call.1} parent=1 // loop_pre_header
      _
    $region3: #{tpu_custom_call.1} parent=1 // loop_header
      %s19 = sphi 0, %s23
      %p20 = scmp.ge.s32.totalorder %s19, 4
      %s29 = sphi 0, %s31
      %s32 = sphi 0, %s29
      %s33 = sphi 0, %s32
      %s49 = sphi 0, %s33
      %s55 = sphi 0, %s57
      %s58 = sphi 0, %s55
      %s59 = sphi 0, %s58
      %s75 = sphi 0, %s59
      %s79 = sphi 0, %s79
      %s81 = sphi 0, %s79
      %s82 = sphi 0, %s81
      %s96 = sphi 0, %s82
      %s100 = sphi 0, %s100
      %s102 = sphi 0, %s100
      %s103 = sphi 0, %s102
      %s117 = sphi 0, %s103
      %s121 = sphi 0, %s121
      %s123 = sphi 0, %s121
      %s124 = sphi 0, %s123
      %s138 = sphi 0, %s124
      %s142 = sphi 0, %s142
      %s144 = sphi 0, %s142
      %s145 = sphi 0, %s144
      %s159 = sphi 0, %s145
    $region4: #{tpu_custom_call.1} parent=1 // loop_header_branch
      %22 = sbr.rel (%p20) target = $region8
    $region5: #{tpu_custom_call.1} parent=1 // loop_body
      %s24 = ssub.s32 %s19, 1
      %s25 = ssub.s32 %s19, 2
      %s26 = sadd.s32 %s19, 1
      %s27 = ssub.s32 %s19, %s26
      %p28 = scmp.eq.s32.totalorder %s27, 0
      %s30 = sadd.s32 %s29, 1
      %s31 = scalar_select %p28, %s29, %s30
      %p34 = pneg %p28
      %p35 = scmp.eq.s32.totalorder %s19, 1
      %p36 = por %p34, %p35
      %p37 = scmp.ne.s32.totalorder %s29, %s32
      %p38 = scmp.eq.s32.totalorder %s19, 0
      %p39 = por %p37, %p38
      %p40 = scmp.ne.s32.totalorder %s29, %s32
      %p41 = scmp.eq.s32.totalorder %s24, 1
      %p42 = por %p40, %p41
      %p43 = scmp.ne.s32.totalorder %s32, %s33
      %p44 = scmp.eq.s32.totalorder %s24, 0
      %p45 = por %p43, %p44
      %p46 = scmp.ne.s32.totalorder %s32, %s33
      %p47 = scmp.eq.s32.totalorder %s25, 1
      %p48 = por %p46, %p47
      %p50 = scmp.ne.s32.totalorder %s33, %s49
      %p51 = scmp.eq.s32.totalorder %s25, 0
      %p52 = por %p50, %p51
      %s53 = ssub.s32 %s19, %s26
      %p54 = scmp.eq.s32.totalorder %s53, 0
      %s56 = sadd.s32 %s55, 1
      %s57 = scalar_select %p54, %s55, %s56
      %p60 = pneg %p54
      %p61 = scmp.eq.s32.totalorder %s19, 1
      %p62 = por %p60, %p61
      %p63 = scmp.ne.s32.totalorder %s55, %s58
      %p64 = scmp.eq.s32.totalorder %s19, 0
      %p65 = por %p63, %p64
      %p66 = scmp.ne.s32.totalorder %s55, %s58
      %p67 = scmp.eq.s32.totalorder %s24, 1
      %p68 = por %p66, %p67
      %p69 = scmp.ne.s32.totalorder %s58, %s59
      %p70 = scmp.eq.s32.totalorder %s24, 0
      %p71 = por %p69, %p70
      %p72 = scmp.ne.s32.totalorder %s58, %s59
      %p73 = scmp.eq.s32.totalorder %s25, 1
      %p74 = por %p72, %p73
      %p76 = scmp.ne.s32.totalorder %s59, %s75
      %p77 = scmp.eq.s32.totalorder %s25, 0
      %p78 = por %p76, %p77
      %s80 = sadd.s32 %s79, 1
      %p83 = scmp.eq.s32.totalorder %s19, 1
      %p84 = scmp.ne.s32.totalorder %s79, %s81
      %p85 = scmp.eq.s32.totalorder %s19, 0
      %p86 = por %p84, %p85
      %p87 = scmp.ne.s32.totalorder %s79, %s81
      %p88 = scmp.eq.s32.totalorder %s24, 1
      %p89 = por %p87, %p88
      %p90 = scmp.ne.s32.totalorder %s81, %s82
      %p91 = scmp.eq.s32.totalorder %s24, 0
      %p92 = por %p90, %p91
      %p93 = scmp.ne.s32.totalorder %s81, %s82
      %p94 = scmp.eq.s32.totalorder %s25, 1
      %p95 = por %p93, %p94
      %p97 = scmp.ne.s32.totalorder %s82, %s96
      %p98 = scmp.eq.s32.totalorder %s25, 0
      %p99 = por %p97, %p98
      %s101 = sadd.s32 %s100, 1
      %p104 = scmp.eq.s32.totalorder %s19, 1
      %p105 = scmp.ne.s32.totalorder %s100, %s102
      %p106 = scmp.eq.s32.totalorder %s19, 0
      %p107 = por %p105, %p106
      %p108 = scmp.ne.s32.totalorder %s100, %s102
      %p109 = scmp.eq.s32.totalorder %s24, 1
      %p110 = por %p108, %p109
      %p111 = scmp.ne.s32.totalorder %s102, %s103
      %p112 = scmp.eq.s32.totalorder %s24, 0
      %p113 = por %p111, %p112
      %p114 = scmp.ne.s32.totalorder %s102, %s103
      %p115 = scmp.eq.s32.totalorder %s25, 1
      %p116 = por %p114, %p115
      %p118 = scmp.ne.s32.totalorder %s103, %s117
      %p119 = scmp.eq.s32.totalorder %s25, 0
      %p120 = por %p118, %p119
      %s122 = sadd.s32 %s121, 1
      %p125 = scmp.eq.s32.totalorder %s19, 1
      %p126 = scmp.ne.s32.totalorder %s121, %s123
      %p127 = scmp.eq.s32.totalorder %s19, 0
      %p128 = por %p126, %p127
      %p129 = scmp.ne.s32.totalorder %s121, %s123
      %p130 = scmp.eq.s32.totalorder %s24, 1
      %p131 = por %p129, %p130
      %p132 = scmp.ne.s32.totalorder %s123, %s124
      %p133 = scmp.eq.s32.totalorder %s24, 0
      %p134 = por %p132, %p133
      %p135 = scmp.ne.s32.totalorder %s123, %s124
      %p136 = scmp.eq.s32.totalorder %s25, 1
      %p137 = por %p135, %p136
      %p139 = scmp.ne.s32.totalorder %s124, %s138
      %p140 = scmp.eq.s32.totalorder %s25, 0
      %p141 = por %p139, %p140
      %s143 = sadd.s32 %s142, 1
      %p146 = scmp.eq.s32.totalorder %s19, 1
      %p147 = scmp.ne.s32.totalorder %s142, %s144
      %p148 = scmp.eq.s32.totalorder %s19, 0
      %p149 = por %p147, %p148
      %p150 = scmp.ne.s32.totalorder %s142, %s144
      %p151 = scmp.eq.s32.totalorder %s24, 1
      %p152 = por %p150, %p151
      %p153 = scmp.ne.s32.totalorder %s144, %s145
      %p154 = scmp.eq.s32.totalorder %s24, 0
      %p155 = por %p153, %p154
      %p156 = scmp.ne.s32.totalorder %s144, %s145
      %p157 = scmp.eq.s32.totalorder %s25, 1
      %p158 = por %p156, %p157
      %p160 = scmp.ne.s32.totalorder %s145, %s159
      %p161 = scmp.eq.s32.totalorder %s25, 0
      %p162 = por %p160, %p161
      %p163 = scmp.le.s32.totalorder 1, %s19
      %p164 = scmp.lt.s32.totalorder %s19, 3
      %p165 = pnand %p163, %p164
      %p166 = pneg %p165
      // Predicated region
      $region9: #{tpu_custom_call.1} parent=5 // pred_check
        _
      $region10: #{tpu_custom_call.1} parent=5 // pred_check_branch
        %168 = sbr.rel (%p165) target = $region12
      $region11: #{tpu_custom_call.1} parent=5 // pred_region
        %s169 = ssub.s32 %s19, 1
        // Predicated region
        $region13: #{tpu_custom_call.1} parent=11 // pred_check
          %p170 = pneg %p92
        $region14: #{tpu_custom_call.1} parent=11 // pred_check_branch
          %172 = sbr.rel (%p170) target = $region16
        $region15: #{tpu_custom_call.1} parent=11 // pred_region
          %s174 = ssub.s32 32, 32
          %175 = vsyncadd [#allocation7], %s174
          %s177 = sshll.u32 [#allocation8], 4
          %s178 = int_to_ptr.vmem [resolvable:$true] %s177
          %180 = dma.hbm_to_vmem [thread:$0]  %s2, 32, %s178, [#allocation7]
        $region16: #{tpu_custom_call.1} parent=11 // pred_fallthru
          _
        // Predicated region
        $region17: #{tpu_custom_call.1} parent=11 // pred_check
          %p181 = pneg %p113
        $region18: #{tpu_custom_call.1} parent=11 // pred_check_branch
          %183 = sbr.rel (%p181) target = $region20
        $region19: #{tpu_custom_call.1} parent=11 // pred_region
          _
        $region20: #{tpu_custom_call.1} parent=11 // pred_fallthru
          _
        // Predicated region
        $region21: #{tpu_custom_call.1} parent=11 // pred_check
          %p184 = pneg %p134
        $region22: #{tpu_custom_call.1} parent=11 // pred_check_branch
          %186 = sbr.rel (%p184) target = $region24
        $region23: #{tpu_custom_call.1} parent=11 // pred_region
          %s188 = ssub.s32 16, 16
          %189 = vsyncadd [#allocation10], %s188
          %s191 = sshll.u32 [#allocation9], 4
          %s192 = int_to_ptr.vmem [resolvable:$true] %s191
          %194 = dma.hbm_to_vmem [thread:$0]  %s4, 16, %s192, [#allocation10]
        $region24: #{tpu_custom_call.1} parent=11 // pred_fallthru
          _
      $region12: #{tpu_custom_call.1} parent=5 // pred_fallthru
        _
      %p195 = scmp.lt.s32.totalorder %s19, 2
      // Predicated region
      $region25: #{tpu_custom_call.1} parent=5 // pred_check
        %p196 = pneg %p195
      $region26: #{tpu_custom_call.1} parent=5 // pred_check_branch
        %198 = sbr.rel (%p196) target = $region28
      $region27: #{tpu_custom_call.1} parent=5 // pred_region
        // Predicated region
        $region29: #{tpu_custom_call.1} parent=27 // pred_check
          %p199 = pneg %p39
        $region30: #{tpu_custom_call.1} parent=27 // pred_check_branch
          %201 = sbr.rel (%p199) target = $region32
        $region31: #{tpu_custom_call.1} parent=27 // pred_region
          %s202 = sand.u32 %s29, 1
          %s203 = scalar_lea.sflag [#allocation4], %s202
          %s204 = sand.u32 %s29, 1
          %s205 = smul.addr %s204, 64
          %s206 = scalar_lea.vmem [#allocation3], %s205
          %s207 = smul.u32 64, %s19
          %s209 = ssub.s32 1024, 1024
          %210 = vsyncadd %s203, %s209
          %s211 = smul.addr %s207, 16
          %s212 = scalar_lea.hbm %s0, %s211
          %s214 = sshll.u32 %s206, 4
          %s215 = int_to_ptr.vmem [resolvable:$true] %s214
          %217 = dma.hbm_to_vmem [thread:$0]  %s212, 1024, %s215, %s203
        $region32: #{tpu_custom_call.1} parent=27 // pred_fallthru
          _
        // Predicated region
        $region33: #{tpu_custom_call.1} parent=27 // pred_check
          %p218 = pneg %p65
        $region34: #{tpu_custom_call.1} parent=27 // pred_check_branch
          %220 = sbr.rel (%p218) target = $region36
        $region35: #{tpu_custom_call.1} parent=27 // pred_region
          %s221 = sand.u32 %s19, 1
          %s222 = scalar_lea.sflag [#allocation7], %s221
          %s223 = sand.u32 %s55, 1
          %s224 = smul.addr %s223, 8192
          %s225 = scalar_lea.vmem [#allocation6], %s224
          %s226 = smul.u32 1024, %s19
          %s228 = ssub.s32 131072, 131072
          %229 = vsyncadd %s222, %s228
          %s230 = smul.addr %s226, 2
          %s231 = smul.addr %s230, 64
          %s232 = scalar_lea.hbm %s1, %s231
          %s233 = sshll.u32 %s225, 4
          %s234 = int_to_ptr.vmem [resolvable:$true] %s233
          %239 = dma.hbm_to_vmem [thread:$0]  %s232, 131072, %s234, %s222, 128, 128, 8
        $region36: #{tpu_custom_call.1} parent=27 // pred_fallthru
          _
      $region28: #{tpu_custom_call.1} parent=5 // pred_fallthru
        _
      %p240 = scmp.le.s32.totalorder 1, %s19
      %p241 = scmp.lt.s32.totalorder %s19, 3
      %p242 = pnand %p240, %p241
      %p243 = pneg %p242
      // Predicated region
      $region37: #{tpu_custom_call.1} parent=5 // pred_check
        _
      $region38: #{tpu_custom_call.1} parent=5 // pred_check_branch
        %245 = sbr.rel (%p242) target = $region40
      $region39: #{tpu_custom_call.1} parent=5 // pred_region
        %s246 = ssub.s32 %s19, 1
        %s247 = sand.u32 %s32, 1
        %s248 = scalar_lea.sflag [#allocation4], %s247
        %s249 = sand.u32 %s32, 1
        %s250 = smul.addr %s249, 64
        %s251 = scalar_lea.vmem [#allocation3], %s250
        // Predicated region
        $region41: #{tpu_custom_call.1} parent=39 // pred_check
          %p252 = pneg %p45
        $region42: #{tpu_custom_call.1} parent=39 // pred_check_branch
          %254 = sbr.rel (%p252) target = $region44
        $region43: #{tpu_custom_call.1} parent=39 // pred_region
          %255 = dma.done %s248, 1024
        $region44: #{tpu_custom_call.1} parent=39 // pred_fallthru
          _
        %s256 = sand.u32 %s24, 1
        %s257 = scalar_lea.sflag [#allocation7], %s256
        %s258 = sand.u32 %s58, 1
        %s259 = smul.addr %s258, 8192
        %s260 = scalar_lea.vmem [#allocation6], %s259
        // Predicated region
        $region45: #{tpu_custom_call.1} parent=39 // pred_check
          %p261 = pneg %p71
        $region46: #{tpu_custom_call.1} parent=39 // pred_check_branch
          %263 = sbr.rel (%p261) target = $region48
        $region47: #{tpu_custom_call.1} parent=39 // pred_region
          %264 = dma.done %s257, 131072
        $region48: #{tpu_custom_call.1} parent=39 // pred_fallthru
          _
        // Predicated region
        $region49: #{tpu_custom_call.1} parent=39 // pred_check
          %p265 = pneg %p92
        $region50: #{tpu_custom_call.1} parent=39 // pred_check_branch
          %267 = sbr.rel (%p265) target = $region52
        $region51: #{tpu_custom_call.1} parent=39 // pred_region
          %268 = dma.done [#allocation7], 32
        $region52: #{tpu_custom_call.1} parent=39 // pred_fallthru
          _
        // Predicated region
        $region53: #{tpu_custom_call.1} parent=39 // pred_check
          %p269 = pneg %p134
        $region54: #{tpu_custom_call.1} parent=39 // pred_check_branch
          %271 = sbr.rel (%p269) target = $region56
        $region55: #{tpu_custom_call.1} parent=39 // pred_region
          %272 = dma.done [#allocation10], 16
        $region56: #{tpu_custom_call.1} parent=39 // pred_fallthru
          _
        %s273 = sand.u32 %s32, 1
        %s274 = scalar_lea.sflag [#allocation4], %s273
        %s275 = sand.u32 %s32, 1
        %s276 = smul.addr %s275, 64
        %s277 = scalar_lea.vmem [#allocation3], %s276
        %p278 = pneg %p45
        %p279 = pneg %p42
        %s280 = sand.u32 %s24, 1
        %s281 = scalar_lea.sflag [#allocation7], %s280
        %s282 = sand.u32 %s58, 1
        %s283 = smul.addr %s282, 8192
        %s284 = scalar_lea.vmem [#allocation6], %s283
        %p285 = pneg %p71
        %p286 = pneg %p68
        %p287 = pneg %p92
        %p288 = pneg %p89
        %p289 = pneg %p113
        %p290 = pneg %p110
        %p291 = pneg %p134
        %p292 = pneg %p131
        %p293 = pneg %p155
        %p294 = pneg %p152
        %s295 = smul.u32 64, %s24
        %s296 = smul.u32 1024, %s24
        %p297 = scmp.eq.s32.totalorder %s24, 0
        // Predicated region
        $region57: #{tpu_custom_call.1} parent=39 // pred_check
          %p298 = pneg %p297
        $region58: #{tpu_custom_call.1} parent=39 // pred_check_branch
          %300 = sbr.rel (%p298) target = $region60
        $region59: #{tpu_custom_call.1} parent=39 // pred_region
          %v301 = vld [vmem:[#allocation8] sm:$0x3]
          %v303 = vlaneseq
          %v304 = vshrl.u32 %v303, 7
          %v305 = vsub.s32 0, %v304
          %v306 = vrot.slane %v301, %v305
          %v307 = vlaneseq
          %v308 = vshrl.u32 %v307, 7
          %v309 = vsub.s32 1, %v308
          %v310 = vrot.slane %v301, %v309
          %v311 = vcombine.low %v306, %v310
          %v313 = vunpack.c.l.s4 1983009808
          %v314 = vunpack.c.0.s8 %v313
          %v315 = vlaneseq
          %v316 = vshrl.u32 %v315, 7
          %v317 = vsub.s32 %v314, %v316
          %v318 = vrot.slane %v311, %v317
          %320 = vst [vmem:[#allocation2] sm:$0xf] %v318
        $region60: #{tpu_custom_call.1} parent=39 // pred_fallthru
          _
        %v321 = vld [vmem:[#allocation2] sm:$0xf]
        %v322 = vld [vmem:[%s251] sm:$0xff]
        %v323 = vld [vmem:[%s251 + $0x8] sm:$0xff]
        %v324 = vld [vmem:[%s251 + $0x10] sm:$0xff]
        %v325 = vld [vmem:[%s251 + $0x18] sm:$0xff]
        %v326 = vld [vmem:[%s251 + $0x20] sm:$0xff]
        %v327 = vld [vmem:[%s251 + $0x28] sm:$0xff]
        %v328 = vld [vmem:[%s251 + $0x30] sm:$0xff]
        %v329 = vld [vmem:[%s251 + $0x38] sm:$0xff]
        %v330 = vld [vmem:[%s260] sm:$0xff]
        %v331 = vld [vmem:[%s260 + $0x8] sm:$0xff]
        %v332 = vld [vmem:[%s260 + $0x10] sm:$0xff]
        %v333 = vld [vmem:[%s260 + $0x18] sm:$0xff]
        %v334 = vld [vmem:[%s260 + $0x20] sm:$0xff]
        %v335 = vld [vmem:[%s260 + $0x28] sm:$0xff]
        %v336 = vld [vmem:[%s260 + $0x30] sm:$0xff]
        %v337 = vld [vmem:[%s260 + $0x38] sm:$0xff]
        %v338 = vld [vmem:[%s260 + $0x40] sm:$0xff]
        %v339 = vld [vmem:[%s260 + $0x48] sm:$0xff]
        %v340 = vld [vmem:[%s260 + $0x50] sm:$0xff]
        %v341 = vld [vmem:[%s260 + $0x58] sm:$0xff]
        %v342 = vld [vmem:[%s260 + $0x60] sm:$0xff]
        %v343 = vld [vmem:[%s260 + $0x68] sm:$0xff]
        %v344 = vld [vmem:[%s260 + $0x70] sm:$0xff]
        %v345 = vld [vmem:[%s260 + $0x78] sm:$0xff]
        %v346 = vld [vmem:[%s260 + $0x80] sm:$0xff]
        %v347 = vld [vmem:[%s260 + $0x88] sm:$0xff]
        %v348 = vld [vmem:[%s260 + $0x90] sm:$0xff]
        %v349 = vld [vmem:[%s260 + $0x98] sm:$0xff]
        %v350 = vld [vmem:[%s260 + $0xa0] sm:$0xff]
        %v351 = vld [vmem:[%s260 + $0xa8] sm:$0xff]
        %v352 = vld [vmem:[%s260 + $0xb0] sm:$0xff]
        %v353 = vld [vmem:[%s260 + $0xb8] sm:$0xff]
        %v354 = vld [vmem:[%s260 + $0xc0] sm:$0xff]
        %v355 = vld [vmem:[%s260 + $0xc8] sm:$0xff]
        %v356 = vld [vmem:[%s260 + $0xd0] sm:$0xff]
        %v357 = vld [vmem:[%s260 + $0xd8] sm:$0xff]
        %v358 = vld [vmem:[%s260 + $0xe0] sm:$0xff]
        %v359 = vld [vmem:[%s260 + $0xe8] sm:$0xff]
        %v360 = vld [vmem:[%s260 + $0xf0] sm:$0xff]
        %v361 = vld [vmem:[%s260 + $0xf8] sm:$0xff]
        %v362 = vld [vmem:[%s260 + $0x100] sm:$0xff]
        %v363 = vld [vmem:[%s260 + $0x108] sm:$0xff]
        %v364 = vld [vmem:[%s260 + $0x110] sm:$0xff]
        %v365 = vld [vmem:[%s260 + $0x118] sm:$0xff]
        %v366 = vld [vmem:[%s260 + $0x120] sm:$0xff]
        %v367 = vld [vmem:[%s260 + $0x128] sm:$0xff]
        %v368 = vld [vmem:[%s260 + $0x130] sm:$0xff]
        %v369 = vld [vmem:[%s260 + $0x138] sm:$0xff]
        %v370 = vld [vmem:[%s260 + $0x140] sm:$0xff]
        %v371 = vld [vmem:[%s260 + $0x148] sm:$0xff]
        %v372 = vld [vmem:[%s260 + $0x150] sm:$0xff]
        %v373 = vld [vmem:[%s260 + $0x158] sm:$0xff]
        %v374 = vld [vmem:[%s260 + $0x160] sm:$0xff]
        %v375 = vld [vmem:[%s260 + $0x168] sm:$0xff]
        %v376 = vld [vmem:[%s260 + $0x170] sm:$0xff]
        %v377 = vld [vmem:[%s260 + $0x178] sm:$0xff]
        %v378 = vld [vmem:[%s260 + $0x180] sm:$0xff]
        %v379 = vld [vmem:[%s260 + $0x188] sm:$0xff]
        %v380 = vld [vmem:[%s260 + $0x190] sm:$0xff]
        %v381 = vld [vmem:[%s260 + $0x198] sm:$0xff]
        %v382 = vld [vmem:[%s260 + $0x1a0] sm:$0xff]
        %v383 = vld [vmem:[%s260 + $0x1a8] sm:$0xff]
        %v384 = vld [vmem:[%s260 + $0x1b0] sm:$0xff]
        %v385 = vld [vmem:[%s260 + $0x1b8] sm:$0xff]
        %v386 = vld [vmem:[%s260 + $0x1c0] sm:$0xff]
        %v387 = vld [vmem:[%s260 + $0x1c8] sm:$0xff]
        %v388 = vld [vmem:[%s260 + $0x1d0] sm:$0xff]
        %v389 = vld [vmem:[%s260 + $0x1d8] sm:$0xff]
        %v390 = vld [vmem:[%s260 + $0x1e0] sm:$0xff]
        %v391 = vld [vmem:[%s260 + $0x1e8] sm:$0xff]
        %v392 = vld [vmem:[%s260 + $0x1f0] sm:$0xff]
        %v393 = vld [vmem:[%s260 + $0x1f8] sm:$0xff]
        %v394 = vld [vmem:[%s260 + $0x200] sm:$0xff]
        %v395 = vld [vmem:[%s260 + $0x208] sm:$0xff]
        %v396 = vld [vmem:[%s260 + $0x210] sm:$0xff]
        %v397 = vld [vmem:[%s260 + $0x218] sm:$0xff]
        %v398 = vld [vmem:[%s260 + $0x220] sm:$0xff]
        %v399 = vld [vmem:[%s260 + $0x228] sm:$0xff]
        %v400 = vld [vmem:[%s260 + $0x230] sm:$0xff]
        %v401 = vld [vmem:[%s260 + $0x238] sm:$0xff]
        %v402 = vld [vmem:[%s260 + $0x240] sm:$0xff]
        %v403 = vld [vmem:[%s260 + $0x248] sm:$0xff]
        %v404 = vld [vmem:[%s260 + $0x250] sm:$0xff]
        %v405 = vld [vmem:[%s260 + $0x258] sm:$0xff]
        %v406 = vld [vmem:[%s260 + $0x260] sm:$0xff]
        %v407 = vld [vmem:[%s260 + $0x268] sm:$0xff]
        %v408 = vld [vmem:[%s260 + $0x270] sm:$0xff]
        %v409 = vld [vmem:[%s260 + $0x278] sm:$0xff]
        %v410 = vld [vmem:[%s260 + $0x280] sm:$0xff]
        %v411 = vld [vmem:[%s260 + $0x288] sm:$0xff]
        %v412 = vld [vmem:[%s260 + $0x290] sm:$0xff]
        %v413 = vld [vmem:[%s260 + $0x298] sm:$0xff]
        %v414 = vld [vmem:[%s260 + $0x2a0] sm:$0xff]
        %v415 = vld [vmem:[%s260 + $0x2a8] sm:$0xff]
        %v416 = vld [vmem:[%s260 + $0x2b0] sm:$0xff]
        %v417 = vld [vmem:[%s260 + $0x2b8] sm:$0xff]
        %v418 = vld [vmem:[%s260 + $0x2c0] sm:$0xff]
        %v419 = vld [vmem:[%s260 + $0x2c8] sm:$0xff]
        %v420 = vld [vmem:[%s260 + $0x2d0] sm:$0xff]
        %v421 = vld [vmem:[%s260 + $0x2d8] sm:$0xff]
        %v422 = vld [vmem:[%s260 + $0x2e0] sm:$0xff]
        %v423 = vld [vmem:[%s260 + $0x2e8] sm:$0xff]
        %v424 = vld [vmem:[%s260 + $0x2f0] sm:$0xff]
        %v425 = vld [vmem:[%s260 + $0x2f8] sm:$0xff]
        %v426 = vld [vmem:[%s260 + $0x300] sm:$0xff]
        %v427 = vld [vmem:[%s260 + $0x308] sm:$0xff]
        %v428 = vld [vmem:[%s260 + $0x310] sm:$0xff]
        %v429 = vld [vmem:[%s260 + $0x318] sm:$0xff]
        %v430 = vld [vmem:[%s260 + $0x320] sm:$0xff]
        %v431 = vld [vmem:[%s260 + $0x328] sm:$0xff]
        %v432 = vld [vmem:[%s260 + $0x330] sm:$0xff]
        %v433 = vld [vmem:[%s260 + $0x338] sm:$0xff]
        %v434 = vld [vmem:[%s260 + $0x340] sm:$0xff]
        %v435 = vld [vmem:[%s260 + $0x348] sm:$0xff]
        %v436 = vld [vmem:[%s260 + $0x350] sm:$0xff]
        %v437 = vld [vmem:[%s260 + $0x358] sm:$0xff]
        %v438 = vld [vmem:[%s260 + $0x360] sm:$0xff]
        %v439 = vld [vmem:[%s260 + $0x368] sm:$0xff]
        %v440 = vld [vmem:[%s260 + $0x370] sm:$0xff]
        %v441 = vld [vmem:[%s260 + $0x378] sm:$0xff]
        %v442 = vld [vmem:[%s260 + $0x380] sm:$0xff]
        %v443 = vld [vmem:[%s260 + $0x388] sm:$0xff]
        %v444 = vld [vmem:[%s260 + $0x390] sm:$0xff]
        %v445 = vld [vmem:[%s260 + $0x398] sm:$0xff]
        %v446 = vld [vmem:[%s260 + $0x3a0] sm:$0xff]
        %v447 = vld [vmem:[%s260 + $0x3a8] sm:$0xff]
        %v448 = vld [vmem:[%s260 + $0x3b0] sm:$0xff]
        %v449 = vld [vmem:[%s260 + $0x3b8] sm:$0xff]
        %v450 = vld [vmem:[%s260 + $0x3c0] sm:$0xff]
        %v451 = vld [vmem:[%s260 + $0x3c8] sm:$0xff]
        %v452 = vld [vmem:[%s260 + $0x3d0] sm:$0xff]
        %v453 = vld [vmem:[%s260 + $0x3d8] sm:$0xff]
        %v454 = vld [vmem:[%s260 + $0x3e0] sm:$0xff]
        %v455 = vld [vmem:[%s260 + $0x3e8] sm:$0xff]
        %v456 = vld [vmem:[%s260 + $0x3f0] sm:$0xff]
        %v457 = vld [vmem:[%s260 + $0x3f8] sm:$0xff]
        %v458 = vld [vmem:[%s260 + $0x400] sm:$0xff]
        %v459 = vld [vmem:[%s260 + $0x408] sm:$0xff]
        %v460 = vld [vmem:[%s260 + $0x410] sm:$0xff]
        %v461 = vld [vmem:[%s260 + $0x418] sm:$0xff]
        %v462 = vld [vmem:[%s260 + $0x420] sm:$0xff]
        %v463 = vld [vmem:[%s260 + $0x428] sm:$0xff]
        %v464 = vld [vmem:[%s260 + $0x430] sm:$0xff]
        %v465 = vld [vmem:[%s260 + $0x438] sm:$0xff]
        %v466 = vld [vmem:[%s260 + $0x440] sm:$0xff]
        %v467 = vld [vmem:[%s260 + $0x448] sm:$0xff]
        %v468 = vld [vmem:[%s260 + $0x450] sm:$0xff]
        %v469 = vld [vmem:[%s260 + $0x458] sm:$0xff]
        %v470 = vld [vmem:[%s260 + $0x460] sm:$0xff]
        %v471 = vld [vmem:[%s260 + $0x468] sm:$0xff]
        %v472 = vld [vmem:[%s260 + $0x470] sm:$0xff]
        %v473 = vld [vmem:[%s260 + $0x478] sm:$0xff]
        %v474 = vld [vmem:[%s260 + $0x480] sm:$0xff]
        %v475 = vld [vmem:[%s260 + $0x488] sm:$0xff]
        %v476 = vld [vmem:[%s260 + $0x490] sm:$0xff]
        %v477 = vld [vmem:[%s260 + $0x498] sm:$0xff]
        %v478 = vld [vmem:[%s260 + $0x4a0] sm:$0xff]
        %v479 = vld [vmem:[%s260 + $0x4a8] sm:$0xff]
        %v480 = vld [vmem:[%s260 + $0x4b0] sm:$0xff]
        %v481 = vld [vmem:[%s260 + $0x4b8] sm:$0xff]
        %v482 = vld [vmem:[%s260 + $0x4c0] sm:$0xff]
        %v483 = vld [vmem:[%s260 + $0x4c8] sm:$0xff]
        %v484 = vld [vmem:[%s260 + $0x4d0] sm:$0xff]
        %v485 = vld [vmem:[%s260 + $0x4d8] sm:$0xff]
        %v486 = vld [vmem:[%s260 + $0x4e0] sm:$0xff]
        %v487 = vld [vmem:[%s260 + $0x4e8] sm:$0xff]
        %v488 = vld [vmem:[%s260 + $0x4f0] sm:$0xff]
        %v489 = vld [vmem:[%s260 + $0x4f8] sm:$0xff]
        %v490 = vld [vmem:[%s260 + $0x500] sm:$0xff]
        %v491 = vld [vmem:[%s260 + $0x508] sm:$0xff]
        %v492 = vld [vmem:[%s260 + $0x510] sm:$0xff]
        %v493 = vld [vmem:[%s260 + $0x518] sm:$0xff]
        %v494 = vld [vmem:[%s260 + $0x520] sm:$0xff]
        %v495 = vld [vmem:[%s260 + $0x528] sm:$0xff]
        %v496 = vld [vmem:[%s260 + $0x530] sm:$0xff]
        %v497 = vld [vmem:[%s260 + $0x538] sm:$0xff]
        %v498 = vld [vmem:[%s260 + $0x540] sm:$0xff]
        %v499 = vld [vmem:[%s260 + $0x548] sm:$0xff]
        %v500 = vld [vmem:[%s260 + $0x550] sm:$0xff]
        %v501 = vld [vmem:[%s260 + $0x558] sm:$0xff]
        %v502 = vld [vmem:[%s260 + $0x560] sm:$0xff]
        %v503 = vld [vmem:[%s260 + $0x568] sm:$0xff]
        %v504 = vld [vmem:[%s260 + $0x570] sm:$0xff]
        %v505 = vld [vmem:[%s260 + $0x578] sm:$0xff]
        %v506 = vld [vmem:[%s260 + $0x580] sm:$0xff]
        %v507 = vld [vmem:[%s260 + $0x588] sm:$0xff]
        %v508 = vld [vmem:[%s260 + $0x590] sm:$0xff]
        %v509 = vld [vmem:[%s260 + $0x598] sm:$0xff]
        %v510 = vld [vmem:[%s260 + $0x5a0] sm:$0xff]
        %v511 = vld [vmem:[%s260 + $0x5a8] sm:$0xff]
        %v512 = vld [vmem:[%s260 + $0x5b0] sm:$0xff]
        %v513 = vld [vmem:[%s260 + $0x5b8] sm:$0xff]
        %v514 = vld [vmem:[%s260 + $0x5c0] sm:$0xff]
        %v515 = vld [vmem:[%s260 + $0x5c8] sm:$0xff]
        %v516 = vld [vmem:[%s260 + $0x5d0] sm:$0xff]
        %v517 = vld [vmem:[%s260 + $0x5d8] sm:$0xff]
        %v518 = vld [vmem:[%s260 + $0x5e0] sm:$0xff]
        %v519 = vld [vmem:[%s260 + $0x5e8] sm:$0xff]
        %v520 = vld [vmem:[%s260 + $0x5f0] sm:$0xff]
        %v521 = vld [vmem:[%s260 + $0x5f8] sm:$0xff]
        %v522 = vld [vmem:[%s260 + $0x600] sm:$0xff]
        %v523 = vld [vmem:[%s260 + $0x608] sm:$0xff]
        %v524 = vld [vmem:[%s260 + $0x610] sm:$0xff]
        %v525 = vld [vmem:[%s260 + $0x618] sm:$0xff]
        %v526 = vld [vmem:[%s260 + $0x620] sm:$0xff]
        %v527 = vld [vmem:[%s260 + $0x628] sm:$0xff]
        %v528 = vld [vmem:[%s260 + $0x630] sm:$0xff]
        %v529 = vld [vmem:[%s260 + $0x638] sm:$0xff]
        %v530 = vld [vmem:[%s260 + $0x640] sm:$0xff]
        %v531 = vld [vmem:[%s260 + $0x648] sm:$0xff]
        %v532 = vld [vmem:[%s260 + $0x650] sm:$0xff]
        %v533 = vld [vmem:[%s260 + $0x658] sm:$0xff]
        %v534 = vld [vmem:[%s260 + $0x660] sm:$0xff]
        %v535 = vld [vmem:[%s260 + $0x668] sm:$0xff]
        %v536 = vld [vmem:[%s260 + $0x670] sm:$0xff]
        %v537 = vld [vmem:[%s260 + $0x678] sm:$0xff]
        %v538 = vld [vmem:[%s260 + $0x680] sm:$0xff]
        %v539 = vld [vmem:[%s260 + $0x688] sm:$0xff]
        %v540 = vld [vmem:[%s260 + $0x690] sm:$0xff]
        %v541 = vld [vmem:[%s260 + $0x698] sm:$0xff]
        %v542 = vld [vmem:[%s260 + $0x6a0] sm:$0xff]
        %v543 = vld [vmem:[%s260 + $0x6a8] sm:$0xff]
        %v544 = vld [vmem:[%s260 + $0x6b0] sm:$0xff]
        %v545 = vld [vmem:[%s260 + $0x6b8] sm:$0xff]
        %v546 = vld [vmem:[%s260 + $0x6c0] sm:$0xff]
        %v547 = vld [vmem:[%s260 + $0x6c8] sm:$0xff]
        %v548 = vld [vmem:[%s260 + $0x6d0] sm:$0xff]
        %v549 = vld [vmem:[%s260 + $0x6d8] sm:$0xff]
        %v550 = vld [vmem:[%s260 + $0x6e0] sm:$0xff]
        %v551 = vld [vmem:[%s260 + $0x6e8] sm:$0xff]
        %v552 = vld [vmem:[%s260 + $0x6f0] sm:$0xff]
        %v553 = vld [vmem:[%s260 + $0x6f8] sm:$0xff]
        %v554 = vld [vmem:[%s260 + $0x700] sm:$0xff]
        %v555 = vld [vmem:[%s260 + $0x708] sm:$0xff]
        %v556 = vld [vmem:[%s260 + $0x710] sm:$0xff]
        %v557 = vld [vmem:[%s260 + $0x718] sm:$0xff]
        %v558 = vld [vmem:[%s260 + $0x720] sm:$0xff]
        %v559 = vld [vmem:[%s260 + $0x728] sm:$0xff]
        %v560 = vld [vmem:[%s260 + $0x730] sm:$0xff]
        %v561 = vld [vmem:[%s260 + $0x738] sm:$0xff]
        %v562 = vld [vmem:[%s260 + $0x740] sm:$0xff]
        %v563 = vld [vmem:[%s260 + $0x748] sm:$0xff]
        %v564 = vld [vmem:[%s260 + $0x750] sm:$0xff]
        %v565 = vld [vmem:[%s260 + $0x758] sm:$0xff]
        %v566 = vld [vmem:[%s260 + $0x760] sm:$0xff]
        %v567 = vld [vmem:[%s260 + $0x768] sm:$0xff]
        %v568 = vld [vmem:[%s260 + $0x770] sm:$0xff]
        %v569 = vld [vmem:[%s260 + $0x778] sm:$0xff]
        %v570 = vld [vmem:[%s260 + $0x780] sm:$0xff]
        %v571 = vld [vmem:[%s260 + $0x788] sm:$0xff]
        %v572 = vld [vmem:[%s260 + $0x790] sm:$0xff]
        %v573 = vld [vmem:[%s260 + $0x798] sm:$0xff]
        %v574 = vld [vmem:[%s260 + $0x7a0] sm:$0xff]
        %v575 = vld [vmem:[%s260 + $0x7a8] sm:$0xff]
        %v576 = vld [vmem:[%s260 + $0x7b0] sm:$0xff]
        %v577 = vld [vmem:[%s260 + $0x7b8] sm:$0xff]
        %v578 = vld [vmem:[%s260 + $0x7c0] sm:$0xff]
        %v579 = vld [vmem:[%s260 + $0x7c8] sm:$0xff]
        %v580 = vld [vmem:[%s260 + $0x7d0] sm:$0xff]
        %v581 = vld [vmem:[%s260 + $0x7d8] sm:$0xff]
        %v582 = vld [vmem:[%s260 + $0x7e0] sm:$0xff]
        %v583 = vld [vmem:[%s260 + $0x7e8] sm:$0xff]
        %v584 = vld [vmem:[%s260 + $0x7f0] sm:$0xff]
        %v585 = vld [vmem:[%s260 + $0x7f8] sm:$0xff]
        %v586 = vld [vmem:[%s260 + $0x800] sm:$0xff]
        %v587 = vld [vmem:[%s260 + $0x808] sm:$0xff]
        %v588 = vld [vmem:[%s260 + $0x810] sm:$0xff]
        %v589 = vld [vmem:[%s260 + $0x818] sm:$0xff]
        %v590 = vld [vmem:[%s260 + $0x820] sm:$0xff]
        %v591 = vld [vmem:[%s260 + $0x828] sm:$0xff]
        %v592 = vld [vmem:[%s260 + $0x830] sm:$0xff]
        %v593 = vld [vmem:[%s260 + $0x838] sm:$0xff]
        %v594 = vld [vmem:[%s260 + $0x840] sm:$0xff]
        %v595 = vld [vmem:[%s260 + $0x848] sm:$0xff]
        %v596 = vld [vmem:[%s260 + $0x850] sm:$0xff]
        %v597 = vld [vmem:[%s260 + $0x858] sm:$0xff]
        %v598 = vld [vmem:[%s260 + $0x860] sm:$0xff]
        %v599 = vld [vmem:[%s260 + $0x868] sm:$0xff]
        %v600 = vld [vmem:[%s260 + $0x870] sm:$0xff]
        %v601 = vld [vmem:[%s260 + $0x878] sm:$0xff]
        %v602 = vld [vmem:[%s260 + $0x880] sm:$0xff]
        %v603 = vld [vmem:[%s260 + $0x888] sm:$0xff]
        %v604 = vld [vmem:[%s260 + $0x890] sm:$0xff]
        %v605 = vld [vmem:[%s260 + $0x898] sm:$0xff]
        %v606 = vld [vmem:[%s260 + $0x8a0] sm:$0xff]
        %v607 = vld [vmem:[%s260 + $0x8a8] sm:$0xff]
        %v608 = vld [vmem:[%s260 + $0x8b0] sm:$0xff]
        %v609 = vld [vmem:[%s260 + $0x8b8] sm:$0xff]
        %v610 = vld [vmem:[%s260 + $0x8c0] sm:$0xff]
        %v611 = vld [vmem:[%s260 + $0x8c8] sm:$0xff]
        %v612 = vld [vmem:[%s260 + $0x8d0] sm:$0xff]
        %v613 = vld [vmem:[%s260 + $0x8d8] sm:$0xff]
        %v614 = vld [vmem:[%s260 + $0x8e0] sm:$0xff]
        %v615 = vld [vmem:[%s260 + $0x8e8] sm:$0xff]
        %v616 = vld [vmem:[%s260 + $0x8f0] sm:$0xff]
        %v617 = vld [vmem:[%s260 + $0x8f8] sm:$0xff]
        %v618 = vld [vmem:[%s260 + $0x900] sm:$0xff]
        %v619 = vld [vmem:[%s260 + $0x908] sm:$0xff]
        %v620 = vld [vmem:[%s260 + $0x910] sm:$0xff]
        %v621 = vld [vmem:[%s260 + $0x918] sm:$0xff]
        %v622 = vld [vmem:[%s260 + $0x920] sm:$0xff]
        %v623 = vld [vmem:[%s260 + $0x928] sm:$0xff]
        %v624 = vld [vmem:[%s260 + $0x930] sm:$0xff]
        %v625 = vld [vmem:[%s260 + $0x938] sm:$0xff]
        %v626 = vld [vmem:[%s260 + $0x940] sm:$0xff]
        %v627 = vld [vmem:[%s260 + $0x948] sm:$0xff]
        %v628 = vld [vmem:[%s260 + $0x950] sm:$0xff]
        %v629 = vld [vmem:[%s260 + $0x958] sm:$0xff]
        %v630 = vld [vmem:[%s260 + $0x960] sm:$0xff]
        %v631 = vld [vmem:[%s260 + $0x968] sm:$0xff]
        %v632 = vld [vmem:[%s260 + $0x970] sm:$0xff]
        %v633 = vld [vmem:[%s260 + $0x978] sm:$0xff]
        %v634 = vld [vmem:[%s260 + $0x980] sm:$0xff]
        %v635 = vld [vmem:[%s260 + $0x988] sm:$0xff]
        %v636 = vld [vmem:[%s260 + $0x990] sm:$0xff]
        %v637 = vld [vmem:[%s260 + $0x998] sm:$0xff]
        %v638 = vld [vmem:[%s260 + $0x9a0] sm:$0xff]
        %v639 = vld [vmem:[%s260 + $0x9a8] sm:$0xff]
        %v640 = vld [vmem:[%s260 + $0x9b0] sm:$0xff]
        %v641 = vld [vmem:[%s260 + $0x9b8] sm:$0xff]
        %v642 = vld [vmem:[%s260 + $0x9c0] sm:$0xff]
        %v643 = vld [vmem:[%s260 + $0x9c8] sm:$0xff]
        %v644 = vld [vmem:[%s260 + $0x9d0] sm:$0xff]
        %v645 = vld [vmem:[%s260 + $0x9d8] sm:$0xff]
        %v646 = vld [vmem:[%s260 + $0x9e0] sm:$0xff]
        %v647 = vld [vmem:[%s260 + $0x9e8] sm:$0xff]
        %v648 = vld [vmem:[%s260 + $0x9f0] sm:$0xff]
        %v649 = vld [vmem:[%s260 + $0x9f8] sm:$0xff]
        %v650 = vld [vmem:[%s260 + $0xa00] sm:$0xff]
        %v651 = vld [vmem:[%s260 + $0xa08] sm:$0xff]
        %v652 = vld [vmem:[%s260 + $0xa10] sm:$0xff]
        %v653 = vld [vmem:[%s260 + $0xa18] sm:$0xff]
        %v654 = vld [vmem:[%s260 + $0xa20] sm:$0xff]
        %v655 = vld [vmem:[%s260 + $0xa28] sm:$0xff]
        %v656 = vld [vmem:[%s260 + $0xa30] sm:$0xff]
        %v657 = vld [vmem:[%s260 + $0xa38] sm:$0xff]
        %v658 = vld [vmem:[%s260 + $0xa40] sm:$0xff]
        %v659 = vld [vmem:[%s260 + $0xa48] sm:$0xff]
        %v660 = vld [vmem:[%s260 + $0xa50] sm:$0xff]
        %v661 = vld [vmem:[%s260 + $0xa58] sm:$0xff]
        %v662 = vld [vmem:[%s260 + $0xa60] sm:$0xff]
        %v663 = vld [vmem:[%s260 + $0xa68] sm:$0xff]
        %v664 = vld [vmem:[%s260 + $0xa70] sm:$0xff]
        %v665 = vld [vmem:[%s260 + $0xa78] sm:$0xff]
        %v666 = vld [vmem:[%s260 + $0xa80] sm:$0xff]
        %v667 = vld [vmem:[%s260 + $0xa88] sm:$0xff]
        %v668 = vld [vmem:[%s260 + $0xa90] sm:$0xff]
        %v669 = vld [vmem:[%s260 + $0xa98] sm:$0xff]
        %v670 = vld [vmem:[%s260 + $0xaa0] sm:$0xff]
        %v671 = vld [vmem:[%s260 + $0xaa8] sm:$0xff]
        %v672 = vld [vmem:[%s260 + $0xab0] sm:$0xff]
        %v673 = vld [vmem:[%s260 + $0xab8] sm:$0xff]
        %v674 = vld [vmem:[%s260 + $0xac0] sm:$0xff]
        %v675 = vld [vmem:[%s260 + $0xac8] sm:$0xff]
        %v676 = vld [vmem:[%s260 + $0xad0] sm:$0xff]
        %v677 = vld [vmem:[%s260 + $0xad8] sm:$0xff]
        %v678 = vld [vmem:[%s260 + $0xae0] sm:$0xff]
        %v679 = vld [vmem:[%s260 + $0xae8] sm:$0xff]
        %v680 = vld [vmem:[%s260 + $0xaf0] sm:$0xff]
        %v681 = vld [vmem:[%s260 + $0xaf8] sm:$0xff]
        %v682 = vld [vmem:[%s260 + $0xb00] sm:$0xff]
        %v683 = vld [vmem:[%s260 + $0xb08] sm:$0xff]
        %v684 = vld [vmem:[%s260 + $0xb10] sm:$0xff]
        %v685 = vld [vmem:[%s260 + $0xb18] sm:$0xff]
        %v686 = vld [vmem:[%s260 + $0xb20] sm:$0xff]
        %v687 = vld [vmem:[%s260 + $0xb28] sm:$0xff]
        %v688 = vld [vmem:[%s260 + $0xb30] sm:$0xff]
        %v689 = vld [vmem:[%s260 + $0xb38] sm:$0xff]
        %v690 = vld [vmem:[%s260 + $0xb40] sm:$0xff]
        %v691 = vld [vmem:[%s260 + $0xb48] sm:$0xff]
        %v692 = vld [vmem:[%s260 + $0xb50] sm:$0xff]
        %v693 = vld [vmem:[%s260 + $0xb58] sm:$0xff]
        %v694 = vld [vmem:[%s260 + $0xb60] sm:$0xff]
        %v695 = vld [vmem:[%s260 + $0xb68] sm:$0xff]
        %v696 = vld [vmem:[%s260 + $0xb70] sm:$0xff]
        %v697 = vld [vmem:[%s260 + $0xb78] sm:$0xff]
        %v698 = vld [vmem:[%s260 + $0xb80] sm:$0xff]
        %v699 = vld [vmem:[%s260 + $0xb88] sm:$0xff]
        %v700 = vld [vmem:[%s260 + $0xb90] sm:$0xff]
        %v701 = vld [vmem:[%s260 + $0xb98] sm:$0xff]
        %v702 = vld [vmem:[%s260 + $0xba0] sm:$0xff]
        %v703 = vld [vmem:[%s260 + $0xba8] sm:$0xff]
        %v704 = vld [vmem:[%s260 + $0xbb0] sm:$0xff]
        %v705 = vld [vmem:[%s260 + $0xbb8] sm:$0xff]
        %v706 = vld [vmem:[%s260 + $0xbc0] sm:$0xff]
        %v707 = vld [vmem:[%s260 + $0xbc8] sm:$0xff]
        %v708 = vld [vmem:[%s260 + $0xbd0] sm:$0xff]
        %v709 = vld [vmem:[%s260 + $0xbd8] sm:$0xff]
        %v710 = vld [vmem:[%s260 + $0xbe0] sm:$0xff]
        %v711 = vld [vmem:[%s260 + $0xbe8] sm:$0xff]
        %v712 = vld [vmem:[%s260 + $0xbf0] sm:$0xff]
        %v713 = vld [vmem:[%s260 + $0xbf8] sm:$0xff]
        %v714 = vld [vmem:[%s260 + $0xc00] sm:$0xff]
        %v715 = vld [vmem:[%s260 + $0xc08] sm:$0xff]
        %v716 = vld [vmem:[%s260 + $0xc10] sm:$0xff]
        %v717 = vld [vmem:[%s260 + $0xc18] sm:$0xff]
        %v718 = vld [vmem:[%s260 + $0xc20] sm:$0xff]
        %v719 = vld [vmem:[%s260 + $0xc28] sm:$0xff]
        %v720 = vld [vmem:[%s260 + $0xc30] sm:$0xff]
        %v721 = vld [vmem:[%s260 + $0xc38] sm:$0xff]
        %v722 = vld [vmem:[%s260 + $0xc40] sm:$0xff]
        %v723 = vld [vmem:[%s260 + $0xc48] sm:$0xff]
        %v724 = vld [vmem:[%s260 + $0xc50] sm:$0xff]
        %v725 = vld [vmem:[%s260 + $0xc58] sm:$0xff]
        %v726 = vld [vmem:[%s260 + $0xc60] sm:$0xff]
        %v727 = vld [vmem:[%s260 + $0xc68] sm:$0xff]
        %v728 = vld [vmem:[%s260 + $0xc70] sm:$0xff]
        %v729 = vld [vmem:[%s260 + $0xc78] sm:$0xff]
        %v730 = vld [vmem:[%s260 + $0xc80] sm:$0xff]
        %v731 = vld [vmem:[%s260 + $0xc88] sm:$0xff]
        %v732 = vld [vmem:[%s260 + $0xc90] sm:$0xff]
        %v733 = vld [vmem:[%s260 + $0xc98] sm:$0xff]
        %v734 = vld [vmem:[%s260 + $0xca0] sm:$0xff]
        %v735 = vld [vmem:[%s260 + $0xca8] sm:$0xff]
        %v736 = vld [vmem:[%s260 + $0xcb0] sm:$0xff]
        %v737 = vld [vmem:[%s260 + $0xcb8] sm:$0xff]
        %v738 = vld [vmem:[%s260 + $0xcc0] sm:$0xff]
        %v739 = vld [vmem:[%s260 + $0xcc8] sm:$0xff]
        %v740 = vld [vmem:[%s260 + $0xcd0] sm:$0xff]
        %v741 = vld [vmem:[%s260 + $0xcd8] sm:$0xff]
        %v742 = vld [vmem:[%s260 + $0xce0] sm:$0xff]
        %v743 = vld [vmem:[%s260 + $0xce8] sm:$0xff]
        %v744 = vld [vmem:[%s260 + $0xcf0] sm:$0xff]
        %v745 = vld [vmem:[%s260 + $0xcf8] sm:$0xff]
        %v746 = vld [vmem:[%s260 + $0xd00] sm:$0xff]
        %v747 = vld [vmem:[%s260 + $0xd08] sm:$0xff]
        %v748 = vld [vmem:[%s260 + $0xd10] sm:$0xff]
        %v749 = vld [vmem:[%s260 + $0xd18] sm:$0xff]
        %v750 = vld [vmem:[%s260 + $0xd20] sm:$0xff]
        %v751 = vld [vmem:[%s260 + $0xd28] sm:$0xff]
        %v752 = vld [vmem:[%s260 + $0xd30] sm:$0xff]
        %v753 = vld [vmem:[%s260 + $0xd38] sm:$0xff]
        %v754 = vld [vmem:[%s260 + $0xd40] sm:$0xff]
        %v755 = vld [vmem:[%s260 + $0xd48] sm:$0xff]
        %v756 = vld [vmem:[%s260 + $0xd50] sm:$0xff]
        %v757 = vld [vmem:[%s260 + $0xd58] sm:$0xff]
        %v758 = vld [vmem:[%s260 + $0xd60] sm:$0xff]
        %v759 = vld [vmem:[%s260 + $0xd68] sm:$0xff]
        %v760 = vld [vmem:[%s260 + $0xd70] sm:$0xff]
        %v761 = vld [vmem:[%s260 + $0xd78] sm:$0xff]
        %v762 = vld [vmem:[%s260 + $0xd80] sm:$0xff]
        %v763 = vld [vmem:[%s260 + $0xd88] sm:$0xff]
        %v764 = vld [vmem:[%s260 + $0xd90] sm:$0xff]
        %v765 = vld [vmem:[%s260 + $0xd98] sm:$0xff]
        %v766 = vld [vmem:[%s260 + $0xda0] sm:$0xff]
        %v767 = vld [vmem:[%s260 + $0xda8] sm:$0xff]
        %v768 = vld [vmem:[%s260 + $0xdb0] sm:$0xff]
        %v769 = vld [vmem:[%s260 + $0xdb8] sm:$0xff]
        %v770 = vld [vmem:[%s260 + $0xdc0] sm:$0xff]
        %v771 = vld [vmem:[%s260 + $0xdc8] sm:$0xff]
        %v772 = vld [vmem:[%s260 + $0xdd0] sm:$0xff]
        %v773 = vld [vmem:[%s260 + $0xdd8] sm:$0xff]
        %v774 = vld [vmem:[%s260 + $0xde0] sm:$0xff]
        %v775 = vld [vmem:[%s260 + $0xde8] sm:$0xff]
        %v776 = vld [vmem:[%s260 + $0xdf0] sm:$0xff]
        %v777 = vld [vmem:[%s260 + $0xdf8] sm:$0xff]
        %v778 = vld [vmem:[%s260 + $0xe00] sm:$0xff]
        %v779 = vld [vmem:[%s260 + $0xe08] sm:$0xff]
        %v780 = vld [vmem:[%s260 + $0xe10] sm:$0xff]
        %v781 = vld [vmem:[%s260 + $0xe18] sm:$0xff]
        %v782 = vld [vmem:[%s260 + $0xe20] sm:$0xff]
        %v783 = vld [vmem:[%s260 + $0xe28] sm:$0xff]
        %v784 = vld [vmem:[%s260 + $0xe30] sm:$0xff]
        %v785 = vld [vmem:[%s260 + $0xe38] sm:$0xff]
        %v786 = vld [vmem:[%s260 + $0xe40] sm:$0xff]
        %v787 = vld [vmem:[%s260 + $0xe48] sm:$0xff]
        %v788 = vld [vmem:[%s260 + $0xe50] sm:$0xff]
        %v789 = vld [vmem:[%s260 + $0xe58] sm:$0xff]
        %v790 = vld [vmem:[%s260 + $0xe60] sm:$0xff]
        %v791 = vld [vmem:[%s260 + $0xe68] sm:$0xff]
        %v792 = vld [vmem:[%s260 + $0xe70] sm:$0xff]
        %v793 = vld [vmem:[%s260 + $0xe78] sm:$0xff]
        %v794 = vld [vmem:[%s260 + $0xe80] sm:$0xff]
        %v795 = vld [vmem:[%s260 + $0xe88] sm:$0xff]
        %v796 = vld [vmem:[%s260 + $0xe90] sm:$0xff]
        %v797 = vld [vmem:[%s260 + $0xe98] sm:$0xff]
        %v798 = vld [vmem:[%s260 + $0xea0] sm:$0xff]
        %v799 = vld [vmem:[%s260 + $0xea8] sm:$0xff]
        %v800 = vld [vmem:[%s260 + $0xeb0] sm:$0xff]
        %v801 = vld [vmem:[%s260 + $0xeb8] sm:$0xff]
        %v802 = vld [vmem:[%s260 + $0xec0] sm:$0xff]
        %v803 = vld [vmem:[%s260 + $0xec8] sm:$0xff]
        %v804 = vld [vmem:[%s260 + $0xed0] sm:$0xff]
        %v805 = vld [vmem:[%s260 + $0xed8] sm:$0xff]
        %v806 = vld [vmem:[%s260 + $0xee0] sm:$0xff]
        %v807 = vld [vmem:[%s260 + $0xee8] sm:$0xff]
        %v808 = vld [vmem:[%s260 + $0xef0] sm:$0xff]
        %v809 = vld [vmem:[%s260 + $0xef8] sm:$0xff]
        %v810 = vld [vmem:[%s260 + $0xf00] sm:$0xff]
        %v811 = vld [vmem:[%s260 + $0xf08] sm:$0xff]
        %v812 = vld [vmem:[%s260 + $0xf10] sm:$0xff]
        %v813 = vld [vmem:[%s260 + $0xf18] sm:$0xff]
        %v814 = vld [vmem:[%s260 + $0xf20] sm:$0xff]
        %v815 = vld [vmem:[%s260 + $0xf28] sm:$0xff]
        %v816 = vld [vmem:[%s260 + $0xf30] sm:$0xff]
        %v817 = vld [vmem:[%s260 + $0xf38] sm:$0xff]
        %v818 = vld [vmem:[%s260 + $0xf40] sm:$0xff]
        %v819 = vld [vmem:[%s260 + $0xf48] sm:$0xff]
        %v820 = vld [vmem:[%s260 + $0xf50] sm:$0xff]
        %v821 = vld [vmem:[%s260 + $0xf58] sm:$0xff]
        %v822 = vld [vmem:[%s260 + $0xf60] sm:$0xff]
        %v823 = vld [vmem:[%s260 + $0xf68] sm:$0xff]
        %v824 = vld [vmem:[%s260 + $0xf70] sm:$0xff]
        %v825 = vld [vmem:[%s260 + $0xf78] sm:$0xff]
        %v826 = vld [vmem:[%s260 + $0xf80] sm:$0xff]
        %v827 = vld [vmem:[%s260 + $0xf88] sm:$0xff]
        %v828 = vld [vmem:[%s260 + $0xf90] sm:$0xff]
        %v829 = vld [vmem:[%s260 + $0xf98] sm:$0xff]
        %v830 = vld [vmem:[%s260 + $0xfa0] sm:$0xff]
        %v831 = vld [vmem:[%s260 + $0xfa8] sm:$0xff]
        %v832 = vld [vmem:[%s260 + $0xfb0] sm:$0xff]
        %v833 = vld [vmem:[%s260 + $0xfb8] sm:$0xff]
        %v834 = vld [vmem:[%s260 + $0xfc0] sm:$0xff]
        %v835 = vld [vmem:[%s260 + $0xfc8] sm:$0xff]
        %v836 = vld [vmem:[%s260 + $0xfd0] sm:$0xff]
        %v837 = vld [vmem:[%s260 + $0xfd8] sm:$0xff]
        %v838 = vld [vmem:[%s260 + $0xfe0] sm:$0xff]
        %v839 = vld [vmem:[%s260 + $0xfe8] sm:$0xff]
        %v840 = vld [vmem:[%s260 + $0xff0] sm:$0xff]
        %v841 = vld [vmem:[%s260 + $0xff8] sm:$0xff]
        %v842 = vld [vmem:[%s260 + $0x1000] sm:$0xff]
        %v843 = vld [vmem:[%s260 + $0x1008] sm:$0xff]
        %v844 = vld [vmem:[%s260 + $0x1010] sm:$0xff]
        %v845 = vld [vmem:[%s260 + $0x1018] sm:$0xff]
        %v846 = vld [vmem:[%s260 + $0x1020] sm:$0xff]
        %v847 = vld [vmem:[%s260 + $0x1028] sm:$0xff]
        %v848 = vld [vmem:[%s260 + $0x1030] sm:$0xff]
        %v849 = vld [vmem:[%s260 + $0x1038] sm:$0xff]
        %v850 = vld [vmem:[%s260 + $0x1040] sm:$0xff]
        %v851 = vld [vmem:[%s260 + $0x1048] sm:$0xff]
        %v852 = vld [vmem:[%s260 + $0x1050] sm:$0xff]
        %v853 = vld [vmem:[%s260 + $0x1058] sm:$0xff]
        %v854 = vld [vmem:[%s260 + $0x1060] sm:$0xff]
        %v855 = vld [vmem:[%s260 + $0x1068] sm:$0xff]
        %v856 = vld [vmem:[%s260 + $0x1070] sm:$0xff]
        %v857 = vld [vmem:[%s260 + $0x1078] sm:$0xff]
        %v858 = vld [vmem:[%s260 + $0x1080] sm:$0xff]
        %v859 = vld [vmem:[%s260 + $0x1088] sm:$0xff]
        %v860 = vld [vmem:[%s260 + $0x1090] sm:$0xff]
        %v861 = vld [vmem:[%s260 + $0x1098] sm:$0xff]
        %v862 = vld [vmem:[%s260 + $0x10a0] sm:$0xff]
        %v863 = vld [vmem:[%s260 + $0x10a8] sm:$0xff]
        %v864 = vld [vmem:[%s260 + $0x10b0] sm:$0xff]
        %v865 = vld [vmem:[%s260 + $0x10b8] sm:$0xff]
        %v866 = vld [vmem:[%s260 + $0x10c0] sm:$0xff]
        %v867 = vld [vmem:[%s260 + $0x10c8] sm:$0xff]
        %v868 = vld [vmem:[%s260 + $0x10d0] sm:$0xff]
        %v869 = vld [vmem:[%s260 + $0x10d8] sm:$0xff]
        %v870 = vld [vmem:[%s260 + $0x10e0] sm:$0xff]
        %v871 = vld [vmem:[%s260 + $0x10e8] sm:$0xff]
        %v872 = vld [vmem:[%s260 + $0x10f0] sm:$0xff]
        %v873 = vld [vmem:[%s260 + $0x10f8] sm:$0xff]
        %v874 = vld [vmem:[%s260 + $0x1100] sm:$0xff]
        %v875 = vld [vmem:[%s260 + $0x1108] sm:$0xff]
        %v876 = vld [vmem:[%s260 + $0x1110] sm:$0xff]
        %v877 = vld [vmem:[%s260 + $0x1118] sm:$0xff]
        %v878 = vld [vmem:[%s260 + $0x1120] sm:$0xff]
        %v879 = vld [vmem:[%s260 + $0x1128] sm:$0xff]
        %v880 = vld [vmem:[%s260 + $0x1130] sm:$0xff]
        %v881 = vld [vmem:[%s260 + $0x1138] sm:$0xff]
        %v882 = vld [vmem:[%s260 + $0x1140] sm:$0xff]
        %v883 = vld [vmem:[%s260 + $0x1148] sm:$0xff]
        %v884 = vld [vmem:[%s260 + $0x1150] sm:$0xff]
        %v885 = vld [vmem:[%s260 + $0x1158] sm:$0xff]
        %v886 = vld [vmem:[%s260 + $0x1160] sm:$0xff]
        %v887 = vld [vmem:[%s260 + $0x1168] sm:$0xff]
        %v888 = vld [vmem:[%s260 + $0x1170] sm:$0xff]
        %v889 = vld [vmem:[%s260 + $0x1178] sm:$0xff]
        %v890 = vld [vmem:[%s260 + $0x1180] sm:$0xff]
        %v891 = vld [vmem:[%s260 + $0x1188] sm:$0xff]
        %v892 = vld [vmem:[%s260 + $0x1190] sm:$0xff]
        %v893 = vld [vmem:[%s260 + $0x1198] sm:$0xff]
        %v894 = vld [vmem:[%s260 + $0x11a0] sm:$0xff]
        %v895 = vld [vmem:[%s260 + $0x11a8] sm:$0xff]
        %v896 = vld [vmem:[%s260 + $0x11b0] sm:$0xff]
        %v897 = vld [vmem:[%s260 + $0x11b8] sm:$0xff]
        %v898 = vld [vmem:[%s260 + $0x11c0] sm:$0xff]
        %v899 = vld [vmem:[%s260 + $0x11c8] sm:$0xff]
        %v900 = vld [vmem:[%s260 + $0x11d0] sm:$0xff]
        %v901 = vld [vmem:[%s260 + $0x11d8] sm:$0xff]
        %v902 = vld [vmem:[%s260 + $0x11e0] sm:$0xff]
        %v903 = vld [vmem:[%s260 + $0x11e8] sm:$0xff]
        %v904 = vld [vmem:[%s260 + $0x11f0] sm:$0xff]
        %v905 = vld [vmem:[%s260 + $0x11f8] sm:$0xff]
        %v906 = vld [vmem:[%s260 + $0x1200] sm:$0xff]
        %v907 = vld [vmem:[%s260 + $0x1208] sm:$0xff]
        %v908 = vld [vmem:[%s260 + $0x1210] sm:$0xff]
        %v909 = vld [vmem:[%s260 + $0x1218] sm:$0xff]
        %v910 = vld [vmem:[%s260 + $0x1220] sm:$0xff]
        %v911 = vld [vmem:[%s260 + $0x1228] sm:$0xff]
        %v912 = vld [vmem:[%s260 + $0x1230] sm:$0xff]
        %v913 = vld [vmem:[%s260 + $0x1238] sm:$0xff]
        %v914 = vld [vmem:[%s260 + $0x1240] sm:$0xff]
        %v915 = vld [vmem:[%s260 + $0x1248] sm:$0xff]
        %v916 = vld [vmem:[%s260 + $0x1250] sm:$0xff]
        %v917 = vld [vmem:[%s260 + $0x1258] sm:$0xff]
        %v918 = vld [vmem:[%s260 + $0x1260] sm:$0xff]
        %v919 = vld [vmem:[%s260 + $0x1268] sm:$0xff]
        %v920 = vld [vmem:[%s260 + $0x1270] sm:$0xff]
        %v921 = vld [vmem:[%s260 + $0x1278] sm:$0xff]
        %v922 = vld [vmem:[%s260 + $0x1280] sm:$0xff]
        %v923 = vld [vmem:[%s260 + $0x1288] sm:$0xff]
        %v924 = vld [vmem:[%s260 + $0x1290] sm:$0xff]
        %v925 = vld [vmem:[%s260 + $0x1298] sm:$0xff]
        %v926 = vld [vmem:[%s260 + $0x12a0] sm:$0xff]
        %v927 = vld [vmem:[%s260 + $0x12a8] sm:$0xff]
        %v928 = vld [vmem:[%s260 + $0x12b0] sm:$0xff]
        %v929 = vld [vmem:[%s260 + $0x12b8] sm:$0xff]
        %v930 = vld [vmem:[%s260 + $0x12c0] sm:$0xff]
        %v931 = vld [vmem:[%s260 + $0x12c8] sm:$0xff]
        %v932 = vld [vmem:[%s260 + $0x12d0] sm:$0xff]
        %v933 = vld [vmem:[%s260 + $0x12d8] sm:$0xff]
        %v934 = vld [vmem:[%s260 + $0x12e0] sm:$0xff]
        %v935 = vld [vmem:[%s260 + $0x12e8] sm:$0xff]
        %v936 = vld [vmem:[%s260 + $0x12f0] sm:$0xff]
        %v937 = vld [vmem:[%s260 + $0x12f8] sm:$0xff]
        %v938 = vld [vmem:[%s260 + $0x1300] sm:$0xff]
        %v939 = vld [vmem:[%s260 + $0x1308] sm:$0xff]
        %v940 = vld [vmem:[%s260 + $0x1310] sm:$0xff]
        %v941 = vld [vmem:[%s260 + $0x1318] sm:$0xff]
        %v942 = vld [vmem:[%s260 + $0x1320] sm:$0xff]
        %v943 = vld [vmem:[%s260 + $0x1328] sm:$0xff]
        %v944 = vld [vmem:[%s260 + $0x1330] sm:$0xff]
        %v945 = vld [vmem:[%s260 + $0x1338] sm:$0xff]
        %v946 = vld [vmem:[%s260 + $0x1340] sm:$0xff]
        %v947 = vld [vmem:[%s260 + $0x1348] sm:$0xff]
        %v948 = vld [vmem:[%s260 + $0x1350] sm:$0xff]
        %v949 = vld [vmem:[%s260 + $0x1358] sm:$0xff]
        %v950 = vld [vmem:[%s260 + $0x1360] sm:$0xff]
        %v951 = vld [vmem:[%s260 + $0x1368] sm:$0xff]
        %v952 = vld [vmem:[%s260 + $0x1370] sm:$0xff]
        %v953 = vld [vmem:[%s260 + $0x1378] sm:$0xff]
        %v954 = vld [vmem:[%s260 + $0x1380] sm:$0xff]
        %v955 = vld [vmem:[%s260 + $0x1388] sm:$0xff]
        %v956 = vld [vmem:[%s260 + $0x1390] sm:$0xff]
        %v957 = vld [vmem:[%s260 + $0x1398] sm:$0xff]
        %v958 = vld [vmem:[%s260 + $0x13a0] sm:$0xff]
        %v959 = vld [vmem:[%s260 + $0x13a8] sm:$0xff]
        %v960 = vld [vmem:[%s260 + $0x13b0] sm:$0xff]
        %v961 = vld [vmem:[%s260 + $0x13b8] sm:$0xff]
        %v962 = vld [vmem:[%s260 + $0x13c0] sm:$0xff]
        %v963 = vld [vmem:[%s260 + $0x13c8] sm:$0xff]
        %v964 = vld [vmem:[%s260 + $0x13d0] sm:$0xff]
        %v965 = vld [vmem:[%s260 + $0x13d8] sm:$0xff]
        %v966 = vld [vmem:[%s260 + $0x13e0] sm:$0xff]
        %v967 = vld [vmem:[%s260 + $0x13e8] sm:$0xff]
        %v968 = vld [vmem:[%s260 + $0x13f0] sm:$0xff]
        %v969 = vld [vmem:[%s260 + $0x13f8] sm:$0xff]
        %v970 = vld [vmem:[%s260 + $0x1400] sm:$0xff]
        %v971 = vld [vmem:[%s260 + $0x1408] sm:$0xff]
        %v972 = vld [vmem:[%s260 + $0x1410] sm:$0xff]
        %v973 = vld [vmem:[%s260 + $0x1418] sm:$0xff]
        %v974 = vld [vmem:[%s260 + $0x1420] sm:$0xff]
        %v975 = vld [vmem:[%s260 + $0x1428] sm:$0xff]
        %v976 = vld [vmem:[%s260 + $0x1430] sm:$0xff]
        %v977 = vld [vmem:[%s260 + $0x1438] sm:$0xff]
        %v978 = vld [vmem:[%s260 + $0x1440] sm:$0xff]
        %v979 = vld [vmem:[%s260 + $0x1448] sm:$0xff]
        %v980 = vld [vmem:[%s260 + $0x1450] sm:$0xff]
        %v981 = vld [vmem:[%s260 + $0x1458] sm:$0xff]
        %v982 = vld [vmem:[%s260 + $0x1460] sm:$0xff]
        %v983 = vld [vmem:[%s260 + $0x1468] sm:$0xff]
        %v984 = vld [vmem:[%s260 + $0x1470] sm:$0xff]
        %v985 = vld [vmem:[%s260 + $0x1478] sm:$0xff]
        %v986 = vld [vmem:[%s260 + $0x1480] sm:$0xff]
        %v987 = vld [vmem:[%s260 + $0x1488] sm:$0xff]
        %v988 = vld [vmem:[%s260 + $0x1490] sm:$0xff]
        %v989 = vld [vmem:[%s260 + $0x1498] sm:$0xff]
        %v990 = vld [vmem:[%s260 + $0x14a0] sm:$0xff]
        %v991 = vld [vmem:[%s260 + $0x14a8] sm:$0xff]
        %v992 = vld [vmem:[%s260 + $0x14b0] sm:$0xff]
        %v993 = vld [vmem:[%s260 + $0x14b8] sm:$0xff]
        %v994 = vld [vmem:[%s260 + $0x14c0] sm:$0xff]
        %v995 = vld [vmem:[%s260 + $0x14c8] sm:$0xff]
        %v996 = vld [vmem:[%s260 + $0x14d0] sm:$0xff]
        %v997 = vld [vmem:[%s260 + $0x14d8] sm:$0xff]
        %v998 = vld [vmem:[%s260 + $0x14e0] sm:$0xff]
        %v999 = vld [vmem:[%s260 + $0x14e8] sm:$0xff]
        %v1000 = vld [vmem:[%s260 + $0x14f0] sm:$0xff]
        %v1001 = vld [vmem:[%s260 + $0x14f8] sm:$0xff]
        %v1002 = vld [vmem:[%s260 + $0x1500] sm:$0xff]
        %v1003 = vld [vmem:[%s260 + $0x1508] sm:$0xff]
        %v1004 = vld [vmem:[%s260 + $0x1510] sm:$0xff]
        %v1005 = vld [vmem:[%s260 + $0x1518] sm:$0xff]
        %v1006 = vld [vmem:[%s260 + $0x1520] sm:$0xff]
        %v1007 = vld [vmem:[%s260 + $0x1528] sm:$0xff]
        %v1008 = vld [vmem:[%s260 + $0x1530] sm:$0xff]
        %v1009 = vld [vmem:[%s260 + $0x1538] sm:$0xff]
        %v1010 = vld [vmem:[%s260 + $0x1540] sm:$0xff]
        %v1011 = vld [vmem:[%s260 + $0x1548] sm:$0xff]
        %v1012 = vld [vmem:[%s260 + $0x1550] sm:$0xff]
        %v1013 = vld [vmem:[%s260 + $0x1558] sm:$0xff]
        %v1014 = vld [vmem:[%s260 + $0x1560] sm:$0xff]
        %v1015 = vld [vmem:[%s260 + $0x1568] sm:$0xff]
        %v1016 = vld [vmem:[%s260 + $0x1570] sm:$0xff]
        %v1017 = vld [vmem:[%s260 + $0x1578] sm:$0xff]
        %v1018 = vld [vmem:[%s260 + $0x1580] sm:$0xff]
        %v1019 = vld [vmem:[%s260 + $0x1588] sm:$0xff]
        %v1020 = vld [vmem:[%s260 + $0x1590] sm:$0xff]
        %v1021 = vld [vmem:[%s260 + $0x1598] sm:$0xff]
        %v1022 = vld [vmem:[%s260 + $0x15a0] sm:$0xff]
        %v1023 = vld [vmem:[%s260 + $0x15a8] sm:$0xff]
        %v1024 = vld [vmem:[%s260 + $0x15b0] sm:$0xff]
        %v1025 = vld [vmem:[%s260 + $0x15b8] sm:$0xff]
        %v1026 = vld [vmem:[%s260 + $0x15c0] sm:$0xff]
        %v1027 = vld [vmem:[%s260 + $0x15c8] sm:$0xff]
        %v1028 = vld [vmem:[%s260 + $0x15d0] sm:$0xff]
        %v1029 = vld [vmem:[%s260 + $0x15d8] sm:$0xff]
        %v1030 = vld [vmem:[%s260 + $0x15e0] sm:$0xff]
        %v1031 = vld [vmem:[%s260 + $0x15e8] sm:$0xff]
        %v1032 = vld [vmem:[%s260 + $0x15f0] sm:$0xff]
        %v1033 = vld [vmem:[%s260 + $0x15f8] sm:$0xff]
        %v1034 = vld [vmem:[%s260 + $0x1600] sm:$0xff]
        %v1035 = vld [vmem:[%s260 + $0x1608] sm:$0xff]
        %v1036 = vld [vmem:[%s260 + $0x1610] sm:$0xff]
        %v1037 = vld [vmem:[%s260 + $0x1618] sm:$0xff]
        %v1038 = vld [vmem:[%s260 + $0x1620] sm:$0xff]
        %v1039 = vld [vmem:[%s260 + $0x1628] sm:$0xff]
        %v1040 = vld [vmem:[%s260 + $0x1630] sm:$0xff]
        %v1041 = vld [vmem:[%s260 + $0x1638] sm:$0xff]
        %v1042 = vld [vmem:[%s260 + $0x1640] sm:$0xff]
        %v1043 = vld [vmem:[%s260 + $0x1648] sm:$0xff]
        %v1044 = vld [vmem:[%s260 + $0x1650] sm:$0xff]
        %v1045 = vld [vmem:[%s260 + $0x1658] sm:$0xff]
        %v1046 = vld [vmem:[%s260 + $0x1660] sm:$0xff]
        %v1047 = vld [vmem:[%s260 + $0x1668] sm:$0xff]
        %v1048 = vld [vmem:[%s260 + $0x1670] sm:$0xff]
        %v1049 = vld [vmem:[%s260 + $0x1678] sm:$0xff]
        %v1050 = vld [vmem:[%s260 + $0x1680] sm:$0xff]
        %v1051 = vld [vmem:[%s260 + $0x1688] sm:$0xff]
        %v1052 = vld [vmem:[%s260 + $0x1690] sm:$0xff]
        %v1053 = vld [vmem:[%s260 + $0x1698] sm:$0xff]
        %v1054 = vld [vmem:[%s260 + $0x16a0] sm:$0xff]
        %v1055 = vld [vmem:[%s260 + $0x16a8] sm:$0xff]
        %v1056 = vld [vmem:[%s260 + $0x16b0] sm:$0xff]
        %v1057 = vld [vmem:[%s260 + $0x16b8] sm:$0xff]
        %v1058 = vld [vmem:[%s260 + $0x16c0] sm:$0xff]
        %v1059 = vld [vmem:[%s260 + $0x16c8] sm:$0xff]
        %v1060 = vld [vmem:[%s260 + $0x16d0] sm:$0xff]
        %v1061 = vld [vmem:[%s260 + $0x16d8] sm:$0xff]
        %v1062 = vld [vmem:[%s260 + $0x16e0] sm:$0xff]
        %v1063 = vld [vmem:[%s260 + $0x16e8] sm:$0xff]
        %v1064 = vld [vmem:[%s260 + $0x16f0] sm:$0xff]
        %v1065 = vld [vmem:[%s260 + $0x16f8] sm:$0xff]
        %v1066 = vld [vmem:[%s260 + $0x1700] sm:$0xff]
        %v1067 = vld [vmem:[%s260 + $0x1708] sm:$0xff]
        %v1068 = vld [vmem:[%s260 + $0x1710] sm:$0xff]
        %v1069 = vld [vmem:[%s260 + $0x1718] sm:$0xff]
        %v1070 = vld [vmem:[%s260 + $0x1720] sm:$0xff]
        %v1071 = vld [vmem:[%s260 + $0x1728] sm:$0xff]
        %v1072 = vld [vmem:[%s260 + $0x1730] sm:$0xff]
        %v1073 = vld [vmem:[%s260 + $0x1738] sm:$0xff]
        %v1074 = vld [vmem:[%s260 + $0x1740] sm:$0xff]
        %v1075 = vld [vmem:[%s260 + $0x1748] sm:$0xff]
        %v1076 = vld [vmem:[%s260 + $0x1750] sm:$0xff]
        %v1077 = vld [vmem:[%s260 + $0x1758] sm:$0xff]
        %v1078 = vld [vmem:[%s260 + $0x1760] sm:$0xff]
        %v1079 = vld [vmem:[%s260 + $0x1768] sm:$0xff]
        %v1080 = vld [vmem:[%s260 + $0x1770] sm:$0xff]
        %v1081 = vld [vmem:[%s260 + $0x1778] sm:$0xff]
        %v1082 = vld [vmem:[%s260 + $0x1780] sm:$0xff]
        %v1083 = vld [vmem:[%s260 + $0x1788] sm:$0xff]
        %v1084 = vld [vmem:[%s260 + $0x1790] sm:$0xff]
        %v1085 = vld [vmem:[%s260 + $0x1798] sm:$0xff]
        %v1086 = vld [vmem:[%s260 + $0x17a0] sm:$0xff]
        %v1087 = vld [vmem:[%s260 + $0x17a8] sm:$0xff]
        %v1088 = vld [vmem:[%s260 + $0x17b0] sm:$0xff]
        %v1089 = vld [vmem:[%s260 + $0x17b8] sm:$0xff]
        %v1090 = vld [vmem:[%s260 + $0x17c0] sm:$0xff]
        %v1091 = vld [vmem:[%s260 + $0x17c8] sm:$0xff]
        %v1092 = vld [vmem:[%s260 + $0x17d0] sm:$0xff]
        %v1093 = vld [vmem:[%s260 + $0x17d8] sm:$0xff]
        %v1094 = vld [vmem:[%s260 + $0x17e0] sm:$0xff]
        %v1095 = vld [vmem:[%s260 + $0x17e8] sm:$0xff]
        %v1096 = vld [vmem:[%s260 + $0x17f0] sm:$0xff]
        %v1097 = vld [vmem:[%s260 + $0x17f8] sm:$0xff]
        %v1098 = vld [vmem:[%s260 + $0x1800] sm:$0xff]
        %v1099 = vld [vmem:[%s260 + $0x1808] sm:$0xff]
        %v1100 = vld [vmem:[%s260 + $0x1810] sm:$0xff]
        %v1101 = vld [vmem:[%s260 + $0x1818] sm:$0xff]
        %v1102 = vld [vmem:[%s260 + $0x1820] sm:$0xff]
        %v1103 = vld [vmem:[%s260 + $0x1828] sm:$0xff]
        %v1104 = vld [vmem:[%s260 + $0x1830] sm:$0xff]
        %v1105 = vld [vmem:[%s260 + $0x1838] sm:$0xff]
        %v1106 = vld [vmem:[%s260 + $0x1840] sm:$0xff]
        %v1107 = vld [vmem:[%s260 + $0x1848] sm:$0xff]
        %v1108 = vld [vmem:[%s260 + $0x1850] sm:$0xff]
        %v1109 = vld [vmem:[%s260 + $0x1858] sm:$0xff]
        %v1110 = vld [vmem:[%s260 + $0x1860] sm:$0xff]
        %v1111 = vld [vmem:[%s260 + $0x1868] sm:$0xff]
        %v1112 = vld [vmem:[%s260 + $0x1870] sm:$0xff]
        %v1113 = vld [vmem:[%s260 + $0x1878] sm:$0xff]
        %v1114 = vld [vmem:[%s260 + $0x1880] sm:$0xff]
        %v1115 = vld [vmem:[%s260 + $0x1888] sm:$0xff]
        %v1116 = vld [vmem:[%s260 + $0x1890] sm:$0xff]
        %v1117 = vld [vmem:[%s260 + $0x1898] sm:$0xff]
        %v1118 = vld [vmem:[%s260 + $0x18a0] sm:$0xff]
        %v1119 = vld [vmem:[%s260 + $0x18a8] sm:$0xff]
        %v1120 = vld [vmem:[%s260 + $0x18b0] sm:$0xff]
        %v1121 = vld [vmem:[%s260 + $0x18b8] sm:$0xff]
        %v1122 = vld [vmem:[%s260 + $0x18c0] sm:$0xff]
        %v1123 = vld [vmem:[%s260 + $0x18c8] sm:$0xff]
        %v1124 = vld [vmem:[%s260 + $0x18d0] sm:$0xff]
        %v1125 = vld [vmem:[%s260 + $0x18d8] sm:$0xff]
        %v1126 = vld [vmem:[%s260 + $0x18e0] sm:$0xff]
        %v1127 = vld [vmem:[%s260 + $0x18e8] sm:$0xff]
        %v1128 = vld [vmem:[%s260 + $0x18f0] sm:$0xff]
        %v1129 = vld [vmem:[%s260 + $0x18f8] sm:$0xff]
        %v1130 = vld [vmem:[%s260 + $0x1900] sm:$0xff]
        %v1131 = vld [vmem:[%s260 + $0x1908] sm:$0xff]
        %v1132 = vld [vmem:[%s260 + $0x1910] sm:$0xff]
        %v1133 = vld [vmem:[%s260 + $0x1918] sm:$0xff]
        %v1134 = vld [vmem:[%s260 + $0x1920] sm:$0xff]
        %v1135 = vld [vmem:[%s260 + $0x1928] sm:$0xff]
        %v1136 = vld [vmem:[%s260 + $0x1930] sm:$0xff]
        %v1137 = vld [vmem:[%s260 + $0x1938] sm:$0xff]
        %v1138 = vld [vmem:[%s260 + $0x1940] sm:$0xff]
        %v1139 = vld [vmem:[%s260 + $0x1948] sm:$0xff]
        %v1140 = vld [vmem:[%s260 + $0x1950] sm:$0xff]
        %v1141 = vld [vmem:[%s260 + $0x1958] sm:$0xff]
        %v1142 = vld [vmem:[%s260 + $0x1960] sm:$0xff]
        %v1143 = vld [vmem:[%s260 + $0x1968] sm:$0xff]
        %v1144 = vld [vmem:[%s260 + $0x1970] sm:$0xff]
        %v1145 = vld [vmem:[%s260 + $0x1978] sm:$0xff]
        %v1146 = vld [vmem:[%s260 + $0x1980] sm:$0xff]
        %v1147 = vld [vmem:[%s260 + $0x1988] sm:$0xff]
        %v1148 = vld [vmem:[%s260 + $0x1990] sm:$0xff]
        %v1149 = vld [vmem:[%s260 + $0x1998] sm:$0xff]
        %v1150 = vld [vmem:[%s260 + $0x19a0] sm:$0xff]
        %v1151 = vld [vmem:[%s260 + $0x19a8] sm:$0xff]
        %v1152 = vld [vmem:[%s260 + $0x19b0] sm:$0xff]
        %v1153 = vld [vmem:[%s260 + $0x19b8] sm:$0xff]
        %v1154 = vld [vmem:[%s260 + $0x19c0] sm:$0xff]
        %v1155 = vld [vmem:[%s260 + $0x19c8] sm:$0xff]
        %v1156 = vld [vmem:[%s260 + $0x19d0] sm:$0xff]
        %v1157 = vld [vmem:[%s260 + $0x19d8] sm:$0xff]
        %v1158 = vld [vmem:[%s260 + $0x19e0] sm:$0xff]
        %v1159 = vld [vmem:[%s260 + $0x19e8] sm:$0xff]
        %v1160 = vld [vmem:[%s260 + $0x19f0] sm:$0xff]
        %v1161 = vld [vmem:[%s260 + $0x19f8] sm:$0xff]
        %v1162 = vld [vmem:[%s260 + $0x1a00] sm:$0xff]
        %v1163 = vld [vmem:[%s260 + $0x1a08] sm:$0xff]
        %v1164 = vld [vmem:[%s260 + $0x1a10] sm:$0xff]
        %v1165 = vld [vmem:[%s260 + $0x1a18] sm:$0xff]
        %v1166 = vld [vmem:[%s260 + $0x1a20] sm:$0xff]
        %v1167 = vld [vmem:[%s260 + $0x1a28] sm:$0xff]
        %v1168 = vld [vmem:[%s260 + $0x1a30] sm:$0xff]
        %v1169 = vld [vmem:[%s260 + $0x1a38] sm:$0xff]
        %v1170 = vld [vmem:[%s260 + $0x1a40] sm:$0xff]
        %v1171 = vld [vmem:[%s260 + $0x1a48] sm:$0xff]
        %v1172 = vld [vmem:[%s260 + $0x1a50] sm:$0xff]
        %v1173 = vld [vmem:[%s260 + $0x1a58] sm:$0xff]
        %v1174 = vld [vmem:[%s260 + $0x1a60] sm:$0xff]
        %v1175 = vld [vmem:[%s260 + $0x1a68] sm:$0xff]
        %v1176 = vld [vmem:[%s260 + $0x1a70] sm:$0xff]
        %v1177 = vld [vmem:[%s260 + $0x1a78] sm:$0xff]
        %v1178 = vld [vmem:[%s260 + $0x1a80] sm:$0xff]
        %v1179 = vld [vmem:[%s260 + $0x1a88] sm:$0xff]
        %v1180 = vld [vmem:[%s260 + $0x1a90] sm:$0xff]
        %v1181 = vld [vmem:[%s260 + $0x1a98] sm:$0xff]
        %v1182 = vld [vmem:[%s260 + $0x1aa0] sm:$0xff]
        %v1183 = vld [vmem:[%s260 + $0x1aa8] sm:$0xff]
        %v1184 = vld [vmem:[%s260 + $0x1ab0] sm:$0xff]
        %v1185 = vld [vmem:[%s260 + $0x1ab8] sm:$0xff]
        %v1186 = vld [vmem:[%s260 + $0x1ac0] sm:$0xff]
        %v1187 = vld [vmem:[%s260 + $0x1ac8] sm:$0xff]
        %v1188 = vld [vmem:[%s260 + $0x1ad0] sm:$0xff]
        %v1189 = vld [vmem:[%s260 + $0x1ad8] sm:$0xff]
        %v1190 = vld [vmem:[%s260 + $0x1ae0] sm:$0xff]
        %v1191 = vld [vmem:[%s260 + $0x1ae8] sm:$0xff]
        %v1192 = vld [vmem:[%s260 + $0x1af0] sm:$0xff]
        %v1193 = vld [vmem:[%s260 + $0x1af8] sm:$0xff]
        %v1194 = vld [vmem:[%s260 + $0x1b00] sm:$0xff]
        %v1195 = vld [vmem:[%s260 + $0x1b08] sm:$0xff]
        %v1196 = vld [vmem:[%s260 + $0x1b10] sm:$0xff]
        %v1197 = vld [vmem:[%s260 + $0x1b18] sm:$0xff]
        %v1198 = vld [vmem:[%s260 + $0x1b20] sm:$0xff]
        %v1199 = vld [vmem:[%s260 + $0x1b28] sm:$0xff]
        %v1200 = vld [vmem:[%s260 + $0x1b30] sm:$0xff]
        %v1201 = vld [vmem:[%s260 + $0x1b38] sm:$0xff]
        %v1202 = vld [vmem:[%s260 + $0x1b40] sm:$0xff]
        %v1203 = vld [vmem:[%s260 + $0x1b48] sm:$0xff]
        %v1204 = vld [vmem:[%s260 + $0x1b50] sm:$0xff]
        %v1205 = vld [vmem:[%s260 + $0x1b58] sm:$0xff]
        %v1206 = vld [vmem:[%s260 + $0x1b60] sm:$0xff]
        %v1207 = vld [vmem:[%s260 + $0x1b68] sm:$0xff]
        %v1208 = vld [vmem:[%s260 + $0x1b70] sm:$0xff]
        %v1209 = vld [vmem:[%s260 + $0x1b78] sm:$0xff]
        %v1210 = vld [vmem:[%s260 + $0x1b80] sm:$0xff]
        %v1211 = vld [vmem:[%s260 + $0x1b88] sm:$0xff]
        %v1212 = vld [vmem:[%s260 + $0x1b90] sm:$0xff]
        %v1213 = vld [vmem:[%s260 + $0x1b98] sm:$0xff]
        %v1214 = vld [vmem:[%s260 + $0x1ba0] sm:$0xff]
        %v1215 = vld [vmem:[%s260 + $0x1ba8] sm:$0xff]
        %v1216 = vld [vmem:[%s260 + $0x1bb0] sm:$0xff]
        %v1217 = vld [vmem:[%s260 + $0x1bb8] sm:$0xff]
        %v1218 = vld [vmem:[%s260 + $0x1bc0] sm:$0xff]
        %v1219 = vld [vmem:[%s260 + $0x1bc8] sm:$0xff]
        %v1220 = vld [vmem:[%s260 + $0x1bd0] sm:$0xff]
        %v1221 = vld [vmem:[%s260 + $0x1bd8] sm:$0xff]
        %v1222 = vld [vmem:[%s260 + $0x1be0] sm:$0xff]
        %v1223 = vld [vmem:[%s260 + $0x1be8] sm:$0xff]
        %v1224 = vld [vmem:[%s260 + $0x1bf0] sm:$0xff]
        %v1225 = vld [vmem:[%s260 + $0x1bf8] sm:$0xff]
        %v1226 = vld [vmem:[%s260 + $0x1c00] sm:$0xff]
        %v1227 = vld [vmem:[%s260 + $0x1c08] sm:$0xff]
        %v1228 = vld [vmem:[%s260 + $0x1c10] sm:$0xff]
        %v1229 = vld [vmem:[%s260 + $0x1c18] sm:$0xff]
        %v1230 = vld [vmem:[%s260 + $0x1c20] sm:$0xff]
        %v1231 = vld [vmem:[%s260 + $0x1c28] sm:$0xff]
        %v1232 = vld [vmem:[%s260 + $0x1c30] sm:$0xff]
        %v1233 = vld [vmem:[%s260 + $0x1c38] sm:$0xff]
        %v1234 = vld [vmem:[%s260 + $0x1c40] sm:$0xff]
        %v1235 = vld [vmem:[%s260 + $0x1c48] sm:$0xff]
        %v1236 = vld [vmem:[%s260 + $0x1c50] sm:$0xff]
        %v1237 = vld [vmem:[%s260 + $0x1c58] sm:$0xff]
        %v1238 = vld [vmem:[%s260 + $0x1c60] sm:$0xff]
        %v1239 = vld [vmem:[%s260 + $0x1c68] sm:$0xff]
        %v1240 = vld [vmem:[%s260 + $0x1c70] sm:$0xff]
        %v1241 = vld [vmem:[%s260 + $0x1c78] sm:$0xff]
        %v1242 = vld [vmem:[%s260 + $0x1c80] sm:$0xff]
        %v1243 = vld [vmem:[%s260 + $0x1c88] sm:$0xff]
        %v1244 = vld [vmem:[%s260 + $0x1c90] sm:$0xff]
        %v1245 = vld [vmem:[%s260 + $0x1c98] sm:$0xff]
        %v1246 = vld [vmem:[%s260 + $0x1ca0] sm:$0xff]
        %v1247 = vld [vmem:[%s260 + $0x1ca8] sm:$0xff]
        %v1248 = vld [vmem:[%s260 + $0x1cb0] sm:$0xff]
        %v1249 = vld [vmem:[%s260 + $0x1cb8] sm:$0xff]
        %v1250 = vld [vmem:[%s260 + $0x1cc0] sm:$0xff]
        %v1251 = vld [vmem:[%s260 + $0x1cc8] sm:$0xff]
        %v1252 = vld [vmem:[%s260 + $0x1cd0] sm:$0xff]
        %v1253 = vld [vmem:[%s260 + $0x1cd8] sm:$0xff]
        %v1254 = vld [vmem:[%s260 + $0x1ce0] sm:$0xff]
        %v1255 = vld [vmem:[%s260 + $0x1ce8] sm:$0xff]
        %v1256 = vld [vmem:[%s260 + $0x1cf0] sm:$0xff]
        %v1257 = vld [vmem:[%s260 + $0x1cf8] sm:$0xff]
        %v1258 = vld [vmem:[%s260 + $0x1d00] sm:$0xff]
        %v1259 = vld [vmem:[%s260 + $0x1d08] sm:$0xff]
        %v1260 = vld [vmem:[%s260 + $0x1d10] sm:$0xff]
        %v1261 = vld [vmem:[%s260 + $0x1d18] sm:$0xff]
        %v1262 = vld [vmem:[%s260 + $0x1d20] sm:$0xff]
        %v1263 = vld [vmem:[%s260 + $0x1d28] sm:$0xff]
        %v1264 = vld [vmem:[%s260 + $0x1d30] sm:$0xff]
        %v1265 = vld [vmem:[%s260 + $0x1d38] sm:$0xff]
        %v1266 = vld [vmem:[%s260 + $0x1d40] sm:$0xff]
        %v1267 = vld [vmem:[%s260 + $0x1d48] sm:$0xff]
        %v1268 = vld [vmem:[%s260 + $0x1d50] sm:$0xff]
        %v1269 = vld [vmem:[%s260 + $0x1d58] sm:$0xff]
        %v1270 = vld [vmem:[%s260 + $0x1d60] sm:$0xff]
        %v1271 = vld [vmem:[%s260 + $0x1d68] sm:$0xff]
        %v1272 = vld [vmem:[%s260 + $0x1d70] sm:$0xff]
        %v1273 = vld [vmem:[%s260 + $0x1d78] sm:$0xff]
        %v1274 = vld [vmem:[%s260 + $0x1d80] sm:$0xff]
        %v1275 = vld [vmem:[%s260 + $0x1d88] sm:$0xff]
        %v1276 = vld [vmem:[%s260 + $0x1d90] sm:$0xff]
        %v1277 = vld [vmem:[%s260 + $0x1d98] sm:$0xff]
        %v1278 = vld [vmem:[%s260 + $0x1da0] sm:$0xff]
        %v1279 = vld [vmem:[%s260 + $0x1da8] sm:$0xff]
        %v1280 = vld [vmem:[%s260 + $0x1db0] sm:$0xff]
        %v1281 = vld [vmem:[%s260 + $0x1db8] sm:$0xff]
        %v1282 = vld [vmem:[%s260 + $0x1dc0] sm:$0xff]
        %v1283 = vld [vmem:[%s260 + $0x1dc8] sm:$0xff]
        %v1284 = vld [vmem:[%s260 + $0x1dd0] sm:$0xff]
        %v1285 = vld [vmem:[%s260 + $0x1dd8] sm:$0xff]
        %v1286 = vld [vmem:[%s260 + $0x1de0] sm:$0xff]
        %v1287 = vld [vmem:[%s260 + $0x1de8] sm:$0xff]
        %v1288 = vld [vmem:[%s260 + $0x1df0] sm:$0xff]
        %v1289 = vld [vmem:[%s260 + $0x1df8] sm:$0xff]
        %v1290 = vld [vmem:[%s260 + $0x1e00] sm:$0xff]
        %v1291 = vld [vmem:[%s260 + $0x1e08] sm:$0xff]
        %v1292 = vld [vmem:[%s260 + $0x1e10] sm:$0xff]
        %v1293 = vld [vmem:[%s260 + $0x1e18] sm:$0xff]
        %v1294 = vld [vmem:[%s260 + $0x1e20] sm:$0xff]
        %v1295 = vld [vmem:[%s260 + $0x1e28] sm:$0xff]
        %v1296 = vld [vmem:[%s260 + $0x1e30] sm:$0xff]
        %v1297 = vld [vmem:[%s260 + $0x1e38] sm:$0xff]
        %v1298 = vld [vmem:[%s260 + $0x1e40] sm:$0xff]
        %v1299 = vld [vmem:[%s260 + $0x1e48] sm:$0xff]
        %v1300 = vld [vmem:[%s260 + $0x1e50] sm:$0xff]
        %v1301 = vld [vmem:[%s260 + $0x1e58] sm:$0xff]
        %v1302 = vld [vmem:[%s260 + $0x1e60] sm:$0xff]
        %v1303 = vld [vmem:[%s260 + $0x1e68] sm:$0xff]
        %v1304 = vld [vmem:[%s260 + $0x1e70] sm:$0xff]
        %v1305 = vld [vmem:[%s260 + $0x1e78] sm:$0xff]
        %v1306 = vld [vmem:[%s260 + $0x1e80] sm:$0xff]
        %v1307 = vld [vmem:[%s260 + $0x1e88] sm:$0xff]
        %v1308 = vld [vmem:[%s260 + $0x1e90] sm:$0xff]
        %v1309 = vld [vmem:[%s260 + $0x1e98] sm:$0xff]
        %v1310 = vld [vmem:[%s260 + $0x1ea0] sm:$0xff]
        %v1311 = vld [vmem:[%s260 + $0x1ea8] sm:$0xff]
        %v1312 = vld [vmem:[%s260 + $0x1eb0] sm:$0xff]
        %v1313 = vld [vmem:[%s260 + $0x1eb8] sm:$0xff]
        %v1314 = vld [vmem:[%s260 + $0x1ec0] sm:$0xff]
        %v1315 = vld [vmem:[%s260 + $0x1ec8] sm:$0xff]
        %v1316 = vld [vmem:[%s260 + $0x1ed0] sm:$0xff]
        %v1317 = vld [vmem:[%s260 + $0x1ed8] sm:$0xff]
        %v1318 = vld [vmem:[%s260 + $0x1ee0] sm:$0xff]
        %v1319 = vld [vmem:[%s260 + $0x1ee8] sm:$0xff]
        %v1320 = vld [vmem:[%s260 + $0x1ef0] sm:$0xff]
        %v1321 = vld [vmem:[%s260 + $0x1ef8] sm:$0xff]
        %v1322 = vld [vmem:[%s260 + $0x1f00] sm:$0xff]
        %v1323 = vld [vmem:[%s260 + $0x1f08] sm:$0xff]
        %v1324 = vld [vmem:[%s260 + $0x1f10] sm:$0xff]
        %v1325 = vld [vmem:[%s260 + $0x1f18] sm:$0xff]
        %v1326 = vld [vmem:[%s260 + $0x1f20] sm:$0xff]
        %v1327 = vld [vmem:[%s260 + $0x1f28] sm:$0xff]
        %v1328 = vld [vmem:[%s260 + $0x1f30] sm:$0xff]
        %v1329 = vld [vmem:[%s260 + $0x1f38] sm:$0xff]
        %v1330 = vld [vmem:[%s260 + $0x1f40] sm:$0xff]
        %v1331 = vld [vmem:[%s260 + $0x1f48] sm:$0xff]
        %v1332 = vld [vmem:[%s260 + $0x1f50] sm:$0xff]
        %v1333 = vld [vmem:[%s260 + $0x1f58] sm:$0xff]
        %v1334 = vld [vmem:[%s260 + $0x1f60] sm:$0xff]
        %v1335 = vld [vmem:[%s260 + $0x1f68] sm:$0xff]
        %v1336 = vld [vmem:[%s260 + $0x1f70] sm:$0xff]
        %v1337 = vld [vmem:[%s260 + $0x1f78] sm:$0xff]
        %v1338 = vld [vmem:[%s260 + $0x1f80] sm:$0xff]
        %v1339 = vld [vmem:[%s260 + $0x1f88] sm:$0xff]
        %v1340 = vld [vmem:[%s260 + $0x1f90] sm:$0xff]
        %v1341 = vld [vmem:[%s260 + $0x1f98] sm:$0xff]
        %v1342 = vld [vmem:[%s260 + $0x1fa0] sm:$0xff]
        %v1343 = vld [vmem:[%s260 + $0x1fa8] sm:$0xff]
        %v1344 = vld [vmem:[%s260 + $0x1fb0] sm:$0xff]
        %v1345 = vld [vmem:[%s260 + $0x1fb8] sm:$0xff]
        %v1346 = vld [vmem:[%s260 + $0x1fc0] sm:$0xff]
        %v1347 = vld [vmem:[%s260 + $0x1fc8] sm:$0xff]
        %v1348 = vld [vmem:[%s260 + $0x1fd0] sm:$0xff]
        %v1349 = vld [vmem:[%s260 + $0x1fd8] sm:$0xff]
        %v1350 = vld [vmem:[%s260 + $0x1fe0] sm:$0xff]
        %v1351 = vld [vmem:[%s260 + $0x1fe8] sm:$0xff]
        %v1352 = vld [vmem:[%s260 + $0x1ff0] sm:$0xff]
        %v1353 = vld [vmem:[%s260 + $0x1ff8] sm:$0xff]
        %v1362 = vcombine.high %v322, %v322
        %v1364 = vunpack.c.l.s4 1966171168
        %v1365 = vunpack.c.0.s8 %v1364
        %v1366 = vlaneseq
        %v1367 = vshrl.u32 %v1366, 7
        %v1368 = vsub.s32 %v1365, %v1367
        %v1369 = vrot.slane %v322, %v1368
        %v1371 = vunpack.c.l.s4 1966171168
        %v1372 = vunpack.c.0.s8 %v1371
        %v1373 = vlaneseq
        %v1374 = vshrl.u32 %v1373, 7
        %v1375 = vsub.s32 %v1372, %v1374
        %v1376 = vrot.slane %v1362, %v1375
        %v1377 = vcombine.high %v1369, %v1369
        %v1378 = vcombine.high %v1376, %v1376
        %v1380 = vunpack.c.l.s4 1966171168
        %v1381 = vunpack.c.0.s8 %v1380
        %v1382 = vlaneseq
        %v1383 = vshrl.u32 %v1382, 7
        %v1384 = vsub.s32 %v1381, %v1383
        %v1385 = vrot.slane %v1369, %v1384
        %v1387 = vunpack.c.l.s4 1966171168
        %v1388 = vunpack.c.0.s8 %v1387
        %v1389 = vlaneseq
        %v1390 = vshrl.u32 %v1389, 7
        %v1391 = vsub.s32 %v1388, %v1390
        %v1392 = vrot.slane %v1376, %v1391
        %v1394 = vunpack.c.l.s4 1966171168
        %v1395 = vunpack.c.0.s8 %v1394
        %v1396 = vlaneseq
        %v1397 = vshrl.u32 %v1396, 7
        %v1398 = vsub.s32 %v1395, %v1397
        %v1399 = vrot.slane %v1377, %v1398
        %v1401 = vunpack.c.l.s4 1966171168
        %v1402 = vunpack.c.0.s8 %v1401
        %v1403 = vlaneseq
        %v1404 = vshrl.u32 %v1403, 7
        %v1405 = vsub.s32 %v1402, %v1404
        %v1406 = vrot.slane %v1378, %v1405
        %v1407 = vcombine.high %v1385, %v1385
        %v1408 = vcombine.high %v1392, %v1392
        %v1409 = vcombine.high %v1399, %v1399
        %v1410 = vcombine.high %v1406, %v1406
        %v1411 = vcombine.high %v323, %v323
        %v1413 = vunpack.c.l.s4 1966171168
        %v1414 = vunpack.c.0.s8 %v1413
        %v1415 = vlaneseq
        %v1416 = vshrl.u32 %v1415, 7
        %v1417 = vsub.s32 %v1414, %v1416
        %v1418 = vrot.slane %v323, %v1417
        %v1420 = vunpack.c.l.s4 1966171168
        %v1421 = vunpack.c.0.s8 %v1420
        %v1422 = vlaneseq
        %v1423 = vshrl.u32 %v1422, 7
        %v1424 = vsub.s32 %v1421, %v1423
        %v1425 = vrot.slane %v1411, %v1424
        %v1426 = vcombine.high %v1418, %v1418
        %v1427 = vcombine.high %v1425, %v1425
        %v1429 = vunpack.c.l.s4 1966171168
        %v1430 = vunpack.c.0.s8 %v1429
        %v1431 = vlaneseq
        %v1432 = vshrl.u32 %v1431, 7
        %v1433 = vsub.s32 %v1430, %v1432
        %v1434 = vrot.slane %v1418, %v1433
        %v1436 = vunpack.c.l.s4 1966171168
        %v1437 = vunpack.c.0.s8 %v1436
        %v1438 = vlaneseq
        %v1439 = vshrl.u32 %v1438, 7
        %v1440 = vsub.s32 %v1437, %v1439
        %v1441 = vrot.slane %v1425, %v1440
        %v1443 = vunpack.c.l.s4 1966171168
        %v1444 = vunpack.c.0.s8 %v1443
        %v1445 = vlaneseq
        %v1446 = vshrl.u32 %v1445, 7
        %v1447 = vsub.s32 %v1444, %v1446
        %v1448 = vrot.slane %v1426, %v1447
        %v1450 = vunpack.c.l.s4 1966171168
        %v1451 = vunpack.c.0.s8 %v1450
        %v1452 = vlaneseq
        %v1453 = vshrl.u32 %v1452, 7
        %v1454 = vsub.s32 %v1451, %v1453
        %v1455 = vrot.slane %v1427, %v1454
        %v1456 = vcombine.high %v1434, %v1434
        %v1457 = vcombine.high %v1441, %v1441
        %v1458 = vcombine.high %v1448, %v1448
        %v1459 = vcombine.high %v1455, %v1455
        %v1460 = vcombine.high %v324, %v324
        %v1462 = vunpack.c.l.s4 1966171168
        %v1463 = vunpack.c.0.s8 %v1462
        %v1464 = vlaneseq
        %v1465 = vshrl.u32 %v1464, 7
        %v1466 = vsub.s32 %v1463, %v1465
        %v1467 = vrot.slane %v324, %v1466
        %v1469 = vunpack.c.l.s4 1966171168
        %v1470 = vunpack.c.0.s8 %v1469
        %v1471 = vlaneseq
        %v1472 = vshrl.u32 %v1471, 7
        %v1473 = vsub.s32 %v1470, %v1472
        %v1474 = vrot.slane %v1460, %v1473
        %v1475 = vcombine.high %v1467, %v1467
        %v1476 = vcombine.high %v1474, %v1474
        %v1478 = vunpack.c.l.s4 1966171168
        %v1479 = vunpack.c.0.s8 %v1478
        %v1480 = vlaneseq
        %v1481 = vshrl.u32 %v1480, 7
        %v1482 = vsub.s32 %v1479, %v1481
        %v1483 = vrot.slane %v1467, %v1482
        %v1485 = vunpack.c.l.s4 1966171168
        %v1486 = vunpack.c.0.s8 %v1485
        %v1487 = vlaneseq
        %v1488 = vshrl.u32 %v1487, 7
        %v1489 = vsub.s32 %v1486, %v1488
        %v1490 = vrot.slane %v1474, %v1489
        %v1492 = vunpack.c.l.s4 1966171168
        %v1493 = vunpack.c.0.s8 %v1492
        %v1494 = vlaneseq
        %v1495 = vshrl.u32 %v1494, 7
        %v1496 = vsub.s32 %v1493, %v1495
        %v1497 = vrot.slane %v1475, %v1496
        %v1499 = vunpack.c.l.s4 1966171168
        %v1500 = vunpack.c.0.s8 %v1499
        %v1501 = vlaneseq
        %v1502 = vshrl.u32 %v1501, 7
        %v1503 = vsub.s32 %v1500, %v1502
        %v1504 = vrot.slane %v1476, %v1503
        %v1505 = vcombine.high %v1483, %v1483
        %v1506 = vcombine.high %v1490, %v1490
        %v1507 = vcombine.high %v1497, %v1497
        %v1508 = vcombine.high %v1504, %v1504
        %v1509 = vcombine.high %v325, %v325
        %v1511 = vunpack.c.l.s4 1966171168
        %v1512 = vunpack.c.0.s8 %v1511
        %v1513 = vlaneseq
        %v1514 = vshrl.u32 %v1513, 7
        %v1515 = vsub.s32 %v1512, %v1514
        %v1516 = vrot.slane %v325, %v1515
        %v1518 = vunpack.c.l.s4 1966171168
        %v1519 = vunpack.c.0.s8 %v1518
        %v1520 = vlaneseq
        %v1521 = vshrl.u32 %v1520, 7
        %v1522 = vsub.s32 %v1519, %v1521
        %v1523 = vrot.slane %v1509, %v1522
        %v1524 = vcombine.high %v1516, %v1516
        %v1525 = vcombine.high %v1523, %v1523
        %v1527 = vunpack.c.l.s4 1966171168
        %v1528 = vunpack.c.0.s8 %v1527
        %v1529 = vlaneseq
        %v1530 = vshrl.u32 %v1529, 7
        %v1531 = vsub.s32 %v1528, %v1530
        %v1532 = vrot.slane %v1516, %v1531
        %v1534 = vunpack.c.l.s4 1966171168
        %v1535 = vunpack.c.0.s8 %v1534
        %v1536 = vlaneseq
        %v1537 = vshrl.u32 %v1536, 7
        %v1538 = vsub.s32 %v1535, %v1537
        %v1539 = vrot.slane %v1523, %v1538
        %v1541 = vunpack.c.l.s4 1966171168
        %v1542 = vunpack.c.0.s8 %v1541
        %v1543 = vlaneseq
        %v1544 = vshrl.u32 %v1543, 7
        %v1545 = vsub.s32 %v1542, %v1544
        %v1546 = vrot.slane %v1524, %v1545
        %v1548 = vunpack.c.l.s4 1966171168
        %v1549 = vunpack.c.0.s8 %v1548
        %v1550 = vlaneseq
        %v1551 = vshrl.u32 %v1550, 7
        %v1552 = vsub.s32 %v1549, %v1551
        %v1553 = vrot.slane %v1525, %v1552
        %v1554 = vcombine.high %v1532, %v1532
        %v1555 = vcombine.high %v1539, %v1539
        %v1556 = vcombine.high %v1546, %v1546
        %v1557 = vcombine.high %v1553, %v1553
        %v1558 = vcombine.high %v326, %v326
        %v1560 = vunpack.c.l.s4 1966171168
        %v1561 = vunpack.c.0.s8 %v1560
        %v1562 = vlaneseq
        %v1563 = vshrl.u32 %v1562, 7
        %v1564 = vsub.s32 %v1561, %v1563
        %v1565 = vrot.slane %v326, %v1564
        %v1567 = vunpack.c.l.s4 1966171168
        %v1568 = vunpack.c.0.s8 %v1567
        %v1569 = vlaneseq
        %v1570 = vshrl.u32 %v1569, 7
        %v1571 = vsub.s32 %v1568, %v1570
        %v1572 = vrot.slane %v1558, %v1571
        %v1573 = vcombine.high %v1565, %v1565
        %v1574 = vcombine.high %v1572, %v1572
        %v1576 = vunpack.c.l.s4 1966171168
        %v1577 = vunpack.c.0.s8 %v1576
        %v1578 = vlaneseq
        %v1579 = vshrl.u32 %v1578, 7
        %v1580 = vsub.s32 %v1577, %v1579
        %v1581 = vrot.slane %v1565, %v1580
        %v1583 = vunpack.c.l.s4 1966171168
        %v1584 = vunpack.c.0.s8 %v1583
        %v1585 = vlaneseq
        %v1586 = vshrl.u32 %v1585, 7
        %v1587 = vsub.s32 %v1584, %v1586
        %v1588 = vrot.slane %v1572, %v1587
        %v1590 = vunpack.c.l.s4 1966171168
        %v1591 = vunpack.c.0.s8 %v1590
        %v1592 = vlaneseq
        %v1593 = vshrl.u32 %v1592, 7
        %v1594 = vsub.s32 %v1591, %v1593
        %v1595 = vrot.slane %v1573, %v1594
        %v1597 = vunpack.c.l.s4 1966171168
        %v1598 = vunpack.c.0.s8 %v1597
        %v1599 = vlaneseq
        %v1600 = vshrl.u32 %v1599, 7
        %v1601 = vsub.s32 %v1598, %v1600
        %v1602 = vrot.slane %v1574, %v1601
        %v1603 = vcombine.high %v1581, %v1581
        %v1604 = vcombine.high %v1588, %v1588
        %v1605 = vcombine.high %v1595, %v1595
        %v1606 = vcombine.high %v1602, %v1602
        %v1607 = vcombine.high %v327, %v327
        %v1609 = vunpack.c.l.s4 1966171168
        %v1610 = vunpack.c.0.s8 %v1609
        %v1611 = vlaneseq
        %v1612 = vshrl.u32 %v1611, 7
        %v1613 = vsub.s32 %v1610, %v1612
        %v1614 = vrot.slane %v327, %v1613
        %v1616 = vunpack.c.l.s4 1966171168
        %v1617 = vunpack.c.0.s8 %v1616
        %v1618 = vlaneseq
        %v1619 = vshrl.u32 %v1618, 7
        %v1620 = vsub.s32 %v1617, %v1619
        %v1621 = vrot.slane %v1607, %v1620
        %v1622 = vcombine.high %v1614, %v1614
        %v1623 = vcombine.high %v1621, %v1621
        %v1625 = vunpack.c.l.s4 1966171168
        %v1626 = vunpack.c.0.s8 %v1625
        %v1627 = vlaneseq
        %v1628 = vshrl.u32 %v1627, 7
        %v1629 = vsub.s32 %v1626, %v1628
        %v1630 = vrot.slane %v1614, %v1629
        %v1632 = vunpack.c.l.s4 1966171168
        %v1633 = vunpack.c.0.s8 %v1632
        %v1634 = vlaneseq
        %v1635 = vshrl.u32 %v1634, 7
        %v1636 = vsub.s32 %v1633, %v1635
        %v1637 = vrot.slane %v1621, %v1636
        %v1639 = vunpack.c.l.s4 1966171168
        %v1640 = vunpack.c.0.s8 %v1639
        %v1641 = vlaneseq
        %v1642 = vshrl.u32 %v1641, 7
        %v1643 = vsub.s32 %v1640, %v1642
        %v1644 = vrot.slane %v1622, %v1643
        %v1646 = vunpack.c.l.s4 1966171168
        %v1647 = vunpack.c.0.s8 %v1646
        %v1648 = vlaneseq
        %v1649 = vshrl.u32 %v1648, 7
        %v1650 = vsub.s32 %v1647, %v1649
        %v1651 = vrot.slane %v1623, %v1650
        %v1652 = vcombine.high %v1630, %v1630
        %v1653 = vcombine.high %v1637, %v1637
        %v1654 = vcombine.high %v1644, %v1644
        %v1655 = vcombine.high %v1651, %v1651
        %v1656 = vcombine.high %v328, %v328
        %v1658 = vunpack.c.l.s4 1966171168
        %v1659 = vunpack.c.0.s8 %v1658
        %v1660 = vlaneseq
        %v1661 = vshrl.u32 %v1660, 7
        %v1662 = vsub.s32 %v1659, %v1661
        %v1663 = vrot.slane %v328, %v1662
        %v1665 = vunpack.c.l.s4 1966171168
        %v1666 = vunpack.c.0.s8 %v1665
        %v1667 = vlaneseq
        %v1668 = vshrl.u32 %v1667, 7
        %v1669 = vsub.s32 %v1666, %v1668
        %v1670 = vrot.slane %v1656, %v1669
        %v1671 = vcombine.high %v1663, %v1663
        %v1672 = vcombine.high %v1670, %v1670
        %v1674 = vunpack.c.l.s4 1966171168
        %v1675 = vunpack.c.0.s8 %v1674
        %v1676 = vlaneseq
        %v1677 = vshrl.u32 %v1676, 7
        %v1678 = vsub.s32 %v1675, %v1677
        %v1679 = vrot.slane %v1663, %v1678
        %v1681 = vunpack.c.l.s4 1966171168
        %v1682 = vunpack.c.0.s8 %v1681
        %v1683 = vlaneseq
        %v1684 = vshrl.u32 %v1683, 7
        %v1685 = vsub.s32 %v1682, %v1684
        %v1686 = vrot.slane %v1670, %v1685
        %v1688 = vunpack.c.l.s4 1966171168
        %v1689 = vunpack.c.0.s8 %v1688
        %v1690 = vlaneseq
        %v1691 = vshrl.u32 %v1690, 7
        %v1692 = vsub.s32 %v1689, %v1691
        %v1693 = vrot.slane %v1671, %v1692
        %v1695 = vunpack.c.l.s4 1966171168
        %v1696 = vunpack.c.0.s8 %v1695
        %v1697 = vlaneseq
        %v1698 = vshrl.u32 %v1697, 7
        %v1699 = vsub.s32 %v1696, %v1698
        %v1700 = vrot.slane %v1672, %v1699
        %v1701 = vcombine.high %v1679, %v1679
        %v1702 = vcombine.high %v1686, %v1686
        %v1703 = vcombine.high %v1693, %v1693
        %v1704 = vcombine.high %v1700, %v1700
        %v1705 = vcombine.high %v329, %v329
        %v1707 = vunpack.c.l.s4 1966171168
        %v1708 = vunpack.c.0.s8 %v1707
        %v1709 = vlaneseq
        %v1710 = vshrl.u32 %v1709, 7
        %v1711 = vsub.s32 %v1708, %v1710
        %v1712 = vrot.slane %v329, %v1711
        %v1714 = vunpack.c.l.s4 1966171168
        %v1715 = vunpack.c.0.s8 %v1714
        %v1716 = vlaneseq
        %v1717 = vshrl.u32 %v1716, 7
        %v1718 = vsub.s32 %v1715, %v1717
        %v1719 = vrot.slane %v1705, %v1718
        %v1720 = vcombine.high %v1712, %v1712
        %v1721 = vcombine.high %v1719, %v1719
        %v1723 = vunpack.c.l.s4 1966171168
        %v1724 = vunpack.c.0.s8 %v1723
        %v1725 = vlaneseq
        %v1726 = vshrl.u32 %v1725, 7
        %v1727 = vsub.s32 %v1724, %v1726
        %v1728 = vrot.slane %v1712, %v1727
        %v1730 = vunpack.c.l.s4 1966171168
        %v1731 = vunpack.c.0.s8 %v1730
        %v1732 = vlaneseq
        %v1733 = vshrl.u32 %v1732, 7
        %v1734 = vsub.s32 %v1731, %v1733
        %v1735 = vrot.slane %v1719, %v1734
        %v1737 = vunpack.c.l.s4 1966171168
        %v1738 = vunpack.c.0.s8 %v1737
        %v1739 = vlaneseq
        %v1740 = vshrl.u32 %v1739, 7
        %v1741 = vsub.s32 %v1738, %v1740
        %v1742 = vrot.slane %v1720, %v1741
        %v1744 = vunpack.c.l.s4 1966171168
        %v1745 = vunpack.c.0.s8 %v1744
        %v1746 = vlaneseq
        %v1747 = vshrl.u32 %v1746, 7
        %v1748 = vsub.s32 %v1745, %v1747
        %v1749 = vrot.slane %v1721, %v1748
        %v1750 = vcombine.high %v1728, %v1728
        %v1751 = vcombine.high %v1735, %v1735
        %v1752 = vcombine.high %v1742, %v1742
        %v1753 = vcombine.high %v1749, %v1749
        %v2842 = vunpack.c.l.b16 %v330
        %v2843 = vunpack.c.h.b16 %v330
        %v2844 = vunpack.c.l.b16 %v331
        %v2845 = vunpack.c.h.b16 %v331
        %v2846 = vunpack.c.l.b16 %v332
        %v2847 = vunpack.c.h.b16 %v332
        %v2848 = vunpack.c.l.b16 %v333
        %v2849 = vunpack.c.h.b16 %v333
        %v2850 = vunpack.c.l.b16 %v334
        %v2851 = vunpack.c.h.b16 %v334
        %v2852 = vunpack.c.l.b16 %v335
        %v2853 = vunpack.c.h.b16 %v335
        %v2854 = vunpack.c.l.b16 %v336
        %v2855 = vunpack.c.h.b16 %v336
        %v2856 = vunpack.c.l.b16 %v337
        %v2857 = vunpack.c.h.b16 %v337
        %v2858 = vunpack.c.l.b16 %v338
        %v2859 = vunpack.c.h.b16 %v338
        %v2860 = vunpack.c.l.b16 %v339
        %v2861 = vunpack.c.h.b16 %v339
        %v2862 = vunpack.c.l.b16 %v340
        %v2863 = vunpack.c.h.b16 %v340
        %v2864 = vunpack.c.l.b16 %v341
        %v2865 = vunpack.c.h.b16 %v341
        %v2866 = vunpack.c.l.b16 %v342
        %v2867 = vunpack.c.h.b16 %v342
        %v2868 = vunpack.c.l.b16 %v343
        %v2869 = vunpack.c.h.b16 %v343
        %v2870 = vunpack.c.l.b16 %v344
        %v2871 = vunpack.c.h.b16 %v344
        %v2872 = vunpack.c.l.b16 %v345
        %v2873 = vunpack.c.h.b16 %v345
        %v2874 = vunpack.c.l.b16 %v346
        %v2875 = vunpack.c.h.b16 %v346
        %v2876 = vunpack.c.l.b16 %v347
        %v2877 = vunpack.c.h.b16 %v347
        %v2878 = vunpack.c.l.b16 %v348
        %v2879 = vunpack.c.h.b16 %v348
        %v2880 = vunpack.c.l.b16 %v349
        %v2881 = vunpack.c.h.b16 %v349
        %v2882 = vunpack.c.l.b16 %v350
        %v2883 = vunpack.c.h.b16 %v350
        %v2884 = vunpack.c.l.b16 %v351
        %v2885 = vunpack.c.h.b16 %v351
        %v2886 = vunpack.c.l.b16 %v352
        %v2887 = vunpack.c.h.b16 %v352
        %v2888 = vunpack.c.l.b16 %v353
        %v2889 = vunpack.c.h.b16 %v353
        %v2890 = vunpack.c.l.b16 %v354
        %v2891 = vunpack.c.h.b16 %v354
        %v2892 = vunpack.c.l.b16 %v355
        %v2893 = vunpack.c.h.b16 %v355
        %v2894 = vunpack.c.l.b16 %v356
        %v2895 = vunpack.c.h.b16 %v356
        %v2896 = vunpack.c.l.b16 %v357
        %v2897 = vunpack.c.h.b16 %v357
        %v2898 = vunpack.c.l.b16 %v358
        %v2899 = vunpack.c.h.b16 %v358
        %v2900 = vunpack.c.l.b16 %v359
        %v2901 = vunpack.c.h.b16 %v359
        %v2902 = vunpack.c.l.b16 %v360
        %v2903 = vunpack.c.h.b16 %v360
        %v2904 = vunpack.c.l.b16 %v361
        %v2905 = vunpack.c.h.b16 %v361
        %v2906 = vunpack.c.l.b16 %v362
        %v2907 = vunpack.c.h.b16 %v362
        %v2908 = vunpack.c.l.b16 %v363
        %v2909 = vunpack.c.h.b16 %v363
        %v2910 = vunpack.c.l.b16 %v364
        %v2911 = vunpack.c.h.b16 %v364
        %v2912 = vunpack.c.l.b16 %v365
        %v2913 = vunpack.c.h.b16 %v365
        %v2914 = vunpack.c.l.b16 %v366
        %v2915 = vunpack.c.h.b16 %v366
        %v2916 = vunpack.c.l.b16 %v367
        %v2917 = vunpack.c.h.b16 %v367
        %v2918 = vunpack.c.l.b16 %v368
        %v2919 = vunpack.c.h.b16 %v368
        %v2920 = vunpack.c.l.b16 %v369
        %v2921 = vunpack.c.h.b16 %v369
        %v2922 = vunpack.c.l.b16 %v370
        %v2923 = vunpack.c.h.b16 %v370
        %v2924 = vunpack.c.l.b16 %v371
        %v2925 = vunpack.c.h.b16 %v371
        %v2926 = vunpack.c.l.b16 %v372
        %v2927 = vunpack.c.h.b16 %v372
        %v2928 = vunpack.c.l.b16 %v373
        %v2929 = vunpack.c.h.b16 %v373
        %v2930 = vunpack.c.l.b16 %v374
        %v2931 = vunpack.c.h.b16 %v374
        %v2932 = vunpack.c.l.b16 %v375
        %v2933 = vunpack.c.h.b16 %v375
        %v2934 = vunpack.c.l.b16 %v376
        %v2935 = vunpack.c.h.b16 %v376
        %v2936 = vunpack.c.l.b16 %v377
        %v2937 = vunpack.c.h.b16 %v377
        %v2938 = vunpack.c.l.b16 %v378
        %v2939 = vunpack.c.h.b16 %v378
        %v2940 = vunpack.c.l.b16 %v379
        %v2941 = vunpack.c.h.b16 %v379
        %v2942 = vunpack.c.l.b16 %v380
        %v2943 = vunpack.c.h.b16 %v380
        %v2944 = vunpack.c.l.b16 %v381
        %v2945 = vunpack.c.h.b16 %v381
        %v2946 = vunpack.c.l.b16 %v382
        %v2947 = vunpack.c.h.b16 %v382
        %v2948 = vunpack.c.l.b16 %v383
        %v2949 = vunpack.c.h.b16 %v383
        %v2950 = vunpack.c.l.b16 %v384
        %v2951 = vunpack.c.h.b16 %v384
        %v2952 = vunpack.c.l.b16 %v385
        %v2953 = vunpack.c.h.b16 %v385
        %v2954 = vunpack.c.l.b16 %v386
        %v2955 = vunpack.c.h.b16 %v386
        %v2956 = vunpack.c.l.b16 %v387
        %v2957 = vunpack.c.h.b16 %v387
        %v2958 = vunpack.c.l.b16 %v388
        %v2959 = vunpack.c.h.b16 %v388
        %v2960 = vunpack.c.l.b16 %v389
        %v2961 = vunpack.c.h.b16 %v389
        %v2962 = vunpack.c.l.b16 %v390
        %v2963 = vunpack.c.h.b16 %v390
        %v2964 = vunpack.c.l.b16 %v391
        %v2965 = vunpack.c.h.b16 %v391
        %v2966 = vunpack.c.l.b16 %v392
        %v2967 = vunpack.c.h.b16 %v392
        %v2968 = vunpack.c.l.b16 %v393
        %v2969 = vunpack.c.h.b16 %v393
        %v2970 = vunpack.c.l.b16 %v394
        %v2971 = vunpack.c.h.b16 %v394
        %v2972 = vunpack.c.l.b16 %v395
        %v2973 = vunpack.c.h.b16 %v395
        %v2974 = vunpack.c.l.b16 %v396
        %v2975 = vunpack.c.h.b16 %v396
        %v2976 = vunpack.c.l.b16 %v397
        %v2977 = vunpack.c.h.b16 %v397
        %v2978 = vunpack.c.l.b16 %v398
        %v2979 = vunpack.c.h.b16 %v398
        %v2980 = vunpack.c.l.b16 %v399
        %v2981 = vunpack.c.h.b16 %v399
        %v2982 = vunpack.c.l.b16 %v400
        %v2983 = vunpack.c.h.b16 %v400
        %v2984 = vunpack.c.l.b16 %v401
        %v2985 = vunpack.c.h.b16 %v401
        %v2986 = vunpack.c.l.b16 %v402
        %v2987 = vunpack.c.h.b16 %v402
        %v2988 = vunpack.c.l.b16 %v403
        %v2989 = vunpack.c.h.b16 %v403
        %v2990 = vunpack.c.l.b16 %v404
        %v2991 = vunpack.c.h.b16 %v404
        %v2992 = vunpack.c.l.b16 %v405
        %v2993 = vunpack.c.h.b16 %v405
        %v2994 = vunpack.c.l.b16 %v406
        %v2995 = vunpack.c.h.b16 %v406
        %v2996 = vunpack.c.l.b16 %v407
        %v2997 = vunpack.c.h.b16 %v407
        %v2998 = vunpack.c.l.b16 %v408
        %v2999 = vunpack.c.h.b16 %v408
        %v3000 = vunpack.c.l.b16 %v409
        %v3001 = vunpack.c.h.b16 %v409
        %v3002 = vunpack.c.l.b16 %v410
        %v3003 = vunpack.c.h.b16 %v410
        %v3004 = vunpack.c.l.b16 %v411
        %v3005 = vunpack.c.h.b16 %v411
        %v3006 = vunpack.c.l.b16 %v412
        %v3007 = vunpack.c.h.b16 %v412
        %v3008 = vunpack.c.l.b16 %v413
        %v3009 = vunpack.c.h.b16 %v413
        %v3010 = vunpack.c.l.b16 %v414
        %v3011 = vunpack.c.h.b16 %v414
        %v3012 = vunpack.c.l.b16 %v415
        %v3013 = vunpack.c.h.b16 %v415
        %v3014 = vunpack.c.l.b16 %v416
        %v3015 = vunpack.c.h.b16 %v416
        %v3016 = vunpack.c.l.b16 %v417
        %v3017 = vunpack.c.h.b16 %v417
        %v3018 = vunpack.c.l.b16 %v418
        %v3019 = vunpack.c.h.b16 %v418
        %v3020 = vunpack.c.l.b16 %v419
        %v3021 = vunpack.c.h.b16 %v419
        %v3022 = vunpack.c.l.b16 %v420
        %v3023 = vunpack.c.h.b16 %v420
        %v3024 = vunpack.c.l.b16 %v421
        %v3025 = vunpack.c.h.b16 %v421
        %v3026 = vunpack.c.l.b16 %v422
        %v3027 = vunpack.c.h.b16 %v422
        %v3028 = vunpack.c.l.b16 %v423
        %v3029 = vunpack.c.h.b16 %v423
        %v3030 = vunpack.c.l.b16 %v424
        %v3031 = vunpack.c.h.b16 %v424
        %v3032 = vunpack.c.l.b16 %v425
        %v3033 = vunpack.c.h.b16 %v425
        %v3034 = vunpack.c.l.b16 %v426
        %v3035 = vunpack.c.h.b16 %v426
        %v3036 = vunpack.c.l.b16 %v427
        %v3037 = vunpack.c.h.b16 %v427
        %v3038 = vunpack.c.l.b16 %v428
        %v3039 = vunpack.c.h.b16 %v428
        %v3040 = vunpack.c.l.b16 %v429
        %v3041 = vunpack.c.h.b16 %v429
        %v3042 = vunpack.c.l.b16 %v430
        %v3043 = vunpack.c.h.b16 %v430
        %v3044 = vunpack.c.l.b16 %v431
        %v3045 = vunpack.c.h.b16 %v431
        %v3046 = vunpack.c.l.b16 %v432
        %v3047 = vunpack.c.h.b16 %v432
        %v3048 = vunpack.c.l.b16 %v433
        %v3049 = vunpack.c.h.b16 %v433
        %v3050 = vunpack.c.l.b16 %v434
        %v3051 = vunpack.c.h.b16 %v434
        %v3052 = vunpack.c.l.b16 %v435
        %v3053 = vunpack.c.h.b16 %v435
        %v3054 = vunpack.c.l.b16 %v436
        %v3055 = vunpack.c.h.b16 %v436
        %v3056 = vunpack.c.l.b16 %v437
        %v3057 = vunpack.c.h.b16 %v437
        %v3058 = vunpack.c.l.b16 %v438
        %v3059 = vunpack.c.h.b16 %v438
        %v3060 = vunpack.c.l.b16 %v439
        %v3061 = vunpack.c.h.b16 %v439
        %v3062 = vunpack.c.l.b16 %v440
        %v3063 = vunpack.c.h.b16 %v440
        %v3064 = vunpack.c.l.b16 %v441
        %v3065 = vunpack.c.h.b16 %v441
        %v3066 = vunpack.c.l.b16 %v442
        %v3067 = vunpack.c.h.b16 %v442
        %v3068 = vunpack.c.l.b16 %v443
        %v3069 = vunpack.c.h.b16 %v443
        %v3070 = vunpack.c.l.b16 %v444
        %v3071 = vunpack.c.h.b16 %v444
        %v3072 = vunpack.c.l.b16 %v445
        %v3073 = vunpack.c.h.b16 %v445
        %v3074 = vunpack.c.l.b16 %v446
        %v3075 = vunpack.c.h.b16 %v446
        %v3076 = vunpack.c.l.b16 %v447
        %v3077 = vunpack.c.h.b16 %v447
        %v3078 = vunpack.c.l.b16 %v448
        %v3079 = vunpack.c.h.b16 %v448
        %v3080 = vunpack.c.l.b16 %v449
        %v3081 = vunpack.c.h.b16 %v449
        %v3082 = vunpack.c.l.b16 %v450
        %v3083 = vunpack.c.h.b16 %v450
        %v3084 = vunpack.c.l.b16 %v451
        %v3085 = vunpack.c.h.b16 %v451
        %v3086 = vunpack.c.l.b16 %v452
        %v3087 = vunpack.c.h.b16 %v452
        %v3088 = vunpack.c.l.b16 %v453
        %v3089 = vunpack.c.h.b16 %v453
        %v3090 = vunpack.c.l.b16 %v454
        %v3091 = vunpack.c.h.b16 %v454
        %v3092 = vunpack.c.l.b16 %v455
        %v3093 = vunpack.c.h.b16 %v455
        %v3094 = vunpack.c.l.b16 %v456
        %v3095 = vunpack.c.h.b16 %v456
        %v3096 = vunpack.c.l.b16 %v457
        %v3097 = vunpack.c.h.b16 %v457
        %v3098 = vunpack.c.l.b16 %v458
        %v3099 = vunpack.c.h.b16 %v458
        %v3100 = vunpack.c.l.b16 %v459
        %v3101 = vunpack.c.h.b16 %v459
        %v3102 = vunpack.c.l.b16 %v460
        %v3103 = vunpack.c.h.b16 %v460
        %v3104 = vunpack.c.l.b16 %v461
        %v3105 = vunpack.c.h.b16 %v461
        %v3106 = vunpack.c.l.b16 %v462
        %v3107 = vunpack.c.h.b16 %v462
        %v3108 = vunpack.c.l.b16 %v463
        %v3109 = vunpack.c.h.b16 %v463
        %v3110 = vunpack.c.l.b16 %v464
        %v3111 = vunpack.c.h.b16 %v464
        %v3112 = vunpack.c.l.b16 %v465
        %v3113 = vunpack.c.h.b16 %v465
        %v3114 = vunpack.c.l.b16 %v466
        %v3115 = vunpack.c.h.b16 %v466
        %v3116 = vunpack.c.l.b16 %v467
        %v3117 = vunpack.c.h.b16 %v467
        %v3118 = vunpack.c.l.b16 %v468
        %v3119 = vunpack.c.h.b16 %v468
        %v3120 = vunpack.c.l.b16 %v469
        %v3121 = vunpack.c.h.b16 %v469
        %v3122 = vunpack.c.l.b16 %v470
        %v3123 = vunpack.c.h.b16 %v470
        %v3124 = vunpack.c.l.b16 %v471
        %v3125 = vunpack.c.h.b16 %v471
        %v3126 = vunpack.c.l.b16 %v472
        %v3127 = vunpack.c.h.b16 %v472
        %v3128 = vunpack.c.l.b16 %v473
        %v3129 = vunpack.c.h.b16 %v473
        %v3130 = vunpack.c.l.b16 %v474
        %v3131 = vunpack.c.h.b16 %v474
        %v3132 = vunpack.c.l.b16 %v475
        %v3133 = vunpack.c.h.b16 %v475
        %v3134 = vunpack.c.l.b16 %v476
        %v3135 = vunpack.c.h.b16 %v476
        %v3136 = vunpack.c.l.b16 %v477
        %v3137 = vunpack.c.h.b16 %v477
        %v3138 = vunpack.c.l.b16 %v478
        %v3139 = vunpack.c.h.b16 %v478
        %v3140 = vunpack.c.l.b16 %v479
        %v3141 = vunpack.c.h.b16 %v479
        %v3142 = vunpack.c.l.b16 %v480
        %v3143 = vunpack.c.h.b16 %v480
        %v3144 = vunpack.c.l.b16 %v481
        %v3145 = vunpack.c.h.b16 %v481
        %v3146 = vunpack.c.l.b16 %v482
        %v3147 = vunpack.c.h.b16 %v482
        %v3148 = vunpack.c.l.b16 %v483
        %v3149 = vunpack.c.h.b16 %v483
        %v3150 = vunpack.c.l.b16 %v484
        %v3151 = vunpack.c.h.b16 %v484
        %v3152 = vunpack.c.l.b16 %v485
        %v3153 = vunpack.c.h.b16 %v485
        %v3154 = vunpack.c.l.b16 %v486
        %v3155 = vunpack.c.h.b16 %v486
        %v3156 = vunpack.c.l.b16 %v487
        %v3157 = vunpack.c.h.b16 %v487
        %v3158 = vunpack.c.l.b16 %v488
        %v3159 = vunpack.c.h.b16 %v488
        %v3160 = vunpack.c.l.b16 %v489
        %v3161 = vunpack.c.h.b16 %v489
        %v3162 = vunpack.c.l.b16 %v490
        %v3163 = vunpack.c.h.b16 %v490
        %v3164 = vunpack.c.l.b16 %v491
        %v3165 = vunpack.c.h.b16 %v491
        %v3166 = vunpack.c.l.b16 %v492
        %v3167 = vunpack.c.h.b16 %v492
        %v3168 = vunpack.c.l.b16 %v493
        %v3169 = vunpack.c.h.b16 %v493
        %v3170 = vunpack.c.l.b16 %v494
        %v3171 = vunpack.c.h.b16 %v494
        %v3172 = vunpack.c.l.b16 %v495
        %v3173 = vunpack.c.h.b16 %v495
        %v3174 = vunpack.c.l.b16 %v496
        %v3175 = vunpack.c.h.b16 %v496
        %v3176 = vunpack.c.l.b16 %v497
        %v3177 = vunpack.c.h.b16 %v497
        %v3178 = vunpack.c.l.b16 %v498
        %v3179 = vunpack.c.h.b16 %v498
        %v3180 = vunpack.c.l.b16 %v499
        %v3181 = vunpack.c.h.b16 %v499
        %v3182 = vunpack.c.l.b16 %v500
        %v3183 = vunpack.c.h.b16 %v500
        %v3184 = vunpack.c.l.b16 %v501
        %v3185 = vunpack.c.h.b16 %v501
        %v3186 = vunpack.c.l.b16 %v502
        %v3187 = vunpack.c.h.b16 %v502
        %v3188 = vunpack.c.l.b16 %v503
        %v3189 = vunpack.c.h.b16 %v503
        %v3190 = vunpack.c.l.b16 %v504
        %v3191 = vunpack.c.h.b16 %v504
        %v3192 = vunpack.c.l.b16 %v505
        %v3193 = vunpack.c.h.b16 %v505
        %v3194 = vunpack.c.l.b16 %v506
        %v3195 = vunpack.c.h.b16 %v506
        %v3196 = vunpack.c.l.b16 %v507
        %v3197 = vunpack.c.h.b16 %v507
        %v3198 = vunpack.c.l.b16 %v508
        %v3199 = vunpack.c.h.b16 %v508
        %v3200 = vunpack.c.l.b16 %v509
        %v3201 = vunpack.c.h.b16 %v509
        %v3202 = vunpack.c.l.b16 %v510
        %v3203 = vunpack.c.h.b16 %v510
        %v3204 = vunpack.c.l.b16 %v511
        %v3205 = vunpack.c.h.b16 %v511
        %v3206 = vunpack.c.l.b16 %v512
        %v3207 = vunpack.c.h.b16 %v512
        %v3208 = vunpack.c.l.b16 %v513
        %v3209 = vunpack.c.h.b16 %v513
        %v3210 = vunpack.c.l.b16 %v514
        %v3211 = vunpack.c.h.b16 %v514
        %v3212 = vunpack.c.l.b16 %v515
        %v3213 = vunpack.c.h.b16 %v515
        %v3214 = vunpack.c.l.b16 %v516
        %v3215 = vunpack.c.h.b16 %v516
        %v3216 = vunpack.c.l.b16 %v517
        %v3217 = vunpack.c.h.b16 %v517
        %v3218 = vunpack.c.l.b16 %v518
        %v3219 = vunpack.c.h.b16 %v518
        %v3220 = vunpack.c.l.b16 %v519
        %v3221 = vunpack.c.h.b16 %v519
        %v3222 = vunpack.c.l.b16 %v520
        %v3223 = vunpack.c.h.b16 %v520
        %v3224 = vunpack.c.l.b16 %v521
        %v3225 = vunpack.c.h.b16 %v521
        %v3226 = vunpack.c.l.b16 %v522
        %v3227 = vunpack.c.h.b16 %v522
        %v3228 = vunpack.c.l.b16 %v523
        %v3229 = vunpack.c.h.b16 %v523
        %v3230 = vunpack.c.l.b16 %v524
        %v3231 = vunpack.c.h.b16 %v524
        %v3232 = vunpack.c.l.b16 %v525
        %v3233 = vunpack.c.h.b16 %v525
        %v3234 = vunpack.c.l.b16 %v526
        %v3235 = vunpack.c.h.b16 %v526
        %v3236 = vunpack.c.l.b16 %v527
        %v3237 = vunpack.c.h.b16 %v527
        %v3238 = vunpack.c.l.b16 %v528
        %v3239 = vunpack.c.h.b16 %v528
        %v3240 = vunpack.c.l.b16 %v529
        %v3241 = vunpack.c.h.b16 %v529
        %v3242 = vunpack.c.l.b16 %v530
        %v3243 = vunpack.c.h.b16 %v530
        %v3244 = vunpack.c.l.b16 %v531
        %v3245 = vunpack.c.h.b16 %v531
        %v3246 = vunpack.c.l.b16 %v532
        %v3247 = vunpack.c.h.b16 %v532
        %v3248 = vunpack.c.l.b16 %v533
        %v3249 = vunpack.c.h.b16 %v533
        %v3250 = vunpack.c.l.b16 %v534
        %v3251 = vunpack.c.h.b16 %v534
        %v3252 = vunpack.c.l.b16 %v535
        %v3253 = vunpack.c.h.b16 %v535
        %v3254 = vunpack.c.l.b16 %v536
        %v3255 = vunpack.c.h.b16 %v536
        %v3256 = vunpack.c.l.b16 %v537
        %v3257 = vunpack.c.h.b16 %v537
        %v3258 = vunpack.c.l.b16 %v538
        %v3259 = vunpack.c.h.b16 %v538
        %v3260 = vunpack.c.l.b16 %v539
        %v3261 = vunpack.c.h.b16 %v539
        %v3262 = vunpack.c.l.b16 %v540
        %v3263 = vunpack.c.h.b16 %v540
        %v3264 = vunpack.c.l.b16 %v541
        %v3265 = vunpack.c.h.b16 %v541
        %v3266 = vunpack.c.l.b16 %v542
        %v3267 = vunpack.c.h.b16 %v542
        %v3268 = vunpack.c.l.b16 %v543
        %v3269 = vunpack.c.h.b16 %v543
        %v3270 = vunpack.c.l.b16 %v544
        %v3271 = vunpack.c.h.b16 %v544
        %v3272 = vunpack.c.l.b16 %v545
        %v3273 = vunpack.c.h.b16 %v545
        %v3274 = vunpack.c.l.b16 %v546
        %v3275 = vunpack.c.h.b16 %v546
        %v3276 = vunpack.c.l.b16 %v547
        %v3277 = vunpack.c.h.b16 %v547
        %v3278 = vunpack.c.l.b16 %v548
        %v3279 = vunpack.c.h.b16 %v548
        %v3280 = vunpack.c.l.b16 %v549
        %v3281 = vunpack.c.h.b16 %v549
        %v3282 = vunpack.c.l.b16 %v550
        %v3283 = vunpack.c.h.b16 %v550
        %v3284 = vunpack.c.l.b16 %v551
        %v3285 = vunpack.c.h.b16 %v551
        %v3286 = vunpack.c.l.b16 %v552
        %v3287 = vunpack.c.h.b16 %v552
        %v3288 = vunpack.c.l.b16 %v553
        %v3289 = vunpack.c.h.b16 %v553
        %v3290 = vunpack.c.l.b16 %v554
        %v3291 = vunpack.c.h.b16 %v554
        %v3292 = vunpack.c.l.b16 %v555
        %v3293 = vunpack.c.h.b16 %v555
        %v3294 = vunpack.c.l.b16 %v556
        %v3295 = vunpack.c.h.b16 %v556
        %v3296 = vunpack.c.l.b16 %v557
        %v3297 = vunpack.c.h.b16 %v557
        %v3298 = vunpack.c.l.b16 %v558
        %v3299 = vunpack.c.h.b16 %v558
        %v3300 = vunpack.c.l.b16 %v559
        %v3301 = vunpack.c.h.b16 %v559
        %v3302 = vunpack.c.l.b16 %v560
        %v3303 = vunpack.c.h.b16 %v560
        %v3304 = vunpack.c.l.b16 %v561
        %v3305 = vunpack.c.h.b16 %v561
        %v3306 = vunpack.c.l.b16 %v562
        %v3307 = vunpack.c.h.b16 %v562
        %v3308 = vunpack.c.l.b16 %v563
        %v3309 = vunpack.c.h.b16 %v563
        %v3310 = vunpack.c.l.b16 %v564
        %v3311 = vunpack.c.h.b16 %v564
        %v3312 = vunpack.c.l.b16 %v565
        %v3313 = vunpack.c.h.b16 %v565
        %v3314 = vunpack.c.l.b16 %v566
        %v3315 = vunpack.c.h.b16 %v566
        %v3316 = vunpack.c.l.b16 %v567
        %v3317 = vunpack.c.h.b16 %v567
        %v3318 = vunpack.c.l.b16 %v568
        %v3319 = vunpack.c.h.b16 %v568
        %v3320 = vunpack.c.l.b16 %v569
        %v3321 = vunpack.c.h.b16 %v569
        %v3322 = vunpack.c.l.b16 %v570
        %v3323 = vunpack.c.h.b16 %v570
        %v3324 = vunpack.c.l.b16 %v571
        %v3325 = vunpack.c.h.b16 %v571
        %v3326 = vunpack.c.l.b16 %v572
        %v3327 = vunpack.c.h.b16 %v572
        %v3328 = vunpack.c.l.b16 %v573
        %v3329 = vunpack.c.h.b16 %v573
        %v3330 = vunpack.c.l.b16 %v574
        %v3331 = vunpack.c.h.b16 %v574
        %v3332 = vunpack.c.l.b16 %v575
        %v3333 = vunpack.c.h.b16 %v575
        %v3334 = vunpack.c.l.b16 %v576
        %v3335 = vunpack.c.h.b16 %v576
        %v3336 = vunpack.c.l.b16 %v577
        %v3337 = vunpack.c.h.b16 %v577
        %v3338 = vunpack.c.l.b16 %v578
        %v3339 = vunpack.c.h.b16 %v578
        %v3340 = vunpack.c.l.b16 %v579
        %v3341 = vunpack.c.h.b16 %v579
        %v3342 = vunpack.c.l.b16 %v580
        %v3343 = vunpack.c.h.b16 %v580
        %v3344 = vunpack.c.l.b16 %v581
        %v3345 = vunpack.c.h.b16 %v581
        %v3346 = vunpack.c.l.b16 %v582
        %v3347 = vunpack.c.h.b16 %v582
        %v3348 = vunpack.c.l.b16 %v583
        %v3349 = vunpack.c.h.b16 %v583
        %v3350 = vunpack.c.l.b16 %v584
        %v3351 = vunpack.c.h.b16 %v584
        %v3352 = vunpack.c.l.b16 %v585
        %v3353 = vunpack.c.h.b16 %v585
        %v3354 = vunpack.c.l.b16 %v586
        %v3355 = vunpack.c.h.b16 %v586
        %v3356 = vunpack.c.l.b16 %v587
        %v3357 = vunpack.c.h.b16 %v587
        %v3358 = vunpack.c.l.b16 %v588
        %v3359 = vunpack.c.h.b16 %v588
        %v3360 = vunpack.c.l.b16 %v589
        %v3361 = vunpack.c.h.b16 %v589
        %v3362 = vunpack.c.l.b16 %v590
        %v3363 = vunpack.c.h.b16 %v590
        %v3364 = vunpack.c.l.b16 %v591
        %v3365 = vunpack.c.h.b16 %v591
        %v3366 = vunpack.c.l.b16 %v592
        %v3367 = vunpack.c.h.b16 %v592
        %v3368 = vunpack.c.l.b16 %v593
        %v3369 = vunpack.c.h.b16 %v593
        %v3370 = vunpack.c.l.b16 %v594
        %v3371 = vunpack.c.h.b16 %v594
        %v3372 = vunpack.c.l.b16 %v595
        %v3373 = vunpack.c.h.b16 %v595
        %v3374 = vunpack.c.l.b16 %v596
        %v3375 = vunpack.c.h.b16 %v596
        %v3376 = vunpack.c.l.b16 %v597
        %v3377 = vunpack.c.h.b16 %v597
        %v3378 = vunpack.c.l.b16 %v598
        %v3379 = vunpack.c.h.b16 %v598
        %v3380 = vunpack.c.l.b16 %v599
        %v3381 = vunpack.c.h.b16 %v599
        %v3382 = vunpack.c.l.b16 %v600
        %v3383 = vunpack.c.h.b16 %v600
        %v3384 = vunpack.c.l.b16 %v601
        %v3385 = vunpack.c.h.b16 %v601
        %v3386 = vunpack.c.l.b16 %v602
        %v3387 = vunpack.c.h.b16 %v602
        %v3388 = vunpack.c.l.b16 %v603
        %v3389 = vunpack.c.h.b16 %v603
        %v3390 = vunpack.c.l.b16 %v604
        %v3391 = vunpack.c.h.b16 %v604
        %v3392 = vunpack.c.l.b16 %v605
        %v3393 = vunpack.c.h.b16 %v605
        %v3394 = vunpack.c.l.b16 %v606
        %v3395 = vunpack.c.h.b16 %v606
        %v3396 = vunpack.c.l.b16 %v607
        %v3397 = vunpack.c.h.b16 %v607
        %v3398 = vunpack.c.l.b16 %v608
        %v3399 = vunpack.c.h.b16 %v608
        %v3400 = vunpack.c.l.b16 %v609
        %v3401 = vunpack.c.h.b16 %v609
        %v3402 = vunpack.c.l.b16 %v610
        %v3403 = vunpack.c.h.b16 %v610
        %v3404 = vunpack.c.l.b16 %v611
        %v3405 = vunpack.c.h.b16 %v611
        %v3406 = vunpack.c.l.b16 %v612
        %v3407 = vunpack.c.h.b16 %v612
        %v3408 = vunpack.c.l.b16 %v613
        %v3409 = vunpack.c.h.b16 %v613
        %v3410 = vunpack.c.l.b16 %v614
        %v3411 = vunpack.c.h.b16 %v614
        %v3412 = vunpack.c.l.b16 %v615
        %v3413 = vunpack.c.h.b16 %v615
        %v3414 = vunpack.c.l.b16 %v616
        %v3415 = vunpack.c.h.b16 %v616
        %v3416 = vunpack.c.l.b16 %v617
        %v3417 = vunpack.c.h.b16 %v617
        %v3418 = vunpack.c.l.b16 %v618
        %v3419 = vunpack.c.h.b16 %v618
        %v3420 = vunpack.c.l.b16 %v619
        %v3421 = vunpack.c.h.b16 %v619
        %v3422 = vunpack.c.l.b16 %v620
        %v3423 = vunpack.c.h.b16 %v620
        %v3424 = vunpack.c.l.b16 %v621
        %v3425 = vunpack.c.h.b16 %v621
        %v3426 = vunpack.c.l.b16 %v622
        %v3427 = vunpack.c.h.b16 %v622
        %v3428 = vunpack.c.l.b16 %v623
        %v3429 = vunpack.c.h.b16 %v623
        %v3430 = vunpack.c.l.b16 %v624
        %v3431 = vunpack.c.h.b16 %v624
        %v3432 = vunpack.c.l.b16 %v625
        %v3433 = vunpack.c.h.b16 %v625
        %v3434 = vunpack.c.l.b16 %v626
        %v3435 = vunpack.c.h.b16 %v626
        %v3436 = vunpack.c.l.b16 %v627
        %v3437 = vunpack.c.h.b16 %v627
        %v3438 = vunpack.c.l.b16 %v628
        %v3439 = vunpack.c.h.b16 %v628
        %v3440 = vunpack.c.l.b16 %v629
        %v3441 = vunpack.c.h.b16 %v629
        %v3442 = vunpack.c.l.b16 %v630
        %v3443 = vunpack.c.h.b16 %v630
        %v3444 = vunpack.c.l.b16 %v631
        %v3445 = vunpack.c.h.b16 %v631
        %v3446 = vunpack.c.l.b16 %v632
        %v3447 = vunpack.c.h.b16 %v632
        %v3448 = vunpack.c.l.b16 %v633
        %v3449 = vunpack.c.h.b16 %v633
        %v3450 = vunpack.c.l.b16 %v634
        %v3451 = vunpack.c.h.b16 %v634
        %v3452 = vunpack.c.l.b16 %v635
        %v3453 = vunpack.c.h.b16 %v635
        %v3454 = vunpack.c.l.b16 %v636
        %v3455 = vunpack.c.h.b16 %v636
        %v3456 = vunpack.c.l.b16 %v637
        %v3457 = vunpack.c.h.b16 %v637
        %v3458 = vunpack.c.l.b16 %v638
        %v3459 = vunpack.c.h.b16 %v638
        %v3460 = vunpack.c.l.b16 %v639
        %v3461 = vunpack.c.h.b16 %v639
        %v3462 = vunpack.c.l.b16 %v640
        %v3463 = vunpack.c.h.b16 %v640
        %v3464 = vunpack.c.l.b16 %v641
        %v3465 = vunpack.c.h.b16 %v641
        %v3466 = vunpack.c.l.b16 %v642
        %v3467 = vunpack.c.h.b16 %v642
        %v3468 = vunpack.c.l.b16 %v643
        %v3469 = vunpack.c.h.b16 %v643
        %v3470 = vunpack.c.l.b16 %v644
        %v3471 = vunpack.c.h.b16 %v644
        %v3472 = vunpack.c.l.b16 %v645
        %v3473 = vunpack.c.h.b16 %v645
        %v3474 = vunpack.c.l.b16 %v646
        %v3475 = vunpack.c.h.b16 %v646
        %v3476 = vunpack.c.l.b16 %v647
        %v3477 = vunpack.c.h.b16 %v647
        %v3478 = vunpack.c.l.b16 %v648
        %v3479 = vunpack.c.h.b16 %v648
        %v3480 = vunpack.c.l.b16 %v649
        %v3481 = vunpack.c.h.b16 %v649
        %v3482 = vunpack.c.l.b16 %v650
        %v3483 = vunpack.c.h.b16 %v650
        %v3484 = vunpack.c.l.b16 %v651
        %v3485 = vunpack.c.h.b16 %v651
        %v3486 = vunpack.c.l.b16 %v652
        %v3487 = vunpack.c.h.b16 %v652
        %v3488 = vunpack.c.l.b16 %v653
        %v3489 = vunpack.c.h.b16 %v653
        %v3490 = vunpack.c.l.b16 %v654
        %v3491 = vunpack.c.h.b16 %v654
        %v3492 = vunpack.c.l.b16 %v655
        %v3493 = vunpack.c.h.b16 %v655
        %v3494 = vunpack.c.l.b16 %v656
        %v3495 = vunpack.c.h.b16 %v656
        %v3496 = vunpack.c.l.b16 %v657
        %v3497 = vunpack.c.h.b16 %v657
        %v3498 = vunpack.c.l.b16 %v658
        %v3499 = vunpack.c.h.b16 %v658
        %v3500 = vunpack.c.l.b16 %v659
        %v3501 = vunpack.c.h.b16 %v659
        %v3502 = vunpack.c.l.b16 %v660
        %v3503 = vunpack.c.h.b16 %v660
        %v3504 = vunpack.c.l.b16 %v661
        %v3505 = vunpack.c.h.b16 %v661
        %v3506 = vunpack.c.l.b16 %v662
        %v3507 = vunpack.c.h.b16 %v662
        %v3508 = vunpack.c.l.b16 %v663
        %v3509 = vunpack.c.h.b16 %v663
        %v3510 = vunpack.c.l.b16 %v664
        %v3511 = vunpack.c.h.b16 %v664
        %v3512 = vunpack.c.l.b16 %v665
        %v3513 = vunpack.c.h.b16 %v665
        %v3514 = vunpack.c.l.b16 %v666
        %v3515 = vunpack.c.h.b16 %v666
        %v3516 = vunpack.c.l.b16 %v667
        %v3517 = vunpack.c.h.b16 %v667
        %v3518 = vunpack.c.l.b16 %v668
        %v3519 = vunpack.c.h.b16 %v668
        %v3520 = vunpack.c.l.b16 %v669
        %v3521 = vunpack.c.h.b16 %v669
        %v3522 = vunpack.c.l.b16 %v670
        %v3523 = vunpack.c.h.b16 %v670
        %v3524 = vunpack.c.l.b16 %v671
        %v3525 = vunpack.c.h.b16 %v671
        %v3526 = vunpack.c.l.b16 %v672
        %v3527 = vunpack.c.h.b16 %v672
        %v3528 = vunpack.c.l.b16 %v673
        %v3529 = vunpack.c.h.b16 %v673
        %v3530 = vunpack.c.l.b16 %v674
        %v3531 = vunpack.c.h.b16 %v674
        %v3532 = vunpack.c.l.b16 %v675
        %v3533 = vunpack.c.h.b16 %v675
        %v3534 = vunpack.c.l.b16 %v676
        %v3535 = vunpack.c.h.b16 %v676
        %v3536 = vunpack.c.l.b16 %v677
        %v3537 = vunpack.c.h.b16 %v677
        %v3538 = vunpack.c.l.b16 %v678
        %v3539 = vunpack.c.h.b16 %v678
        %v3540 = vunpack.c.l.b16 %v679
        %v3541 = vunpack.c.h.b16 %v679
        %v3542 = vunpack.c.l.b16 %v680
        %v3543 = vunpack.c.h.b16 %v680
        %v3544 = vunpack.c.l.b16 %v681
        %v3545 = vunpack.c.h.b16 %v681
        %v3546 = vunpack.c.l.b16 %v682
        %v3547 = vunpack.c.h.b16 %v682
        %v3548 = vunpack.c.l.b16 %v683
        %v3549 = vunpack.c.h.b16 %v683
        %v3550 = vunpack.c.l.b16 %v684
        %v3551 = vunpack.c.h.b16 %v684
        %v3552 = vunpack.c.l.b16 %v685
        %v3553 = vunpack.c.h.b16 %v685
        %v3554 = vunpack.c.l.b16 %v686
        %v3555 = vunpack.c.h.b16 %v686
        %v3556 = vunpack.c.l.b16 %v687
        %v3557 = vunpack.c.h.b16 %v687
        %v3558 = vunpack.c.l.b16 %v688
        %v3559 = vunpack.c.h.b16 %v688
        %v3560 = vunpack.c.l.b16 %v689
        %v3561 = vunpack.c.h.b16 %v689
        %v3562 = vunpack.c.l.b16 %v690
        %v3563 = vunpack.c.h.b16 %v690
        %v3564 = vunpack.c.l.b16 %v691
        %v3565 = vunpack.c.h.b16 %v691
        %v3566 = vunpack.c.l.b16 %v692
        %v3567 = vunpack.c.h.b16 %v692
        %v3568 = vunpack.c.l.b16 %v693
        %v3569 = vunpack.c.h.b16 %v693
        %v3570 = vunpack.c.l.b16 %v694
        %v3571 = vunpack.c.h.b16 %v694
        %v3572 = vunpack.c.l.b16 %v695
        %v3573 = vunpack.c.h.b16 %v695
        %v3574 = vunpack.c.l.b16 %v696
        %v3575 = vunpack.c.h.b16 %v696
        %v3576 = vunpack.c.l.b16 %v697
        %v3577 = vunpack.c.h.b16 %v697
        %v3578 = vunpack.c.l.b16 %v698
        %v3579 = vunpack.c.h.b16 %v698
        %v3580 = vunpack.c.l.b16 %v699
        %v3581 = vunpack.c.h.b16 %v699
        %v3582 = vunpack.c.l.b16 %v700
        %v3583 = vunpack.c.h.b16 %v700
        %v3584 = vunpack.c.l.b16 %v701
        %v3585 = vunpack.c.h.b16 %v701
        %v3586 = vunpack.c.l.b16 %v702
        %v3587 = vunpack.c.h.b16 %v702
        %v3588 = vunpack.c.l.b16 %v703
        %v3589 = vunpack.c.h.b16 %v703
        %v3590 = vunpack.c.l.b16 %v704
        %v3591 = vunpack.c.h.b16 %v704
        %v3592 = vunpack.c.l.b16 %v705
        %v3593 = vunpack.c.h.b16 %v705
        %v3594 = vunpack.c.l.b16 %v706
        %v3595 = vunpack.c.h.b16 %v706
        %v3596 = vunpack.c.l.b16 %v707
        %v3597 = vunpack.c.h.b16 %v707
        %v3598 = vunpack.c.l.b16 %v708
        %v3599 = vunpack.c.h.b16 %v708
        %v3600 = vunpack.c.l.b16 %v709
        %v3601 = vunpack.c.h.b16 %v709
        %v3602 = vunpack.c.l.b16 %v710
        %v3603 = vunpack.c.h.b16 %v710
        %v3604 = vunpack.c.l.b16 %v711
        %v3605 = vunpack.c.h.b16 %v711
        %v3606 = vunpack.c.l.b16 %v712
        %v3607 = vunpack.c.h.b16 %v712
        %v3608 = vunpack.c.l.b16 %v713
        %v3609 = vunpack.c.h.b16 %v713
        %v3610 = vunpack.c.l.b16 %v714
        %v3611 = vunpack.c.h.b16 %v714
        %v3612 = vunpack.c.l.b16 %v715
        %v3613 = vunpack.c.h.b16 %v715
        %v3614 = vunpack.c.l.b16 %v716
        %v3615 = vunpack.c.h.b16 %v716
        %v3616 = vunpack.c.l.b16 %v717
        %v3617 = vunpack.c.h.b16 %v717
        %v3618 = vunpack.c.l.b16 %v718
        %v3619 = vunpack.c.h.b16 %v718
        %v3620 = vunpack.c.l.b16 %v719
        %v3621 = vunpack.c.h.b16 %v719
        %v3622 = vunpack.c.l.b16 %v720
        %v3623 = vunpack.c.h.b16 %v720
        %v3624 = vunpack.c.l.b16 %v721
        %v3625 = vunpack.c.h.b16 %v721
        %v3626 = vunpack.c.l.b16 %v722
        %v3627 = vunpack.c.h.b16 %v722
        %v3628 = vunpack.c.l.b16 %v723
        %v3629 = vunpack.c.h.b16 %v723
        %v3630 = vunpack.c.l.b16 %v724
        %v3631 = vunpack.c.h.b16 %v724
        %v3632 = vunpack.c.l.b16 %v725
        %v3633 = vunpack.c.h.b16 %v725
        %v3634 = vunpack.c.l.b16 %v726
        %v3635 = vunpack.c.h.b16 %v726
        %v3636 = vunpack.c.l.b16 %v727
        %v3637 = vunpack.c.h.b16 %v727
        %v3638 = vunpack.c.l.b16 %v728
        %v3639 = vunpack.c.h.b16 %v728
        %v3640 = vunpack.c.l.b16 %v729
        %v3641 = vunpack.c.h.b16 %v729
        %v3642 = vunpack.c.l.b16 %v730
        %v3643 = vunpack.c.h.b16 %v730
        %v3644 = vunpack.c.l.b16 %v731
        %v3645 = vunpack.c.h.b16 %v731
        %v3646 = vunpack.c.l.b16 %v732
        %v3647 = vunpack.c.h.b16 %v732
        %v3648 = vunpack.c.l.b16 %v733
        %v3649 = vunpack.c.h.b16 %v733
        %v3650 = vunpack.c.l.b16 %v734
        %v3651 = vunpack.c.h.b16 %v734
        %v3652 = vunpack.c.l.b16 %v735
        %v3653 = vunpack.c.h.b16 %v735
        %v3654 = vunpack.c.l.b16 %v736
        %v3655 = vunpack.c.h.b16 %v736
        %v3656 = vunpack.c.l.b16 %v737
        %v3657 = vunpack.c.h.b16 %v737
        %v3658 = vunpack.c.l.b16 %v738
        %v3659 = vunpack.c.h.b16 %v738
        %v3660 = vunpack.c.l.b16 %v739
        %v3661 = vunpack.c.h.b16 %v739
        %v3662 = vunpack.c.l.b16 %v740
        %v3663 = vunpack.c.h.b16 %v740
        %v3664 = vunpack.c.l.b16 %v741
        %v3665 = vunpack.c.h.b16 %v741
        %v3666 = vunpack.c.l.b16 %v742
        %v3667 = vunpack.c.h.b16 %v742
        %v3668 = vunpack.c.l.b16 %v743
        %v3669 = vunpack.c.h.b16 %v743
        %v3670 = vunpack.c.l.b16 %v744
        %v3671 = vunpack.c.h.b16 %v744
        %v3672 = vunpack.c.l.b16 %v745
        %v3673 = vunpack.c.h.b16 %v745
        %v3674 = vunpack.c.l.b16 %v746
        %v3675 = vunpack.c.h.b16 %v746
        %v3676 = vunpack.c.l.b16 %v747
        %v3677 = vunpack.c.h.b16 %v747
        %v3678 = vunpack.c.l.b16 %v748
        %v3679 = vunpack.c.h.b16 %v748
        %v3680 = vunpack.c.l.b16 %v749
        %v3681 = vunpack.c.h.b16 %v749
        %v3682 = vunpack.c.l.b16 %v750
        %v3683 = vunpack.c.h.b16 %v750
        %v3684 = vunpack.c.l.b16 %v751
        %v3685 = vunpack.c.h.b16 %v751
        %v3686 = vunpack.c.l.b16 %v752
        %v3687 = vunpack.c.h.b16 %v752
        %v3688 = vunpack.c.l.b16 %v753
        %v3689 = vunpack.c.h.b16 %v753
        %v3690 = vunpack.c.l.b16 %v754
        %v3691 = vunpack.c.h.b16 %v754
        %v3692 = vunpack.c.l.b16 %v755
        %v3693 = vunpack.c.h.b16 %v755
        %v3694 = vunpack.c.l.b16 %v756
        %v3695 = vunpack.c.h.b16 %v756
        %v3696 = vunpack.c.l.b16 %v757
        %v3697 = vunpack.c.h.b16 %v757
        %v3698 = vunpack.c.l.b16 %v758
        %v3699 = vunpack.c.h.b16 %v758
        %v3700 = vunpack.c.l.b16 %v759
        %v3701 = vunpack.c.h.b16 %v759
        %v3702 = vunpack.c.l.b16 %v760
        %v3703 = vunpack.c.h.b16 %v760
        %v3704 = vunpack.c.l.b16 %v761
        %v3705 = vunpack.c.h.b16 %v761
        %v3706 = vunpack.c.l.b16 %v762
        %v3707 = vunpack.c.h.b16 %v762
        %v3708 = vunpack.c.l.b16 %v763
        %v3709 = vunpack.c.h.b16 %v763
        %v3710 = vunpack.c.l.b16 %v764
        %v3711 = vunpack.c.h.b16 %v764
        %v3712 = vunpack.c.l.b16 %v765
        %v3713 = vunpack.c.h.b16 %v765
        %v3714 = vunpack.c.l.b16 %v766
        %v3715 = vunpack.c.h.b16 %v766
        %v3716 = vunpack.c.l.b16 %v767
        %v3717 = vunpack.c.h.b16 %v767
        %v3718 = vunpack.c.l.b16 %v768
        %v3719 = vunpack.c.h.b16 %v768
        %v3720 = vunpack.c.l.b16 %v769
        %v3721 = vunpack.c.h.b16 %v769
        %v3722 = vunpack.c.l.b16 %v770
        %v3723 = vunpack.c.h.b16 %v770
        %v3724 = vunpack.c.l.b16 %v771
        %v3725 = vunpack.c.h.b16 %v771
        %v3726 = vunpack.c.l.b16 %v772
        %v3727 = vunpack.c.h.b16 %v772
        %v3728 = vunpack.c.l.b16 %v773
        %v3729 = vunpack.c.h.b16 %v773
        %v3730 = vunpack.c.l.b16 %v774
        %v3731 = vunpack.c.h.b16 %v774
        %v3732 = vunpack.c.l.b16 %v775
        %v3733 = vunpack.c.h.b16 %v775
        %v3734 = vunpack.c.l.b16 %v776
        %v3735 = vunpack.c.h.b16 %v776
        %v3736 = vunpack.c.l.b16 %v777
        %v3737 = vunpack.c.h.b16 %v777
        %v3738 = vunpack.c.l.b16 %v778
        %v3739 = vunpack.c.h.b16 %v778
        %v3740 = vunpack.c.l.b16 %v779
        %v3741 = vunpack.c.h.b16 %v779
        %v3742 = vunpack.c.l.b16 %v780
        %v3743 = vunpack.c.h.b16 %v780
        %v3744 = vunpack.c.l.b16 %v781
        %v3745 = vunpack.c.h.b16 %v781
        %v3746 = vunpack.c.l.b16 %v782
        %v3747 = vunpack.c.h.b16 %v782
        %v3748 = vunpack.c.l.b16 %v783
        %v3749 = vunpack.c.h.b16 %v783
        %v3750 = vunpack.c.l.b16 %v784
        %v3751 = vunpack.c.h.b16 %v784
        %v3752 = vunpack.c.l.b16 %v785
        %v3753 = vunpack.c.h.b16 %v785
        %v3754 = vunpack.c.l.b16 %v786
        %v3755 = vunpack.c.h.b16 %v786
        %v3756 = vunpack.c.l.b16 %v787
        %v3757 = vunpack.c.h.b16 %v787
        %v3758 = vunpack.c.l.b16 %v788
        %v3759 = vunpack.c.h.b16 %v788
        %v3760 = vunpack.c.l.b16 %v789
        %v3761 = vunpack.c.h.b16 %v789
        %v3762 = vunpack.c.l.b16 %v790
        %v3763 = vunpack.c.h.b16 %v790
        %v3764 = vunpack.c.l.b16 %v791
        %v3765 = vunpack.c.h.b16 %v791
        %v3766 = vunpack.c.l.b16 %v792
        %v3767 = vunpack.c.h.b16 %v792
        %v3768 = vunpack.c.l.b16 %v793
        %v3769 = vunpack.c.h.b16 %v793
        %v3770 = vunpack.c.l.b16 %v794
        %v3771 = vunpack.c.h.b16 %v794
        %v3772 = vunpack.c.l.b16 %v795
        %v3773 = vunpack.c.h.b16 %v795
        %v3774 = vunpack.c.l.b16 %v796
        %v3775 = vunpack.c.h.b16 %v796
        %v3776 = vunpack.c.l.b16 %v797
        %v3777 = vunpack.c.h.b16 %v797
        %v3778 = vunpack.c.l.b16 %v798
        %v3779 = vunpack.c.h.b16 %v798
        %v3780 = vunpack.c.l.b16 %v799
        %v3781 = vunpack.c.h.b16 %v799
        %v3782 = vunpack.c.l.b16 %v800
        %v3783 = vunpack.c.h.b16 %v800
        %v3784 = vunpack.c.l.b16 %v801
        %v3785 = vunpack.c.h.b16 %v801
        %v3786 = vunpack.c.l.b16 %v802
        %v3787 = vunpack.c.h.b16 %v802
        %v3788 = vunpack.c.l.b16 %v803
        %v3789 = vunpack.c.h.b16 %v803
        %v3790 = vunpack.c.l.b16 %v804
        %v3791 = vunpack.c.h.b16 %v804
        %v3792 = vunpack.c.l.b16 %v805
        %v3793 = vunpack.c.h.b16 %v805
        %v3794 = vunpack.c.l.b16 %v806
        %v3795 = vunpack.c.h.b16 %v806
        %v3796 = vunpack.c.l.b16 %v807
        %v3797 = vunpack.c.h.b16 %v807
        %v3798 = vunpack.c.l.b16 %v808
        %v3799 = vunpack.c.h.b16 %v808
        %v3800 = vunpack.c.l.b16 %v809
        %v3801 = vunpack.c.h.b16 %v809
        %v3802 = vunpack.c.l.b16 %v810
        %v3803 = vunpack.c.h.b16 %v810
        %v3804 = vunpack.c.l.b16 %v811
        %v3805 = vunpack.c.h.b16 %v811
        %v3806 = vunpack.c.l.b16 %v812
        %v3807 = vunpack.c.h.b16 %v812
        %v3808 = vunpack.c.l.b16 %v813
        %v3809 = vunpack.c.h.b16 %v813
        %v3810 = vunpack.c.l.b16 %v814
        %v3811 = vunpack.c.h.b16 %v814
        %v3812 = vunpack.c.l.b16 %v815
        %v3813 = vunpack.c.h.b16 %v815
        %v3814 = vunpack.c.l.b16 %v816
        %v3815 = vunpack.c.h.b16 %v816
        %v3816 = vunpack.c.l.b16 %v817
        %v3817 = vunpack.c.h.b16 %v817
        %v3818 = vunpack.c.l.b16 %v818
        %v3819 = vunpack.c.h.b16 %v818
        %v3820 = vunpack.c.l.b16 %v819
        %v3821 = vunpack.c.h.b16 %v819
        %v3822 = vunpack.c.l.b16 %v820
        %v3823 = vunpack.c.h.b16 %v820
        %v3824 = vunpack.c.l.b16 %v821
        %v3825 = vunpack.c.h.b16 %v821
        %v3826 = vunpack.c.l.b16 %v822
        %v3827 = vunpack.c.h.b16 %v822
        %v3828 = vunpack.c.l.b16 %v823
        %v3829 = vunpack.c.h.b16 %v823
        %v3830 = vunpack.c.l.b16 %v824
        %v3831 = vunpack.c.h.b16 %v824
        %v3832 = vunpack.c.l.b16 %v825
        %v3833 = vunpack.c.h.b16 %v825
        %v3834 = vunpack.c.l.b16 %v826
        %v3835 = vunpack.c.h.b16 %v826
        %v3836 = vunpack.c.l.b16 %v827
        %v3837 = vunpack.c.h.b16 %v827
        %v3838 = vunpack.c.l.b16 %v828
        %v3839 = vunpack.c.h.b16 %v828
        %v3840 = vunpack.c.l.b16 %v829
        %v3841 = vunpack.c.h.b16 %v829
        %v3842 = vunpack.c.l.b16 %v830
        %v3843 = vunpack.c.h.b16 %v830
        %v3844 = vunpack.c.l.b16 %v831
        %v3845 = vunpack.c.h.b16 %v831
        %v3846 = vunpack.c.l.b16 %v832
        %v3847 = vunpack.c.h.b16 %v832
        %v3848 = vunpack.c.l.b16 %v833
        %v3849 = vunpack.c.h.b16 %v833
        %v3850 = vunpack.c.l.b16 %v834
        %v3851 = vunpack.c.h.b16 %v834
        %v3852 = vunpack.c.l.b16 %v835
        %v3853 = vunpack.c.h.b16 %v835
        %v3854 = vunpack.c.l.b16 %v836
        %v3855 = vunpack.c.h.b16 %v836
        %v3856 = vunpack.c.l.b16 %v837
        %v3857 = vunpack.c.h.b16 %v837
        %v3858 = vunpack.c.l.b16 %v838
        %v3859 = vunpack.c.h.b16 %v838
        %v3860 = vunpack.c.l.b16 %v839
        %v3861 = vunpack.c.h.b16 %v839
        %v3862 = vunpack.c.l.b16 %v840
        %v3863 = vunpack.c.h.b16 %v840
        %v3864 = vunpack.c.l.b16 %v841
        %v3865 = vunpack.c.h.b16 %v841
        %v3866 = vunpack.c.l.b16 %v842
        %v3867 = vunpack.c.h.b16 %v842
        %v3868 = vunpack.c.l.b16 %v843
        %v3869 = vunpack.c.h.b16 %v843
        %v3870 = vunpack.c.l.b16 %v844
        %v3871 = vunpack.c.h.b16 %v844
        %v3872 = vunpack.c.l.b16 %v845
        %v3873 = vunpack.c.h.b16 %v845
        %v3874 = vunpack.c.l.b16 %v846
        %v3875 = vunpack.c.h.b16 %v846
        %v3876 = vunpack.c.l.b16 %v847
        %v3877 = vunpack.c.h.b16 %v847
        %v3878 = vunpack.c.l.b16 %v848
        %v3879 = vunpack.c.h.b16 %v848
        %v3880 = vunpack.c.l.b16 %v849
        %v3881 = vunpack.c.h.b16 %v849
        %v3882 = vunpack.c.l.b16 %v850
        %v3883 = vunpack.c.h.b16 %v850
        %v3884 = vunpack.c.l.b16 %v851
        %v3885 = vunpack.c.h.b16 %v851
        %v3886 = vunpack.c.l.b16 %v852
        %v3887 = vunpack.c.h.b16 %v852
        %v3888 = vunpack.c.l.b16 %v853
        %v3889 = vunpack.c.h.b16 %v853
        %v3890 = vunpack.c.l.b16 %v854
        %v3891 = vunpack.c.h.b16 %v854
        %v3892 = vunpack.c.l.b16 %v855
        %v3893 = vunpack.c.h.b16 %v855
        %v3894 = vunpack.c.l.b16 %v856
        %v3895 = vunpack.c.h.b16 %v856
        %v3896 = vunpack.c.l.b16 %v857
        %v3897 = vunpack.c.h.b16 %v857
        %v3898 = vunpack.c.l.b16 %v858
        %v3899 = vunpack.c.h.b16 %v858
        %v3900 = vunpack.c.l.b16 %v859
        %v3901 = vunpack.c.h.b16 %v859
        %v3902 = vunpack.c.l.b16 %v860
        %v3903 = vunpack.c.h.b16 %v860
        %v3904 = vunpack.c.l.b16 %v861
        %v3905 = vunpack.c.h.b16 %v861
        %v3906 = vunpack.c.l.b16 %v862
        %v3907 = vunpack.c.h.b16 %v862
        %v3908 = vunpack.c.l.b16 %v863
        %v3909 = vunpack.c.h.b16 %v863
        %v3910 = vunpack.c.l.b16 %v864
        %v3911 = vunpack.c.h.b16 %v864
        %v3912 = vunpack.c.l.b16 %v865
        %v3913 = vunpack.c.h.b16 %v865
        %v3914 = vunpack.c.l.b16 %v866
        %v3915 = vunpack.c.h.b16 %v866
        %v3916 = vunpack.c.l.b16 %v867
        %v3917 = vunpack.c.h.b16 %v867
        %v3918 = vunpack.c.l.b16 %v868
        %v3919 = vunpack.c.h.b16 %v868
        %v3920 = vunpack.c.l.b16 %v869
        %v3921 = vunpack.c.h.b16 %v869
        %v3922 = vunpack.c.l.b16 %v870
        %v3923 = vunpack.c.h.b16 %v870
        %v3924 = vunpack.c.l.b16 %v871
        %v3925 = vunpack.c.h.b16 %v871
        %v3926 = vunpack.c.l.b16 %v872
        %v3927 = vunpack.c.h.b16 %v872
        %v3928 = vunpack.c.l.b16 %v873
        %v3929 = vunpack.c.h.b16 %v873
        %v3930 = vunpack.c.l.b16 %v874
        %v3931 = vunpack.c.h.b16 %v874
        %v3932 = vunpack.c.l.b16 %v875
        %v3933 = vunpack.c.h.b16 %v875
        %v3934 = vunpack.c.l.b16 %v876
        %v3935 = vunpack.c.h.b16 %v876
        %v3936 = vunpack.c.l.b16 %v877
        %v3937 = vunpack.c.h.b16 %v877
        %v3938 = vunpack.c.l.b16 %v878
        %v3939 = vunpack.c.h.b16 %v878
        %v3940 = vunpack.c.l.b16 %v879
        %v3941 = vunpack.c.h.b16 %v879
        %v3942 = vunpack.c.l.b16 %v880
        %v3943 = vunpack.c.h.b16 %v880
        %v3944 = vunpack.c.l.b16 %v881
        %v3945 = vunpack.c.h.b16 %v881
        %v3946 = vunpack.c.l.b16 %v882
        %v3947 = vunpack.c.h.b16 %v882
        %v3948 = vunpack.c.l.b16 %v883
        %v3949 = vunpack.c.h.b16 %v883
        %v3950 = vunpack.c.l.b16 %v884
        %v3951 = vunpack.c.h.b16 %v884
        %v3952 = vunpack.c.l.b16 %v885
        %v3953 = vunpack.c.h.b16 %v885
        %v3954 = vunpack.c.l.b16 %v886
        %v3955 = vunpack.c.h.b16 %v886
        %v3956 = vunpack.c.l.b16 %v887
        %v3957 = vunpack.c.h.b16 %v887
        %v3958 = vunpack.c.l.b16 %v888
        %v3959 = vunpack.c.h.b16 %v888
        %v3960 = vunpack.c.l.b16 %v889
        %v3961 = vunpack.c.h.b16 %v889
        %v3962 = vunpack.c.l.b16 %v890
        %v3963 = vunpack.c.h.b16 %v890
        %v3964 = vunpack.c.l.b16 %v891
        %v3965 = vunpack.c.h.b16 %v891
        %v3966 = vunpack.c.l.b16 %v892
        %v3967 = vunpack.c.h.b16 %v892
        %v3968 = vunpack.c.l.b16 %v893
        %v3969 = vunpack.c.h.b16 %v893
        %v3970 = vunpack.c.l.b16 %v894
        %v3971 = vunpack.c.h.b16 %v894
        %v3972 = vunpack.c.l.b16 %v895
        %v3973 = vunpack.c.h.b16 %v895
        %v3974 = vunpack.c.l.b16 %v896
        %v3975 = vunpack.c.h.b16 %v896
        %v3976 = vunpack.c.l.b16 %v897
        %v3977 = vunpack.c.h.b16 %v897
        %v3978 = vunpack.c.l.b16 %v898
        %v3979 = vunpack.c.h.b16 %v898
        %v3980 = vunpack.c.l.b16 %v899
        %v3981 = vunpack.c.h.b16 %v899
        %v3982 = vunpack.c.l.b16 %v900
        %v3983 = vunpack.c.h.b16 %v900
        %v3984 = vunpack.c.l.b16 %v901
        %v3985 = vunpack.c.h.b16 %v901
        %v3986 = vunpack.c.l.b16 %v902
        %v3987 = vunpack.c.h.b16 %v902
        %v3988 = vunpack.c.l.b16 %v903
        %v3989 = vunpack.c.h.b16 %v903
        %v3990 = vunpack.c.l.b16 %v904
        %v3991 = vunpack.c.h.b16 %v904
        %v3992 = vunpack.c.l.b16 %v905
        %v3993 = vunpack.c.h.b16 %v905
        %v3994 = vunpack.c.l.b16 %v906
        %v3995 = vunpack.c.h.b16 %v906
        %v3996 = vunpack.c.l.b16 %v907
        %v3997 = vunpack.c.h.b16 %v907
        %v3998 = vunpack.c.l.b16 %v908
        %v3999 = vunpack.c.h.b16 %v908
        %v4000 = vunpack.c.l.b16 %v909
        %v4001 = vunpack.c.h.b16 %v909
        %v4002 = vunpack.c.l.b16 %v910
        %v4003 = vunpack.c.h.b16 %v910
        %v4004 = vunpack.c.l.b16 %v911
        %v4005 = vunpack.c.h.b16 %v911
        %v4006 = vunpack.c.l.b16 %v912
        %v4007 = vunpack.c.h.b16 %v912
        %v4008 = vunpack.c.l.b16 %v913
        %v4009 = vunpack.c.h.b16 %v913
        %v4010 = vunpack.c.l.b16 %v914
        %v4011 = vunpack.c.h.b16 %v914
        %v4012 = vunpack.c.l.b16 %v915
        %v4013 = vunpack.c.h.b16 %v915
        %v4014 = vunpack.c.l.b16 %v916
        %v4015 = vunpack.c.h.b16 %v916
        %v4016 = vunpack.c.l.b16 %v917
        %v4017 = vunpack.c.h.b16 %v917
        %v4018 = vunpack.c.l.b16 %v918
        %v4019 = vunpack.c.h.b16 %v918
        %v4020 = vunpack.c.l.b16 %v919
        %v4021 = vunpack.c.h.b16 %v919
        %v4022 = vunpack.c.l.b16 %v920
        %v4023 = vunpack.c.h.b16 %v920
        %v4024 = vunpack.c.l.b16 %v921
        %v4025 = vunpack.c.h.b16 %v921
        %v4026 = vunpack.c.l.b16 %v922
        %v4027 = vunpack.c.h.b16 %v922
        %v4028 = vunpack.c.l.b16 %v923
        %v4029 = vunpack.c.h.b16 %v923
        %v4030 = vunpack.c.l.b16 %v924
        %v4031 = vunpack.c.h.b16 %v924
        %v4032 = vunpack.c.l.b16 %v925
        %v4033 = vunpack.c.h.b16 %v925
        %v4034 = vunpack.c.l.b16 %v926
        %v4035 = vunpack.c.h.b16 %v926
        %v4036 = vunpack.c.l.b16 %v927
        %v4037 = vunpack.c.h.b16 %v927
        %v4038 = vunpack.c.l.b16 %v928
        %v4039 = vunpack.c.h.b16 %v928
        %v4040 = vunpack.c.l.b16 %v929
        %v4041 = vunpack.c.h.b16 %v929
        %v4042 = vunpack.c.l.b16 %v930
        %v4043 = vunpack.c.h.b16 %v930
        %v4044 = vunpack.c.l.b16 %v931
        %v4045 = vunpack.c.h.b16 %v931
        %v4046 = vunpack.c.l.b16 %v932
        %v4047 = vunpack.c.h.b16 %v932
        %v4048 = vunpack.c.l.b16 %v933
        %v4049 = vunpack.c.h.b16 %v933
        %v4050 = vunpack.c.l.b16 %v934
        %v4051 = vunpack.c.h.b16 %v934
        %v4052 = vunpack.c.l.b16 %v935
        %v4053 = vunpack.c.h.b16 %v935
        %v4054 = vunpack.c.l.b16 %v936
        %v4055 = vunpack.c.h.b16 %v936
        %v4056 = vunpack.c.l.b16 %v937
        %v4057 = vunpack.c.h.b16 %v937
        %v4058 = vunpack.c.l.b16 %v938
        %v4059 = vunpack.c.h.b16 %v938
        %v4060 = vunpack.c.l.b16 %v939
        %v4061 = vunpack.c.h.b16 %v939
        %v4062 = vunpack.c.l.b16 %v940
        %v4063 = vunpack.c.h.b16 %v940
        %v4064 = vunpack.c.l.b16 %v941
        %v4065 = vunpack.c.h.b16 %v941
        %v4066 = vunpack.c.l.b16 %v942
        %v4067 = vunpack.c.h.b16 %v942
        %v4068 = vunpack.c.l.b16 %v943
        %v4069 = vunpack.c.h.b16 %v943
        %v4070 = vunpack.c.l.b16 %v944
        %v4071 = vunpack.c.h.b16 %v944
        %v4072 = vunpack.c.l.b16 %v945
        %v4073 = vunpack.c.h.b16 %v945
        %v4074 = vunpack.c.l.b16 %v946
        %v4075 = vunpack.c.h.b16 %v946
        %v4076 = vunpack.c.l.b16 %v947
        %v4077 = vunpack.c.h.b16 %v947
        %v4078 = vunpack.c.l.b16 %v948
        %v4079 = vunpack.c.h.b16 %v948
        %v4080 = vunpack.c.l.b16 %v949
        %v4081 = vunpack.c.h.b16 %v949
        %v4082 = vunpack.c.l.b16 %v950
        %v4083 = vunpack.c.h.b16 %v950
        %v4084 = vunpack.c.l.b16 %v951
        %v4085 = vunpack.c.h.b16 %v951
        %v4086 = vunpack.c.l.b16 %v952
        %v4087 = vunpack.c.h.b16 %v952
        %v4088 = vunpack.c.l.b16 %v953
        %v4089 = vunpack.c.h.b16 %v953
        %v4090 = vunpack.c.l.b16 %v954
        %v4091 = vunpack.c.h.b16 %v954
        %v4092 = vunpack.c.l.b16 %v955
        %v4093 = vunpack.c.h.b16 %v955
        %v4094 = vunpack.c.l.b16 %v956
        %v4095 = vunpack.c.h.b16 %v956
        %v4096 = vunpack.c.l.b16 %v957
        %v4097 = vunpack.c.h.b16 %v957
        %v4098 = vunpack.c.l.b16 %v958
        %v4099 = vunpack.c.h.b16 %v958
        %v4100 = vunpack.c.l.b16 %v959
        %v4101 = vunpack.c.h.b16 %v959
        %v4102 = vunpack.c.l.b16 %v960
        %v4103 = vunpack.c.h.b16 %v960
        %v4104 = vunpack.c.l.b16 %v961
        %v4105 = vunpack.c.h.b16 %v961
        %v4106 = vunpack.c.l.b16 %v962
        %v4107 = vunpack.c.h.b16 %v962
        %v4108 = vunpack.c.l.b16 %v963
        %v4109 = vunpack.c.h.b16 %v963
        %v4110 = vunpack.c.l.b16 %v964
        %v4111 = vunpack.c.h.b16 %v964
        %v4112 = vunpack.c.l.b16 %v965
        %v4113 = vunpack.c.h.b16 %v965
        %v4114 = vunpack.c.l.b16 %v966
        %v4115 = vunpack.c.h.b16 %v966
        %v4116 = vunpack.c.l.b16 %v967
        %v4117 = vunpack.c.h.b16 %v967
        %v4118 = vunpack.c.l.b16 %v968
        %v4119 = vunpack.c.h.b16 %v968
        %v4120 = vunpack.c.l.b16 %v969
        %v4121 = vunpack.c.h.b16 %v969
        %v4122 = vunpack.c.l.b16 %v970
        %v4123 = vunpack.c.h.b16 %v970
        %v4124 = vunpack.c.l.b16 %v971
        %v4125 = vunpack.c.h.b16 %v971
        %v4126 = vunpack.c.l.b16 %v972
        %v4127 = vunpack.c.h.b16 %v972
        %v4128 = vunpack.c.l.b16 %v973
        %v4129 = vunpack.c.h.b16 %v973
        %v4130 = vunpack.c.l.b16 %v974
        %v4131 = vunpack.c.h.b16 %v974
        %v4132 = vunpack.c.l.b16 %v975
        %v4133 = vunpack.c.h.b16 %v975
        %v4134 = vunpack.c.l.b16 %v976
        %v4135 = vunpack.c.h.b16 %v976
        %v4136 = vunpack.c.l.b16 %v977
        %v4137 = vunpack.c.h.b16 %v977
        %v4138 = vunpack.c.l.b16 %v978
        %v4139 = vunpack.c.h.b16 %v978
        %v4140 = vunpack.c.l.b16 %v979
        %v4141 = vunpack.c.h.b16 %v979
        %v4142 = vunpack.c.l.b16 %v980
        %v4143 = vunpack.c.h.b16 %v980
        %v4144 = vunpack.c.l.b16 %v981
        %v4145 = vunpack.c.h.b16 %v981
        %v4146 = vunpack.c.l.b16 %v982
        %v4147 = vunpack.c.h.b16 %v982
        %v4148 = vunpack.c.l.b16 %v983
        %v4149 = vunpack.c.h.b16 %v983
        %v4150 = vunpack.c.l.b16 %v984
        %v4151 = vunpack.c.h.b16 %v984
        %v4152 = vunpack.c.l.b16 %v985
        %v4153 = vunpack.c.h.b16 %v985
        %v4154 = vunpack.c.l.b16 %v986
        %v4155 = vunpack.c.h.b16 %v986
        %v4156 = vunpack.c.l.b16 %v987
        %v4157 = vunpack.c.h.b16 %v987
        %v4158 = vunpack.c.l.b16 %v988
        %v4159 = vunpack.c.h.b16 %v988
        %v4160 = vunpack.c.l.b16 %v989
        %v4161 = vunpack.c.h.b16 %v989
        %v4162 = vunpack.c.l.b16 %v990
        %v4163 = vunpack.c.h.b16 %v990
        %v4164 = vunpack.c.l.b16 %v991
        %v4165 = vunpack.c.h.b16 %v991
        %v4166 = vunpack.c.l.b16 %v992
        %v4167 = vunpack.c.h.b16 %v992
        %v4168 = vunpack.c.l.b16 %v993
        %v4169 = vunpack.c.h.b16 %v993
        %v4170 = vunpack.c.l.b16 %v994
        %v4171 = vunpack.c.h.b16 %v994
        %v4172 = vunpack.c.l.b16 %v995
        %v4173 = vunpack.c.h.b16 %v995
        %v4174 = vunpack.c.l.b16 %v996
        %v4175 = vunpack.c.h.b16 %v996
        %v4176 = vunpack.c.l.b16 %v997
        %v4177 = vunpack.c.h.b16 %v997
        %v4178 = vunpack.c.l.b16 %v998
        %v4179 = vunpack.c.h.b16 %v998
        %v4180 = vunpack.c.l.b16 %v999
        %v4181 = vunpack.c.h.b16 %v999
        %v4182 = vunpack.c.l.b16 %v1000
        %v4183 = vunpack.c.h.b16 %v1000
        %v4184 = vunpack.c.l.b16 %v1001
        %v4185 = vunpack.c.h.b16 %v1001
        %v4186 = vunpack.c.l.b16 %v1002
        %v4187 = vunpack.c.h.b16 %v1002
        %v4188 = vunpack.c.l.b16 %v1003
        %v4189 = vunpack.c.h.b16 %v1003
        %v4190 = vunpack.c.l.b16 %v1004
        %v4191 = vunpack.c.h.b16 %v1004
        %v4192 = vunpack.c.l.b16 %v1005
        %v4193 = vunpack.c.h.b16 %v1005
        %v4194 = vunpack.c.l.b16 %v1006
        %v4195 = vunpack.c.h.b16 %v1006
        %v4196 = vunpack.c.l.b16 %v1007
        %v4197 = vunpack.c.h.b16 %v1007
        %v4198 = vunpack.c.l.b16 %v1008
        %v4199 = vunpack.c.h.b16 %v1008
        %v4200 = vunpack.c.l.b16 %v1009
        %v4201 = vunpack.c.h.b16 %v1009
        %v4202 = vunpack.c.l.b16 %v1010
        %v4203 = vunpack.c.h.b16 %v1010
        %v4204 = vunpack.c.l.b16 %v1011
        %v4205 = vunpack.c.h.b16 %v1011
        %v4206 = vunpack.c.l.b16 %v1012
        %v4207 = vunpack.c.h.b16 %v1012
        %v4208 = vunpack.c.l.b16 %v1013
        %v4209 = vunpack.c.h.b16 %v1013
        %v4210 = vunpack.c.l.b16 %v1014
        %v4211 = vunpack.c.h.b16 %v1014
        %v4212 = vunpack.c.l.b16 %v1015
        %v4213 = vunpack.c.h.b16 %v1015
        %v4214 = vunpack.c.l.b16 %v1016
        %v4215 = vunpack.c.h.b16 %v1016
        %v4216 = vunpack.c.l.b16 %v1017
        %v4217 = vunpack.c.h.b16 %v1017
        %v4218 = vunpack.c.l.b16 %v1018
        %v4219 = vunpack.c.h.b16 %v1018
        %v4220 = vunpack.c.l.b16 %v1019
        %v4221 = vunpack.c.h.b16 %v1019
        %v4222 = vunpack.c.l.b16 %v1020
        %v4223 = vunpack.c.h.b16 %v1020
        %v4224 = vunpack.c.l.b16 %v1021
        %v4225 = vunpack.c.h.b16 %v1021
        %v4226 = vunpack.c.l.b16 %v1022
        %v4227 = vunpack.c.h.b16 %v1022
        %v4228 = vunpack.c.l.b16 %v1023
        %v4229 = vunpack.c.h.b16 %v1023
        %v4230 = vunpack.c.l.b16 %v1024
        %v4231 = vunpack.c.h.b16 %v1024
        %v4232 = vunpack.c.l.b16 %v1025
        %v4233 = vunpack.c.h.b16 %v1025
        %v4234 = vunpack.c.l.b16 %v1026
        %v4235 = vunpack.c.h.b16 %v1026
        %v4236 = vunpack.c.l.b16 %v1027
        %v4237 = vunpack.c.h.b16 %v1027
        %v4238 = vunpack.c.l.b16 %v1028
        %v4239 = vunpack.c.h.b16 %v1028
        %v4240 = vunpack.c.l.b16 %v1029
        %v4241 = vunpack.c.h.b16 %v1029
        %v4242 = vunpack.c.l.b16 %v1030
        %v4243 = vunpack.c.h.b16 %v1030
        %v4244 = vunpack.c.l.b16 %v1031
        %v4245 = vunpack.c.h.b16 %v1031
        %v4246 = vunpack.c.l.b16 %v1032
        %v4247 = vunpack.c.h.b16 %v1032
        %v4248 = vunpack.c.l.b16 %v1033
        %v4249 = vunpack.c.h.b16 %v1033
        %v4250 = vunpack.c.l.b16 %v1034
        %v4251 = vunpack.c.h.b16 %v1034
        %v4252 = vunpack.c.l.b16 %v1035
        %v4253 = vunpack.c.h.b16 %v1035
        %v4254 = vunpack.c.l.b16 %v1036
        %v4255 = vunpack.c.h.b16 %v1036
        %v4256 = vunpack.c.l.b16 %v1037
        %v4257 = vunpack.c.h.b16 %v1037
        %v4258 = vunpack.c.l.b16 %v1038
        %v4259 = vunpack.c.h.b16 %v1038
        %v4260 = vunpack.c.l.b16 %v1039
        %v4261 = vunpack.c.h.b16 %v1039
        %v4262 = vunpack.c.l.b16 %v1040
        %v4263 = vunpack.c.h.b16 %v1040
        %v4264 = vunpack.c.l.b16 %v1041
        %v4265 = vunpack.c.h.b16 %v1041
        %v4266 = vunpack.c.l.b16 %v1042
        %v4267 = vunpack.c.h.b16 %v1042
        %v4268 = vunpack.c.l.b16 %v1043
        %v4269 = vunpack.c.h.b16 %v1043
        %v4270 = vunpack.c.l.b16 %v1044
        %v4271 = vunpack.c.h.b16 %v1044
        %v4272 = vunpack.c.l.b16 %v1045
        %v4273 = vunpack.c.h.b16 %v1045
        %v4274 = vunpack.c.l.b16 %v1046
        %v4275 = vunpack.c.h.b16 %v1046
        %v4276 = vunpack.c.l.b16 %v1047
        %v4277 = vunpack.c.h.b16 %v1047
        %v4278 = vunpack.c.l.b16 %v1048
        %v4279 = vunpack.c.h.b16 %v1048
        %v4280 = vunpack.c.l.b16 %v1049
        %v4281 = vunpack.c.h.b16 %v1049
        %v4282 = vunpack.c.l.b16 %v1050
        %v4283 = vunpack.c.h.b16 %v1050
        %v4284 = vunpack.c.l.b16 %v1051
        %v4285 = vunpack.c.h.b16 %v1051
        %v4286 = vunpack.c.l.b16 %v1052
        %v4287 = vunpack.c.h.b16 %v1052
        %v4288 = vunpack.c.l.b16 %v1053
        %v4289 = vunpack.c.h.b16 %v1053
        %v4290 = vunpack.c.l.b16 %v1054
        %v4291 = vunpack.c.h.b16 %v1054
        %v4292 = vunpack.c.l.b16 %v1055
        %v4293 = vunpack.c.h.b16 %v1055
        %v4294 = vunpack.c.l.b16 %v1056
        %v4295 = vunpack.c.h.b16 %v1056
        %v4296 = vunpack.c.l.b16 %v1057
        %v4297 = vunpack.c.h.b16 %v1057
        %v4298 = vunpack.c.l.b16 %v1058
        %v4299 = vunpack.c.h.b16 %v1058
        %v4300 = vunpack.c.l.b16 %v1059
        %v4301 = vunpack.c.h.b16 %v1059
        %v4302 = vunpack.c.l.b16 %v1060
        %v4303 = vunpack.c.h.b16 %v1060
        %v4304 = vunpack.c.l.b16 %v1061
        %v4305 = vunpack.c.h.b16 %v1061
        %v4306 = vunpack.c.l.b16 %v1062
        %v4307 = vunpack.c.h.b16 %v1062
        %v4308 = vunpack.c.l.b16 %v1063
        %v4309 = vunpack.c.h.b16 %v1063
        %v4310 = vunpack.c.l.b16 %v1064
        %v4311 = vunpack.c.h.b16 %v1064
        %v4312 = vunpack.c.l.b16 %v1065
        %v4313 = vunpack.c.h.b16 %v1065
        %v4314 = vunpack.c.l.b16 %v1066
        %v4315 = vunpack.c.h.b16 %v1066
        %v4316 = vunpack.c.l.b16 %v1067
        %v4317 = vunpack.c.h.b16 %v1067
        %v4318 = vunpack.c.l.b16 %v1068
        %v4319 = vunpack.c.h.b16 %v1068
        %v4320 = vunpack.c.l.b16 %v1069
        %v4321 = vunpack.c.h.b16 %v1069
        %v4322 = vunpack.c.l.b16 %v1070
        %v4323 = vunpack.c.h.b16 %v1070
        %v4324 = vunpack.c.l.b16 %v1071
        %v4325 = vunpack.c.h.b16 %v1071
        %v4326 = vunpack.c.l.b16 %v1072
        %v4327 = vunpack.c.h.b16 %v1072
        %v4328 = vunpack.c.l.b16 %v1073
        %v4329 = vunpack.c.h.b16 %v1073
        %v4330 = vunpack.c.l.b16 %v1074
        %v4331 = vunpack.c.h.b16 %v1074
        %v4332 = vunpack.c.l.b16 %v1075
        %v4333 = vunpack.c.h.b16 %v1075
        %v4334 = vunpack.c.l.b16 %v1076
        %v4335 = vunpack.c.h.b16 %v1076
        %v4336 = vunpack.c.l.b16 %v1077
        %v4337 = vunpack.c.h.b16 %v1077
        %v4338 = vunpack.c.l.b16 %v1078
        %v4339 = vunpack.c.h.b16 %v1078
        %v4340 = vunpack.c.l.b16 %v1079
        %v4341 = vunpack.c.h.b16 %v1079
        %v4342 = vunpack.c.l.b16 %v1080
        %v4343 = vunpack.c.h.b16 %v1080
        %v4344 = vunpack.c.l.b16 %v1081
        %v4345 = vunpack.c.h.b16 %v1081
        %v4346 = vunpack.c.l.b16 %v1082
        %v4347 = vunpack.c.h.b16 %v1082
        %v4348 = vunpack.c.l.b16 %v1083
        %v4349 = vunpack.c.h.b16 %v1083
        %v4350 = vunpack.c.l.b16 %v1084
        %v4351 = vunpack.c.h.b16 %v1084
        %v4352 = vunpack.c.l.b16 %v1085
        %v4353 = vunpack.c.h.b16 %v1085
        %v4354 = vunpack.c.l.b16 %v1086
        %v4355 = vunpack.c.h.b16 %v1086
        %v4356 = vunpack.c.l.b16 %v1087
        %v4357 = vunpack.c.h.b16 %v1087
        %v4358 = vunpack.c.l.b16 %v1088
        %v4359 = vunpack.c.h.b16 %v1088
        %v4360 = vunpack.c.l.b16 %v1089
        %v4361 = vunpack.c.h.b16 %v1089
        %v4362 = vunpack.c.l.b16 %v1090
        %v4363 = vunpack.c.h.b16 %v1090
        %v4364 = vunpack.c.l.b16 %v1091
        %v4365 = vunpack.c.h.b16 %v1091
        %v4366 = vunpack.c.l.b16 %v1092
        %v4367 = vunpack.c.h.b16 %v1092
        %v4368 = vunpack.c.l.b16 %v1093
        %v4369 = vunpack.c.h.b16 %v1093
        %v4370 = vunpack.c.l.b16 %v1094
        %v4371 = vunpack.c.h.b16 %v1094
        %v4372 = vunpack.c.l.b16 %v1095
        %v4373 = vunpack.c.h.b16 %v1095
        %v4374 = vunpack.c.l.b16 %v1096
        %v4375 = vunpack.c.h.b16 %v1096
        %v4376 = vunpack.c.l.b16 %v1097
        %v4377 = vunpack.c.h.b16 %v1097
        %v4378 = vunpack.c.l.b16 %v1098
        %v4379 = vunpack.c.h.b16 %v1098
        %v4380 = vunpack.c.l.b16 %v1099
        %v4381 = vunpack.c.h.b16 %v1099
        %v4382 = vunpack.c.l.b16 %v1100
        %v4383 = vunpack.c.h.b16 %v1100
        %v4384 = vunpack.c.l.b16 %v1101
        %v4385 = vunpack.c.h.b16 %v1101
        %v4386 = vunpack.c.l.b16 %v1102
        %v4387 = vunpack.c.h.b16 %v1102
        %v4388 = vunpack.c.l.b16 %v1103
        %v4389 = vunpack.c.h.b16 %v1103
        %v4390 = vunpack.c.l.b16 %v1104
        %v4391 = vunpack.c.h.b16 %v1104
        %v4392 = vunpack.c.l.b16 %v1105
        %v4393 = vunpack.c.h.b16 %v1105
        %v4394 = vunpack.c.l.b16 %v1106
        %v4395 = vunpack.c.h.b16 %v1106
        %v4396 = vunpack.c.l.b16 %v1107
        %v4397 = vunpack.c.h.b16 %v1107
        %v4398 = vunpack.c.l.b16 %v1108
        %v4399 = vunpack.c.h.b16 %v1108
        %v4400 = vunpack.c.l.b16 %v1109
        %v4401 = vunpack.c.h.b16 %v1109
        %v4402 = vunpack.c.l.b16 %v1110
        %v4403 = vunpack.c.h.b16 %v1110
        %v4404 = vunpack.c.l.b16 %v1111
        %v4405 = vunpack.c.h.b16 %v1111
        %v4406 = vunpack.c.l.b16 %v1112
        %v4407 = vunpack.c.h.b16 %v1112
        %v4408 = vunpack.c.l.b16 %v1113
        %v4409 = vunpack.c.h.b16 %v1113
        %v4410 = vunpack.c.l.b16 %v1114
        %v4411 = vunpack.c.h.b16 %v1114
        %v4412 = vunpack.c.l.b16 %v1115
        %v4413 = vunpack.c.h.b16 %v1115
        %v4414 = vunpack.c.l.b16 %v1116
        %v4415 = vunpack.c.h.b16 %v1116
        %v4416 = vunpack.c.l.b16 %v1117
        %v4417 = vunpack.c.h.b16 %v1117
        %v4418 = vunpack.c.l.b16 %v1118
        %v4419 = vunpack.c.h.b16 %v1118
        %v4420 = vunpack.c.l.b16 %v1119
        %v4421 = vunpack.c.h.b16 %v1119
        %v4422 = vunpack.c.l.b16 %v1120
        %v4423 = vunpack.c.h.b16 %v1120
        %v4424 = vunpack.c.l.b16 %v1121
        %v4425 = vunpack.c.h.b16 %v1121
        %v4426 = vunpack.c.l.b16 %v1122
        %v4427 = vunpack.c.h.b16 %v1122
        %v4428 = vunpack.c.l.b16 %v1123
        %v4429 = vunpack.c.h.b16 %v1123
        %v4430 = vunpack.c.l.b16 %v1124
        %v4431 = vunpack.c.h.b16 %v1124
        %v4432 = vunpack.c.l.b16 %v1125
        %v4433 = vunpack.c.h.b16 %v1125
        %v4434 = vunpack.c.l.b16 %v1126
        %v4435 = vunpack.c.h.b16 %v1126
        %v4436 = vunpack.c.l.b16 %v1127
        %v4437 = vunpack.c.h.b16 %v1127
        %v4438 = vunpack.c.l.b16 %v1128
        %v4439 = vunpack.c.h.b16 %v1128
        %v4440 = vunpack.c.l.b16 %v1129
        %v4441 = vunpack.c.h.b16 %v1129
        %v4442 = vunpack.c.l.b16 %v1130
        %v4443 = vunpack.c.h.b16 %v1130
        %v4444 = vunpack.c.l.b16 %v1131
        %v4445 = vunpack.c.h.b16 %v1131
        %v4446 = vunpack.c.l.b16 %v1132
        %v4447 = vunpack.c.h.b16 %v1132
        %v4448 = vunpack.c.l.b16 %v1133
        %v4449 = vunpack.c.h.b16 %v1133
        %v4450 = vunpack.c.l.b16 %v1134
        %v4451 = vunpack.c.h.b16 %v1134
        %v4452 = vunpack.c.l.b16 %v1135
        %v4453 = vunpack.c.h.b16 %v1135
        %v4454 = vunpack.c.l.b16 %v1136
        %v4455 = vunpack.c.h.b16 %v1136
        %v4456 = vunpack.c.l.b16 %v1137
        %v4457 = vunpack.c.h.b16 %v1137
        %v4458 = vunpack.c.l.b16 %v1138
        %v4459 = vunpack.c.h.b16 %v1138
        %v4460 = vunpack.c.l.b16 %v1139
        %v4461 = vunpack.c.h.b16 %v1139
        %v4462 = vunpack.c.l.b16 %v1140
        %v4463 = vunpack.c.h.b16 %v1140
        %v4464 = vunpack.c.l.b16 %v1141
        %v4465 = vunpack.c.h.b16 %v1141
        %v4466 = vunpack.c.l.b16 %v1142
        %v4467 = vunpack.c.h.b16 %v1142
        %v4468 = vunpack.c.l.b16 %v1143
        %v4469 = vunpack.c.h.b16 %v1143
        %v4470 = vunpack.c.l.b16 %v1144
        %v4471 = vunpack.c.h.b16 %v1144
        %v4472 = vunpack.c.l.b16 %v1145
        %v4473 = vunpack.c.h.b16 %v1145
        %v4474 = vunpack.c.l.b16 %v1146
        %v4475 = vunpack.c.h.b16 %v1146
        %v4476 = vunpack.c.l.b16 %v1147
        %v4477 = vunpack.c.h.b16 %v1147
        %v4478 = vunpack.c.l.b16 %v1148
        %v4479 = vunpack.c.h.b16 %v1148
        %v4480 = vunpack.c.l.b16 %v1149
        %v4481 = vunpack.c.h.b16 %v1149
        %v4482 = vunpack.c.l.b16 %v1150
        %v4483 = vunpack.c.h.b16 %v1150
        %v4484 = vunpack.c.l.b16 %v1151
        %v4485 = vunpack.c.h.b16 %v1151
        %v4486 = vunpack.c.l.b16 %v1152
        %v4487 = vunpack.c.h.b16 %v1152
        %v4488 = vunpack.c.l.b16 %v1153
        %v4489 = vunpack.c.h.b16 %v1153
        %v4490 = vunpack.c.l.b16 %v1154
        %v4491 = vunpack.c.h.b16 %v1154
        %v4492 = vunpack.c.l.b16 %v1155
        %v4493 = vunpack.c.h.b16 %v1155
        %v4494 = vunpack.c.l.b16 %v1156
        %v4495 = vunpack.c.h.b16 %v1156
        %v4496 = vunpack.c.l.b16 %v1157
        %v4497 = vunpack.c.h.b16 %v1157
        %v4498 = vunpack.c.l.b16 %v1158
        %v4499 = vunpack.c.h.b16 %v1158
        %v4500 = vunpack.c.l.b16 %v1159
        %v4501 = vunpack.c.h.b16 %v1159
        %v4502 = vunpack.c.l.b16 %v1160
        %v4503 = vunpack.c.h.b16 %v1160
        %v4504 = vunpack.c.l.b16 %v1161
        %v4505 = vunpack.c.h.b16 %v1161
        %v4506 = vunpack.c.l.b16 %v1162
        %v4507 = vunpack.c.h.b16 %v1162
        %v4508 = vunpack.c.l.b16 %v1163
        %v4509 = vunpack.c.h.b16 %v1163
        %v4510 = vunpack.c.l.b16 %v1164
        %v4511 = vunpack.c.h.b16 %v1164
        %v4512 = vunpack.c.l.b16 %v1165
        %v4513 = vunpack.c.h.b16 %v1165
        %v4514 = vunpack.c.l.b16 %v1166
        %v4515 = vunpack.c.h.b16 %v1166
        %v4516 = vunpack.c.l.b16 %v1167
        %v4517 = vunpack.c.h.b16 %v1167
        %v4518 = vunpack.c.l.b16 %v1168
        %v4519 = vunpack.c.h.b16 %v1168
        %v4520 = vunpack.c.l.b16 %v1169
        %v4521 = vunpack.c.h.b16 %v1169
        %v4522 = vunpack.c.l.b16 %v1170
        %v4523 = vunpack.c.h.b16 %v1170
        %v4524 = vunpack.c.l.b16 %v1171
        %v4525 = vunpack.c.h.b16 %v1171
        %v4526 = vunpack.c.l.b16 %v1172
        %v4527 = vunpack.c.h.b16 %v1172
        %v4528 = vunpack.c.l.b16 %v1173
        %v4529 = vunpack.c.h.b16 %v1173
        %v4530 = vunpack.c.l.b16 %v1174
        %v4531 = vunpack.c.h.b16 %v1174
        %v4532 = vunpack.c.l.b16 %v1175
        %v4533 = vunpack.c.h.b16 %v1175
        %v4534 = vunpack.c.l.b16 %v1176
        %v4535 = vunpack.c.h.b16 %v1176
        %v4536 = vunpack.c.l.b16 %v1177
        %v4537 = vunpack.c.h.b16 %v1177
        %v4538 = vunpack.c.l.b16 %v1178
        %v4539 = vunpack.c.h.b16 %v1178
        %v4540 = vunpack.c.l.b16 %v1179
        %v4541 = vunpack.c.h.b16 %v1179
        %v4542 = vunpack.c.l.b16 %v1180
        %v4543 = vunpack.c.h.b16 %v1180
        %v4544 = vunpack.c.l.b16 %v1181
        %v4545 = vunpack.c.h.b16 %v1181
        %v4546 = vunpack.c.l.b16 %v1182
        %v4547 = vunpack.c.h.b16 %v1182
        %v4548 = vunpack.c.l.b16 %v1183
        %v4549 = vunpack.c.h.b16 %v1183
        %v4550 = vunpack.c.l.b16 %v1184
        %v4551 = vunpack.c.h.b16 %v1184
        %v4552 = vunpack.c.l.b16 %v1185
        %v4553 = vunpack.c.h.b16 %v1185
        %v4554 = vunpack.c.l.b16 %v1186
        %v4555 = vunpack.c.h.b16 %v1186
        %v4556 = vunpack.c.l.b16 %v1187
        %v4557 = vunpack.c.h.b16 %v1187
        %v4558 = vunpack.c.l.b16 %v1188
        %v4559 = vunpack.c.h.b16 %v1188
        %v4560 = vunpack.c.l.b16 %v1189
        %v4561 = vunpack.c.h.b16 %v1189
        %v4562 = vunpack.c.l.b16 %v1190
        %v4563 = vunpack.c.h.b16 %v1190
        %v4564 = vunpack.c.l.b16 %v1191
        %v4565 = vunpack.c.h.b16 %v1191
        %v4566 = vunpack.c.l.b16 %v1192
        %v4567 = vunpack.c.h.b16 %v1192
        %v4568 = vunpack.c.l.b16 %v1193
        %v4569 = vunpack.c.h.b16 %v1193
        %v4570 = vunpack.c.l.b16 %v1194
        %v4571 = vunpack.c.h.b16 %v1194
        %v4572 = vunpack.c.l.b16 %v1195
        %v4573 = vunpack.c.h.b16 %v1195
        %v4574 = vunpack.c.l.b16 %v1196
        %v4575 = vunpack.c.h.b16 %v1196
        %v4576 = vunpack.c.l.b16 %v1197
        %v4577 = vunpack.c.h.b16 %v1197
        %v4578 = vunpack.c.l.b16 %v1198
        %v4579 = vunpack.c.h.b16 %v1198
        %v4580 = vunpack.c.l.b16 %v1199
        %v4581 = vunpack.c.h.b16 %v1199
        %v4582 = vunpack.c.l.b16 %v1200
        %v4583 = vunpack.c.h.b16 %v1200
        %v4584 = vunpack.c.l.b16 %v1201
        %v4585 = vunpack.c.h.b16 %v1201
        %v4586 = vunpack.c.l.b16 %v1202
        %v4587 = vunpack.c.h.b16 %v1202
        %v4588 = vunpack.c.l.b16 %v1203
        %v4589 = vunpack.c.h.b16 %v1203
        %v4590 = vunpack.c.l.b16 %v1204
        %v4591 = vunpack.c.h.b16 %v1204
        %v4592 = vunpack.c.l.b16 %v1205
        %v4593 = vunpack.c.h.b16 %v1205
        %v4594 = vunpack.c.l.b16 %v1206
        %v4595 = vunpack.c.h.b16 %v1206
        %v4596 = vunpack.c.l.b16 %v1207
        %v4597 = vunpack.c.h.b16 %v1207
        %v4598 = vunpack.c.l.b16 %v1208
        %v4599 = vunpack.c.h.b16 %v1208
        %v4600 = vunpack.c.l.b16 %v1209
        %v4601 = vunpack.c.h.b16 %v1209
        %v4602 = vunpack.c.l.b16 %v1210
        %v4603 = vunpack.c.h.b16 %v1210
        %v4604 = vunpack.c.l.b16 %v1211
        %v4605 = vunpack.c.h.b16 %v1211
        %v4606 = vunpack.c.l.b16 %v1212
        %v4607 = vunpack.c.h.b16 %v1212
        %v4608 = vunpack.c.l.b16 %v1213
        %v4609 = vunpack.c.h.b16 %v1213
        %v4610 = vunpack.c.l.b16 %v1214
        %v4611 = vunpack.c.h.b16 %v1214
        %v4612 = vunpack.c.l.b16 %v1215
        %v4613 = vunpack.c.h.b16 %v1215
        %v4614 = vunpack.c.l.b16 %v1216
        %v4615 = vunpack.c.h.b16 %v1216
        %v4616 = vunpack.c.l.b16 %v1217
        %v4617 = vunpack.c.h.b16 %v1217
        %v4618 = vunpack.c.l.b16 %v1218
        %v4619 = vunpack.c.h.b16 %v1218
        %v4620 = vunpack.c.l.b16 %v1219
        %v4621 = vunpack.c.h.b16 %v1219
        %v4622 = vunpack.c.l.b16 %v1220
        %v4623 = vunpack.c.h.b16 %v1220
        %v4624 = vunpack.c.l.b16 %v1221
        %v4625 = vunpack.c.h.b16 %v1221
        %v4626 = vunpack.c.l.b16 %v1222
        %v4627 = vunpack.c.h.b16 %v1222
        %v4628 = vunpack.c.l.b16 %v1223
        %v4629 = vunpack.c.h.b16 %v1223
        %v4630 = vunpack.c.l.b16 %v1224
        %v4631 = vunpack.c.h.b16 %v1224
        %v4632 = vunpack.c.l.b16 %v1225
        %v4633 = vunpack.c.h.b16 %v1225
        %v4634 = vunpack.c.l.b16 %v1226
        %v4635 = vunpack.c.h.b16 %v1226
        %v4636 = vunpack.c.l.b16 %v1227
        %v4637 = vunpack.c.h.b16 %v1227
        %v4638 = vunpack.c.l.b16 %v1228
        %v4639 = vunpack.c.h.b16 %v1228
        %v4640 = vunpack.c.l.b16 %v1229
        %v4641 = vunpack.c.h.b16 %v1229
        %v4642 = vunpack.c.l.b16 %v1230
        %v4643 = vunpack.c.h.b16 %v1230
        %v4644 = vunpack.c.l.b16 %v1231
        %v4645 = vunpack.c.h.b16 %v1231
        %v4646 = vunpack.c.l.b16 %v1232
        %v4647 = vunpack.c.h.b16 %v1232
        %v4648 = vunpack.c.l.b16 %v1233
        %v4649 = vunpack.c.h.b16 %v1233
        %v4650 = vunpack.c.l.b16 %v1234
        %v4651 = vunpack.c.h.b16 %v1234
        %v4652 = vunpack.c.l.b16 %v1235
        %v4653 = vunpack.c.h.b16 %v1235
        %v4654 = vunpack.c.l.b16 %v1236
        %v4655 = vunpack.c.h.b16 %v1236
        %v4656 = vunpack.c.l.b16 %v1237
        %v4657 = vunpack.c.h.b16 %v1237
        %v4658 = vunpack.c.l.b16 %v1238
        %v4659 = vunpack.c.h.b16 %v1238
        %v4660 = vunpack.c.l.b16 %v1239
        %v4661 = vunpack.c.h.b16 %v1239
        %v4662 = vunpack.c.l.b16 %v1240
        %v4663 = vunpack.c.h.b16 %v1240
        %v4664 = vunpack.c.l.b16 %v1241
        %v4665 = vunpack.c.h.b16 %v1241
        %v4666 = vunpack.c.l.b16 %v1242
        %v4667 = vunpack.c.h.b16 %v1242
        %v4668 = vunpack.c.l.b16 %v1243
        %v4669 = vunpack.c.h.b16 %v1243
        %v4670 = vunpack.c.l.b16 %v1244
        %v4671 = vunpack.c.h.b16 %v1244
        %v4672 = vunpack.c.l.b16 %v1245
        %v4673 = vunpack.c.h.b16 %v1245
        %v4674 = vunpack.c.l.b16 %v1246
        %v4675 = vunpack.c.h.b16 %v1246
        %v4676 = vunpack.c.l.b16 %v1247
        %v4677 = vunpack.c.h.b16 %v1247
        %v4678 = vunpack.c.l.b16 %v1248
        %v4679 = vunpack.c.h.b16 %v1248
        %v4680 = vunpack.c.l.b16 %v1249
        %v4681 = vunpack.c.h.b16 %v1249
        %v4682 = vunpack.c.l.b16 %v1250
        %v4683 = vunpack.c.h.b16 %v1250
        %v4684 = vunpack.c.l.b16 %v1251
        %v4685 = vunpack.c.h.b16 %v1251
        %v4686 = vunpack.c.l.b16 %v1252
        %v4687 = vunpack.c.h.b16 %v1252
        %v4688 = vunpack.c.l.b16 %v1253
        %v4689 = vunpack.c.h.b16 %v1253
        %v4690 = vunpack.c.l.b16 %v1254
        %v4691 = vunpack.c.h.b16 %v1254
        %v4692 = vunpack.c.l.b16 %v1255
        %v4693 = vunpack.c.h.b16 %v1255
        %v4694 = vunpack.c.l.b16 %v1256
        %v4695 = vunpack.c.h.b16 %v1256
        %v4696 = vunpack.c.l.b16 %v1257
        %v4697 = vunpack.c.h.b16 %v1257
        %v4698 = vunpack.c.l.b16 %v1258
        %v4699 = vunpack.c.h.b16 %v1258
        %v4700 = vunpack.c.l.b16 %v1259
        %v4701 = vunpack.c.h.b16 %v1259
        %v4702 = vunpack.c.l.b16 %v1260
        %v4703 = vunpack.c.h.b16 %v1260
        %v4704 = vunpack.c.l.b16 %v1261
        %v4705 = vunpack.c.h.b16 %v1261
        %v4706 = vunpack.c.l.b16 %v1262
        %v4707 = vunpack.c.h.b16 %v1262
        %v4708 = vunpack.c.l.b16 %v1263
        %v4709 = vunpack.c.h.b16 %v1263
        %v4710 = vunpack.c.l.b16 %v1264
        %v4711 = vunpack.c.h.b16 %v1264
        %v4712 = vunpack.c.l.b16 %v1265
        %v4713 = vunpack.c.h.b16 %v1265
        %v4714 = vunpack.c.l.b16 %v1266
        %v4715 = vunpack.c.h.b16 %v1266
        %v4716 = vunpack.c.l.b16 %v1267
        %v4717 = vunpack.c.h.b16 %v1267
        %v4718 = vunpack.c.l.b16 %v1268
        %v4719 = vunpack.c.h.b16 %v1268
        %v4720 = vunpack.c.l.b16 %v1269
        %v4721 = vunpack.c.h.b16 %v1269
        %v4722 = vunpack.c.l.b16 %v1270
        %v4723 = vunpack.c.h.b16 %v1270
        %v4724 = vunpack.c.l.b16 %v1271
        %v4725 = vunpack.c.h.b16 %v1271
        %v4726 = vunpack.c.l.b16 %v1272
        %v4727 = vunpack.c.h.b16 %v1272
        %v4728 = vunpack.c.l.b16 %v1273
        %v4729 = vunpack.c.h.b16 %v1273
        %v4730 = vunpack.c.l.b16 %v1274
        %v4731 = vunpack.c.h.b16 %v1274
        %v4732 = vunpack.c.l.b16 %v1275
        %v4733 = vunpack.c.h.b16 %v1275
        %v4734 = vunpack.c.l.b16 %v1276
        %v4735 = vunpack.c.h.b16 %v1276
        %v4736 = vunpack.c.l.b16 %v1277
        %v4737 = vunpack.c.h.b16 %v1277
        %v4738 = vunpack.c.l.b16 %v1278
        %v4739 = vunpack.c.h.b16 %v1278
        %v4740 = vunpack.c.l.b16 %v1279
        %v4741 = vunpack.c.h.b16 %v1279
        %v4742 = vunpack.c.l.b16 %v1280
        %v4743 = vunpack.c.h.b16 %v1280
        %v4744 = vunpack.c.l.b16 %v1281
        %v4745 = vunpack.c.h.b16 %v1281
        %v4746 = vunpack.c.l.b16 %v1282
        %v4747 = vunpack.c.h.b16 %v1282
        %v4748 = vunpack.c.l.b16 %v1283
        %v4749 = vunpack.c.h.b16 %v1283
        %v4750 = vunpack.c.l.b16 %v1284
        %v4751 = vunpack.c.h.b16 %v1284
        %v4752 = vunpack.c.l.b16 %v1285
        %v4753 = vunpack.c.h.b16 %v1285
        %v4754 = vunpack.c.l.b16 %v1286
        %v4755 = vunpack.c.h.b16 %v1286
        %v4756 = vunpack.c.l.b16 %v1287
        %v4757 = vunpack.c.h.b16 %v1287
        %v4758 = vunpack.c.l.b16 %v1288
        %v4759 = vunpack.c.h.b16 %v1288
        %v4760 = vunpack.c.l.b16 %v1289
        %v4761 = vunpack.c.h.b16 %v1289
        %v4762 = vunpack.c.l.b16 %v1290
        %v4763 = vunpack.c.h.b16 %v1290
        %v4764 = vunpack.c.l.b16 %v1291
        %v4765 = vunpack.c.h.b16 %v1291
        %v4766 = vunpack.c.l.b16 %v1292
        %v4767 = vunpack.c.h.b16 %v1292
        %v4768 = vunpack.c.l.b16 %v1293
        %v4769 = vunpack.c.h.b16 %v1293
        %v4770 = vunpack.c.l.b16 %v1294
        %v4771 = vunpack.c.h.b16 %v1294
        %v4772 = vunpack.c.l.b16 %v1295
        %v4773 = vunpack.c.h.b16 %v1295
        %v4774 = vunpack.c.l.b16 %v1296
        %v4775 = vunpack.c.h.b16 %v1296
        %v4776 = vunpack.c.l.b16 %v1297
        %v4777 = vunpack.c.h.b16 %v1297
        %v4778 = vunpack.c.l.b16 %v1298
        %v4779 = vunpack.c.h.b16 %v1298
        %v4780 = vunpack.c.l.b16 %v1299
        %v4781 = vunpack.c.h.b16 %v1299
        %v4782 = vunpack.c.l.b16 %v1300
        %v4783 = vunpack.c.h.b16 %v1300
        %v4784 = vunpack.c.l.b16 %v1301
        %v4785 = vunpack.c.h.b16 %v1301
        %v4786 = vunpack.c.l.b16 %v1302
        %v4787 = vunpack.c.h.b16 %v1302
        %v4788 = vunpack.c.l.b16 %v1303
        %v4789 = vunpack.c.h.b16 %v1303
        %v4790 = vunpack.c.l.b16 %v1304
        %v4791 = vunpack.c.h.b16 %v1304
        %v4792 = vunpack.c.l.b16 %v1305
        %v4793 = vunpack.c.h.b16 %v1305
        %v4794 = vunpack.c.l.b16 %v1306
        %v4795 = vunpack.c.h.b16 %v1306
        %v4796 = vunpack.c.l.b16 %v1307
        %v4797 = vunpack.c.h.b16 %v1307
        %v4798 = vunpack.c.l.b16 %v1308
        %v4799 = vunpack.c.h.b16 %v1308
        %v4800 = vunpack.c.l.b16 %v1309
        %v4801 = vunpack.c.h.b16 %v1309
        %v4802 = vunpack.c.l.b16 %v1310
        %v4803 = vunpack.c.h.b16 %v1310
        %v4804 = vunpack.c.l.b16 %v1311
        %v4805 = vunpack.c.h.b16 %v1311
        %v4806 = vunpack.c.l.b16 %v1312
        %v4807 = vunpack.c.h.b16 %v1312
        %v4808 = vunpack.c.l.b16 %v1313
        %v4809 = vunpack.c.h.b16 %v1313
        %v4810 = vunpack.c.l.b16 %v1314
        %v4811 = vunpack.c.h.b16 %v1314
        %v4812 = vunpack.c.l.b16 %v1315
        %v4813 = vunpack.c.h.b16 %v1315
        %v4814 = vunpack.c.l.b16 %v1316
        %v4815 = vunpack.c.h.b16 %v1316
        %v4816 = vunpack.c.l.b16 %v1317
        %v4817 = vunpack.c.h.b16 %v1317
        %v4818 = vunpack.c.l.b16 %v1318
        %v4819 = vunpack.c.h.b16 %v1318
        %v4820 = vunpack.c.l.b16 %v1319
        %v4821 = vunpack.c.h.b16 %v1319
        %v4822 = vunpack.c.l.b16 %v1320
        %v4823 = vunpack.c.h.b16 %v1320
        %v4824 = vunpack.c.l.b16 %v1321
        %v4825 = vunpack.c.h.b16 %v1321
        %v4826 = vunpack.c.l.b16 %v1322
        %v4827 = vunpack.c.h.b16 %v1322
        %v4828 = vunpack.c.l.b16 %v1323
        %v4829 = vunpack.c.h.b16 %v1323
        %v4830 = vunpack.c.l.b16 %v1324
        %v4831 = vunpack.c.h.b16 %v1324
        %v4832 = vunpack.c.l.b16 %v1325
        %v4833 = vunpack.c.h.b16 %v1325
        %v4834 = vunpack.c.l.b16 %v1326
        %v4835 = vunpack.c.h.b16 %v1326
        %v4836 = vunpack.c.l.b16 %v1327
        %v4837 = vunpack.c.h.b16 %v1327
        %v4838 = vunpack.c.l.b16 %v1328
        %v4839 = vunpack.c.h.b16 %v1328
        %v4840 = vunpack.c.l.b16 %v1329
        %v4841 = vunpack.c.h.b16 %v1329
        %v4842 = vunpack.c.l.b16 %v1330
        %v4843 = vunpack.c.h.b16 %v1330
        %v4844 = vunpack.c.l.b16 %v1331
        %v4845 = vunpack.c.h.b16 %v1331
        %v4846 = vunpack.c.l.b16 %v1332
        %v4847 = vunpack.c.h.b16 %v1332
        %v4848 = vunpack.c.l.b16 %v1333
        %v4849 = vunpack.c.h.b16 %v1333
        %v4850 = vunpack.c.l.b16 %v1334
        %v4851 = vunpack.c.h.b16 %v1334
        %v4852 = vunpack.c.l.b16 %v1335
        %v4853 = vunpack.c.h.b16 %v1335
        %v4854 = vunpack.c.l.b16 %v1336
        %v4855 = vunpack.c.h.b16 %v1336
        %v4856 = vunpack.c.l.b16 %v1337
        %v4857 = vunpack.c.h.b16 %v1337
        %v4858 = vunpack.c.l.b16 %v1338
        %v4859 = vunpack.c.h.b16 %v1338
        %v4860 = vunpack.c.l.b16 %v1339
        %v4861 = vunpack.c.h.b16 %v1339
        %v4862 = vunpack.c.l.b16 %v1340
        %v4863 = vunpack.c.h.b16 %v1340
        %v4864 = vunpack.c.l.b16 %v1341
        %v4865 = vunpack.c.h.b16 %v1341
        %v4866 = vunpack.c.l.b16 %v1342
        %v4867 = vunpack.c.h.b16 %v1342
        %v4868 = vunpack.c.l.b16 %v1343
        %v4869 = vunpack.c.h.b16 %v1343
        %v4870 = vunpack.c.l.b16 %v1344
        %v4871 = vunpack.c.h.b16 %v1344
        %v4872 = vunpack.c.l.b16 %v1345
        %v4873 = vunpack.c.h.b16 %v1345
        %v4874 = vunpack.c.l.b16 %v1346
        %v4875 = vunpack.c.h.b16 %v1346
        %v4876 = vunpack.c.l.b16 %v1347
        %v4877 = vunpack.c.h.b16 %v1347
        %v4878 = vunpack.c.l.b16 %v1348
        %v4879 = vunpack.c.h.b16 %v1348
        %v4880 = vunpack.c.l.b16 %v1349
        %v4881 = vunpack.c.h.b16 %v1349
        %v4882 = vunpack.c.l.b16 %v1350
        %v4883 = vunpack.c.h.b16 %v1350
        %v4884 = vunpack.c.l.b16 %v1351
        %v4885 = vunpack.c.h.b16 %v1351
        %v4886 = vunpack.c.l.b16 %v1352
        %v4887 = vunpack.c.h.b16 %v1352
        %v4888 = vunpack.c.l.b16 %v1353
        %v4889 = vunpack.c.h.b16 %v1353
        %v4890 = vpack.c.b16 %v2844, %v2842
        %v4891 = vpack.c.b16 %v2845, %v2843
        %v4892 = vpack.c.b16 %v2848, %v2846
        %v4893 = vpack.c.b16 %v2849, %v2847
        %v4894 = vpack.c.b16 %v2852, %v2850
        %v4895 = vpack.c.b16 %v2853, %v2851
        %v4896 = vpack.c.b16 %v2856, %v2854
        %v4897 = vpack.c.b16 %v2857, %v2855
        %v4898 = vpack.c.b16 %v2860, %v2858
        %v4899 = vpack.c.b16 %v2861, %v2859
        %v4900 = vpack.c.b16 %v2864, %v2862
        %v4901 = vpack.c.b16 %v2865, %v2863
        %v4902 = vpack.c.b16 %v2868, %v2866
        %v4903 = vpack.c.b16 %v2869, %v2867
        %v4904 = vpack.c.b16 %v2872, %v2870
        %v4905 = vpack.c.b16 %v2873, %v2871
        %v4906 = vpack.c.b16 %v2876, %v2874
        %v4907 = vpack.c.b16 %v2877, %v2875
        %v4908 = vpack.c.b16 %v2880, %v2878
        %v4909 = vpack.c.b16 %v2881, %v2879
        %v4910 = vpack.c.b16 %v2884, %v2882
        %v4911 = vpack.c.b16 %v2885, %v2883
        %v4912 = vpack.c.b16 %v2888, %v2886
        %v4913 = vpack.c.b16 %v2889, %v2887
        %v4914 = vpack.c.b16 %v2892, %v2890
        %v4915 = vpack.c.b16 %v2893, %v2891
        %v4916 = vpack.c.b16 %v2896, %v2894
        %v4917 = vpack.c.b16 %v2897, %v2895
        %v4918 = vpack.c.b16 %v2900, %v2898
        %v4919 = vpack.c.b16 %v2901, %v2899
        %v4920 = vpack.c.b16 %v2904, %v2902
        %v4921 = vpack.c.b16 %v2905, %v2903
        %v4922 = vpack.c.b16 %v2908, %v2906
        %v4923 = vpack.c.b16 %v2909, %v2907
        %v4924 = vpack.c.b16 %v2912, %v2910
        %v4925 = vpack.c.b16 %v2913, %v2911
        %v4926 = vpack.c.b16 %v2916, %v2914
        %v4927 = vpack.c.b16 %v2917, %v2915
        %v4928 = vpack.c.b16 %v2920, %v2918
        %v4929 = vpack.c.b16 %v2921, %v2919
        %v4930 = vpack.c.b16 %v2924, %v2922
        %v4931 = vpack.c.b16 %v2925, %v2923
        %v4932 = vpack.c.b16 %v2928, %v2926
        %v4933 = vpack.c.b16 %v2929, %v2927
        %v4934 = vpack.c.b16 %v2932, %v2930
        %v4935 = vpack.c.b16 %v2933, %v2931
        %v4936 = vpack.c.b16 %v2936, %v2934
        %v4937 = vpack.c.b16 %v2937, %v2935
        %v4938 = vpack.c.b16 %v2940, %v2938
        %v4939 = vpack.c.b16 %v2941, %v2939
        %v4940 = vpack.c.b16 %v2944, %v2942
        %v4941 = vpack.c.b16 %v2945, %v2943
        %v4942 = vpack.c.b16 %v2948, %v2946
        %v4943 = vpack.c.b16 %v2949, %v2947
        %v4944 = vpack.c.b16 %v2952, %v2950
        %v4945 = vpack.c.b16 %v2953, %v2951
        %v4946 = vpack.c.b16 %v2956, %v2954
        %v4947 = vpack.c.b16 %v2957, %v2955
        %v4948 = vpack.c.b16 %v2960, %v2958
        %v4949 = vpack.c.b16 %v2961, %v2959
        %v4950 = vpack.c.b16 %v2964, %v2962
        %v4951 = vpack.c.b16 %v2965, %v2963
        %v4952 = vpack.c.b16 %v2968, %v2966
        %v4953 = vpack.c.b16 %v2969, %v2967
        %v4954 = vpack.c.b16 %v2972, %v2970
        %v4955 = vpack.c.b16 %v2973, %v2971
        %v4956 = vpack.c.b16 %v2976, %v2974
        %v4957 = vpack.c.b16 %v2977, %v2975
        %v4958 = vpack.c.b16 %v2980, %v2978
        %v4959 = vpack.c.b16 %v2981, %v2979
        %v4960 = vpack.c.b16 %v2984, %v2982
        %v4961 = vpack.c.b16 %v2985, %v2983
        %v4962 = vpack.c.b16 %v2988, %v2986
        %v4963 = vpack.c.b16 %v2989, %v2987
        %v4964 = vpack.c.b16 %v2992, %v2990
        %v4965 = vpack.c.b16 %v2993, %v2991
        %v4966 = vpack.c.b16 %v2996, %v2994
        %v4967 = vpack.c.b16 %v2997, %v2995
        %v4968 = vpack.c.b16 %v3000, %v2998
        %v4969 = vpack.c.b16 %v3001, %v2999
        %v4970 = vpack.c.b16 %v3004, %v3002
        %v4971 = vpack.c.b16 %v3005, %v3003
        %v4972 = vpack.c.b16 %v3008, %v3006
        %v4973 = vpack.c.b16 %v3009, %v3007
        %v4974 = vpack.c.b16 %v3012, %v3010
        %v4975 = vpack.c.b16 %v3013, %v3011
        %v4976 = vpack.c.b16 %v3016, %v3014
        %v4977 = vpack.c.b16 %v3017, %v3015
        %v4978 = vpack.c.b16 %v3020, %v3018
        %v4979 = vpack.c.b16 %v3021, %v3019
        %v4980 = vpack.c.b16 %v3024, %v3022
        %v4981 = vpack.c.b16 %v3025, %v3023
        %v4982 = vpack.c.b16 %v3028, %v3026
        %v4983 = vpack.c.b16 %v3029, %v3027
        %v4984 = vpack.c.b16 %v3032, %v3030
        %v4985 = vpack.c.b16 %v3033, %v3031
        %v4986 = vpack.c.b16 %v3036, %v3034
        %v4987 = vpack.c.b16 %v3037, %v3035
        %v4988 = vpack.c.b16 %v3040, %v3038
        %v4989 = vpack.c.b16 %v3041, %v3039
        %v4990 = vpack.c.b16 %v3044, %v3042
        %v4991 = vpack.c.b16 %v3045, %v3043
        %v4992 = vpack.c.b16 %v3048, %v3046
        %v4993 = vpack.c.b16 %v3049, %v3047
        %v4994 = vpack.c.b16 %v3052, %v3050
        %v4995 = vpack.c.b16 %v3053, %v3051
        %v4996 = vpack.c.b16 %v3056, %v3054
        %v4997 = vpack.c.b16 %v3057, %v3055
        %v4998 = vpack.c.b16 %v3060, %v3058
        %v4999 = vpack.c.b16 %v3061, %v3059
        %v5000 = vpack.c.b16 %v3064, %v3062
        %v5001 = vpack.c.b16 %v3065, %v3063
        %v5002 = vpack.c.b16 %v3068, %v3066
        %v5003 = vpack.c.b16 %v3069, %v3067
        %v5004 = vpack.c.b16 %v3072, %v3070
        %v5005 = vpack.c.b16 %v3073, %v3071
        %v5006 = vpack.c.b16 %v3076, %v3074
        %v5007 = vpack.c.b16 %v3077, %v3075
        %v5008 = vpack.c.b16 %v3080, %v3078
        %v5009 = vpack.c.b16 %v3081, %v3079
        %v5010 = vpack.c.b16 %v3084, %v3082
        %v5011 = vpack.c.b16 %v3085, %v3083
        %v5012 = vpack.c.b16 %v3088, %v3086
        %v5013 = vpack.c.b16 %v3089, %v3087
        %v5014 = vpack.c.b16 %v3092, %v3090
        %v5015 = vpack.c.b16 %v3093, %v3091
        %v5016 = vpack.c.b16 %v3096, %v3094
        %v5017 = vpack.c.b16 %v3097, %v3095
        %v5018 = vpack.c.b16 %v3100, %v3098
        %v5019 = vpack.c.b16 %v3101, %v3099
        %v5020 = vpack.c.b16 %v3104, %v3102
        %v5021 = vpack.c.b16 %v3105, %v3103
        %v5022 = vpack.c.b16 %v3108, %v3106
        %v5023 = vpack.c.b16 %v3109, %v3107
        %v5024 = vpack.c.b16 %v3112, %v3110
        %v5025 = vpack.c.b16 %v3113, %v3111
        %v5026 = vpack.c.b16 %v3116, %v3114
        %v5027 = vpack.c.b16 %v3117, %v3115
        %v5028 = vpack.c.b16 %v3120, %v3118
        %v5029 = vpack.c.b16 %v3121, %v3119
        %v5030 = vpack.c.b16 %v3124, %v3122
        %v5031 = vpack.c.b16 %v3125, %v3123
        %v5032 = vpack.c.b16 %v3128, %v3126
        %v5033 = vpack.c.b16 %v3129, %v3127
        %v5034 = vpack.c.b16 %v3132, %v3130
        %v5035 = vpack.c.b16 %v3133, %v3131
        %v5036 = vpack.c.b16 %v3136, %v3134
        %v5037 = vpack.c.b16 %v3137, %v3135
        %v5038 = vpack.c.b16 %v3140, %v3138
        %v5039 = vpack.c.b16 %v3141, %v3139
        %v5040 = vpack.c.b16 %v3144, %v3142
        %v5041 = vpack.c.b16 %v3145, %v3143
        %v5042 = vpack.c.b16 %v3148, %v3146
        %v5043 = vpack.c.b16 %v3149, %v3147
        %v5044 = vpack.c.b16 %v3152, %v3150
        %v5045 = vpack.c.b16 %v3153, %v3151
        %v5046 = vpack.c.b16 %v3156, %v3154
        %v5047 = vpack.c.b16 %v3157, %v3155
        %v5048 = vpack.c.b16 %v3160, %v3158
        %v5049 = vpack.c.b16 %v3161, %v3159
        %v5050 = vpack.c.b16 %v3164, %v3162
        %v5051 = vpack.c.b16 %v3165, %v3163
        %v5052 = vpack.c.b16 %v3168, %v3166
        %v5053 = vpack.c.b16 %v3169, %v3167
        %v5054 = vpack.c.b16 %v3172, %v3170
        %v5055 = vpack.c.b16 %v3173, %v3171
        %v5056 = vpack.c.b16 %v3176, %v3174
        %v5057 = vpack.c.b16 %v3177, %v3175
        %v5058 = vpack.c.b16 %v3180, %v3178
        %v5059 = vpack.c.b16 %v3181, %v3179
        %v5060 = vpack.c.b16 %v3184, %v3182
        %v5061 = vpack.c.b16 %v3185, %v3183
        %v5062 = vpack.c.b16 %v3188, %v3186
        %v5063 = vpack.c.b16 %v3189, %v3187
        %v5064 = vpack.c.b16 %v3192, %v3190
        %v5065 = vpack.c.b16 %v3193, %v3191
        %v5066 = vpack.c.b16 %v3196, %v3194
        %v5067 = vpack.c.b16 %v3197, %v3195
        %v5068 = vpack.c.b16 %v3200, %v3198
        %v5069 = vpack.c.b16 %v3201, %v3199
        %v5070 = vpack.c.b16 %v3204, %v3202
        %v5071 = vpack.c.b16 %v3205, %v3203
        %v5072 = vpack.c.b16 %v3208, %v3206
        %v5073 = vpack.c.b16 %v3209, %v3207
        %v5074 = vpack.c.b16 %v3212, %v3210
        %v5075 = vpack.c.b16 %v3213, %v3211
        %v5076 = vpack.c.b16 %v3216, %v3214
        %v5077 = vpack.c.b16 %v3217, %v3215
        %v5078 = vpack.c.b16 %v3220, %v3218
        %v5079 = vpack.c.b16 %v3221, %v3219
        %v5080 = vpack.c.b16 %v3224, %v3222
        %v5081 = vpack.c.b16 %v3225, %v3223
        %v5082 = vpack.c.b16 %v3228, %v3226
        %v5083 = vpack.c.b16 %v3229, %v3227
        %v5084 = vpack.c.b16 %v3232, %v3230
        %v5085 = vpack.c.b16 %v3233, %v3231
        %v5086 = vpack.c.b16 %v3236, %v3234
        %v5087 = vpack.c.b16 %v3237, %v3235
        %v5088 = vpack.c.b16 %v3240, %v3238
        %v5089 = vpack.c.b16 %v3241, %v3239
        %v5090 = vpack.c.b16 %v3244, %v3242
        %v5091 = vpack.c.b16 %v3245, %v3243
        %v5092 = vpack.c.b16 %v3248, %v3246
        %v5093 = vpack.c.b16 %v3249, %v3247
        %v5094 = vpack.c.b16 %v3252, %v3250
        %v5095 = vpack.c.b16 %v3253, %v3251
        %v5096 = vpack.c.b16 %v3256, %v3254
        %v5097 = vpack.c.b16 %v3257, %v3255
        %v5098 = vpack.c.b16 %v3260, %v3258
        %v5099 = vpack.c.b16 %v3261, %v3259
        %v5100 = vpack.c.b16 %v3264, %v3262
        %v5101 = vpack.c.b16 %v3265, %v3263
        %v5102 = vpack.c.b16 %v3268, %v3266
        %v5103 = vpack.c.b16 %v3269, %v3267
        %v5104 = vpack.c.b16 %v3272, %v3270
        %v5105 = vpack.c.b16 %v3273, %v3271
        %v5106 = vpack.c.b16 %v3276, %v3274
        %v5107 = vpack.c.b16 %v3277, %v3275
        %v5108 = vpack.c.b16 %v3280, %v3278
        %v5109 = vpack.c.b16 %v3281, %v3279
        %v5110 = vpack.c.b16 %v3284, %v3282
        %v5111 = vpack.c.b16 %v3285, %v3283
        %v5112 = vpack.c.b16 %v3288, %v3286
        %v5113 = vpack.c.b16 %v3289, %v3287
        %v5114 = vpack.c.b16 %v3292, %v3290
        %v5115 = vpack.c.b16 %v3293, %v3291
        %v5116 = vpack.c.b16 %v3296, %v3294
        %v5117 = vpack.c.b16 %v3297, %v3295
        %v5118 = vpack.c.b16 %v3300, %v3298
        %v5119 = vpack.c.b16 %v3301, %v3299
        %v5120 = vpack.c.b16 %v3304, %v3302
        %v5121 = vpack.c.b16 %v3305, %v3303
        %v5122 = vpack.c.b16 %v3308, %v3306
        %v5123 = vpack.c.b16 %v3309, %v3307
        %v5124 = vpack.c.b16 %v3312, %v3310
        %v5125 = vpack.c.b16 %v3313, %v3311
        %v5126 = vpack.c.b16 %v3316, %v3314
        %v5127 = vpack.c.b16 %v3317, %v3315
        %v5128 = vpack.c.b16 %v3320, %v3318
        %v5129 = vpack.c.b16 %v3321, %v3319
        %v5130 = vpack.c.b16 %v3324, %v3322
        %v5131 = vpack.c.b16 %v3325, %v3323
        %v5132 = vpack.c.b16 %v3328, %v3326
        %v5133 = vpack.c.b16 %v3329, %v3327
        %v5134 = vpack.c.b16 %v3332, %v3330
        %v5135 = vpack.c.b16 %v3333, %v3331
        %v5136 = vpack.c.b16 %v3336, %v3334
        %v5137 = vpack.c.b16 %v3337, %v3335
        %v5138 = vpack.c.b16 %v3340, %v3338
        %v5139 = vpack.c.b16 %v3341, %v3339
        %v5140 = vpack.c.b16 %v3344, %v3342
        %v5141 = vpack.c.b16 %v3345, %v3343
        %v5142 = vpack.c.b16 %v3348, %v3346
        %v5143 = vpack.c.b16 %v3349, %v3347
        %v5144 = vpack.c.b16 %v3352, %v3350
        %v5145 = vpack.c.b16 %v3353, %v3351
        %v5146 = vpack.c.b16 %v3356, %v3354
        %v5147 = vpack.c.b16 %v3357, %v3355
        %v5148 = vpack.c.b16 %v3360, %v3358
        %v5149 = vpack.c.b16 %v3361, %v3359
        %v5150 = vpack.c.b16 %v3364, %v3362
        %v5151 = vpack.c.b16 %v3365, %v3363
        %v5152 = vpack.c.b16 %v3368, %v3366
        %v5153 = vpack.c.b16 %v3369, %v3367
        %v5154 = vpack.c.b16 %v3372, %v3370
        %v5155 = vpack.c.b16 %v3373, %v3371
        %v5156 = vpack.c.b16 %v3376, %v3374
        %v5157 = vpack.c.b16 %v3377, %v3375
        %v5158 = vpack.c.b16 %v3380, %v3378
        %v5159 = vpack.c.b16 %v3381, %v3379
        %v5160 = vpack.c.b16 %v3384, %v3382
        %v5161 = vpack.c.b16 %v3385, %v3383
        %v5162 = vpack.c.b16 %v3388, %v3386
        %v5163 = vpack.c.b16 %v3389, %v3387
        %v5164 = vpack.c.b16 %v3392, %v3390
        %v5165 = vpack.c.b16 %v3393, %v3391
        %v5166 = vpack.c.b16 %v3396, %v3394
        %v5167 = vpack.c.b16 %v3397, %v3395
        %v5168 = vpack.c.b16 %v3400, %v3398
        %v5169 = vpack.c.b16 %v3401, %v3399
        %v5170 = vpack.c.b16 %v3404, %v3402
        %v5171 = vpack.c.b16 %v3405, %v3403
        %v5172 = vpack.c.b16 %v3408, %v3406
        %v5173 = vpack.c.b16 %v3409, %v3407
        %v5174 = vpack.c.b16 %v3412, %v3410
        %v5175 = vpack.c.b16 %v3413, %v3411
        %v5176 = vpack.c.b16 %v3416, %v3414
        %v5177 = vpack.c.b16 %v3417, %v3415
        %v5178 = vpack.c.b16 %v3420, %v3418
        %v5179 = vpack.c.b16 %v3421, %v3419
        %v5180 = vpack.c.b16 %v3424, %v3422
        %v5181 = vpack.c.b16 %v3425, %v3423
        %v5182 = vpack.c.b16 %v3428, %v3426
        %v5183 = vpack.c.b16 %v3429, %v3427
        %v5184 = vpack.c.b16 %v3432, %v3430
        %v5185 = vpack.c.b16 %v3433, %v3431
        %v5186 = vpack.c.b16 %v3436, %v3434
        %v5187 = vpack.c.b16 %v3437, %v3435
        %v5188 = vpack.c.b16 %v3440, %v3438
        %v5189 = vpack.c.b16 %v3441, %v3439
        %v5190 = vpack.c.b16 %v3444, %v3442
        %v5191 = vpack.c.b16 %v3445, %v3443
        %v5192 = vpack.c.b16 %v3448, %v3446
        %v5193 = vpack.c.b16 %v3449, %v3447
        %v5194 = vpack.c.b16 %v3452, %v3450
        %v5195 = vpack.c.b16 %v3453, %v3451
        %v5196 = vpack.c.b16 %v3456, %v3454
        %v5197 = vpack.c.b16 %v3457, %v3455
        %v5198 = vpack.c.b16 %v3460, %v3458
        %v5199 = vpack.c.b16 %v3461, %v3459
        %v5200 = vpack.c.b16 %v3464, %v3462
        %v5201 = vpack.c.b16 %v3465, %v3463
        %v5202 = vpack.c.b16 %v3468, %v3466
        %v5203 = vpack.c.b16 %v3469, %v3467
        %v5204 = vpack.c.b16 %v3472, %v3470
        %v5205 = vpack.c.b16 %v3473, %v3471
        %v5206 = vpack.c.b16 %v3476, %v3474
        %v5207 = vpack.c.b16 %v3477, %v3475
        %v5208 = vpack.c.b16 %v3480, %v3478
        %v5209 = vpack.c.b16 %v3481, %v3479
        %v5210 = vpack.c.b16 %v3484, %v3482
        %v5211 = vpack.c.b16 %v3485, %v3483
        %v5212 = vpack.c.b16 %v3488, %v3486
        %v5213 = vpack.c.b16 %v3489, %v3487
        %v5214 = vpack.c.b16 %v3492, %v3490
        %v5215 = vpack.c.b16 %v3493, %v3491
        %v5216 = vpack.c.b16 %v3496, %v3494
        %v5217 = vpack.c.b16 %v3497, %v3495
        %v5218 = vpack.c.b16 %v3500, %v3498
        %v5219 = vpack.c.b16 %v3501, %v3499
        %v5220 = vpack.c.b16 %v3504, %v3502
        %v5221 = vpack.c.b16 %v3505, %v3503
        %v5222 = vpack.c.b16 %v3508, %v3506
        %v5223 = vpack.c.b16 %v3509, %v3507
        %v5224 = vpack.c.b16 %v3512, %v3510
        %v5225 = vpack.c.b16 %v3513, %v3511
        %v5226 = vpack.c.b16 %v3516, %v3514
        %v5227 = vpack.c.b16 %v3517, %v3515
        %v5228 = vpack.c.b16 %v3520, %v3518
        %v5229 = vpack.c.b16 %v3521, %v3519
        %v5230 = vpack.c.b16 %v3524, %v3522
        %v5231 = vpack.c.b16 %v3525, %v3523
        %v5232 = vpack.c.b16 %v3528, %v3526
        %v5233 = vpack.c.b16 %v3529, %v3527
        %v5234 = vpack.c.b16 %v3532, %v3530
        %v5235 = vpack.c.b16 %v3533, %v3531
        %v5236 = vpack.c.b16 %v3536, %v3534
        %v5237 = vpack.c.b16 %v3537, %v3535
        %v5238 = vpack.c.b16 %v3540, %v3538
        %v5239 = vpack.c.b16 %v3541, %v3539
        %v5240 = vpack.c.b16 %v3544, %v3542
        %v5241 = vpack.c.b16 %v3545, %v3543
        %v5242 = vpack.c.b16 %v3548, %v3546
        %v5243 = vpack.c.b16 %v3549, %v3547
        %v5244 = vpack.c.b16 %v3552, %v3550
        %v5245 = vpack.c.b16 %v3553, %v3551
        %v5246 = vpack.c.b16 %v3556, %v3554
        %v5247 = vpack.c.b16 %v3557, %v3555
        %v5248 = vpack.c.b16 %v3560, %v3558
        %v5249 = vpack.c.b16 %v3561, %v3559
        %v5250 = vpack.c.b16 %v3564, %v3562
        %v5251 = vpack.c.b16 %v3565, %v3563
        %v5252 = vpack.c.b16 %v3568, %v3566
        %v5253 = vpack.c.b16 %v3569, %v3567
        %v5254 = vpack.c.b16 %v3572, %v3570
        %v5255 = vpack.c.b16 %v3573, %v3571
        %v5256 = vpack.c.b16 %v3576, %v3574
        %v5257 = vpack.c.b16 %v3577, %v3575
        %v5258 = vpack.c.b16 %v3580, %v3578
        %v5259 = vpack.c.b16 %v3581, %v3579
        %v5260 = vpack.c.b16 %v3584, %v3582
        %v5261 = vpack.c.b16 %v3585, %v3583
        %v5262 = vpack.c.b16 %v3588, %v3586
        %v5263 = vpack.c.b16 %v3589, %v3587
        %v5264 = vpack.c.b16 %v3592, %v3590
        %v5265 = vpack.c.b16 %v3593, %v3591
        %v5266 = vpack.c.b16 %v3596, %v3594
        %v5267 = vpack.c.b16 %v3597, %v3595
        %v5268 = vpack.c.b16 %v3600, %v3598
        %v5269 = vpack.c.b16 %v3601, %v3599
        %v5270 = vpack.c.b16 %v3604, %v3602
        %v5271 = vpack.c.b16 %v3605, %v3603
        %v5272 = vpack.c.b16 %v3608, %v3606
        %v5273 = vpack.c.b16 %v3609, %v3607
        %v5274 = vpack.c.b16 %v3612, %v3610
        %v5275 = vpack.c.b16 %v3613, %v3611
        %v5276 = vpack.c.b16 %v3616, %v3614
        %v5277 = vpack.c.b16 %v3617, %v3615
        %v5278 = vpack.c.b16 %v3620, %v3618
        %v5279 = vpack.c.b16 %v3621, %v3619
        %v5280 = vpack.c.b16 %v3624, %v3622
        %v5281 = vpack.c.b16 %v3625, %v3623
        %v5282 = vpack.c.b16 %v3628, %v3626
        %v5283 = vpack.c.b16 %v3629, %v3627
        %v5284 = vpack.c.b16 %v3632, %v3630
        %v5285 = vpack.c.b16 %v3633, %v3631
        %v5286 = vpack.c.b16 %v3636, %v3634
        %v5287 = vpack.c.b16 %v3637, %v3635
        %v5288 = vpack.c.b16 %v3640, %v3638
        %v5289 = vpack.c.b16 %v3641, %v3639
        %v5290 = vpack.c.b16 %v3644, %v3642
        %v5291 = vpack.c.b16 %v3645, %v3643
        %v5292 = vpack.c.b16 %v3648, %v3646
        %v5293 = vpack.c.b16 %v3649, %v3647
        %v5294 = vpack.c.b16 %v3652, %v3650
        %v5295 = vpack.c.b16 %v3653, %v3651
        %v5296 = vpack.c.b16 %v3656, %v3654
        %v5297 = vpack.c.b16 %v3657, %v3655
        %v5298 = vpack.c.b16 %v3660, %v3658
        %v5299 = vpack.c.b16 %v3661, %v3659
        %v5300 = vpack.c.b16 %v3664, %v3662
        %v5301 = vpack.c.b16 %v3665, %v3663
        %v5302 = vpack.c.b16 %v3668, %v3666
        %v5303 = vpack.c.b16 %v3669, %v3667
        %v5304 = vpack.c.b16 %v3672, %v3670
        %v5305 = vpack.c.b16 %v3673, %v3671
        %v5306 = vpack.c.b16 %v3676, %v3674
        %v5307 = vpack.c.b16 %v3677, %v3675
        %v5308 = vpack.c.b16 %v3680, %v3678
        %v5309 = vpack.c.b16 %v3681, %v3679
        %v5310 = vpack.c.b16 %v3684, %v3682
        %v5311 = vpack.c.b16 %v3685, %v3683
        %v5312 = vpack.c.b16 %v3688, %v3686
        %v5313 = vpack.c.b16 %v3689, %v3687
        %v5314 = vpack.c.b16 %v3692, %v3690
        %v5315 = vpack.c.b16 %v3693, %v3691
        %v5316 = vpack.c.b16 %v3696, %v3694
        %v5317 = vpack.c.b16 %v3697, %v3695
        %v5318 = vpack.c.b16 %v3700, %v3698
        %v5319 = vpack.c.b16 %v3701, %v3699
        %v5320 = vpack.c.b16 %v3704, %v3702
        %v5321 = vpack.c.b16 %v3705, %v3703
        %v5322 = vpack.c.b16 %v3708, %v3706
        %v5323 = vpack.c.b16 %v3709, %v3707
        %v5324 = vpack.c.b16 %v3712, %v3710
        %v5325 = vpack.c.b16 %v3713, %v3711
        %v5326 = vpack.c.b16 %v3716, %v3714
        %v5327 = vpack.c.b16 %v3717, %v3715
        %v5328 = vpack.c.b16 %v3720, %v3718
        %v5329 = vpack.c.b16 %v3721, %v3719
        %v5330 = vpack.c.b16 %v3724, %v3722
        %v5331 = vpack.c.b16 %v3725, %v3723
        %v5332 = vpack.c.b16 %v3728, %v3726
        %v5333 = vpack.c.b16 %v3729, %v3727
        %v5334 = vpack.c.b16 %v3732, %v3730
        %v5335 = vpack.c.b16 %v3733, %v3731
        %v5336 = vpack.c.b16 %v3736, %v3734
        %v5337 = vpack.c.b16 %v3737, %v3735
        %v5338 = vpack.c.b16 %v3740, %v3738
        %v5339 = vpack.c.b16 %v3741, %v3739
        %v5340 = vpack.c.b16 %v3744, %v3742
        %v5341 = vpack.c.b16 %v3745, %v3743
        %v5342 = vpack.c.b16 %v3748, %v3746
        %v5343 = vpack.c.b16 %v3749, %v3747
        %v5344 = vpack.c.b16 %v3752, %v3750
        %v5345 = vpack.c.b16 %v3753, %v3751
        %v5346 = vpack.c.b16 %v3756, %v3754
        %v5347 = vpack.c.b16 %v3757, %v3755
        %v5348 = vpack.c.b16 %v3760, %v3758
        %v5349 = vpack.c.b16 %v3761, %v3759
        %v5350 = vpack.c.b16 %v3764, %v3762
        %v5351 = vpack.c.b16 %v3765, %v3763
        %v5352 = vpack.c.b16 %v3768, %v3766
        %v5353 = vpack.c.b16 %v3769, %v3767
        %v5354 = vpack.c.b16 %v3772, %v3770
        %v5355 = vpack.c.b16 %v3773, %v3771
        %v5356 = vpack.c.b16 %v3776, %v3774
        %v5357 = vpack.c.b16 %v3777, %v3775
        %v5358 = vpack.c.b16 %v3780, %v3778
        %v5359 = vpack.c.b16 %v3781, %v3779
        %v5360 = vpack.c.b16 %v3784, %v3782
        %v5361 = vpack.c.b16 %v3785, %v3783
        %v5362 = vpack.c.b16 %v3788, %v3786
        %v5363 = vpack.c.b16 %v3789, %v3787
        %v5364 = vpack.c.b16 %v3792, %v3790
        %v5365 = vpack.c.b16 %v3793, %v3791
        %v5366 = vpack.c.b16 %v3796, %v3794
        %v5367 = vpack.c.b16 %v3797, %v3795
        %v5368 = vpack.c.b16 %v3800, %v3798
        %v5369 = vpack.c.b16 %v3801, %v3799
        %v5370 = vpack.c.b16 %v3804, %v3802
        %v5371 = vpack.c.b16 %v3805, %v3803
        %v5372 = vpack.c.b16 %v3808, %v3806
        %v5373 = vpack.c.b16 %v3809, %v3807
        %v5374 = vpack.c.b16 %v3812, %v3810
        %v5375 = vpack.c.b16 %v3813, %v3811
        %v5376 = vpack.c.b16 %v3816, %v3814
        %v5377 = vpack.c.b16 %v3817, %v3815
        %v5378 = vpack.c.b16 %v3820, %v3818
        %v5379 = vpack.c.b16 %v3821, %v3819
        %v5380 = vpack.c.b16 %v3824, %v3822
        %v5381 = vpack.c.b16 %v3825, %v3823
        %v5382 = vpack.c.b16 %v3828, %v3826
        %v5383 = vpack.c.b16 %v3829, %v3827
        %v5384 = vpack.c.b16 %v3832, %v3830
        %v5385 = vpack.c.b16 %v3833, %v3831
        %v5386 = vpack.c.b16 %v3836, %v3834
        %v5387 = vpack.c.b16 %v3837, %v3835
        %v5388 = vpack.c.b16 %v3840, %v3838
        %v5389 = vpack.c.b16 %v3841, %v3839
        %v5390 = vpack.c.b16 %v3844, %v3842
        %v5391 = vpack.c.b16 %v3845, %v3843
        %v5392 = vpack.c.b16 %v3848, %v3846
        %v5393 = vpack.c.b16 %v3849, %v3847
        %v5394 = vpack.c.b16 %v3852, %v3850
        %v5395 = vpack.c.b16 %v3853, %v3851
        %v5396 = vpack.c.b16 %v3856, %v3854
        %v5397 = vpack.c.b16 %v3857, %v3855
        %v5398 = vpack.c.b16 %v3860, %v3858
        %v5399 = vpack.c.b16 %v3861, %v3859
        %v5400 = vpack.c.b16 %v3864, %v3862
        %v5401 = vpack.c.b16 %v3865, %v3863
        %v5402 = vpack.c.b16 %v3868, %v3866
        %v5403 = vpack.c.b16 %v3869, %v3867
        %v5404 = vpack.c.b16 %v3872, %v3870
        %v5405 = vpack.c.b16 %v3873, %v3871
        %v5406 = vpack.c.b16 %v3876, %v3874
        %v5407 = vpack.c.b16 %v3877, %v3875
        %v5408 = vpack.c.b16 %v3880, %v3878
        %v5409 = vpack.c.b16 %v3881, %v3879
        %v5410 = vpack.c.b16 %v3884, %v3882
        %v5411 = vpack.c.b16 %v3885, %v3883
        %v5412 = vpack.c.b16 %v3888, %v3886
        %v5413 = vpack.c.b16 %v3889, %v3887
        %v5414 = vpack.c.b16 %v3892, %v3890
        %v5415 = vpack.c.b16 %v3893, %v3891
        %v5416 = vpack.c.b16 %v3896, %v3894
        %v5417 = vpack.c.b16 %v3897, %v3895
        %v5418 = vpack.c.b16 %v3900, %v3898
        %v5419 = vpack.c.b16 %v3901, %v3899
        %v5420 = vpack.c.b16 %v3904, %v3902
        %v5421 = vpack.c.b16 %v3905, %v3903
        %v5422 = vpack.c.b16 %v3908, %v3906
        %v5423 = vpack.c.b16 %v3909, %v3907
        %v5424 = vpack.c.b16 %v3912, %v3910
        %v5425 = vpack.c.b16 %v3913, %v3911
        %v5426 = vpack.c.b16 %v3916, %v3914
        %v5427 = vpack.c.b16 %v3917, %v3915
        %v5428 = vpack.c.b16 %v3920, %v3918
        %v5429 = vpack.c.b16 %v3921, %v3919
        %v5430 = vpack.c.b16 %v3924, %v3922
        %v5431 = vpack.c.b16 %v3925, %v3923
        %v5432 = vpack.c.b16 %v3928, %v3926
        %v5433 = vpack.c.b16 %v3929, %v3927
        %v5434 = vpack.c.b16 %v3932, %v3930
        %v5435 = vpack.c.b16 %v3933, %v3931
        %v5436 = vpack.c.b16 %v3936, %v3934
        %v5437 = vpack.c.b16 %v3937, %v3935
        %v5438 = vpack.c.b16 %v3940, %v3938
        %v5439 = vpack.c.b16 %v3941, %v3939
        %v5440 = vpack.c.b16 %v3944, %v3942
        %v5441 = vpack.c.b16 %v3945, %v3943
        %v5442 = vpack.c.b16 %v3948, %v3946
        %v5443 = vpack.c.b16 %v3949, %v3947
        %v5444 = vpack.c.b16 %v3952, %v3950
        %v5445 = vpack.c.b16 %v3953, %v3951
        %v5446 = vpack.c.b16 %v3956, %v3954
        %v5447 = vpack.c.b16 %v3957, %v3955
        %v5448 = vpack.c.b16 %v3960, %v3958
        %v5449 = vpack.c.b16 %v3961, %v3959
        %v5450 = vpack.c.b16 %v3964, %v3962
        %v5451 = vpack.c.b16 %v3965, %v3963
        %v5452 = vpack.c.b16 %v3968, %v3966
        %v5453 = vpack.c.b16 %v3969, %v3967
        %v5454 = vpack.c.b16 %v3972, %v3970
        %v5455 = vpack.c.b16 %v3973, %v3971
        %v5456 = vpack.c.b16 %v3976, %v3974
        %v5457 = vpack.c.b16 %v3977, %v3975
        %v5458 = vpack.c.b16 %v3980, %v3978
        %v5459 = vpack.c.b16 %v3981, %v3979
        %v5460 = vpack.c.b16 %v3984, %v3982
        %v5461 = vpack.c.b16 %v3985, %v3983
        %v5462 = vpack.c.b16 %v3988, %v3986
        %v5463 = vpack.c.b16 %v3989, %v3987
        %v5464 = vpack.c.b16 %v3992, %v3990
        %v5465 = vpack.c.b16 %v3993, %v3991
        %v5466 = vpack.c.b16 %v3996, %v3994
        %v5467 = vpack.c.b16 %v3997, %v3995
        %v5468 = vpack.c.b16 %v4000, %v3998
        %v5469 = vpack.c.b16 %v4001, %v3999
        %v5470 = vpack.c.b16 %v4004, %v4002
        %v5471 = vpack.c.b16 %v4005, %v4003
        %v5472 = vpack.c.b16 %v4008, %v4006
        %v5473 = vpack.c.b16 %v4009, %v4007
        %v5474 = vpack.c.b16 %v4012, %v4010
        %v5475 = vpack.c.b16 %v4013, %v4011
        %v5476 = vpack.c.b16 %v4016, %v4014
        %v5477 = vpack.c.b16 %v4017, %v4015
        %v5478 = vpack.c.b16 %v4020, %v4018
        %v5479 = vpack.c.b16 %v4021, %v4019
        %v5480 = vpack.c.b16 %v4024, %v4022
        %v5481 = vpack.c.b16 %v4025, %v4023
        %v5482 = vpack.c.b16 %v4028, %v4026
        %v5483 = vpack.c.b16 %v4029, %v4027
        %v5484 = vpack.c.b16 %v4032, %v4030
        %v5485 = vpack.c.b16 %v4033, %v4031
        %v5486 = vpack.c.b16 %v4036, %v4034
        %v5487 = vpack.c.b16 %v4037, %v4035
        %v5488 = vpack.c.b16 %v4040, %v4038
        %v5489 = vpack.c.b16 %v4041, %v4039
        %v5490 = vpack.c.b16 %v4044, %v4042
        %v5491 = vpack.c.b16 %v4045, %v4043
        %v5492 = vpack.c.b16 %v4048, %v4046
        %v5493 = vpack.c.b16 %v4049, %v4047
        %v5494 = vpack.c.b16 %v4052, %v4050
        %v5495 = vpack.c.b16 %v4053, %v4051
        %v5496 = vpack.c.b16 %v4056, %v4054
        %v5497 = vpack.c.b16 %v4057, %v4055
        %v5498 = vpack.c.b16 %v4060, %v4058
        %v5499 = vpack.c.b16 %v4061, %v4059
        %v5500 = vpack.c.b16 %v4064, %v4062
        %v5501 = vpack.c.b16 %v4065, %v4063
        %v5502 = vpack.c.b16 %v4068, %v4066
        %v5503 = vpack.c.b16 %v4069, %v4067
        %v5504 = vpack.c.b16 %v4072, %v4070
        %v5505 = vpack.c.b16 %v4073, %v4071
        %v5506 = vpack.c.b16 %v4076, %v4074
        %v5507 = vpack.c.b16 %v4077, %v4075
        %v5508 = vpack.c.b16 %v4080, %v4078
        %v5509 = vpack.c.b16 %v4081, %v4079
        %v5510 = vpack.c.b16 %v4084, %v4082
        %v5511 = vpack.c.b16 %v4085, %v4083
        %v5512 = vpack.c.b16 %v4088, %v4086
        %v5513 = vpack.c.b16 %v4089, %v4087
        %v5514 = vpack.c.b16 %v4092, %v4090
        %v5515 = vpack.c.b16 %v4093, %v4091
        %v5516 = vpack.c.b16 %v4096, %v4094
        %v5517 = vpack.c.b16 %v4097, %v4095
        %v5518 = vpack.c.b16 %v4100, %v4098
        %v5519 = vpack.c.b16 %v4101, %v4099
        %v5520 = vpack.c.b16 %v4104, %v4102
        %v5521 = vpack.c.b16 %v4105, %v4103
        %v5522 = vpack.c.b16 %v4108, %v4106
        %v5523 = vpack.c.b16 %v4109, %v4107
        %v5524 = vpack.c.b16 %v4112, %v4110
        %v5525 = vpack.c.b16 %v4113, %v4111
        %v5526 = vpack.c.b16 %v4116, %v4114
        %v5527 = vpack.c.b16 %v4117, %v4115
        %v5528 = vpack.c.b16 %v4120, %v4118
        %v5529 = vpack.c.b16 %v4121, %v4119
        %v5530 = vpack.c.b16 %v4124, %v4122
        %v5531 = vpack.c.b16 %v4125, %v4123
        %v5532 = vpack.c.b16 %v4128, %v4126
        %v5533 = vpack.c.b16 %v4129, %v4127
        %v5534 = vpack.c.b16 %v4132, %v4130
        %v5535 = vpack.c.b16 %v4133, %v4131
        %v5536 = vpack.c.b16 %v4136, %v4134
        %v5537 = vpack.c.b16 %v4137, %v4135
        %v5538 = vpack.c.b16 %v4140, %v4138
        %v5539 = vpack.c.b16 %v4141, %v4139
        %v5540 = vpack.c.b16 %v4144, %v4142
        %v5541 = vpack.c.b16 %v4145, %v4143
        %v5542 = vpack.c.b16 %v4148, %v4146
        %v5543 = vpack.c.b16 %v4149, %v4147
        %v5544 = vpack.c.b16 %v4152, %v4150
        %v5545 = vpack.c.b16 %v4153, %v4151
        %v5546 = vpack.c.b16 %v4156, %v4154
        %v5547 = vpack.c.b16 %v4157, %v4155
        %v5548 = vpack.c.b16 %v4160, %v4158
        %v5549 = vpack.c.b16 %v4161, %v4159
        %v5550 = vpack.c.b16 %v4164, %v4162
        %v5551 = vpack.c.b16 %v4165, %v4163
        %v5552 = vpack.c.b16 %v4168, %v4166
        %v5553 = vpack.c.b16 %v4169, %v4167
        %v5554 = vpack.c.b16 %v4172, %v4170
        %v5555 = vpack.c.b16 %v4173, %v4171
        %v5556 = vpack.c.b16 %v4176, %v4174
        %v5557 = vpack.c.b16 %v4177, %v4175
        %v5558 = vpack.c.b16 %v4180, %v4178
        %v5559 = vpack.c.b16 %v4181, %v4179
        %v5560 = vpack.c.b16 %v4184, %v4182
        %v5561 = vpack.c.b16 %v4185, %v4183
        %v5562 = vpack.c.b16 %v4188, %v4186
        %v5563 = vpack.c.b16 %v4189, %v4187
        %v5564 = vpack.c.b16 %v4192, %v4190
        %v5565 = vpack.c.b16 %v4193, %v4191
        %v5566 = vpack.c.b16 %v4196, %v4194
        %v5567 = vpack.c.b16 %v4197, %v4195
        %v5568 = vpack.c.b16 %v4200, %v4198
        %v5569 = vpack.c.b16 %v4201, %v4199
        %v5570 = vpack.c.b16 %v4204, %v4202
        %v5571 = vpack.c.b16 %v4205, %v4203
        %v5572 = vpack.c.b16 %v4208, %v4206
        %v5573 = vpack.c.b16 %v4209, %v4207
        %v5574 = vpack.c.b16 %v4212, %v4210
        %v5575 = vpack.c.b16 %v4213, %v4211
        %v5576 = vpack.c.b16 %v4216, %v4214
        %v5577 = vpack.c.b16 %v4217, %v4215
        %v5578 = vpack.c.b16 %v4220, %v4218
        %v5579 = vpack.c.b16 %v4221, %v4219
        %v5580 = vpack.c.b16 %v4224, %v4222
        %v5581 = vpack.c.b16 %v4225, %v4223
        %v5582 = vpack.c.b16 %v4228, %v4226
        %v5583 = vpack.c.b16 %v4229, %v4227
        %v5584 = vpack.c.b16 %v4232, %v4230
        %v5585 = vpack.c.b16 %v4233, %v4231
        %v5586 = vpack.c.b16 %v4236, %v4234
        %v5587 = vpack.c.b16 %v4237, %v4235
        %v5588 = vpack.c.b16 %v4240, %v4238
        %v5589 = vpack.c.b16 %v4241, %v4239
        %v5590 = vpack.c.b16 %v4244, %v4242
        %v5591 = vpack.c.b16 %v4245, %v4243
        %v5592 = vpack.c.b16 %v4248, %v4246
        %v5593 = vpack.c.b16 %v4249, %v4247
        %v5594 = vpack.c.b16 %v4252, %v4250
        %v5595 = vpack.c.b16 %v4253, %v4251
        %v5596 = vpack.c.b16 %v4256, %v4254
        %v5597 = vpack.c.b16 %v4257, %v4255
        %v5598 = vpack.c.b16 %v4260, %v4258
        %v5599 = vpack.c.b16 %v4261, %v4259
        %v5600 = vpack.c.b16 %v4264, %v4262
        %v5601 = vpack.c.b16 %v4265, %v4263
        %v5602 = vpack.c.b16 %v4268, %v4266
        %v5603 = vpack.c.b16 %v4269, %v4267
        %v5604 = vpack.c.b16 %v4272, %v4270
        %v5605 = vpack.c.b16 %v4273, %v4271
        %v5606 = vpack.c.b16 %v4276, %v4274
        %v5607 = vpack.c.b16 %v4277, %v4275
        %v5608 = vpack.c.b16 %v4280, %v4278
        %v5609 = vpack.c.b16 %v4281, %v4279
        %v5610 = vpack.c.b16 %v4284, %v4282
        %v5611 = vpack.c.b16 %v4285, %v4283
        %v5612 = vpack.c.b16 %v4288, %v4286
        %v5613 = vpack.c.b16 %v4289, %v4287
        %v5614 = vpack.c.b16 %v4292, %v4290
        %v5615 = vpack.c.b16 %v4293, %v4291
        %v5616 = vpack.c.b16 %v4296, %v4294
        %v5617 = vpack.c.b16 %v4297, %v4295
        %v5618 = vpack.c.b16 %v4300, %v4298
        %v5619 = vpack.c.b16 %v4301, %v4299
        %v5620 = vpack.c.b16 %v4304, %v4302
        %v5621 = vpack.c.b16 %v4305, %v4303
        %v5622 = vpack.c.b16 %v4308, %v4306
        %v5623 = vpack.c.b16 %v4309, %v4307
        %v5624 = vpack.c.b16 %v4312, %v4310
        %v5625 = vpack.c.b16 %v4313, %v4311
        %v5626 = vpack.c.b16 %v4316, %v4314
        %v5627 = vpack.c.b16 %v4317, %v4315
        %v5628 = vpack.c.b16 %v4320, %v4318
        %v5629 = vpack.c.b16 %v4321, %v4319
        %v5630 = vpack.c.b16 %v4324, %v4322
        %v5631 = vpack.c.b16 %v4325, %v4323
        %v5632 = vpack.c.b16 %v4328, %v4326
        %v5633 = vpack.c.b16 %v4329, %v4327
        %v5634 = vpack.c.b16 %v4332, %v4330
        %v5635 = vpack.c.b16 %v4333, %v4331
        %v5636 = vpack.c.b16 %v4336, %v4334
        %v5637 = vpack.c.b16 %v4337, %v4335
        %v5638 = vpack.c.b16 %v4340, %v4338
        %v5639 = vpack.c.b16 %v4341, %v4339
        %v5640 = vpack.c.b16 %v4344, %v4342
        %v5641 = vpack.c.b16 %v4345, %v4343
        %v5642 = vpack.c.b16 %v4348, %v4346
        %v5643 = vpack.c.b16 %v4349, %v4347
        %v5644 = vpack.c.b16 %v4352, %v4350
        %v5645 = vpack.c.b16 %v4353, %v4351
        %v5646 = vpack.c.b16 %v4356, %v4354
        %v5647 = vpack.c.b16 %v4357, %v4355
        %v5648 = vpack.c.b16 %v4360, %v4358
        %v5649 = vpack.c.b16 %v4361, %v4359
        %v5650 = vpack.c.b16 %v4364, %v4362
        %v5651 = vpack.c.b16 %v4365, %v4363
        %v5652 = vpack.c.b16 %v4368, %v4366
        %v5653 = vpack.c.b16 %v4369, %v4367
        %v5654 = vpack.c.b16 %v4372, %v4370
        %v5655 = vpack.c.b16 %v4373, %v4371
        %v5656 = vpack.c.b16 %v4376, %v4374
        %v5657 = vpack.c.b16 %v4377, %v4375
        %v5658 = vpack.c.b16 %v4380, %v4378
        %v5659 = vpack.c.b16 %v4381, %v4379
        %v5660 = vpack.c.b16 %v4384, %v4382
        %v5661 = vpack.c.b16 %v4385, %v4383
        %v5662 = vpack.c.b16 %v4388, %v4386
        %v5663 = vpack.c.b16 %v4389, %v4387
        %v5664 = vpack.c.b16 %v4392, %v4390
        %v5665 = vpack.c.b16 %v4393, %v4391
        %v5666 = vpack.c.b16 %v4396, %v4394
        %v5667 = vpack.c.b16 %v4397, %v4395
        %v5668 = vpack.c.b16 %v4400, %v4398
        %v5669 = vpack.c.b16 %v4401, %v4399
        %v5670 = vpack.c.b16 %v4404, %v4402
        %v5671 = vpack.c.b16 %v4405, %v4403
        %v5672 = vpack.c.b16 %v4408, %v4406
        %v5673 = vpack.c.b16 %v4409, %v4407
        %v5674 = vpack.c.b16 %v4412, %v4410
        %v5675 = vpack.c.b16 %v4413, %v4411
        %v5676 = vpack.c.b16 %v4416, %v4414
        %v5677 = vpack.c.b16 %v4417, %v4415
        %v5678 = vpack.c.b16 %v4420, %v4418
        %v5679 = vpack.c.b16 %v4421, %v4419
        %v5680 = vpack.c.b16 %v4424, %v4422
        %v5681 = vpack.c.b16 %v4425, %v4423
        %v5682 = vpack.c.b16 %v4428, %v4426
        %v5683 = vpack.c.b16 %v4429, %v4427
        %v5684 = vpack.c.b16 %v4432, %v4430
        %v5685 = vpack.c.b16 %v4433, %v4431
        %v5686 = vpack.c.b16 %v4436, %v4434
        %v5687 = vpack.c.b16 %v4437, %v4435
        %v5688 = vpack.c.b16 %v4440, %v4438
        %v5689 = vpack.c.b16 %v4441, %v4439
        %v5690 = vpack.c.b16 %v4444, %v4442
        %v5691 = vpack.c.b16 %v4445, %v4443
        %v5692 = vpack.c.b16 %v4448, %v4446
        %v5693 = vpack.c.b16 %v4449, %v4447
        %v5694 = vpack.c.b16 %v4452, %v4450
        %v5695 = vpack.c.b16 %v4453, %v4451
        %v5696 = vpack.c.b16 %v4456, %v4454
        %v5697 = vpack.c.b16 %v4457, %v4455
        %v5698 = vpack.c.b16 %v4460, %v4458
        %v5699 = vpack.c.b16 %v4461, %v4459
        %v5700 = vpack.c.b16 %v4464, %v4462
        %v5701 = vpack.c.b16 %v4465, %v4463
        %v5702 = vpack.c.b16 %v4468, %v4466
        %v5703 = vpack.c.b16 %v4469, %v4467
        %v5704 = vpack.c.b16 %v4472, %v4470
        %v5705 = vpack.c.b16 %v4473, %v4471
        %v5706 = vpack.c.b16 %v4476, %v4474
        %v5707 = vpack.c.b16 %v4477, %v4475
        %v5708 = vpack.c.b16 %v4480, %v4478
        %v5709 = vpack.c.b16 %v4481, %v4479
        %v5710 = vpack.c.b16 %v4484, %v4482
        %v5711 = vpack.c.b16 %v4485, %v4483
        %v5712 = vpack.c.b16 %v4488, %v4486
        %v5713 = vpack.c.b16 %v4489, %v4487
        %v5714 = vpack.c.b16 %v4492, %v4490
        %v5715 = vpack.c.b16 %v4493, %v4491
        %v5716 = vpack.c.b16 %v4496, %v4494
        %v5717 = vpack.c.b16 %v4497, %v4495
        %v5718 = vpack.c.b16 %v4500, %v4498
        %v5719 = vpack.c.b16 %v4501, %v4499
        %v5720 = vpack.c.b16 %v4504, %v4502
        %v5721 = vpack.c.b16 %v4505, %v4503
        %v5722 = vpack.c.b16 %v4508, %v4506
        %v5723 = vpack.c.b16 %v4509, %v4507
        %v5724 = vpack.c.b16 %v4512, %v4510
        %v5725 = vpack.c.b16 %v4513, %v4511
        %v5726 = vpack.c.b16 %v4516, %v4514
        %v5727 = vpack.c.b16 %v4517, %v4515
        %v5728 = vpack.c.b16 %v4520, %v4518
        %v5729 = vpack.c.b16 %v4521, %v4519
        %v5730 = vpack.c.b16 %v4524, %v4522
        %v5731 = vpack.c.b16 %v4525, %v4523
        %v5732 = vpack.c.b16 %v4528, %v4526
        %v5733 = vpack.c.b16 %v4529, %v4527
        %v5734 = vpack.c.b16 %v4532, %v4530
        %v5735 = vpack.c.b16 %v4533, %v4531
        %v5736 = vpack.c.b16 %v4536, %v4534
        %v5737 = vpack.c.b16 %v4537, %v4535
        %v5738 = vpack.c.b16 %v4540, %v4538
        %v5739 = vpack.c.b16 %v4541, %v4539
        %v5740 = vpack.c.b16 %v4544, %v4542
        %v5741 = vpack.c.b16 %v4545, %v4543
        %v5742 = vpack.c.b16 %v4548, %v4546
        %v5743 = vpack.c.b16 %v4549, %v4547
        %v5744 = vpack.c.b16 %v4552, %v4550
        %v5745 = vpack.c.b16 %v4553, %v4551
        %v5746 = vpack.c.b16 %v4556, %v4554
        %v5747 = vpack.c.b16 %v4557, %v4555
        %v5748 = vpack.c.b16 %v4560, %v4558
        %v5749 = vpack.c.b16 %v4561, %v4559
        %v5750 = vpack.c.b16 %v4564, %v4562
        %v5751 = vpack.c.b16 %v4565, %v4563
        %v5752 = vpack.c.b16 %v4568, %v4566
        %v5753 = vpack.c.b16 %v4569, %v4567
        %v5754 = vpack.c.b16 %v4572, %v4570
        %v5755 = vpack.c.b16 %v4573, %v4571
        %v5756 = vpack.c.b16 %v4576, %v4574
        %v5757 = vpack.c.b16 %v4577, %v4575
        %v5758 = vpack.c.b16 %v4580, %v4578
        %v5759 = vpack.c.b16 %v4581, %v4579
        %v5760 = vpack.c.b16 %v4584, %v4582
        %v5761 = vpack.c.b16 %v4585, %v4583
        %v5762 = vpack.c.b16 %v4588, %v4586
        %v5763 = vpack.c.b16 %v4589, %v4587
        %v5764 = vpack.c.b16 %v4592, %v4590
        %v5765 = vpack.c.b16 %v4593, %v4591
        %v5766 = vpack.c.b16 %v4596, %v4594
        %v5767 = vpack.c.b16 %v4597, %v4595
        %v5768 = vpack.c.b16 %v4600, %v4598
        %v5769 = vpack.c.b16 %v4601, %v4599
        %v5770 = vpack.c.b16 %v4604, %v4602
        %v5771 = vpack.c.b16 %v4605, %v4603
        %v5772 = vpack.c.b16 %v4608, %v4606
        %v5773 = vpack.c.b16 %v4609, %v4607
        %v5774 = vpack.c.b16 %v4612, %v4610
        %v5775 = vpack.c.b16 %v4613, %v4611
        %v5776 = vpack.c.b16 %v4616, %v4614
        %v5777 = vpack.c.b16 %v4617, %v4615
        %v5778 = vpack.c.b16 %v4620, %v4618
        %v5779 = vpack.c.b16 %v4621, %v4619
        %v5780 = vpack.c.b16 %v4624, %v4622
        %v5781 = vpack.c.b16 %v4625, %v4623
        %v5782 = vpack.c.b16 %v4628, %v4626
        %v5783 = vpack.c.b16 %v4629, %v4627
        %v5784 = vpack.c.b16 %v4632, %v4630
        %v5785 = vpack.c.b16 %v4633, %v4631
        %v5786 = vpack.c.b16 %v4636, %v4634
        %v5787 = vpack.c.b16 %v4637, %v4635
        %v5788 = vpack.c.b16 %v4640, %v4638
        %v5789 = vpack.c.b16 %v4641, %v4639
        %v5790 = vpack.c.b16 %v4644, %v4642
        %v5791 = vpack.c.b16 %v4645, %v4643
        %v5792 = vpack.c.b16 %v4648, %v4646
        %v5793 = vpack.c.b16 %v4649, %v4647
        %v5794 = vpack.c.b16 %v4652, %v4650
        %v5795 = vpack.c.b16 %v4653, %v4651
        %v5796 = vpack.c.b16 %v4656, %v4654
        %v5797 = vpack.c.b16 %v4657, %v4655
        %v5798 = vpack.c.b16 %v4660, %v4658
        %v5799 = vpack.c.b16 %v4661, %v4659
        %v5800 = vpack.c.b16 %v4664, %v4662
        %v5801 = vpack.c.b16 %v4665, %v4663
        %v5802 = vpack.c.b16 %v4668, %v4666
        %v5803 = vpack.c.b16 %v4669, %v4667
        %v5804 = vpack.c.b16 %v4672, %v4670
        %v5805 = vpack.c.b16 %v4673, %v4671
        %v5806 = vpack.c.b16 %v4676, %v4674
        %v5807 = vpack.c.b16 %v4677, %v4675
        %v5808 = vpack.c.b16 %v4680, %v4678
        %v5809 = vpack.c.b16 %v4681, %v4679
        %v5810 = vpack.c.b16 %v4684, %v4682
        %v5811 = vpack.c.b16 %v4685, %v4683
        %v5812 = vpack.c.b16 %v4688, %v4686
        %v5813 = vpack.c.b16 %v4689, %v4687
        %v5814 = vpack.c.b16 %v4692, %v4690
        %v5815 = vpack.c.b16 %v4693, %v4691
        %v5816 = vpack.c.b16 %v4696, %v4694
        %v5817 = vpack.c.b16 %v4697, %v4695
        %v5818 = vpack.c.b16 %v4700, %v4698
        %v5819 = vpack.c.b16 %v4701, %v4699
        %v5820 = vpack.c.b16 %v4704, %v4702
        %v5821 = vpack.c.b16 %v4705, %v4703
        %v5822 = vpack.c.b16 %v4708, %v4706
        %v5823 = vpack.c.b16 %v4709, %v4707
        %v5824 = vpack.c.b16 %v4712, %v4710
        %v5825 = vpack.c.b16 %v4713, %v4711
        %v5826 = vpack.c.b16 %v4716, %v4714
        %v5827 = vpack.c.b16 %v4717, %v4715
        %v5828 = vpack.c.b16 %v4720, %v4718
        %v5829 = vpack.c.b16 %v4721, %v4719
        %v5830 = vpack.c.b16 %v4724, %v4722
        %v5831 = vpack.c.b16 %v4725, %v4723
        %v5832 = vpack.c.b16 %v4728, %v4726
        %v5833 = vpack.c.b16 %v4729, %v4727
        %v5834 = vpack.c.b16 %v4732, %v4730
        %v5835 = vpack.c.b16 %v4733, %v4731
        %v5836 = vpack.c.b16 %v4736, %v4734
        %v5837 = vpack.c.b16 %v4737, %v4735
        %v5838 = vpack.c.b16 %v4740, %v4738
        %v5839 = vpack.c.b16 %v4741, %v4739
        %v5840 = vpack.c.b16 %v4744, %v4742
        %v5841 = vpack.c.b16 %v4745, %v4743
        %v5842 = vpack.c.b16 %v4748, %v4746
        %v5843 = vpack.c.b16 %v4749, %v4747
        %v5844 = vpack.c.b16 %v4752, %v4750
        %v5845 = vpack.c.b16 %v4753, %v4751
        %v5846 = vpack.c.b16 %v4756, %v4754
        %v5847 = vpack.c.b16 %v4757, %v4755
        %v5848 = vpack.c.b16 %v4760, %v4758
        %v5849 = vpack.c.b16 %v4761, %v4759
        %v5850 = vpack.c.b16 %v4764, %v4762
        %v5851 = vpack.c.b16 %v4765, %v4763
        %v5852 = vpack.c.b16 %v4768, %v4766
        %v5853 = vpack.c.b16 %v4769, %v4767
        %v5854 = vpack.c.b16 %v4772, %v4770
        %v5855 = vpack.c.b16 %v4773, %v4771
        %v5856 = vpack.c.b16 %v4776, %v4774
        %v5857 = vpack.c.b16 %v4777, %v4775
        %v5858 = vpack.c.b16 %v4780, %v4778
        %v5859 = vpack.c.b16 %v4781, %v4779
        %v5860 = vpack.c.b16 %v4784, %v4782
        %v5861 = vpack.c.b16 %v4785, %v4783
        %v5862 = vpack.c.b16 %v4788, %v4786
        %v5863 = vpack.c.b16 %v4789, %v4787
        %v5864 = vpack.c.b16 %v4792, %v4790
        %v5865 = vpack.c.b16 %v4793, %v4791
        %v5866 = vpack.c.b16 %v4796, %v4794
        %v5867 = vpack.c.b16 %v4797, %v4795
        %v5868 = vpack.c.b16 %v4800, %v4798
        %v5869 = vpack.c.b16 %v4801, %v4799
        %v5870 = vpack.c.b16 %v4804, %v4802
        %v5871 = vpack.c.b16 %v4805, %v4803
        %v5872 = vpack.c.b16 %v4808, %v4806
        %v5873 = vpack.c.b16 %v4809, %v4807
        %v5874 = vpack.c.b16 %v4812, %v4810
        %v5875 = vpack.c.b16 %v4813, %v4811
        %v5876 = vpack.c.b16 %v4816, %v4814
        %v5877 = vpack.c.b16 %v4817, %v4815
        %v5878 = vpack.c.b16 %v4820, %v4818
        %v5879 = vpack.c.b16 %v4821, %v4819
        %v5880 = vpack.c.b16 %v4824, %v4822
        %v5881 = vpack.c.b16 %v4825, %v4823
        %v5882 = vpack.c.b16 %v4828, %v4826
        %v5883 = vpack.c.b16 %v4829, %v4827
        %v5884 = vpack.c.b16 %v4832, %v4830
        %v5885 = vpack.c.b16 %v4833, %v4831
        %v5886 = vpack.c.b16 %v4836, %v4834
        %v5887 = vpack.c.b16 %v4837, %v4835
        %v5888 = vpack.c.b16 %v4840, %v4838
        %v5889 = vpack.c.b16 %v4841, %v4839
        %v5890 = vpack.c.b16 %v4844, %v4842
        %v5891 = vpack.c.b16 %v4845, %v4843
        %v5892 = vpack.c.b16 %v4848, %v4846
        %v5893 = vpack.c.b16 %v4849, %v4847
        %v5894 = vpack.c.b16 %v4852, %v4850
        %v5895 = vpack.c.b16 %v4853, %v4851
        %v5896 = vpack.c.b16 %v4856, %v4854
        %v5897 = vpack.c.b16 %v4857, %v4855
        %v5898 = vpack.c.b16 %v4860, %v4858
        %v5899 = vpack.c.b16 %v4861, %v4859
        %v5900 = vpack.c.b16 %v4864, %v4862
        %v5901 = vpack.c.b16 %v4865, %v4863
        %v5902 = vpack.c.b16 %v4868, %v4866
        %v5903 = vpack.c.b16 %v4869, %v4867
        %v5904 = vpack.c.b16 %v4872, %v4870
        %v5905 = vpack.c.b16 %v4873, %v4871
        %v5906 = vpack.c.b16 %v4876, %v4874
        %v5907 = vpack.c.b16 %v4877, %v4875
        %v5908 = vpack.c.b16 %v4880, %v4878
        %v5909 = vpack.c.b16 %v4881, %v4879
        %v5910 = vpack.c.b16 %v4884, %v4882
        %v5911 = vpack.c.b16 %v4885, %v4883
        %v5912 = vpack.c.b16 %v4888, %v4886
        %v5913 = vpack.c.b16 %v4889, %v4887
        %6938 = vmatprep.subr.bf16.mxu0 %v4891
        %6939 = vmatpush1.bf16.msra.mxu0 %v4890
        %6940 = vmatprep.subr.bf16.mxu0 %v4893
        %6941 = vmatpush1.bf16.msra.mxu0 %v4892
        %6942 = vmatprep.subr.bf16.mxu0 %v4895
        %6943 = vmatpush1.bf16.msra.mxu0 %v4894
        %6944 = vmatprep.subr.bf16.mxu0 %v4897
        %6945 = vmatpush1.bf16.msra.mxu0 %v4896
        %6946 = vmatprep.subr.bf16.mxu0 %v4899
        %6947 = vmatpush1.bf16.msra.mxu0 %v4898
        %6948 = vmatprep.subr.bf16.mxu0 %v4901
        %6949 = vmatpush1.bf16.msra.mxu0 %v4900
        %6950 = vmatprep.subr.bf16.mxu0 %v4903
        %6951 = vmatpush1.bf16.msra.mxu0 %v4902
        %6952 = vmatprep.subr.bf16.mxu0 %v4905
        %6953 = vmatpush1.bf16.msra.mxu0 %v4904
        %6954 = vmatprep.subr.bf16.mxu0 %v4907
        %6955 = vmatpush1.bf16.msra.mxu0 %v4906
        %6956 = vmatprep.subr.bf16.mxu0 %v4909
        %6957 = vmatpush1.bf16.msra.mxu0 %v4908
        %6958 = vmatprep.subr.bf16.mxu0 %v4911
        %6959 = vmatpush1.bf16.msra.mxu0 %v4910
        %6960 = vmatprep.subr.bf16.mxu0 %v4913
        %6961 = vmatpush1.bf16.msra.mxu0 %v4912
        %6962 = vmatprep.subr.bf16.mxu0 %v4915
        %6963 = vmatpush1.bf16.msra.mxu0 %v4914
        %6964 = vmatprep.subr.bf16.mxu0 %v4917
        %6965 = vmatpush1.bf16.msra.mxu0 %v4916
        %6966 = vmatprep.subr.bf16.mxu0 %v4919
        %6967 = vmatpush1.bf16.msra.mxu0 %v4918
        %6968 = vmatprep.subr.bf16.mxu0 %v4921
        %6969 = vmatpush1.bf16.msra.mxu0 %v4920
        %6970 = vmatprep.mubr.bf16.mxu0 %v1399
        %6971 = vmatmul.mubr.bf16.gmra.mrb[0].mxu0 %v1385
        %v6972 = vpop.f32.mrb[0].mxu0
        %v6973 = vadd.f32 0.0, %v6972
        %v6974 = vpop.f32.mrb[0].mxu0
        %v6975 = vadd.f32 0.0, %v6974
        %v6976 = vpop.f32.mrb[0].mxu0
        %v6977 = vpop.f32.mrb[0].mxu0
        %6978 = vdwg.mxu0
        %6979 = vmatprep.subr.bf16.mxu0 %v4923
        %6980 = vmatpush1.bf16.msra.mxu0 %v4922
        %6981 = vmatprep.subr.bf16.mxu0 %v4925
        %6982 = vmatpush1.bf16.msra.mxu0 %v4924
        %6983 = vmatprep.subr.bf16.mxu0 %v4927
        %6984 = vmatpush1.bf16.msra.mxu0 %v4926
        %6985 = vmatprep.subr.bf16.mxu0 %v4929
        %6986 = vmatpush1.bf16.msra.mxu0 %v4928
        %6987 = vmatprep.subr.bf16.mxu0 %v4931
        %6988 = vmatpush1.bf16.msra.mxu0 %v4930
        %6989 = vmatprep.subr.bf16.mxu0 %v4933
        %6990 = vmatpush1.bf16.msra.mxu0 %v4932
        %6991 = vmatprep.subr.bf16.mxu0 %v4935
        %6992 = vmatpush1.bf16.msra.mxu0 %v4934
        %6993 = vmatprep.subr.bf16.mxu0 %v4937
        %6994 = vmatpush1.bf16.msra.mxu0 %v4936
        %6995 = vmatprep.subr.bf16.mxu0 %v4939
        %6996 = vmatpush1.bf16.msra.mxu0 %v4938
        %6997 = vmatprep.subr.bf16.mxu0 %v4941
        %6998 = vmatpush1.bf16.msra.mxu0 %v4940
        %6999 = vmatprep.subr.bf16.mxu0 %v4943
        %7000 = vmatpush1.bf16.msra.mxu0 %v4942
        %7001 = vmatprep.subr.bf16.mxu0 %v4945
        %7002 = vmatpush1.bf16.msra.mxu0 %v4944
        %7003 = vmatprep.subr.bf16.mxu0 %v4947
        %7004 = vmatpush1.bf16.msra.mxu0 %v4946
        %7005 = vmatprep.subr.bf16.mxu0 %v4949
        %7006 = vmatpush1.bf16.msra.mxu0 %v4948
        %7007 = vmatprep.subr.bf16.mxu0 %v4951
        %7008 = vmatpush1.bf16.msra.mxu0 %v4950
        %7009 = vmatprep.subr.bf16.mxu0 %v4953
        %7010 = vmatpush1.bf16.msra.mxu0 %v4952
        %7011 = vmatprep.mubr.bf16.mxu0 %v1409
        %7012 = vmatmul.mubr.bf16.gmra.mrb[0].mxu0 %v1407
        %v7013 = vpop.f32.mrb[0].mxu0
        %v7014 = vadd.f32 %v6973, %v7013
        %v7015 = vpop.f32.mrb[0].mxu0
        %v7016 = vadd.f32 %v6975, %v7015
        %v7017 = vpop.f32.mrb[0].mxu0
        %v7018 = vpop.f32.mrb[0].mxu0
        %7019 = vdwg.mxu0
        %7020 = vmatprep.subr.bf16.mxu0 %v4955
        %7021 = vmatpush1.bf16.msra.mxu0 %v4954
        %7022 = vmatprep.subr.bf16.mxu0 %v4957
        %7023 = vmatpush1.bf16.msra.mxu0 %v4956
        %7024 = vmatprep.subr.bf16.mxu0 %v4959
        %7025 = vmatpush1.bf16.msra.mxu0 %v4958
        %7026 = vmatprep.subr.bf16.mxu0 %v4961
        %7027 = vmatpush1.bf16.msra.mxu0 %v4960
        %7028 = vmatprep.subr.bf16.mxu0 %v4963
        %7029 = vmatpush1.bf16.msra.mxu0 %v4962
        %7030 = vmatprep.subr.bf16.mxu0 %v4965
        %7031 = vmatpush1.bf16.msra.mxu0 %v4964
        %7032 = vmatprep.subr.bf16.mxu0 %v4967
        %7033 = vmatpush1.bf16.msra.mxu0 %v4966
        %7034 = vmatprep.subr.bf16.mxu0 %v4969
        %7035 = vmatpush1.bf16.msra.mxu0 %v4968
        %7036 = vmatprep.subr.bf16.mxu0 %v4971
        %7037 = vmatpush1.bf16.msra.mxu0 %v4970
        %7038 = vmatprep.subr.bf16.mxu0 %v4973
        %7039 = vmatpush1.bf16.msra.mxu0 %v4972
        %7040 = vmatprep.subr.bf16.mxu0 %v4975
        %7041 = vmatpush1.bf16.msra.mxu0 %v4974
        %7042 = vmatprep.subr.bf16.mxu0 %v4977
        %7043 = vmatpush1.bf16.msra.mxu0 %v4976
        %7044 = vmatprep.subr.bf16.mxu0 %v4979
        %7045 = vmatpush1.bf16.msra.mxu0 %v4978
        %7046 = vmatprep.subr.bf16.mxu0 %v4981
        %7047 = vmatpush1.bf16.msra.mxu0 %v4980
        %7048 = vmatprep.subr.bf16.mxu0 %v4983
        %7049 = vmatpush1.bf16.msra.mxu0 %v4982
        %7050 = vmatprep.subr.bf16.mxu0 %v4985
        %7051 = vmatpush1.bf16.msra.mxu0 %v4984
        %7052 = vmatprep.mubr.bf16.mxu0 %v1406
        %7053 = vmatmul.mubr.bf16.gmra.mrb[0].mxu0 %v1392
        %v7054 = vpop.f32.mrb[0].mxu0
        %v7055 = vadd.f32 %v7014, %v7054
        %v7056 = vpop.f32.mrb[0].mxu0
        %v7057 = vadd.f32 %v7016, %v7056
        %v7058 = vpop.f32.mrb[0].mxu0
        %v7059 = vpop.f32.mrb[0].mxu0
        %7060 = vdwg.mxu0
        %7061 = vmatprep.subr.bf16.mxu0 %v4987
        %7062 = vmatpush1.bf16.msra.mxu0 %v4986
        %7063 = vmatprep.subr.bf16.mxu0 %v4989
        %7064 = vmatpush1.bf16.msra.mxu0 %v4988
        %7065 = vmatprep.subr.bf16.mxu0 %v4991
        %7066 = vmatpush1.bf16.msra.mxu0 %v4990
        %7067 = vmatprep.subr.bf16.mxu0 %v4993
        %7068 = vmatpush1.bf16.msra.mxu0 %v4992
        %7069 = vmatprep.subr.bf16.mxu0 %v4995
        %7070 = vmatpush1.bf16.msra.mxu0 %v4994
        %7071 = vmatprep.subr.bf16.mxu0 %v4997
        %7072 = vmatpush1.bf16.msra.mxu0 %v4996
        %7073 = vmatprep.subr.bf16.mxu0 %v4999
        %7074 = vmatpush1.bf16.msra.mxu0 %v4998
        %7075 = vmatprep.subr.bf16.mxu0 %v5001
        %7076 = vmatpush1.bf16.msra.mxu0 %v5000
        %7077 = vmatprep.subr.bf16.mxu0 %v5003
        %7078 = vmatpush1.bf16.msra.mxu0 %v5002
        %7079 = vmatprep.subr.bf16.mxu0 %v5005
        %7080 = vmatpush1.bf16.msra.mxu0 %v5004
        %7081 = vmatprep.subr.bf16.mxu0 %v5007
        %7082 = vmatpush1.bf16.msra.mxu0 %v5006
        %7083 = vmatprep.subr.bf16.mxu0 %v5009
        %7084 = vmatpush1.bf16.msra.mxu0 %v5008
        %7085 = vmatprep.subr.bf16.mxu0 %v5011
        %7086 = vmatpush1.bf16.msra.mxu0 %v5010
        %7087 = vmatprep.subr.bf16.mxu0 %v5013
        %7088 = vmatpush1.bf16.msra.mxu0 %v5012
        %7089 = vmatprep.subr.bf16.mxu0 %v5015
        %7090 = vmatpush1.bf16.msra.mxu0 %v5014
        %7091 = vmatprep.subr.bf16.mxu0 %v5017
        %7092 = vmatpush1.bf16.msra.mxu0 %v5016
        %7093 = vmatprep.mubr.bf16.mxu0 %v1410
        %7094 = vmatmul.mubr.bf16.gmra.mrb[0].mxu0 %v1408
        %v7095 = vpop.f32.mrb[0].mxu0
        %v7096 = vadd.f32 %v7055, %v7095
        %v7097 = vpop.f32.mrb[0].mxu0
        %v7098 = vadd.f32 %v7057, %v7097
        %v7099 = vpop.f32.mrb[0].mxu0
        %v7100 = vpop.f32.mrb[0].mxu0
        %7101 = vdwg.mxu0
        %7102 = vmatprep.subr.bf16.mxu0 %v5019
        %7103 = vmatpush1.bf16.msra.mxu0 %v5018
        %7104 = vmatprep.subr.bf16.mxu0 %v5021
        %7105 = vmatpush1.bf16.msra.mxu0 %v5020
        %7106 = vmatprep.subr.bf16.mxu0 %v5023
        %7107 = vmatpush1.bf16.msra.mxu0 %v5022
        %7108 = vmatprep.subr.bf16.mxu0 %v5025
        %7109 = vmatpush1.bf16.msra.mxu0 %v5024
        %7110 = vmatprep.subr.bf16.mxu0 %v5027
        %7111 = vmatpush1.bf16.msra.mxu0 %v5026
        %7112 = vmatprep.subr.bf16.mxu0 %v5029
        %7113 = vmatpush1.bf16.msra.mxu0 %v5028
        %7114 = vmatprep.subr.bf16.mxu0 %v5031
        %7115 = vmatpush1.bf16.msra.mxu0 %v5030
        %7116 = vmatprep.subr.bf16.mxu0 %v5033
        %7117 = vmatpush1.bf16.msra.mxu0 %v5032
        %7118 = vmatprep.subr.bf16.mxu0 %v5035
        %7119 = vmatpush1.bf16.msra.mxu0 %v5034
        %7120 = vmatprep.subr.bf16.mxu0 %v5037
        %7121 = vmatpush1.bf16.msra.mxu0 %v5036
        %7122 = vmatprep.subr.bf16.mxu0 %v5039
        %7123 = vmatpush1.bf16.msra.mxu0 %v5038
        %7124 = vmatprep.subr.bf16.mxu0 %v5041
        %7125 = vmatpush1.bf16.msra.mxu0 %v5040
        %7126 = vmatprep.subr.bf16.mxu0 %v5043
        %7127 = vmatpush1.bf16.msra.mxu0 %v5042
        %7128 = vmatprep.subr.bf16.mxu0 %v5045
        %7129 = vmatpush1.bf16.msra.mxu0 %v5044
        %7130 = vmatprep.subr.bf16.mxu0 %v5047
        %7131 = vmatpush1.bf16.msra.mxu0 %v5046
        %7132 = vmatprep.subr.bf16.mxu0 %v5049
        %7133 = vmatpush1.bf16.msra.mxu0 %v5048
        %7134 = vmatprep.mubr.bf16.mxu0 %v1448
        %7135 = vmatmul.mubr.bf16.gmra.mrb[0].mxu0 %v1434
        %v7136 = vpop.f32.mrb[0].mxu0
        %v7137 = vadd.f32 %v7096, %v7136
        %v7138 = vpop.f32.mrb[0].mxu0
        %v7139 = vadd.f32 %v7098, %v7138
        %v7140 = vpop.f32.mrb[0].mxu0
        %v7141 = vpop.f32.mrb[0].mxu0
        %7142 = vdwg.mxu0
        %7143 = vmatprep.subr.bf16.mxu0 %v5051
        %7144 = vmatpush1.bf16.msra.mxu0 %v5050
        %7145 = vmatprep.subr.bf16.mxu0 %v5053
        %7146 = vmatpush1.bf16.msra.mxu0 %v5052
        %7147 = vmatprep.subr.bf16.mxu0 %v5055
        %7148 = vmatpush1.bf16.msra.mxu0 %v5054
        %7149 = vmatprep.subr.bf16.mxu0 %v5057
        %7150 = vmatpush1.bf16.msra.mxu0 %v5056
        %7151 = vmatprep.subr.bf16.mxu0 %v5059
        %7152 = vmatpush1.bf16.msra.mxu0 %v5058
        %7153 = vmatprep.subr.bf16.mxu0 %v5061
        %7154 = vmatpush1.bf16.msra.mxu0 %v5060
        %7155 = vmatprep.subr.bf16.mxu0 %v5063
        %7156 = vmatpush1.bf16.msra.mxu0 %v5062
        %7157 = vmatprep.subr.bf16.mxu0 %v5065
        %7158 = vmatpush1.bf16.msra.mxu0 %v5064
        %7159 = vmatprep.subr.bf16.mxu0 %v5067
        %7160 = vmatpush1.bf16.msra.mxu0 %v5066
        %7161 = vmatprep.subr.bf16.mxu0 %v5069
        %7162 = vmatpush1.bf16.msra.mxu0 %v5068
        %7163 = vmatprep.subr.bf16.mxu0 %v5071
        %7164 = vmatpush1.bf16.msra.mxu0 %v5070
        %7165 = vmatprep.subr.bf16.mxu0 %v5073
        %7166 = vmatpush1.bf16.msra.mxu0 %v5072
        %7167 = vmatprep.subr.bf16.mxu0 %v5075
        %7168 = vmatpush1.bf16.msra.mxu0 %v5074
        %7169 = vmatprep.subr.bf16.mxu0 %v5077
        %7170 = vmatpush1.bf16.msra.mxu0 %v5076
        %7171 = vmatprep.subr.bf16.mxu0 %v5079
        %7172 = vmatpush1.bf16.msra.mxu0 %v5078
        %7173 = vmatprep.subr.bf16.mxu0 %v5081
        %7174 = vmatpush1.bf16.msra.mxu0 %v5080
        %7175 = vmatprep.mubr.bf16.mxu0 %v1458
        %7176 = vmatmul.mubr.bf16.gmra.mrb[0].mxu0 %v1456
        %v7177 = vpop.f32.mrb[0].mxu0
        %v7178 = vadd.f32 %v7137, %v7177
        %v7179 = vpop.f32.mrb[0].mxu0
        %v7180 = vadd.f32 %v7139, %v7179
        %v7181 = vpop.f32.mrb[0].mxu0
        %v7182 = vpop.f32.mrb[0].mxu0
        %7183 = vdwg.mxu0
        %7184 = vmatprep.subr.bf16.mxu0 %v5083
        %7185 = vmatpush1.bf16.msra.mxu0 %v5082
        %7186 = vmatprep.subr.bf16.mxu0 %v5085
        %7187 = vmatpush1.bf16.msra.mxu0 %v5084
        %7188 = vmatprep.subr.bf16.mxu0 %v5087
        %7189 = vmatpush1.bf16.msra.mxu0 %v5086
        %7190 = vmatprep.subr.bf16.mxu0 %v5089
        %7191 = vmatpush1.bf16.msra.mxu0 %v5088
        %7192 = vmatprep.subr.bf16.mxu0 %v5091
        %7193 = vmatpush1.bf16.msra.mxu0 %v5090
        %7194 = vmatprep.subr.bf16.mxu0 %v5093
        %7195 = vmatpush1.bf16.msra.mxu0 %v5092
        %7196 = vmatprep.subr.bf16.mxu0 %v5095
        %7197 = vmatpush1.bf16.msra.mxu0 %v5094
        %7198 = vmatprep.subr.bf16.mxu0 %v5097
        %7199 = vmatpush1.bf16.msra.mxu0 %v5096
        %7200 = vmatprep.subr.bf16.mxu0 %v5099
        %7201 = vmatpush1.bf16.msra.mxu0 %v5098
        %7202 = vmatprep.subr.bf16.mxu0 %v5101
        %7203 = vmatpush1.bf16.msra.mxu0 %v5100
        %7204 = vmatprep.subr.bf16.mxu0 %v5103
        %7205 = vmatpush1.bf16.msra.mxu0 %v5102
        %7206 = vmatprep.subr.bf16.mxu0 %v5105
        %7207 = vmatpush1.bf16.msra.mxu0 %v5104
        %7208 = vmatprep.subr.bf16.mxu0 %v5107
        %7209 = vmatpush1.bf16.msra.mxu0 %v5106
        %7210 = vmatprep.subr.bf16.mxu0 %v5109
        %7211 = vmatpush1.bf16.msra.mxu0 %v5108
        %7212 = vmatprep.subr.bf16.mxu0 %v5111
        %7213 = vmatpush1.bf16.msra.mxu0 %v5110
        %7214 = vmatprep.subr.bf16.mxu0 %v5113
        %7215 = vmatpush1.bf16.msra.mxu0 %v5112
        %7216 = vmatprep.mubr.bf16.mxu0 %v1455
        %7217 = vmatmul.mubr.bf16.gmra.mrb[0].mxu0 %v1441
        %v7218 = vpop.f32.mrb[0].mxu0
        %v7219 = vadd.f32 %v7178, %v7218
        %v7220 = vpop.f32.mrb[0].mxu0
        %v7221 = vadd.f32 %v7180, %v7220
        %v7222 = vpop.f32.mrb[0].mxu0
        %v7223 = vpop.f32.mrb[0].mxu0
        %7224 = vdwg.mxu0
        %7225 = vmatprep.subr.bf16.mxu0 %v5115
        %7226 = vmatpush1.bf16.msra.mxu0 %v5114
        %7227 = vmatprep.subr.bf16.mxu0 %v5117
        %7228 = vmatpush1.bf16.msra.mxu0 %v5116
        %7229 = vmatprep.subr.bf16.mxu0 %v5119
        %7230 = vmatpush1.bf16.msra.mxu0 %v5118
        %7231 = vmatprep.subr.bf16.mxu0 %v5121
        %7232 = vmatpush1.bf16.msra.mxu0 %v5120
        %7233 = vmatprep.subr.bf16.mxu0 %v5123
        %7234 = vmatpush1.bf16.msra.mxu0 %v5122
        %7235 = vmatprep.subr.bf16.mxu0 %v5125
        %7236 = vmatpush1.bf16.msra.mxu0 %v5124
        %7237 = vmatprep.subr.bf16.mxu0 %v5127
        %7238 = vmatpush1.bf16.msra.mxu0 %v5126
        %7239 = vmatprep.subr.bf16.mxu0 %v5129
        %7240 = vmatpush1.bf16.msra.mxu0 %v5128
        %7241 = vmatprep.subr.bf16.mxu0 %v5131
        %7242 = vmatpush1.bf16.msra.mxu0 %v5130
        %7243 = vmatprep.subr.bf16.mxu0 %v5133
        %7244 = vmatpush1.bf16.msra.mxu0 %v5132
        %7245 = vmatprep.subr.bf16.mxu0 %v5135
        %7246 = vmatpush1.bf16.msra.mxu0 %v5134
        %7247 = vmatprep.subr.bf16.mxu0 %v5137
        %7248 = vmatpush1.bf16.msra.mxu0 %v5136
        %7249 = vmatprep.subr.bf16.mxu0 %v5139
        %7250 = vmatpush1.bf16.msra.mxu0 %v5138
        %7251 = vmatprep.subr.bf16.mxu0 %v5141
        %7252 = vmatpush1.bf16.msra.mxu0 %v5140
        %7253 = vmatprep.subr.bf16.mxu0 %v5143
        %7254 = vmatpush1.bf16.msra.mxu0 %v5142
        %7255 = vmatprep.subr.bf16.mxu0 %v5145
        %7256 = vmatpush1.bf16.msra.mxu0 %v5144
        %7257 = vmatprep.mubr.bf16.mxu0 %v1459
        %7258 = vmatmul.mubr.bf16.gmra.mrb[0].mxu0 %v1457
        %v7259 = vpop.f32.mrb[0].mxu0
        %v7260 = vadd.f32 %v7219, %v7259
        %v7261 = vpop.f32.mrb[0].mxu0
        %v7262 = vadd.f32 %v7221, %v7261
        %v7263 = vpop.f32.mrb[0].mxu0
        %v7264 = vpop.f32.mrb[0].mxu0
        %7265 = vdwg.mxu0
        %7266 = vmatprep.subr.bf16.mxu0 %v5147
        %7267 = vmatpush1.bf16.msra.mxu0 %v5146
        %7268 = vmatprep.subr.bf16.mxu0 %v5149
        %7269 = vmatpush1.bf16.msra.mxu0 %v5148
        %7270 = vmatprep.subr.bf16.mxu0 %v5151
        %7271 = vmatpush1.bf16.msra.mxu0 %v5150
        %7272 = vmatprep.subr.bf16.mxu0 %v5153
        %7273 = vmatpush1.bf16.msra.mxu0 %v5152
        %7274 = vmatprep.subr.bf16.mxu0 %v5155
        %7275 = vmatpush1.bf16.msra.mxu0 %v5154
        %7276 = vmatprep.subr.bf16.mxu0 %v5157
        %7277 = vmatpush1.bf16.msra.mxu0 %v5156
        %7278 = vmatprep.subr.bf16.mxu0 %v5159
        %7279 = vmatpush1.bf16.msra.mxu0 %v5158
        %7280 = vmatprep.subr.bf16.mxu0 %v5161
        %7281 = vmatpush1.bf16.msra.mxu0 %v5160
        %7282 = vmatprep.subr.bf16.mxu0 %v5163
        %7283 = vmatpush1.bf16.msra.mxu0 %v5162
        %7284 = vmatprep.subr.bf16.mxu0 %v5165
        %7285 = vmatpush1.bf16.msra.mxu0 %v5164
        %7286 = vmatprep.subr.bf16.mxu0 %v5167
        %7287 = vmatpush1.bf16.msra.mxu0 %v5166
        %7288 = vmatprep.subr.bf16.mxu0 %v5169
        %7289 = vmatpush1.bf16.msra.mxu0 %v5168
        %7290 = vmatprep.subr.bf16.mxu0 %v5171
        %7291 = vmatpush1.bf16.msra.mxu0 %v5170
        %7292 = vmatprep.subr.bf16.mxu0 %v5173
        %7293 = vmatpush1.bf16.msra.mxu0 %v5172
        %7294 = vmatprep.subr.bf16.mxu0 %v5175
        %7295 = vmatpush1.bf16.msra.mxu0 %v5174
        %7296 = vmatprep.subr.bf16.mxu0 %v5177
        %7297 = vmatpush1.bf16.msra.mxu0 %v5176
        %7298 = vmatprep.mubr.bf16.mxu0 %v1497
        %7299 = vmatmul.mubr.bf16.gmra.mrb[0].mxu0 %v1483
        %v7300 = vpop.f32.mrb[0].mxu0
        %v7301 = vadd.f32 %v7260, %v7300
        %v7302 = vpop.f32.mrb[0].mxu0
        %v7303 = vadd.f32 %v7262, %v7302
        %v7304 = vpop.f32.mrb[0].mxu0
        %v7305 = vpop.f32.mrb[0].mxu0
        %7306 = vdwg.mxu0
        %7307 = vmatprep.subr.bf16.mxu0 %v5179
        %7308 = vmatpush1.bf16.msra.mxu0 %v5178
        %7309 = vmatprep.subr.bf16.mxu0 %v5181
        %7310 = vmatpush1.bf16.msra.mxu0 %v5180
        %7311 = vmatprep.subr.bf16.mxu0 %v5183
        %7312 = vmatpush1.bf16.msra.mxu0 %v5182
        %7313 = vmatprep.subr.bf16.mxu0 %v5185
        %7314 = vmatpush1.bf16.msra.mxu0 %v5184
        %7315 = vmatprep.subr.bf16.mxu0 %v5187
        %7316 = vmatpush1.bf16.msra.mxu0 %v5186
        %7317 = vmatprep.subr.bf16.mxu0 %v5189
        %7318 = vmatpush1.bf16.msra.mxu0 %v5188
        %7319 = vmatprep.subr.bf16.mxu0 %v5191
        %7320 = vmatpush1.bf16.msra.mxu0 %v5190
        %7321 = vmatprep.subr.bf16.mxu0 %v5193
        %7322 = vmatpush1.bf16.msra.mxu0 %v5192
        %7323 = vmatprep.subr.bf16.mxu0 %v5195
        %7324 = vmatpush1.bf16.msra.mxu0 %v5194
        %7325 = vmatprep.subr.bf16.mxu0 %v5197
        %7326 = vmatpush1.bf16.msra.mxu0 %v5196
        %7327 = vmatprep.subr.bf16.mxu0 %v5199
        %7328 = vmatpush1.bf16.msra.mxu0 %v5198
        %7329 = vmatprep.subr.bf16.mxu0 %v5201
        %7330 = vmatpush1.bf16.msra.mxu0 %v5200
        %7331 = vmatprep.subr.bf16.mxu0 %v5203
        %7332 = vmatpush1.bf16.msra.mxu0 %v5202
        %7333 = vmatprep.subr.bf16.mxu0 %v5205
        %7334 = vmatpush1.bf16.msra.mxu0 %v5204
        %7335 = vmatprep.subr.bf16.mxu0 %v5207
        %7336 = vmatpush1.bf16.msra.mxu0 %v5206
        %7337 = vmatprep.subr.bf16.mxu0 %v5209
        %7338 = vmatpush1.bf16.msra.mxu0 %v5208
        %7339 = vmatprep.mubr.bf16.mxu0 %v1507
        %7340 = vmatmul.mubr.bf16.gmra.mrb[0].mxu0 %v1505
        %v7341 = vpop.f32.mrb[0].mxu0
        %v7342 = vadd.f32 %v7301, %v7341
        %v7343 = vpop.f32.mrb[0].mxu0
        %v7344 = vadd.f32 %v7303, %v7343
        %v7345 = vpop.f32.mrb[0].mxu0
        %v7346 = vpop.f32.mrb[0].mxu0
        %7347 = vdwg.mxu0
        %7348 = vmatprep.subr.bf16.mxu0 %v5211
        %7349 = vmatpush1.bf16.msra.mxu0 %v5210
        %7350 = vmatprep.subr.bf16.mxu0 %v5213
        %7351 = vmatpush1.bf16.msra.mxu0 %v5212
        %7352 = vmatprep.subr.bf16.mxu0 %v5215
        %7353 = vmatpush1.bf16.msra.mxu0 %v5214
        %7354 = vmatprep.subr.bf16.mxu0 %v5217
        %7355 = vmatpush1.bf16.msra.mxu0 %v5216
        %7356 = vmatprep.subr.bf16.mxu0 %v5219
        %7357 = vmatpush1.bf16.msra.mxu0 %v5218
        %7358 = vmatprep.subr.bf16.mxu0 %v5221
        %7359 = vmatpush1.bf16.msra.mxu0 %v5220
        %7360 = vmatprep.subr.bf16.mxu0 %v5223
        %7361 = vmatpush1.bf16.msra.mxu0 %v5222
        %7362 = vmatprep.subr.bf16.mxu0 %v5225
        %7363 = vmatpush1.bf16.msra.mxu0 %v5224
        %7364 = vmatprep.subr.bf16.mxu0 %v5227
        %7365 = vmatpush1.bf16.msra.mxu0 %v5226
        %7366 = vmatprep.subr.bf16.mxu0 %v5229
        %7367 = vmatpush1.bf16.msra.mxu0 %v5228
        %7368 = vmatprep.subr.bf16.mxu0 %v5231
        %7369 = vmatpush1.bf16.msra.mxu0 %v5230
        %7370 = vmatprep.subr.bf16.mxu0 %v5233
        %7371 = vmatpush1.bf16.msra.mxu0 %v5232
        %7372 = vmatprep.subr.bf16.mxu0 %v5235
        %7373 = vmatpush1.bf16.msra.mxu0 %v5234
        %7374 = vmatprep.subr.bf16.mxu0 %v5237
        %7375 = vmatpush1.bf16.msra.mxu0 %v5236
        %7376 = vmatprep.subr.bf16.mxu0 %v5239
        %7377 = vmatpush1.bf16.msra.mxu0 %v5238
        %7378 = vmatprep.subr.bf16.mxu0 %v5241
        %7379 = vmatpush1.bf16.msra.mxu0 %v5240
        %7380 = vmatprep.mubr.bf16.mxu0 %v1504
        %7381 = vmatmul.mubr.bf16.gmra.mrb[0].mxu0 %v1490
        %v7382 = vpop.f32.mrb[0].mxu0
        %v7383 = vadd.f32 %v7342, %v7382
        %v7384 = vpop.f32.mrb[0].mxu0
        %v7385 = vadd.f32 %v7344, %v7384
        %v7386 = vpop.f32.mrb[0].mxu0
        %v7387 = vpop.f32.mrb[0].mxu0
        %7388 = vdwg.mxu0
        %7389 = vmatprep.subr.bf16.mxu0 %v5243
        %7390 = vmatpush1.bf16.msra.mxu0 %v5242
        %7391 = vmatprep.subr.bf16.mxu0 %v5245
        %7392 = vmatpush1.bf16.msra.mxu0 %v5244
        %7393 = vmatprep.subr.bf16.mxu0 %v5247
        %7394 = vmatpush1.bf16.msra.mxu0 %v5246
        %7395 = vmatprep.subr.bf16.mxu0 %v5249
        %7396 = vmatpush1.bf16.msra.mxu0 %v5248
        %7397 = vmatprep.subr.bf16.mxu0 %v5251
        %7398 = vmatpush1.bf16.msra.mxu0 %v5250
        %7399 = vmatprep.subr.bf16.mxu0 %v5253
        %7400 = vmatpush1.bf16.msra.mxu0 %v5252
        %7401 = vmatprep.subr.bf16.mxu0 %v5255
        %7402 = vmatpush1.bf16.msra.mxu0 %v5254
        %7403 = vmatprep.subr.bf16.mxu0 %v5257
        %7404 = vmatpush1.bf16.msra.mxu0 %v5256
        %7405 = vmatprep.subr.bf16.mxu0 %v5259
        %7406 = vmatpush1.bf16.msra.mxu0 %v5258
        %7407 = vmatprep.subr.bf16.mxu0 %v5261
        %7408 = vmatpush1.bf16.msra.mxu0 %v5260
        %7409 = vmatprep.subr.bf16.mxu0 %v5263
        %7410 = vmatpush1.bf16.msra.mxu0 %v5262
        %7411 = vmatprep.subr.bf16.mxu0 %v5265
        %7412 = vmatpush1.bf16.msra.mxu0 %v5264
        %7413 = vmatprep.subr.bf16.mxu0 %v5267
        %7414 = vmatpush1.bf16.msra.mxu0 %v5266
        %7415 = vmatprep.subr.bf16.mxu0 %v5269
        %7416 = vmatpush1.bf16.msra.mxu0 %v5268
        %7417 = vmatprep.subr.bf16.mxu0 %v5271
        %7418 = vmatpush1.bf16.msra.mxu0 %v5270
        %7419 = vmatprep.subr.bf16.mxu0 %v5273
        %7420 = vmatpush1.bf16.msra.mxu0 %v5272
        %7421 = vmatprep.mubr.bf16.mxu0 %v1508
        %7422 = vmatmul.mubr.bf16.gmra.mrb[0].mxu0 %v1506
        %v7423 = vpop.f32.mrb[0].mxu0
        %v7424 = vadd.f32 %v7383, %v7423
        %v7425 = vpop.f32.mrb[0].mxu0
        %v7426 = vadd.f32 %v7385, %v7425
        %v7427 = vpop.f32.mrb[0].mxu0
        %v7428 = vpop.f32.mrb[0].mxu0
        %7429 = vdwg.mxu0
        %7430 = vmatprep.subr.bf16.mxu0 %v5275
        %7431 = vmatpush1.bf16.msra.mxu0 %v5274
        %7432 = vmatprep.subr.bf16.mxu0 %v5277
        %7433 = vmatpush1.bf16.msra.mxu0 %v5276
        %7434 = vmatprep.subr.bf16.mxu0 %v5279
        %7435 = vmatpush1.bf16.msra.mxu0 %v5278
        %7436 = vmatprep.subr.bf16.mxu0 %v5281
        %7437 = vmatpush1.bf16.msra.mxu0 %v5280
        %7438 = vmatprep.subr.bf16.mxu0 %v5283
        %7439 = vmatpush1.bf16.msra.mxu0 %v5282
        %7440 = vmatprep.subr.bf16.mxu0 %v5285
        %7441 = vmatpush1.bf16.msra.mxu0 %v5284
        %7442 = vmatprep.subr.bf16.mxu0 %v5287
        %7443 = vmatpush1.bf16.msra.mxu0 %v5286
        %7444 = vmatprep.subr.bf16.mxu0 %v5289
        %7445 = vmatpush1.bf16.msra.mxu0 %v5288
        %7446 = vmatprep.subr.bf16.mxu0 %v5291
        %7447 = vmatpush1.bf16.msra.mxu0 %v5290
        %7448 = vmatprep.subr.bf16.mxu0 %v5293
        %7449 = vmatpush1.bf16.msra.mxu0 %v5292
        %7450 = vmatprep.subr.bf16.mxu0 %v5295
        %7451 = vmatpush1.bf16.msra.mxu0 %v5294
        %7452 = vmatprep.subr.bf16.mxu0 %v5297
        %7453 = vmatpush1.bf16.msra.mxu0 %v5296
        %7454 = vmatprep.subr.bf16.mxu0 %v5299
        %7455 = vmatpush1.bf16.msra.mxu0 %v5298
        %7456 = vmatprep.subr.bf16.mxu0 %v5301
        %7457 = vmatpush1.bf16.msra.mxu0 %v5300
        %7458 = vmatprep.subr.bf16.mxu0 %v5303
        %7459 = vmatpush1.bf16.msra.mxu0 %v5302
        %7460 = vmatprep.subr.bf16.mxu0 %v5305
        %7461 = vmatpush1.bf16.msra.mxu0 %v5304
        %7462 = vmatprep.mubr.bf16.mxu0 %v1546
        %7463 = vmatmul.mubr.bf16.gmra.mrb[0].mxu0 %v1532
        %v7464 = vpop.f32.mrb[0].mxu0
        %v7465 = vadd.f32 %v7424, %v7464
        %v7466 = vpop.f32.mrb[0].mxu0
        %v7467 = vadd.f32 %v7426, %v7466
        %v7468 = vpop.f32.mrb[0].mxu0
        %v7469 = vpop.f32.mrb[0].mxu0
        %7470 = vdwg.mxu0
        %7471 = vmatprep.subr.bf16.mxu0 %v5307
        %7472 = vmatpush1.bf16.msra.mxu0 %v5306
        %7473 = vmatprep.subr.bf16.mxu0 %v5309
        %7474 = vmatpush1.bf16.msra.mxu0 %v5308
        %7475 = vmatprep.subr.bf16.mxu0 %v5311
        %7476 = vmatpush1.bf16.msra.mxu0 %v5310
        %7477 = vmatprep.subr.bf16.mxu0 %v5313
        %7478 = vmatpush1.bf16.msra.mxu0 %v5312
        %7479 = vmatprep.subr.bf16.mxu0 %v5315
        %7480 = vmatpush1.bf16.msra.mxu0 %v5314
        %7481 = vmatprep.subr.bf16.mxu0 %v5317
        %7482 = vmatpush1.bf16.msra.mxu0 %v5316
        %7483 = vmatprep.subr.bf16.mxu0 %v5319
        %7484 = vmatpush1.bf16.msra.mxu0 %v5318
        %7485 = vmatprep.subr.bf16.mxu0 %v5321
        %7486 = vmatpush1.bf16.msra.mxu0 %v5320
        %7487 = vmatprep.subr.bf16.mxu0 %v5323
        %7488 = vmatpush1.bf16.msra.mxu0 %v5322
        %7489 = vmatprep.subr.bf16.mxu0 %v5325
        %7490 = vmatpush1.bf16.msra.mxu0 %v5324
        %7491 = vmatprep.subr.bf16.mxu0 %v5327
        %7492 = vmatpush1.bf16.msra.mxu0 %v5326
        %7493 = vmatprep.subr.bf16.mxu0 %v5329
        %7494 = vmatpush1.bf16.msra.mxu0 %v5328
        %7495 = vmatprep.subr.bf16.mxu0 %v5331
        %7496 = vmatpush1.bf16.msra.mxu0 %v5330
        %7497 = vmatprep.subr.bf16.mxu0 %v5333
        %7498 = vmatpush1.bf16.msra.mxu0 %v5332
        %7499 = vmatprep.subr.bf16.mxu0 %v5335
        %7500 = vmatpush1.bf16.msra.mxu0 %v5334
        %7501 = vmatprep.subr.bf16.mxu0 %v5337
        %7502 = vmatpush1.bf16.msra.mxu0 %v5336
        %7503 = vmatprep.mubr.bf16.mxu0 %v1556
        %7504 = vmatmul.mubr.bf16.gmra.mrb[0].mxu0 %v1554
        %v7505 = vpop.f32.mrb[0].mxu0
        %v7506 = vadd.f32 %v7465, %v7505
        %v7507 = vpop.f32.mrb[0].mxu0
        %v7508 = vadd.f32 %v7467, %v7507
        %v7509 = vpop.f32.mrb[0].mxu0
        %v7510 = vpop.f32.mrb[0].mxu0
        %7511 = vdwg.mxu0
        %7512 = vmatprep.subr.bf16.mxu0 %v5339
        %7513 = vmatpush1.bf16.msra.mxu0 %v5338
        %7514 = vmatprep.subr.bf16.mxu0 %v5341
        %7515 = vmatpush1.bf16.msra.mxu0 %v5340
        %7516 = vmatprep.subr.bf16.mxu0 %v5343
        %7517 = vmatpush1.bf16.msra.mxu0 %v5342
        %7518 = vmatprep.subr.bf16.mxu0 %v5345
        %7519 = vmatpush1.bf16.msra.mxu0 %v5344
        %7520 = vmatprep.subr.bf16.mxu0 %v5347
        %7521 = vmatpush1.bf16.msra.mxu0 %v5346
        %7522 = vmatprep.subr.bf16.mxu0 %v5349
        %7523 = vmatpush1.bf16.msra.mxu0 %v5348
        %7524 = vmatprep.subr.bf16.mxu0 %v5351
        %7525 = vmatpush1.bf16.msra.mxu0 %v5350
        %7526 = vmatprep.subr.bf16.mxu0 %v5353
        %7527 = vmatpush1.bf16.msra.mxu0 %v5352
        %7528 = vmatprep.subr.bf16.mxu0 %v5355
        %7529 = vmatpush1.bf16.msra.mxu0 %v5354
        %7530 = vmatprep.subr.bf16.mxu0 %v5357
        %7531 = vmatpush1.bf16.msra.mxu0 %v5356
        %7532 = vmatprep.subr.bf16.mxu0 %v5359
        %7533 = vmatpush1.bf16.msra.mxu0 %v5358
        %7534 = vmatprep.subr.bf16.mxu0 %v5361
        %7535 = vmatpush1.bf16.msra.mxu0 %v5360
        %7536 = vmatprep.subr.bf16.mxu0 %v5363
        %7537 = vmatpush1.bf16.msra.mxu0 %v5362
        %7538 = vmatprep.subr.bf16.mxu0 %v5365
        %7539 = vmatpush1.bf16.msra.mxu0 %v5364
        %7540 = vmatprep.subr.bf16.mxu0 %v5367
        %7541 = vmatpush1.bf16.msra.mxu0 %v5366
        %7542 = vmatprep.subr.bf16.mxu0 %v5369
        %7543 = vmatpush1.bf16.msra.mxu0 %v5368
        %7544 = vmatprep.mubr.bf16.mxu0 %v1553
        %7545 = vmatmul.mubr.bf16.gmra.mrb[0].mxu0 %v1539
        %v7546 = vpop.f32.mrb[0].mxu0
        %v7547 = vadd.f32 %v7506, %v7546
        %v7548 = vpop.f32.mrb[0].mxu0
        %v7549 = vadd.f32 %v7508, %v7548
        %v7550 = vpop.f32.mrb[0].mxu0
        %v7551 = vpop.f32.mrb[0].mxu0
        %7552 = vdwg.mxu0
        %7553 = vmatprep.subr.bf16.mxu0 %v5371
        %7554 = vmatpush1.bf16.msra.mxu0 %v5370
        %7555 = vmatprep.subr.bf16.mxu0 %v5373
        %7556 = vmatpush1.bf16.msra.mxu0 %v5372
        %7557 = vmatprep.subr.bf16.mxu0 %v5375
        %7558 = vmatpush1.bf16.msra.mxu0 %v5374
        %7559 = vmatprep.subr.bf16.mxu0 %v5377
        %7560 = vmatpush1.bf16.msra.mxu0 %v5376
        %7561 = vmatprep.subr.bf16.mxu0 %v5379
        %7562 = vmatpush1.bf16.msra.mxu0 %v5378
        %7563 = vmatprep.subr.bf16.mxu0 %v5381
        %7564 = vmatpush1.bf16.msra.mxu0 %v5380
        %7565 = vmatprep.subr.bf16.mxu0 %v5383
        %7566 = vmatpush1.bf16.msra.mxu0 %v5382
        %7567 = vmatprep.subr.bf16.mxu0 %v5385
        %7568 = vmatpush1.bf16.msra.mxu0 %v5384
        %7569 = vmatprep.subr.bf16.mxu0 %v5387
        %7570 = vmatpush1.bf16.msra.mxu0 %v5386
        %7571 = vmatprep.subr.bf16.mxu0 %v5389
        %7572 = vmatpush1.bf16.msra.mxu0 %v5388
        %7573 = vmatprep.subr.bf16.mxu0 %v5391
        %7574 = vmatpush1.bf16.msra.mxu0 %v5390
        %7575 = vmatprep.subr.bf16.mxu0 %v5393
        %7576 = vmatpush1.bf16.msra.mxu0 %v5392
        %7577 = vmatprep.subr.bf16.mxu0 %v5395
        %7578 = vmatpush1.bf16.msra.mxu0 %v5394
        %7579 = vmatprep.subr.bf16.mxu0 %v5397
        %7580 = vmatpush1.bf16.msra.mxu0 %v5396
        %7581 = vmatprep.subr.bf16.mxu0 %v5399
        %7582 = vmatpush1.bf16.msra.mxu0 %v5398
        %7583 = vmatprep.subr.bf16.mxu0 %v5401
        %7584 = vmatpush1.bf16.msra.mxu0 %v5400
        %7585 = vmatprep.mubr.bf16.mxu0 %v1557
        %7586 = vmatmul.mubr.bf16.gmra.mrb[0].mxu0 %v1555
        %v7587 = vpop.f32.mrb[0].mxu0
        %v7588 = vadd.f32 %v7547, %v7587
        %v7589 = vpop.f32.mrb[0].mxu0
        %v7590 = vadd.f32 %v7549, %v7589
        %v7591 = vpop.f32.mrb[0].mxu0
        %v7592 = vpop.f32.mrb[0].mxu0
        %7593 = vdwg.mxu0
        %7594 = vmatprep.subr.bf16.mxu0 %v5403
        %7595 = vmatpush1.bf16.msra.mxu0 %v5402
        %7596 = vmatprep.subr.bf16.mxu0 %v5405
        %7597 = vmatpush1.bf16.msra.mxu0 %v5404
        %7598 = vmatprep.subr.bf16.mxu0 %v5407
        %7599 = vmatpush1.bf16.msra.mxu0 %v5406
        %7600 = vmatprep.subr.bf16.mxu0 %v5409
        %7601 = vmatpush1.bf16.msra.mxu0 %v5408
        %7602 = vmatprep.subr.bf16.mxu0 %v5411
        %7603 = vmatpush1.bf16.msra.mxu0 %v5410
        %7604 = vmatprep.subr.bf16.mxu0 %v5413
        %7605 = vmatpush1.bf16.msra.mxu0 %v5412
        %7606 = vmatprep.subr.bf16.mxu0 %v5415
        %7607 = vmatpush1.bf16.msra.mxu0 %v5414
        %7608 = vmatprep.subr.bf16.mxu0 %v5417
        %7609 = vmatpush1.bf16.msra.mxu0 %v5416
        %7610 = vmatprep.subr.bf16.mxu0 %v5419
        %7611 = vmatpush1.bf16.msra.mxu0 %v5418
        %7612 = vmatprep.subr.bf16.mxu0 %v5421
        %7613 = vmatpush1.bf16.msra.mxu0 %v5420
        %7614 = vmatprep.subr.bf16.mxu0 %v5423
        %7615 = vmatpush1.bf16.msra.mxu0 %v5422
        %7616 = vmatprep.subr.bf16.mxu0 %v5425
        %7617 = vmatpush1.bf16.msra.mxu0 %v5424
        %7618 = vmatprep.subr.bf16.mxu0 %v5427
        %7619 = vmatpush1.bf16.msra.mxu0 %v5426
        %7620 = vmatprep.subr.bf16.mxu0 %v5429
        %7621 = vmatpush1.bf16.msra.mxu0 %v5428
        %7622 = vmatprep.subr.bf16.mxu0 %v5431
        %7623 = vmatpush1.bf16.msra.mxu0 %v5430
        %7624 = vmatprep.subr.bf16.mxu0 %v5433
        %7625 = vmatpush1.bf16.msra.mxu0 %v5432
        %7626 = vmatprep.mubr.bf16.mxu0 %v1595
        %7627 = vmatmul.mubr.bf16.gmra.mrb[0].mxu0 %v1581
        %v7628 = vpop.f32.mrb[0].mxu0
        %v7629 = vadd.f32 %v7588, %v7628
        %v7630 = vpop.f32.mrb[0].mxu0
        %v7631 = vadd.f32 %v7590, %v7630
        %v7632 = vpop.f32.mrb[0].mxu0
        %v7633 = vpop.f32.mrb[0].mxu0
        %7634 = vdwg.mxu0
        %7635 = vmatprep.subr.bf16.mxu0 %v5435
        %7636 = vmatpush1.bf16.msra.mxu0 %v5434
        %7637 = vmatprep.subr.bf16.mxu0 %v5437
        %7638 = vmatpush1.bf16.msra.mxu0 %v5436
        %7639 = vmatprep.subr.bf16.mxu0 %v5439
        %7640 = vmatpush1.bf16.msra.mxu0 %v5438
        %7641 = vmatprep.subr.bf16.mxu0 %v5441
        %7642 = vmatpush1.bf16.msra.mxu0 %v5440
        %7643 = vmatprep.subr.bf16.mxu0 %v5443
        %7644 = vmatpush1.bf16.msra.mxu0 %v5442
        %7645 = vmatprep.subr.bf16.mxu0 %v5445
        %7646 = vmatpush1.bf16.msra.mxu0 %v5444
        %7647 = vmatprep.subr.bf16.mxu0 %v5447
        %7648 = vmatpush1.bf16.msra.mxu0 %v5446
        %7649 = vmatprep.subr.bf16.mxu0 %v5449
        %7650 = vmatpush1.bf16.msra.mxu0 %v5448
        %7651 = vmatprep.subr.bf16.mxu0 %v5451
        %7652 = vmatpush1.bf16.msra.mxu0 %v5450
        %7653 = vmatprep.subr.bf16.mxu0 %v5453
        %7654 = vmatpush1.bf16.msra.mxu0 %v5452
        %7655 = vmatprep.subr.bf16.mxu0 %v5455
        %7656 = vmatpush1.bf16.msra.mxu0 %v5454
        %7657 = vmatprep.subr.bf16.mxu0 %v5457
        %7658 = vmatpush1.bf16.msra.mxu0 %v5456
        %7659 = vmatprep.subr.bf16.mxu0 %v5459
        %7660 = vmatpush1.bf16.msra.mxu0 %v5458
        %7661 = vmatprep.subr.bf16.mxu0 %v5461
        %7662 = vmatpush1.bf16.msra.mxu0 %v5460
        %7663 = vmatprep.subr.bf16.mxu0 %v5463
        %7664 = vmatpush1.bf16.msra.mxu0 %v5462
        %7665 = vmatprep.subr.bf16.mxu0 %v5465
        %7666 = vmatpush1.bf16.msra.mxu0 %v5464
        %7667 = vmatprep.mubr.bf16.mxu0 %v1605
        %7668 = vmatmul.mubr.bf16.gmra.mrb[0].mxu0 %v1603
        %v7669 = vpop.f32.mrb[0].mxu0
        %v7670 = vadd.f32 %v7629, %v7669
        %v7671 = vpop.f32.mrb[0].mxu0
        %v7672 = vadd.f32 %v7631, %v7671
        %v7673 = vpop.f32.mrb[0].mxu0
        %v7674 = vpop.f32.mrb[0].mxu0
        %7675 = vdwg.mxu0
        %7676 = vmatprep.subr.bf16.mxu0 %v5467
        %7677 = vmatpush1.bf16.msra.mxu0 %v5466
        %7678 = vmatprep.subr.bf16.mxu0 %v5469
        %7679 = vmatpush1.bf16.msra.mxu0 %v5468
        %7680 = vmatprep.subr.bf16.mxu0 %v5471
        %7681 = vmatpush1.bf16.msra.mxu0 %v5470
        %7682 = vmatprep.subr.bf16.mxu0 %v5473
        %7683 = vmatpush1.bf16.msra.mxu0 %v5472
        %7684 = vmatprep.subr.bf16.mxu0 %v5475
        %7685 = vmatpush1.bf16.msra.mxu0 %v5474
        %7686 = vmatprep.subr.bf16.mxu0 %v5477
        %7687 = vmatpush1.bf16.msra.mxu0 %v5476
        %7688 = vmatprep.subr.bf16.mxu0 %v5479
        %7689 = vmatpush1.bf16.msra.mxu0 %v5478
        %7690 = vmatprep.subr.bf16.mxu0 %v5481
        %7691 = vmatpush1.bf16.msra.mxu0 %v5480
        %7692 = vmatprep.subr.bf16.mxu0 %v5483
        %7693 = vmatpush1.bf16.msra.mxu0 %v5482
        %7694 = vmatprep.subr.bf16.mxu0 %v5485
        %7695 = vmatpush1.bf16.msra.mxu0 %v5484
        %7696 = vmatprep.subr.bf16.mxu0 %v5487
        %7697 = vmatpush1.bf16.msra.mxu0 %v5486
        %7698 = vmatprep.subr.bf16.mxu0 %v5489
        %7699 = vmatpush1.bf16.msra.mxu0 %v5488
        %7700 = vmatprep.subr.bf16.mxu0 %v5491
        %7701 = vmatpush1.bf16.msra.mxu0 %v5490
        %7702 = vmatprep.subr.bf16.mxu0 %v5493
        %7703 = vmatpush1.bf16.msra.mxu0 %v5492
        %7704 = vmatprep.subr.bf16.mxu0 %v5495
        %7705 = vmatpush1.bf16.msra.mxu0 %v5494
        %7706 = vmatprep.subr.bf16.mxu0 %v5497
        %7707 = vmatpush1.bf16.msra.mxu0 %v5496
        %7708 = vmatprep.mubr.bf16.mxu0 %v1602
        %7709 = vmatmul.mubr.bf16.gmra.mrb[0].mxu0 %v1588
        %v7710 = vpop.f32.mrb[0].mxu0
        %v7711 = vadd.f32 %v7670, %v7710
        %v7712 = vpop.f32.mrb[0].mxu0
        %v7713 = vadd.f32 %v7672, %v7712
        %v7714 = vpop.f32.mrb[0].mxu0
        %v7715 = vpop.f32.mrb[0].mxu0
        %7716 = vdwg.mxu0
        %7717 = vmatprep.subr.bf16.mxu0 %v5499
        %7718 = vmatpush1.bf16.msra.mxu0 %v5498
        %7719 = vmatprep.subr.bf16.mxu0 %v5501
        %7720 = vmatpush1.bf16.msra.mxu0 %v5500
        %7721 = vmatprep.subr.bf16.mxu0 %v5503
        %7722 = vmatpush1.bf16.msra.mxu0 %v5502
        %7723 = vmatprep.subr.bf16.mxu0 %v5505
        %7724 = vmatpush1.bf16.msra.mxu0 %v5504
        %7725 = vmatprep.subr.bf16.mxu0 %v5507
        %7726 = vmatpush1.bf16.msra.mxu0 %v5506
        %7727 = vmatprep.subr.bf16.mxu0 %v5509
        %7728 = vmatpush1.bf16.msra.mxu0 %v5508
        %7729 = vmatprep.subr.bf16.mxu0 %v5511
        %7730 = vmatpush1.bf16.msra.mxu0 %v5510
        %7731 = vmatprep.subr.bf16.mxu0 %v5513
        %7732 = vmatpush1.bf16.msra.mxu0 %v5512
        %7733 = vmatprep.subr.bf16.mxu0 %v5515
        %7734 = vmatpush1.bf16.msra.mxu0 %v5514
        %7735 = vmatprep.subr.bf16.mxu0 %v5517
        %7736 = vmatpush1.bf16.msra.mxu0 %v5516
        %7737 = vmatprep.subr.bf16.mxu0 %v5519
        %7738 = vmatpush1.bf16.msra.mxu0 %v5518
        %7739 = vmatprep.subr.bf16.mxu0 %v5521
        %7740 = vmatpush1.bf16.msra.mxu0 %v5520
        %7741 = vmatprep.subr.bf16.mxu0 %v5523
        %7742 = vmatpush1.bf16.msra.mxu0 %v5522
        %7743 = vmatprep.subr.bf16.mxu0 %v5525
        %7744 = vmatpush1.bf16.msra.mxu0 %v5524
        %7745 = vmatprep.subr.bf16.mxu0 %v5527
        %7746 = vmatpush1.bf16.msra.mxu0 %v5526
        %7747 = vmatprep.subr.bf16.mxu0 %v5529
        %7748 = vmatpush1.bf16.msra.mxu0 %v5528
        %7749 = vmatprep.mubr.bf16.mxu0 %v1606
        %7750 = vmatmul.mubr.bf16.gmra.mrb[0].mxu0 %v1604
        %v7751 = vpop.f32.mrb[0].mxu0
        %v7752 = vadd.f32 %v7711, %v7751
        %v7753 = vpop.f32.mrb[0].mxu0
        %v7754 = vadd.f32 %v7713, %v7753
        %v7755 = vpop.f32.mrb[0].mxu0
        %v7756 = vpop.f32.mrb[0].mxu0
        %7757 = vdwg.mxu0
        %7758 = vmatprep.subr.bf16.mxu0 %v5531
        %7759 = vmatpush1.bf16.msra.mxu0 %v5530
        %7760 = vmatprep.subr.bf16.mxu0 %v5533
        %7761 = vmatpush1.bf16.msra.mxu0 %v5532
        %7762 = vmatprep.subr.bf16.mxu0 %v5535
        %7763 = vmatpush1.bf16.msra.mxu0 %v5534
        %7764 = vmatprep.subr.bf16.mxu0 %v5537
        %7765 = vmatpush1.bf16.msra.mxu0 %v5536
        %7766 = vmatprep.subr.bf16.mxu0 %v5539
        %7767 = vmatpush1.bf16.msra.mxu0 %v5538
        %7768 = vmatprep.subr.bf16.mxu0 %v5541
        %7769 = vmatpush1.bf16.msra.mxu0 %v5540
        %7770 = vmatprep.subr.bf16.mxu0 %v5543
        %7771 = vmatpush1.bf16.msra.mxu0 %v5542
        %7772 = vmatprep.subr.bf16.mxu0 %v5545
        %7773 = vmatpush1.bf16.msra.mxu0 %v5544
        %7774 = vmatprep.subr.bf16.mxu0 %v5547
        %7775 = vmatpush1.bf16.msra.mxu0 %v5546
        %7776 = vmatprep.subr.bf16.mxu0 %v5549
        %7777 = vmatpush1.bf16.msra.mxu0 %v5548
        %7778 = vmatprep.subr.bf16.mxu0 %v5551
        %7779 = vmatpush1.bf16.msra.mxu0 %v5550
        %7780 = vmatprep.subr.bf16.mxu0 %v5553
        %7781 = vmatpush1.bf16.msra.mxu0 %v5552
        %7782 = vmatprep.subr.bf16.mxu0 %v5555
        %7783 = vmatpush1.bf16.msra.mxu0 %v5554
        %7784 = vmatprep.subr.bf16.mxu0 %v5557
        %7785 = vmatpush1.bf16.msra.mxu0 %v5556
        %7786 = vmatprep.subr.bf16.mxu0 %v5559
        %7787 = vmatpush1.bf16.msra.mxu0 %v5558
        %7788 = vmatprep.subr.bf16.mxu0 %v5561
        %7789 = vmatpush1.bf16.msra.mxu0 %v5560
        %7790 = vmatprep.mubr.bf16.mxu0 %v1644
        %7791 = vmatmul.mubr.bf16.gmra.mrb[0].mxu0 %v1630
        %v7792 = vpop.f32.mrb[0].mxu0
        %v7793 = vadd.f32 %v7752, %v7792
        %v7794 = vpop.f32.mrb[0].mxu0
        %v7795 = vadd.f32 %v7754, %v7794
        %v7796 = vpop.f32.mrb[0].mxu0
        %v7797 = vpop.f32.mrb[0].mxu0
        %7798 = vdwg.mxu0
        %7799 = vmatprep.subr.bf16.mxu0 %v5563
        %7800 = vmatpush1.bf16.msra.mxu0 %v5562
        %7801 = vmatprep.subr.bf16.mxu0 %v5565
        %7802 = vmatpush1.bf16.msra.mxu0 %v5564
        %7803 = vmatprep.subr.bf16.mxu0 %v5567
        %7804 = vmatpush1.bf16.msra.mxu0 %v5566
        %7805 = vmatprep.subr.bf16.mxu0 %v5569
        %7806 = vmatpush1.bf16.msra.mxu0 %v5568
        %7807 = vmatprep.subr.bf16.mxu0 %v5571
        %7808 = vmatpush1.bf16.msra.mxu0 %v5570
        %7809 = vmatprep.subr.bf16.mxu0 %v5573
        %7810 = vmatpush1.bf16.msra.mxu0 %v5572
        %7811 = vmatprep.subr.bf16.mxu0 %v5575
        %7812 = vmatpush1.bf16.msra.mxu0 %v5574
        %7813 = vmatprep.subr.bf16.mxu0 %v5577
        %7814 = vmatpush1.bf16.msra.mxu0 %v5576
        %7815 = vmatprep.subr.bf16.mxu0 %v5579
        %7816 = vmatpush1.bf16.msra.mxu0 %v5578
        %7817 = vmatprep.subr.bf16.mxu0 %v5581
        %7818 = vmatpush1.bf16.msra.mxu0 %v5580
        %7819 = vmatprep.subr.bf16.mxu0 %v5583
        %7820 = vmatpush1.bf16.msra.mxu0 %v5582
        %7821 = vmatprep.subr.bf16.mxu0 %v5585
        %7822 = vmatpush1.bf16.msra.mxu0 %v5584
        %7823 = vmatprep.subr.bf16.mxu0 %v5587
        %7824 = vmatpush1.bf16.msra.mxu0 %v5586
        %7825 = vmatprep.subr.bf16.mxu0 %v5589
        %7826 = vmatpush1.bf16.msra.mxu0 %v5588
        %7827 = vmatprep.subr.bf16.mxu0 %v5591
        %7828 = vmatpush1.bf16.msra.mxu0 %v5590
        %7829 = vmatprep.subr.bf16.mxu0 %v5593
        %7830 = vmatpush1.bf16.msra.mxu0 %v5592
        %7831 = vmatprep.mubr.bf16.mxu0 %v1654
        %7832 = vmatmul.mubr.bf16.gmra.mrb[0].mxu0 %v1652
        %v7833 = vpop.f32.mrb[0].mxu0
        %v7834 = vadd.f32 %v7793, %v7833
        %v7835 = vpop.f32.mrb[0].mxu0
        %v7836 = vadd.f32 %v7795, %v7835
        %v7837 = vpop.f32.mrb[0].mxu0
        %v7838 = vpop.f32.mrb[0].mxu0
        %7839 = vdwg.mxu0
        %7840 = vmatprep.subr.bf16.mxu0 %v5595
        %7841 = vmatpush1.bf16.msra.mxu0 %v5594
        %7842 = vmatprep.subr.bf16.mxu0 %v5597
        %7843 = vmatpush1.bf16.msra.mxu0 %v5596
        %7844 = vmatprep.subr.bf16.mxu0 %v5599
        %7845 = vmatpush1.bf16.msra.mxu0 %v5598
        %7846 = vmatprep.subr.bf16.mxu0 %v5601
        %7847 = vmatpush1.bf16.msra.mxu0 %v5600
        %7848 = vmatprep.subr.bf16.mxu0 %v5603
        %7849 = vmatpush1.bf16.msra.mxu0 %v5602
        %7850 = vmatprep.subr.bf16.mxu0 %v5605
        %7851 = vmatpush1.bf16.msra.mxu0 %v5604
        %7852 = vmatprep.subr.bf16.mxu0 %v5607
        %7853 = vmatpush1.bf16.msra.mxu0 %v5606
        %7854 = vmatprep.subr.bf16.mxu0 %v5609
        %7855 = vmatpush1.bf16.msra.mxu0 %v5608
        %7856 = vmatprep.subr.bf16.mxu0 %v5611
        %7857 = vmatpush1.bf16.msra.mxu0 %v5610
        %7858 = vmatprep.subr.bf16.mxu0 %v5613
        %7859 = vmatpush1.bf16.msra.mxu0 %v5612
        %7860 = vmatprep.subr.bf16.mxu0 %v5615
        %7861 = vmatpush1.bf16.msra.mxu0 %v5614
        %7862 = vmatprep.subr.bf16.mxu0 %v5617
        %7863 = vmatpush1.bf16.msra.mxu0 %v5616
        %7864 = vmatprep.subr.bf16.mxu0 %v5619
        %7865 = vmatpush1.bf16.msra.mxu0 %v5618
        %7866 = vmatprep.subr.bf16.mxu0 %v5621
        %7867 = vmatpush1.bf16.msra.mxu0 %v5620
        %7868 = vmatprep.subr.bf16.mxu0 %v5623
        %7869 = vmatpush1.bf16.msra.mxu0 %v5622
        %7870 = vmatprep.subr.bf16.mxu0 %v5625
        %7871 = vmatpush1.bf16.msra.mxu0 %v5624
        %7872 = vmatprep.mubr.bf16.mxu0 %v1651
        %7873 = vmatmul.mubr.bf16.gmra.mrb[0].mxu0 %v1637
        %v7874 = vpop.f32.mrb[0].mxu0
        %v7875 = vadd.f32 %v7834, %v7874
        %v7876 = vpop.f32.mrb[0].mxu0
        %v7877 = vadd.f32 %v7836, %v7876
        %v7878 = vpop.f32.mrb[0].mxu0
        %v7879 = vpop.f32.mrb[0].mxu0
        %7880 = vdwg.mxu0
        %7881 = vmatprep.subr.bf16.mxu0 %v5627
        %7882 = vmatpush1.bf16.msra.mxu0 %v5626
        %7883 = vmatprep.subr.bf16.mxu0 %v5629
        %7884 = vmatpush1.bf16.msra.mxu0 %v5628
        %7885 = vmatprep.subr.bf16.mxu0 %v5631
        %7886 = vmatpush1.bf16.msra.mxu0 %v5630
        %7887 = vmatprep.subr.bf16.mxu0 %v5633
        %7888 = vmatpush1.bf16.msra.mxu0 %v5632
        %7889 = vmatprep.subr.bf16.mxu0 %v5635
        %7890 = vmatpush1.bf16.msra.mxu0 %v5634
        %7891 = vmatprep.subr.bf16.mxu0 %v5637
        %7892 = vmatpush1.bf16.msra.mxu0 %v5636
        %7893 = vmatprep.subr.bf16.mxu0 %v5639
        %7894 = vmatpush1.bf16.msra.mxu0 %v5638
        %7895 = vmatprep.subr.bf16.mxu0 %v5641
        %7896 = vmatpush1.bf16.msra.mxu0 %v5640
        %7897 = vmatprep.subr.bf16.mxu0 %v5643
        %7898 = vmatpush1.bf16.msra.mxu0 %v5642
        %7899 = vmatprep.subr.bf16.mxu0 %v5645
        %7900 = vmatpush1.bf16.msra.mxu0 %v5644
        %7901 = vmatprep.subr.bf16.mxu0 %v5647
        %7902 = vmatpush1.bf16.msra.mxu0 %v5646
        %7903 = vmatprep.subr.bf16.mxu0 %v5649
        %7904 = vmatpush1.bf16.msra.mxu0 %v5648
        %7905 = vmatprep.subr.bf16.mxu0 %v5651
        %7906 = vmatpush1.bf16.msra.mxu0 %v5650
        %7907 = vmatprep.subr.bf16.mxu0 %v5653
        %7908 = vmatpush1.bf16.msra.mxu0 %v5652
        %7909 = vmatprep.subr.bf16.mxu0 %v5655
        %7910 = vmatpush1.bf16.msra.mxu0 %v5654
        %7911 = vmatprep.subr.bf16.mxu0 %v5657
        %7912 = vmatpush1.bf16.msra.mxu0 %v5656
        %7913 = vmatprep.mubr.bf16.mxu0 %v1655
        %7914 = vmatmul.mubr.bf16.gmra.mrb[0].mxu0 %v1653
        %v7915 = vpop.f32.mrb[0].mxu0
        %v7916 = vadd.f32 %v7875, %v7915
        %v7917 = vpop.f32.mrb[0].mxu0
        %v7918 = vadd.f32 %v7877, %v7917
        %v7919 = vpop.f32.mrb[0].mxu0
        %v7920 = vpop.f32.mrb[0].mxu0
        %7921 = vdwg.mxu0
        %7922 = vmatprep.subr.bf16.mxu0 %v5659
        %7923 = vmatpush1.bf16.msra.mxu0 %v5658
        %7924 = vmatprep.subr.bf16.mxu0 %v5661
        %7925 = vmatpush1.bf16.msra.mxu0 %v5660
        %7926 = vmatprep.subr.bf16.mxu0 %v5663
        %7927 = vmatpush1.bf16.msra.mxu0 %v5662
        %7928 = vmatprep.subr.bf16.mxu0 %v5665
        %7929 = vmatpush1.bf16.msra.mxu0 %v5664
        %7930 = vmatprep.subr.bf16.mxu0 %v5667
        %7931 = vmatpush1.bf16.msra.mxu0 %v5666
        %7932 = vmatprep.subr.bf16.mxu0 %v5669
        %7933 = vmatpush1.bf16.msra.mxu0 %v5668
        %7934 = vmatprep.subr.bf16.mxu0 %v5671
        %7935 = vmatpush1.bf16.msra.mxu0 %v5670
        %7936 = vmatprep.subr.bf16.mxu0 %v5673
        %7937 = vmatpush1.bf16.msra.mxu0 %v5672
        %7938 = vmatprep.subr.bf16.mxu0 %v5675
        %7939 = vmatpush1.bf16.msra.mxu0 %v5674
        %7940 = vmatprep.subr.bf16.mxu0 %v5677
        %7941 = vmatpush1.bf16.msra.mxu0 %v5676
        %7942 = vmatprep.subr.bf16.mxu0 %v5679
        %7943 = vmatpush1.bf16.msra.mxu0 %v5678
        %7944 = vmatprep.subr.bf16.mxu0 %v5681
        %7945 = vmatpush1.bf16.msra.mxu0 %v5680
        %7946 = vmatprep.subr.bf16.mxu0 %v5683
        %7947 = vmatpush1.bf16.msra.mxu0 %v5682
        %7948 = vmatprep.subr.bf16.mxu0 %v5685
        %7949 = vmatpush1.bf16.msra.mxu0 %v5684
        %7950 = vmatprep.subr.bf16.mxu0 %v5687
        %7951 = vmatpush1.bf16.msra.mxu0 %v5686
        %7952 = vmatprep.subr.bf16.mxu0 %v5689
        %7953 = vmatpush1.bf16.msra.mxu0 %v5688
        %7954 = vmatprep.mubr.bf16.mxu0 %v1693
        %7955 = vmatmul.mubr.bf16.gmra.mrb[0].mxu0 %v1679
        %v7956 = vpop.f32.mrb[0].mxu0
        %v7957 = vadd.f32 %v7916, %v7956
        %v7958 = vpop.f32.mrb[0].mxu0
        %v7959 = vadd.f32 %v7918, %v7958
        %v7960 = vpop.f32.mrb[0].mxu0
        %v7961 = vpop.f32.mrb[0].mxu0
        %7962 = vdwg.mxu0
        %7963 = vmatprep.subr.bf16.mxu0 %v5691
        %7964 = vmatpush1.bf16.msra.mxu0 %v5690
        %7965 = vmatprep.subr.bf16.mxu0 %v5693
        %7966 = vmatpush1.bf16.msra.mxu0 %v5692
        %7967 = vmatprep.subr.bf16.mxu0 %v5695
        %7968 = vmatpush1.bf16.msra.mxu0 %v5694
        %7969 = vmatprep.subr.bf16.mxu0 %v5697
        %7970 = vmatpush1.bf16.msra.mxu0 %v5696
        %7971 = vmatprep.subr.bf16.mxu0 %v5699
        %7972 = vmatpush1.bf16.msra.mxu0 %v5698
        %7973 = vmatprep.subr.bf16.mxu0 %v5701
        %7974 = vmatpush1.bf16.msra.mxu0 %v5700
        %7975 = vmatprep.subr.bf16.mxu0 %v5703
        %7976 = vmatpush1.bf16.msra.mxu0 %v5702
        %7977 = vmatprep.subr.bf16.mxu0 %v5705
        %7978 = vmatpush1.bf16.msra.mxu0 %v5704
        %7979 = vmatprep.subr.bf16.mxu0 %v5707
        %7980 = vmatpush1.bf16.msra.mxu0 %v5706
        %7981 = vmatprep.subr.bf16.mxu0 %v5709
        %7982 = vmatpush1.bf16.msra.mxu0 %v5708
        %7983 = vmatprep.subr.bf16.mxu0 %v5711
        %7984 = vmatpush1.bf16.msra.mxu0 %v5710
        %7985 = vmatprep.subr.bf16.mxu0 %v5713
        %7986 = vmatpush1.bf16.msra.mxu0 %v5712
        %7987 = vmatprep.subr.bf16.mxu0 %v5715
        %7988 = vmatpush1.bf16.msra.mxu0 %v5714
        %7989 = vmatprep.subr.bf16.mxu0 %v5717
        %7990 = vmatpush1.bf16.msra.mxu0 %v5716
        %7991 = vmatprep.subr.bf16.mxu0 %v5719
        %7992 = vmatpush1.bf16.msra.mxu0 %v5718
        %7993 = vmatprep.subr.bf16.mxu0 %v5721
        %7994 = vmatpush1.bf16.msra.mxu0 %v5720
        %7995 = vmatprep.mubr.bf16.mxu0 %v1703
        %7996 = vmatmul.mubr.bf16.gmra.mrb[0].mxu0 %v1701
        %v7997 = vpop.f32.mrb[0].mxu0
        %v7998 = vadd.f32 %v7957, %v7997
        %v7999 = vpop.f32.mrb[0].mxu0
        %v8000 = vadd.f32 %v7959, %v7999
        %v8001 = vpop.f32.mrb[0].mxu0
        %v8002 = vpop.f32.mrb[0].mxu0
        %8003 = vdwg.mxu0
        %8004 = vmatprep.subr.bf16.mxu0 %v5723
        %8005 = vmatpush1.bf16.msra.mxu0 %v5722
        %8006 = vmatprep.subr.bf16.mxu0 %v5725
        %8007 = vmatpush1.bf16.msra.mxu0 %v5724
        %8008 = vmatprep.subr.bf16.mxu0 %v5727
        %8009 = vmatpush1.bf16.msra.mxu0 %v5726
        %8010 = vmatprep.subr.bf16.mxu0 %v5729
        %8011 = vmatpush1.bf16.msra.mxu0 %v5728
        %8012 = vmatprep.subr.bf16.mxu0 %v5731
        %8013 = vmatpush1.bf16.msra.mxu0 %v5730
        %8014 = vmatprep.subr.bf16.mxu0 %v5733
        %8015 = vmatpush1.bf16.msra.mxu0 %v5732
        %8016 = vmatprep.subr.bf16.mxu0 %v5735
        %8017 = vmatpush1.bf16.msra.mxu0 %v5734
        %8018 = vmatprep.subr.bf16.mxu0 %v5737
        %8019 = vmatpush1.bf16.msra.mxu0 %v5736
        %8020 = vmatprep.subr.bf16.mxu0 %v5739
        %8021 = vmatpush1.bf16.msra.mxu0 %v5738
        %8022 = vmatprep.subr.bf16.mxu0 %v5741
        %8023 = vmatpush1.bf16.msra.mxu0 %v5740
        %8024 = vmatprep.subr.bf16.mxu0 %v5743
        %8025 = vmatpush1.bf16.msra.mxu0 %v5742
        %8026 = vmatprep.subr.bf16.mxu0 %v5745
        %8027 = vmatpush1.bf16.msra.mxu0 %v5744
        %8028 = vmatprep.subr.bf16.mxu0 %v5747
        %8029 = vmatpush1.bf16.msra.mxu0 %v5746
        %8030 = vmatprep.subr.bf16.mxu0 %v5749
        %8031 = vmatpush1.bf16.msra.mxu0 %v5748
        %8032 = vmatprep.subr.bf16.mxu0 %v5751
        %8033 = vmatpush1.bf16.msra.mxu0 %v5750
        %8034 = vmatprep.subr.bf16.mxu0 %v5753
        %8035 = vmatpush1.bf16.msra.mxu0 %v5752
        %8036 = vmatprep.mubr.bf16.mxu0 %v1700
        %8037 = vmatmul.mubr.bf16.gmra.mrb[0].mxu0 %v1686
        %v8038 = vpop.f32.mrb[0].mxu0
        %v8039 = vadd.f32 %v7998, %v8038
        %v8040 = vpop.f32.mrb[0].mxu0
        %v8041 = vadd.f32 %v8000, %v8040
        %v8042 = vpop.f32.mrb[0].mxu0
        %v8043 = vpop.f32.mrb[0].mxu0
        %8044 = vdwg.mxu0
        %8045 = vmatprep.subr.bf16.mxu0 %v5755
        %8046 = vmatpush1.bf16.msra.mxu0 %v5754
        %8047 = vmatprep.subr.bf16.mxu0 %v5757
        %8048 = vmatpush1.bf16.msra.mxu0 %v5756
        %8049 = vmatprep.subr.bf16.mxu0 %v5759
        %8050 = vmatpush1.bf16.msra.mxu0 %v5758
        %8051 = vmatprep.subr.bf16.mxu0 %v5761
        %8052 = vmatpush1.bf16.msra.mxu0 %v5760
        %8053 = vmatprep.subr.bf16.mxu0 %v5763
        %8054 = vmatpush1.bf16.msra.mxu0 %v5762
        %8055 = vmatprep.subr.bf16.mxu0 %v5765
        %8056 = vmatpush1.bf16.msra.mxu0 %v5764
        %8057 = vmatprep.subr.bf16.mxu0 %v5767
        %8058 = vmatpush1.bf16.msra.mxu0 %v5766
        %8059 = vmatprep.subr.bf16.mxu0 %v5769
        %8060 = vmatpush1.bf16.msra.mxu0 %v5768
        %8061 = vmatprep.subr.bf16.mxu0 %v5771
        %8062 = vmatpush1.bf16.msra.mxu0 %v5770
        %8063 = vmatprep.subr.bf16.mxu0 %v5773
        %8064 = vmatpush1.bf16.msra.mxu0 %v5772
        %8065 = vmatprep.subr.bf16.mxu0 %v5775
        %8066 = vmatpush1.bf16.msra.mxu0 %v5774
        %8067 = vmatprep.subr.bf16.mxu0 %v5777
        %8068 = vmatpush1.bf16.msra.mxu0 %v5776
        %8069 = vmatprep.subr.bf16.mxu0 %v5779
        %8070 = vmatpush1.bf16.msra.mxu0 %v5778
        %8071 = vmatprep.subr.bf16.mxu0 %v5781
        %8072 = vmatpush1.bf16.msra.mxu0 %v5780
        %8073 = vmatprep.subr.bf16.mxu0 %v5783
        %8074 = vmatpush1.bf16.msra.mxu0 %v5782
        %8075 = vmatprep.subr.bf16.mxu0 %v5785
        %8076 = vmatpush1.bf16.msra.mxu0 %v5784
        %8077 = vmatprep.mubr.bf16.mxu0 %v1704
        %8078 = vmatmul.mubr.bf16.gmra.mrb[0].mxu0 %v1702
        %v8079 = vpop.f32.mrb[0].mxu0
        %v8080 = vadd.f32 %v8039, %v8079
        %v8081 = vpop.f32.mrb[0].mxu0
        %v8082 = vadd.f32 %v8041, %v8081
        %v8083 = vpop.f32.mrb[0].mxu0
        %v8084 = vpop.f32.mrb[0].mxu0
        %8085 = vdwg.mxu0
        %8086 = vmatprep.subr.bf16.mxu0 %v5787
        %8087 = vmatpush1.bf16.msra.mxu0 %v5786
        %8088 = vmatprep.subr.bf16.mxu0 %v5789
        %8089 = vmatpush1.bf16.msra.mxu0 %v5788
        %8090 = vmatprep.subr.bf16.mxu0 %v5791
        %8091 = vmatpush1.bf16.msra.mxu0 %v5790
        %8092 = vmatprep.subr.bf16.mxu0 %v5793
        %8093 = vmatpush1.bf16.msra.mxu0 %v5792
        %8094 = vmatprep.subr.bf16.mxu0 %v5795
        %8095 = vmatpush1.bf16.msra.mxu0 %v5794
        %8096 = vmatprep.subr.bf16.mxu0 %v5797
        %8097 = vmatpush1.bf16.msra.mxu0 %v5796
        %8098 = vmatprep.subr.bf16.mxu0 %v5799
        %8099 = vmatpush1.bf16.msra.mxu0 %v5798
        %8100 = vmatprep.subr.bf16.mxu0 %v5801
        %8101 = vmatpush1.bf16.msra.mxu0 %v5800
        %8102 = vmatprep.subr.bf16.mxu0 %v5803
        %8103 = vmatpush1.bf16.msra.mxu0 %v5802
        %8104 = vmatprep.subr.bf16.mxu0 %v5805
        %8105 = vmatpush1.bf16.msra.mxu0 %v5804
        %8106 = vmatprep.subr.bf16.mxu0 %v5807
        %8107 = vmatpush1.bf16.msra.mxu0 %v5806
        %8108 = vmatprep.subr.bf16.mxu0 %v5809
        %8109 = vmatpush1.bf16.msra.mxu0 %v5808
        %8110 = vmatprep.subr.bf16.mxu0 %v5811
        %8111 = vmatpush1.bf16.msra.mxu0 %v5810
        %8112 = vmatprep.subr.bf16.mxu0 %v5813
        %8113 = vmatpush1.bf16.msra.mxu0 %v5812
        %8114 = vmatprep.subr.bf16.mxu0 %v5815
        %8115 = vmatpush1.bf16.msra.mxu0 %v5814
        %8116 = vmatprep.subr.bf16.mxu0 %v5817
        %8117 = vmatpush1.bf16.msra.mxu0 %v5816
        %8118 = vmatprep.mubr.bf16.mxu0 %v1742
        %8119 = vmatmul.mubr.bf16.gmra.mrb[0].mxu0 %v1728
        %v8120 = vpop.f32.mrb[0].mxu0
        %v8121 = vadd.f32 %v8080, %v8120
        %v8122 = vpop.f32.mrb[0].mxu0
        %v8123 = vadd.f32 %v8082, %v8122
        %v8124 = vpop.f32.mrb[0].mxu0
        %v8125 = vpop.f32.mrb[0].mxu0
        %8126 = vdwg.mxu0
        %8127 = vmatprep.subr.bf16.mxu0 %v5819
        %8128 = vmatpush1.bf16.msra.mxu0 %v5818
        %8129 = vmatprep.subr.bf16.mxu0 %v5821
        %8130 = vmatpush1.bf16.msra.mxu0 %v5820
        %8131 = vmatprep.subr.bf16.mxu0 %v5823
        %8132 = vmatpush1.bf16.msra.mxu0 %v5822
        %8133 = vmatprep.subr.bf16.mxu0 %v5825
        %8134 = vmatpush1.bf16.msra.mxu0 %v5824
        %8135 = vmatprep.subr.bf16.mxu0 %v5827
        %8136 = vmatpush1.bf16.msra.mxu0 %v5826
        %8137 = vmatprep.subr.bf16.mxu0 %v5829
        %8138 = vmatpush1.bf16.msra.mxu0 %v5828
        %8139 = vmatprep.subr.bf16.mxu0 %v5831
        %8140 = vmatpush1.bf16.msra.mxu0 %v5830
        %8141 = vmatprep.subr.bf16.mxu0 %v5833
        %8142 = vmatpush1.bf16.msra.mxu0 %v5832
        %8143 = vmatprep.subr.bf16.mxu0 %v5835
        %8144 = vmatpush1.bf16.msra.mxu0 %v5834
        %8145 = vmatprep.subr.bf16.mxu0 %v5837
        %8146 = vmatpush1.bf16.msra.mxu0 %v5836
        %8147 = vmatprep.subr.bf16.mxu0 %v5839
        %8148 = vmatpush1.bf16.msra.mxu0 %v5838
        %8149 = vmatprep.subr.bf16.mxu0 %v5841
        %8150 = vmatpush1.bf16.msra.mxu0 %v5840
        %8151 = vmatprep.subr.bf16.mxu0 %v5843
        %8152 = vmatpush1.bf16.msra.mxu0 %v5842
        %8153 = vmatprep.subr.bf16.mxu0 %v5845
        %8154 = vmatpush1.bf16.msra.mxu0 %v5844
        %8155 = vmatprep.subr.bf16.mxu0 %v5847
        %8156 = vmatpush1.bf16.msra.mxu0 %v5846
        %8157 = vmatprep.subr.bf16.mxu0 %v5849
        %8158 = vmatpush1.bf16.msra.mxu0 %v5848
        %8159 = vmatprep.mubr.bf16.mxu0 %v1752
        %8160 = vmatmul.mubr.bf16.gmra.mrb[0].mxu0 %v1750
        %v8161 = vpop.f32.mrb[0].mxu0
        %v8162 = vadd.f32 %v8121, %v8161
        %v8163 = vpop.f32.mrb[0].mxu0
        %v8164 = vadd.f32 %v8123, %v8163
        %v8165 = vpop.f32.mrb[0].mxu0
        %v8166 = vpop.f32.mrb[0].mxu0
        %8167 = vdwg.mxu0
        %8168 = vmatprep.subr.bf16.mxu0 %v5851
        %8169 = vmatpush1.bf16.msra.mxu0 %v5850
        %8170 = vmatprep.subr.bf16.mxu0 %v5853
        %8171 = vmatpush1.bf16.msra.mxu0 %v5852
        %8172 = vmatprep.subr.bf16.mxu0 %v5855
        %8173 = vmatpush1.bf16.msra.mxu0 %v5854
        %8174 = vmatprep.subr.bf16.mxu0 %v5857
        %8175 = vmatpush1.bf16.msra.mxu0 %v5856
        %8176 = vmatprep.subr.bf16.mxu0 %v5859
        %8177 = vmatpush1.bf16.msra.mxu0 %v5858
        %8178 = vmatprep.subr.bf16.mxu0 %v5861
        %8179 = vmatpush1.bf16.msra.mxu0 %v5860
        %8180 = vmatprep.subr.bf16.mxu0 %v5863
        %8181 = vmatpush1.bf16.msra.mxu0 %v5862
        %8182 = vmatprep.subr.bf16.mxu0 %v5865
        %8183 = vmatpush1.bf16.msra.mxu0 %v5864
        %8184 = vmatprep.subr.bf16.mxu0 %v5867
        %8185 = vmatpush1.bf16.msra.mxu0 %v5866
        %8186 = vmatprep.subr.bf16.mxu0 %v5869
        %8187 = vmatpush1.bf16.msra.mxu0 %v5868
        %8188 = vmatprep.subr.bf16.mxu0 %v5871
        %8189 = vmatpush1.bf16.msra.mxu0 %v5870
        %8190 = vmatprep.subr.bf16.mxu0 %v5873
        %8191 = vmatpush1.bf16.msra.mxu0 %v5872
        %8192 = vmatprep.subr.bf16.mxu0 %v5875
        %8193 = vmatpush1.bf16.msra.mxu0 %v5874
        %8194 = vmatprep.subr.bf16.mxu0 %v5877
        %8195 = vmatpush1.bf16.msra.mxu0 %v5876
        %8196 = vmatprep.subr.bf16.mxu0 %v5879
        %8197 = vmatpush1.bf16.msra.mxu0 %v5878
        %8198 = vmatprep.subr.bf16.mxu0 %v5881
        %8199 = vmatpush1.bf16.msra.mxu0 %v5880
        %8200 = vmatprep.mubr.bf16.mxu0 %v1749
        %8201 = vmatmul.mubr.bf16.gmra.mrb[0].mxu0 %v1735
        %v8202 = vpop.f32.mrb[0].mxu0
        %v8203 = vadd.f32 %v8162, %v8202
        %v8204 = vpop.f32.mrb[0].mxu0
        %v8205 = vadd.f32 %v8164, %v8204
        %v8206 = vpop.f32.mrb[0].mxu0
        %v8207 = vpop.f32.mrb[0].mxu0
        %8208 = vdwg.mxu0
        %8209 = vmatprep.subr.bf16.mxu0 %v5883
        %8210 = vmatpush1.bf16.msra.mxu0 %v5882
        %8211 = vmatprep.subr.bf16.mxu0 %v5885
        %8212 = vmatpush1.bf16.msra.mxu0 %v5884
        %8213 = vmatprep.subr.bf16.mxu0 %v5887
        %8214 = vmatpush1.bf16.msra.mxu0 %v5886
        %8215 = vmatprep.subr.bf16.mxu0 %v5889
        %8216 = vmatpush1.bf16.msra.mxu0 %v5888
        %8217 = vmatprep.subr.bf16.mxu0 %v5891
        %8218 = vmatpush1.bf16.msra.mxu0 %v5890
        %8219 = vmatprep.subr.bf16.mxu0 %v5893
        %8220 = vmatpush1.bf16.msra.mxu0 %v5892
        %8221 = vmatprep.subr.bf16.mxu0 %v5895
        %8222 = vmatpush1.bf16.msra.mxu0 %v5894
        %8223 = vmatprep.subr.bf16.mxu0 %v5897
        %8224 = vmatpush1.bf16.msra.mxu0 %v5896
        %8225 = vmatprep.subr.bf16.mxu0 %v5899
        %8226 = vmatpush1.bf16.msra.mxu0 %v5898
        %8227 = vmatprep.subr.bf16.mxu0 %v5901
        %8228 = vmatpush1.bf16.msra.mxu0 %v5900
        %8229 = vmatprep.subr.bf16.mxu0 %v5903
        %8230 = vmatpush1.bf16.msra.mxu0 %v5902
        %8231 = vmatprep.subr.bf16.mxu0 %v5905
        %8232 = vmatpush1.bf16.msra.mxu0 %v5904
        %8233 = vmatprep.subr.bf16.mxu0 %v5907
        %8234 = vmatpush1.bf16.msra.mxu0 %v5906
        %8235 = vmatprep.subr.bf16.mxu0 %v5909
        %8236 = vmatpush1.bf16.msra.mxu0 %v5908
        %8237 = vmatprep.subr.bf16.mxu0 %v5911
        %8238 = vmatpush1.bf16.msra.mxu0 %v5910
        %8239 = vmatprep.subr.bf16.mxu0 %v5913
        %8240 = vmatpush1.bf16.msra.mxu0 %v5912
        %8241 = vmatprep.mubr.bf16.mxu0 %v1753
        %8242 = vmatmul.mubr.bf16.gmra.mrb[0].mxu0 %v1751
        %v8243 = vpop.f32.mrb[0].mxu0
        %v8244 = vadd.f32 %v8203, %v8243
        %v8245 = vpop.f32.mrb[0].mxu0
        %v8246 = vadd.f32 %v8205, %v8245
        %v8247 = vpop.f32.mrb[0].mxu0
        %v8248 = vpop.f32.mrb[0].mxu0
        %8249 = vdwg.mxu0
        %v8252 = vcombine.low %v8244, %v8246
        %v8254 = vunpack.c.l.s4 1983009808
        %v8255 = vunpack.c.0.s8 %v8254
        %v8256 = vlaneseq
        %v8257 = vshrl.u32 %v8256, 7
        %v8258 = vsub.s32 %v8255, %v8257
        %v8259 = vrot.slane %v8252, %v8258
        %v8261 = vadd.f32 %v321, %v8259
        %8262 = vst [vmem:[#allocation2] sm:$0xf] %v8261
        %p8263 = scmp.eq.s32.totalorder %s24, 1
        // Predicated region
        $region61: #{tpu_custom_call.1} parent=39 // pred_check
          %p8264 = pneg %p8263
        $region62: #{tpu_custom_call.1} parent=39 // pred_check_branch
          %8266 = sbr.rel (%p8264) target = $region64
        $region63: #{tpu_custom_call.1} parent=39 // pred_region
          %v8267 = vld [vmem:[#allocation2] sm:$0xf]
          %v8268 = vmax.f32 %v8267, 0.0
          %v8269 = vld [vmem:[%s3] sm:$0xff]
          %v8270 = vld [vmem:[%s3 + $0x8] sm:$0xff]
          %v8271 = vld [vmem:[%s3 + $0x10] sm:$0xff]
          %v8272 = vld [vmem:[%s3 + $0x18] sm:$0xff]
          %v8273 = vld [vmem:[%s3 + $0x20] sm:$0xff]
          %v8274 = vld [vmem:[%s3 + $0x28] sm:$0xff]
          %v8275 = vld [vmem:[%s3 + $0x30] sm:$0xff]
          %v8276 = vld [vmem:[%s3 + $0x38] sm:$0xff]
          %v8277 = vld [vmem:[%s3 + $0x40] sm:$0xff]
          %v8278 = vld [vmem:[%s3 + $0x48] sm:$0xff]
          %v8279 = vld [vmem:[%s3 + $0x50] sm:$0xff]
          %v8280 = vld [vmem:[%s3 + $0x58] sm:$0xff]
          %v8281 = vld [vmem:[%s3 + $0x60] sm:$0xff]
          %v8282 = vld [vmem:[%s3 + $0x68] sm:$0xff]
          %v8283 = vld [vmem:[%s3 + $0x70] sm:$0xff]
          %v8284 = vld [vmem:[%s3 + $0x78] sm:$0xff]
          %v8285 = vld [vmem:[%s3 + $0x80] sm:$0xff]
          %v8286 = vld [vmem:[%s3 + $0x88] sm:$0xff]
          %v8287 = vld [vmem:[%s3 + $0x90] sm:$0xff]
          %v8288 = vld [vmem:[%s3 + $0x98] sm:$0xff]
          %v8289 = vld [vmem:[%s3 + $0xa0] sm:$0xff]
          %v8290 = vld [vmem:[%s3 + $0xa8] sm:$0xff]
          %v8291 = vld [vmem:[%s3 + $0xb0] sm:$0xff]
          %v8292 = vld [vmem:[%s3 + $0xb8] sm:$0xff]
          %v8293 = vld [vmem:[%s3 + $0xc0] sm:$0xff]
          %v8294 = vld [vmem:[%s3 + $0xc8] sm:$0xff]
          %v8295 = vld [vmem:[%s3 + $0xd0] sm:$0xff]
          %v8296 = vld [vmem:[%s3 + $0xd8] sm:$0xff]
          %v8297 = vld [vmem:[%s3 + $0xe0] sm:$0xff]
          %v8298 = vld [vmem:[%s3 + $0xe8] sm:$0xff]
          %v8299 = vld [vmem:[%s3 + $0xf0] sm:$0xff]
          %v8300 = vld [vmem:[%s3 + $0xf8] sm:$0xff]
          %v8301 = vld [vmem:[#allocation9] sm:$0x1]
          %v8303 = vlaneseq
          %v8304 = vshrl.u32 %v8303, 7
          %v8305 = vsub.s32 0, %v8304
          %v8306 = vrot.slane %v8301, %v8305
          %v8310 = vunpack.c.l.s4 1983009808
          %v8311 = vunpack.c.0.s8 %v8310
          %v8312 = vlaneseq
          %v8313 = vshrl.u32 %v8312, 7
          %v8314 = vsub.s32 %v8311, %v8313
          %v8315 = vrot.slane %v8268, %v8314
          %v8316 = vcombine.high %v8315, %v8315
          %8319 = vmatprep.subr.mxu0 0.0
          %8320 = vmatpush1.msra.mxu0 %v8269
          %8321 = vmatprep.subr.mxu0 0.0
          %8322 = vmatpush1.msra.mxu0 %v8270
          %8323 = vmatprep.subr.mxu0 0.0
          %8324 = vmatpush1.msra.mxu0 %v8271
          %8325 = vmatprep.subr.mxu0 0.0
          %8326 = vmatpush1.msra.mxu0 %v8272
          %8327 = vmatprep.subr.mxu0 0.0
          %8328 = vmatpush1.msra.mxu0 %v8273
          %8329 = vmatprep.subr.mxu0 0.0
          %8330 = vmatpush1.msra.mxu0 %v8274
          %8331 = vmatprep.subr.mxu0 0.0
          %8332 = vmatpush1.msra.mxu0 %v8275
          %8333 = vmatprep.subr.mxu0 0.0
          %8334 = vmatpush1.msra.mxu0 %v8276
          %8335 = vmatprep.subr.mxu0 0.0
          %8336 = vmatpush1.msra.mxu0 %v8277
          %8337 = vmatprep.subr.mxu0 0.0
          %8338 = vmatpush1.msra.mxu0 %v8278
          %8339 = vmatprep.subr.mxu0 0.0
          %8340 = vmatpush1.msra.mxu0 %v8279
          %8341 = vmatprep.subr.mxu0 0.0
          %8342 = vmatpush1.msra.mxu0 %v8280
          %8343 = vmatprep.subr.mxu0 0.0
          %8344 = vmatpush1.msra.mxu0 %v8281
          %8345 = vmatprep.subr.mxu0 0.0
          %8346 = vmatpush1.msra.mxu0 %v8282
          %8347 = vmatprep.subr.mxu0 0.0
          %8348 = vmatpush1.msra.mxu0 %v8283
          %8349 = vmatprep.subr.mxu0 0.0
          %8350 = vmatpush1.msra.mxu0 %v8284
          %8351 = vmatprep.subr.mxu0 0.0
          %8352 = vmatpush1.msra.mxu0 %v8285
          %8353 = vmatprep.subr.mxu0 0.0
          %8354 = vmatpush1.msra.mxu0 %v8286
          %8355 = vmatprep.subr.mxu0 0.0
          %8356 = vmatpush1.msra.mxu0 %v8287
          %8357 = vmatprep.subr.mxu0 0.0
          %8358 = vmatpush1.msra.mxu0 %v8288
          %8359 = vmatprep.subr.mxu0 0.0
          %8360 = vmatpush1.msra.mxu0 %v8289
          %8361 = vmatprep.subr.mxu0 0.0
          %8362 = vmatpush1.msra.mxu0 %v8290
          %8363 = vmatprep.subr.mxu0 0.0
          %8364 = vmatpush1.msra.mxu0 %v8291
          %8365 = vmatprep.subr.mxu0 0.0
          %8366 = vmatpush1.msra.mxu0 %v8292
          %8367 = vmatprep.subr.mxu0 0.0
          %8368 = vmatpush1.msra.mxu0 %v8293
          %8369 = vmatprep.subr.mxu0 0.0
          %8370 = vmatpush1.msra.mxu0 %v8294
          %8371 = vmatprep.subr.mxu0 0.0
          %8372 = vmatpush1.msra.mxu0 %v8295
          %8373 = vmatprep.subr.mxu0 0.0
          %8374 = vmatpush1.msra.mxu0 %v8296
          %8375 = vmatprep.subr.mxu0 0.0
          %8376 = vmatpush1.msra.mxu0 %v8297
          %8377 = vmatprep.subr.mxu0 0.0
          %8378 = vmatpush1.msra.mxu0 %v8298
          %8379 = vmatprep.subr.mxu0 0.0
          %8380 = vmatpush1.msra.mxu0 %v8299
          %8381 = vmatprep.subr.mxu0 0.0
          %8382 = vmatpush1.msra.mxu0 %v8300
          %8383 = vmatprep.mubr.f32.mxu0 %v8316
          %8384 = vmatmul.mubr.f32.gmra.mrb[0].mxu0 %v8315
          %v8385 = vpop.f32.mrb[0].mxu0
          %v8386 = vadd.f32 %v8306, %v8385
          %v8387 = vpop.f32.mrb[0].mxu0
          %8388 = vdwg.mxu0
          %v8389 = vmax.f32 %v8386, 0.0
          %vm8390 = vcmask 517120
          %8391 = vst.msk [vmem:[#allocation11] sm:$0x3] %vm8390, %v8389
        $region64: #{tpu_custom_call.1} parent=39 // pred_fallthru
          _
        // Predicated region
        $region65: #{tpu_custom_call.1} parent=39 // pred_check
          %p8392 = pneg %p152
        $region66: #{tpu_custom_call.1} parent=39 // pred_check_branch
          %8394 = sbr.rel (%p8392) target = $region68
        $region67: #{tpu_custom_call.1} parent=39 // pred_region
          %s8396 = ssub.s32 32, 32
          %8397 = vsyncadd [#allocation5], %s8396
          %s8399 = sshll.u32 [#allocation11], 4
          %s8400 = int_to_ptr.vmem [resolvable:$true] %s8399
          %8402 = dma.vmem_to_hbm [thread:$0]  %s8400, 32, %s5, [#allocation5]
        $region68: #{tpu_custom_call.1} parent=39 // pred_fallthru
          _
        // Predicated region
        $region69: #{tpu_custom_call.1} parent=39 // pred_check
          %p8403 = pneg %p152
        $region70: #{tpu_custom_call.1} parent=39 // pred_check_branch
          %8405 = sbr.rel (%p8403) target = $region72
        $region71: #{tpu_custom_call.1} parent=39 // pred_region
          %8406 = dma.done [#allocation5], 32
        $region72: #{tpu_custom_call.1} parent=39 // pred_fallthru
          _
      $region40: #{tpu_custom_call.1} parent=5 // pred_fallthru
        _
      %p8407 = scmp.le.s32.totalorder 2, %s19
      // Predicated region
      $region73: #{tpu_custom_call.1} parent=5 // pred_check
        %p8408 = pneg %p8407
      $region74: #{tpu_custom_call.1} parent=5 // pred_check_branch
        %8410 = sbr.rel (%p8408) target = $region76
      $region75: #{tpu_custom_call.1} parent=5 // pred_region
        %s8411 = ssub.s32 %s19, 2
      $region76: #{tpu_custom_call.1} parent=5 // pred_fallthru
        _
    $region6: #{tpu_custom_call.1} parent=1 // loop_footer
      %s23 = sadd.s32 1, %s19
    $region7: #{tpu_custom_call.1} parent=1 // loop_footer_branch
      %18 = sbr.rel target = $region3
    $region8: #{tpu_custom_call.1} parent=1 // loop_exit
      _
    %8412 = vsyncpa [#allocation4], 1
    %s8413 = scalar_lea.sflag [#allocation4], 1
    %8414 = vsyncpa %s8413, 1
    %8415 = vsyncpa [#allocation7], 1
    %s8416 = scalar_lea.sflag [#allocation7], 1
    %8417 = vsyncpa %s8416, 1
    %8418 = vsyncpa [#allocation10], 1
    %8419 = vsyncpa [#allocation5], 1
    %s8420 = scalar_lea.sflag [#allocation5], 1
    %8421 = vsyncpa %s8420, 1

</llo_original>
